<compile_context>
chip_gen: v7x
topology: tpu7x:2x2x1
jax: 0.10.0
libtpu: 0.0.40
codegen_flags: <defaults>
</compile_context>

<pallas_src>
import numpy as np
import jax
import jax.numpy as jnp
from jax.experimental import pallas as pl
from jax.experimental.pallas import tpu as pltpu

# ---------------- static problem sizes ----------------
B, D, H, S = 2, 9, 9, 33          # batch, depth, height, spectral bands
DP, HP = D + 2, H + 2             # zero-padded spatial extents (11, 11)
RP = B * DP * HP                  # flattened padded rows (242)
LEAD = 4                          # leading zero rows -> conv-output rows 8-aligned
RP_PAD = 256                      # padded row count (multiple of 8)
N_OUT = 224                       # conv output rows per block (multiple of 8)
OUT0 = LEAD + HP + 1              # row where conv-output flat index 0 lands (= 16)
CB = 12                           # channels produced by each 3x3 conv block
GW = 64                           # unified channel buffer width (24+12+12+12 = 60 real)
XW = 40                           # x-grid lanes: 33 spectra + 1 mask column + pad
ZW = 128                          # packed per-tap buffer width (9*12 = 108 real)
EPS = 1e-3                        # BatchNorm3d eps (module uses eps=0.001)

DST22, DST23, DST24 = 24, 36, 48  # lane offsets of x22/x23/x24 inside the 64-lane buffer

# ---- weight-slab row layout (all blocks start on a multiple of 8, 128 lanes wide) ----
OFF_FC1, OFF_FC2, OFF_FC3, OFF_FC4 = 0, 40, 64, 80
OFF_C21 = 104
OFF_W22, OFF_W23, OFF_W24 = 144, 208, 272
OFF_HA, OFF_HB = 336, 400
OFF_S22, OFF_S23, OFF_S24 = 464, 592, 720
W_ROWS = 848

# ---- bias / constant-slab row layout ----
ROW_FC1B, ROW_FC2B, ROW_FC3B, ROW_FC4B = 0, 1, 2, 3
ROW_G22IN, ROW_B22IN = 4, 5       # bn21 gamma/beta  (conv22 input, 24 ch)
ROW_G23IN, ROW_B23IN = 6, 7       # bn22             (conv23 input, 36 ch)
ROW_G24IN, ROW_B24IN = 8, 9       # bn23             (conv24 input, 48 ch)
ROW_CBIAS, ROW_FCB = 10, 11       # concat conv biases (60) / head bias (3)
ROW_TAP = 16                      # rows 16..24: 0/1 lane masks of the 9 tap groups
B_ROWS = 32

# ---- row-selection matrix layout ----
ROW_POOL = 0                      # rows 0..B-1 : masked per-sample average-pool weights
ROW_CENTER = B                    # rows B..2B-1: one-hot rows selecting voxel (5, 5)
ROW_STAT = 2 * B                  # masked 1/(B*D*H) row for BN batch statistics
SEL_ROWS = 8

VMEM = pltpu.MemorySpace.VMEM
F32 = jnp.float32


def _sigmoid(x):
    return 1.0 / (1.0 + jnp.exp(-x))


# ---------------- the single fused kernel ----------------
def sae_kernel(xg, rowsel, wslab, bslab, out_ref, gbuf, zbuf, abuf):
    xg_v = xg[...]                        # (RP_PAD, XW): lanes 0:33 spectra, lane 33 mask
    rsel = rowsel[...]                    # (8, RP_PAD)
    mcol = xg_v[:, S:S + 1]               # (RP_PAD, 1) interior-voxel row mask

    # ---- autoencoder / fc branch: (B,33) -> (B,60) (pool/unsqueeze chain is identity) ----
    xc = jnp.dot(rsel, xg_v, preferred_element_type=F32)[ROW_CENTER:ROW_CENTER + B, :]
    h = _sigmoid(jnp.dot(xc, wslab[OFF_FC1:OFF_FC1 + XW, 0:20], preferred_element_type=F32)
                 + bslab[ROW_FC1B:ROW_FC1B + 1, 0:20])
    h = _sigmoid(jnp.dot(h, wslab[OFF_FC2:OFF_FC2 + 20, 0:10], preferred_element_type=F32)
                 + bslab[ROW_FC2B:ROW_FC2B + 1, 0:10])
    h = _sigmoid(jnp.dot(h, wslab[OFF_FC3:OFF_FC3 + 10, 0:20], preferred_element_type=F32)
                 + bslab[ROW_FC3B:ROW_FC3B + 1, 0:20])
    x1 = (jnp.dot(h, wslab[OFF_FC4:OFF_FC4 + 20, 0:GW], preferred_element_type=F32)
          + bslab[ROW_FC4B:ROW_FC4B + 1, 0:GW])                       # (B, 64), lanes 60:64 = 0

    # ---- conv21 (1x1x33 spectral conv): full-width store initialises the whole buffer ----
    # (conv bias deliberately omitted; training-mode BN cancels it, it is re-added at the pool)
    gbuf[...] = jnp.dot(xg_v, wslab[OFF_C21:OFF_C21 + XW, 0:GW], preferred_element_type=F32)

    def bn_relu_input(grow, brow):
        # training-mode batch statistics over the B*D*H real voxels, computed on the MXU.
        gv = gbuf[...]                                                # (RP_PAD, GW)
        m1 = jnp.dot(rsel, gv, preferred_element_type=F32)[ROW_STAT:ROW_STAT + 1, :]
        m2 = jnp.dot(rsel, gv * gv, preferred_element_type=F32)[ROW_STAT:ROW_STAT + 1, :]
        rstd = jax.lax.rsqrt(m2 - m1 * m1 + EPS)
        a = rstd * grow                       # gamma zero-padded beyond the real channels
        b = brow - m1 * a
        # relu(bn(x)); padding rows re-zeroed so the conv taps see torch's zero-padding.
        return jnp.maximum(gv * a + b, 0.0) * mcol

    def conv_block(y, w_off, sel_off):
        # zbuf[r, t*12+c] = tap-t / out-channel-c contribution evaluated at padded row r.
        zbuf[...] = jnp.dot(y, wslab[w_off:w_off + GW, :], preferred_element_type=F32)
        # fold the 9 taps: full-width row-shifted adds masked per tap group (VPU only,
        # no lane extraction), then one 0/1 selection matmul (MXU) that also places the
        # 12 output channels directly at their destination lanes of the unified buffer.
        for kd in range(3):
            part = None
            for kh in range(3):
                t = 3 * kd + kh
                off = LEAD + kd * HP + kh
                term = zbuf[off:off + N_OUT, :] * bslab[ROW_TAP + t:ROW_TAP + t + 1, :]
                part = term if part is None else part + term
            if kd == 0:
                abuf[...] = part
            else:
                abuf[...] = abuf[...] + part
        upd = jnp.dot(abuf[...], wslab[sel_off:sel_off + ZW, 0:GW], preferred_element_type=F32)
        gbuf[OUT0:OUT0 + N_OUT, :] = gbuf[OUT0:OUT0 + N_OUT, :] + upd

    # torch's channel concats are just lane prefixes of gbuf -> one matmul per conv.
    conv_block(bn_relu_input(bslab[ROW_G22IN:ROW_G22IN + 1, 0:GW],
                             bslab[ROW_B22IN:ROW_B22IN + 1, 0:GW]), OFF_W22, OFF_S22)
    conv_block(bn_relu_input(bslab[ROW_G23IN:ROW_G23IN + 1, 0:GW],
                             bslab[ROW_B23IN:ROW_B23IN + 1, 0:GW]), OFF_W23, OFF_S23)
    conv_block(bn_relu_input(bslab[ROW_G24IN:ROW_G24IN + 1, 0:GW],
                             bslab[ROW_B24IN:ROW_B24IN + 1, 0:GW]), OFF_W24, OFF_S24)

    # ---- head: masked global average pool of cat(x21..x24) + Linear(120, 3) ----
    pooled = (jnp.dot(rsel, gbuf[...], preferred_element_type=F32)[ROW_POOL:ROW_POOL + B, :]
              + bslab[ROW_CBIAS:ROW_CBIAS + 1, 0:GW])      # conv biases folded in exactly once
    out_ref[...] = (jnp.dot(x1, wslab[OFF_HA:OFF_HA + GW, 0:3], preferred_element_type=F32)
                    + jnp.dot(pooled, wslab[OFF_HB:OFF_HB + GW, 0:3], preferred_element_type=F32)
                    + bslab[ROW_FCB:ROW_FCB + 1, 0:3])


# ---------------- host-side one-time packing ----------------
def _pack_conv(w):
    """(9, Cin, Cout) tap-major (t = 3*kd + kh) conv weights -> (Cin, 108) packed."""
    t, cin, cout = w.shape
    return np.transpose(np.asarray(w, np.float32), (1, 0, 2)).reshape(cin, t * cout)


def _sel_matrix(dst):
    """(128, GW) 0/1 matrix: fold the 9 tap groups of zbuf into 12 channels at lanes dst:dst+12."""
    sel = np.zeros((ZW, GW), np.float32)
    for t in range(9):
        for c in range(CB):
            sel[t * CB + c, dst + c] = 1.0
    return sel


def pack_params(p):
    """Pack all parameters / constants into 3 DMA slabs + the x-grid template (call once)."""
    w = np.zeros((W_ROWS, 128), np.float32)

    def put(off, a):
        a = np.asarray(a, np.float32)
        w[off:off + a.shape[0], 0:a.shape[1]] = a

    put(OFF_FC1, p["fc1_w"]); put(OFF_FC2, p["fc2_w"])
    put(OFF_FC3, p["fc3_w"]); put(OFF_FC4, p["fc4_w"])
    put(OFF_C21, p["c21_w"])
    put(OFF_W22, _pack_conv(p["c22_w"]))
    put(OFF_W23, _pack_conv(p["c23_w"]))
    put(OFF_W24, _pack_conv(p["c24_w"]))
    fc_w = np.asarray(p["fc_w"], np.float32)
    put(OFF_HA, fc_w[0:60, :]); put(OFF_HB, fc_w[60:120, :])
    put(OFF_S22, _sel_matrix(DST22)); put(OFF_S23, _sel_matrix(DST23)); put(OFF_S24, _sel_matrix(DST24))

    bs = np.zeros((B_ROWS, 128), np.float32)

    def putb(row, a):
        a = np.asarray(a, np.float32).reshape(-1)
        bs[row, 0:a.shape[0]] = a

    putb(ROW_FC1B, p["fc1_b"]); putb(ROW_FC2B, p["fc2_b"])
    putb(ROW_FC3B, p["fc3_b"]); putb(ROW_FC4B, p["fc4_b"])
    putb(ROW_G22IN, p["bn21_g"]); putb(ROW_B22IN, p["bn21_b"])
    putb(ROW_G23IN, p["bn22_g"]); putb(ROW_B23IN, p["bn22_b"])
    putb(ROW_G24IN, p["bn23_g"]); putb(ROW_B24IN, p["bn23_b"])
    putb(ROW_CBIAS, np.concatenate([np.asarray(p["c21_b"], np.float32).reshape(-1),
                                    np.asarray(p["c22_b"], np.float32).reshape(-1),
                                    np.asarray(p["c23_b"], np.float32).reshape(-1),
                                    np.asarray(p["c24_b"], np.float32).reshape(-1)]))
    putb(ROW_FCB, p["fc_b"])
    for t in range(9):
        bs[ROW_TAP + t, t * CB:(t + 1) * CB] = 1.0

    # row-selection matrix: pooling rows, center-voxel rows, BN-stats row
    mask2d = np.zeros((DP, HP), np.float32)
    mask2d[1:D + 1, 1:H + 1] = 1.0
    mask_col = np.zeros((RP_PAD,), np.float32)
    mask_col[LEAD:LEAD + RP] = np.tile(mask2d[None], (B, 1, 1)).reshape(RP)
    rsel = np.zeros((SEL_ROWS, RP_PAD), np.float32)
    for b in range(B):
        rows = slice(LEAD + b * DP * HP, LEAD + (b + 1) * DP * HP)
        rsel[ROW_POOL + b, rows] = mask_col[rows] / float(D * H)
        rsel[ROW_CENTER + b, LEAD + b * DP * HP + 6 * HP + 6] = 1.0      # voxel (5,5) -> padded (6,6)
    rsel[ROW_STAT, :] = mask_col / float(B * D * H)

    # x-grid template with the mask column pre-filled; spectra filled per call
    xg_base = np.zeros((RP_PAD, XW), np.float32)
    xg_base[:, S] = mask_col

    return {"wslab": jnp.asarray(w), "bslab": jnp.asarray(bs),
            "rowsel": jnp.asarray(rsel), "xg_base": jnp.asarray(xg_base)}


# ---------------- forward wrapper ----------------
def sae_3dcnn_forward(x, packed):
    """x: (B, 1, D, H, 33) float32 (torch NCDHW layout). Returns (B, 3)."""
    xp = jnp.pad(x[:, 0], ((0, 0), (1, 1), (1, 1), (0, 0))).reshape(RP, S)
    xg = packed["xg_base"].at[LEAD:LEAD + RP, 0:S].set(xp)

    return pl.pallas_call(
        sae_kernel,
        out_shape=jax.ShapeDtypeStruct((B, 3), F32),
        in_specs=[pl.BlockSpec(memory_space=VMEM)] * 4,
        out_specs=pl.BlockSpec(memory_space=VMEM),
        scratch_shapes=[
            pltpu.VMEM((RP_PAD, GW), F32),    # gbuf: unified [x21|x22|x23|x24] channel buffer
            pltpu.VMEM((RP_PAD, ZW), F32),    # zbuf: packed per-tap conv contributions
            pltpu.VMEM((N_OUT, ZW), F32),     # abuf: tap-folded accumulator
        ],
    )(xg, packed["rowsel"], packed["wslab"], packed["bslab"])


# ---------------- deterministic parameters ----------------
def init_params(key):
    ks = iter(jax.random.split(key, 32))

    def w(shape, scale=0.1):
        return jax.random.normal(next(ks), shape, F32) * scale

    p = {
        "fc1_w": w((33, 20)), "fc1_b": w((1, 20)),
        "fc2_w": w((20, 10)), "fc2_b": w((1, 10)),
        "fc3_w": w((10, 20)), "fc3_b": w((1, 20)),
        "fc4_w": w((20, 60)), "fc4_b": w((1, 60)),
        "c21_w": w((33, 24)), "c21_b": w((1, 24)),
        "c22_w": w((9, 24, 12)), "c22_b": w((1, 12)),
        "c23_w": w((9, 36, 12)), "c23_b": w((1, 12)),
        "c24_w": w((9, 48, 12)), "c24_b": w((1, 12)),
        "bn21_g": 1.0 + w((1, 24), 0.05), "bn21_b": w((1, 24), 0.05),
        "bn22_g": 1.0 + w((1, 36), 0.05), "bn22_b": w((1, 36), 0.05),
        "bn23_g": 1.0 + w((1, 48), 0.05), "bn23_b": w((1, 48), 0.05),
        "fc_w": w((120, 3)), "fc_b": w((1, 3)),
    }
    # TODO(synk): conv25 + its Sigmoid are defined in __init__ but never used in forward(),
    # so they are intentionally not instantiated here.
    # TODO(synk): BatchNorm runs in training mode (batch statistics); eval()-mode inference
    # would need running_mean/running_var instead (and would invalidate the bias folding).
    return p


if __name__ == "__main__":
    key = jax.random.PRNGKey(0)
    pkey, xkey = jax.random.split(key)
    params = init_params(pkey)
    packed = pack_params(params)
    x = jax.random.normal(xkey, (B, 1, D, H, S), jnp.float32)

    out = jax.jit(sae_3dcnn_forward)(x, packed)
    out = jax.block_until_ready(out)
    assert out.shape == (B, 3) and out.dtype == jnp.float32
    print("KERNEL_OK")
</pallas_src>

<mosaic_0001>
module attributes {stable_mosaic.version = 11 : i64} {
  func.func @sae_kernel(%arg0: memref<256x40xf32, #tpu.memory_space<vmem>>, %arg1: memref<8x256xf32, #tpu.memory_space<vmem>>, %arg2: memref<848x128xf32, #tpu.memory_space<vmem>>, %arg3: memref<32x128xf32, #tpu.memory_space<vmem>>, %arg4: memref<2x3xf32, #tpu.memory_space<vmem>>, %arg5: memref<256x64xf32, #tpu.memory_space<vmem>>, %arg6: memref<256x128xf32, #tpu.memory_space<vmem>>, %arg7: memref<224x128xf32, #tpu.memory_space<vmem>>) attributes {dimension_semantics = [], scalar_prefetch = 0 : i64, scratch_operands = 3 : i64, tpu.core_type = #tpu.core_type<tc>} {
    %c0 = arith.constant 0 : index
    %c0_0 = arith.constant 0 : index
    %0 = vector.load %arg0[%c0, %c0_0] : memref<256x40xf32, #tpu.memory_space<vmem>>, vector<256x40xf32>
    %c0_1 = arith.constant 0 : index
    %c0_2 = arith.constant 0 : index
    %1 = vector.load %arg1[%c0_1, %c0_2] : memref<8x256xf32, #tpu.memory_space<vmem>>, vector<8x256xf32>
    %2 = vector.extract_strided_slice %0 {offsets = [0, 33], sizes = [256, 1], strides = [1, 1]} : vector<256x40xf32> to vector<256x1xf32>
    %cst = arith.constant dense<0.000000e+00> : vector<8x40xf32>
    %3 = tpu.matmul %1, %0, %cst {dimension_numbers = #tpu.dot_dimension_numbers<[1], [0], [0], [1], [0, 0, 1, 1], [], []>} : vector<8x256xf32>, vector<256x40xf32>, vector<8x40xf32> -> vector<8x40xf32>
    %4 = vector.extract_strided_slice %3 {offsets = [2, 0], sizes = [2, 40], strides = [1, 1]} : vector<8x40xf32> to vector<2x40xf32>
    %c0_3 = arith.constant 0 : index
    %c0_4 = arith.constant 0 : index
    %5 = vector.load %arg2[%c0_3, %c0_4] : memref<848x128xf32, #tpu.memory_space<vmem>>, vector<40x20xf32>
    %cst_5 = arith.constant dense<0.000000e+00> : vector<2x20xf32>
    %6 = tpu.matmul %4, %5, %cst_5 {dimension_numbers = #tpu.dot_dimension_numbers<[1], [0], [0], [1], [0, 0, 1, 1], [], []>} : vector<2x40xf32>, vector<40x20xf32>, vector<2x20xf32> -> vector<2x20xf32>
    %c0_6 = arith.constant 0 : index
    %c0_7 = arith.constant 0 : index
    %7 = vector.load %arg3[%c0_6, %c0_7] : memref<32x128xf32, #tpu.memory_space<vmem>>, vector<1x20xf32>
    %8 = vector.broadcast %7 : vector<1x20xf32> to vector<2x20xf32>
    %9 = arith.addf %6, %8 : vector<2x20xf32>
    %cst_8 = arith.constant 0.000000e+00 : f32
    %10 = vector.broadcast %cst_8 : f32 to vector<2x20xf32>
    %11 = arith.subf %10, %9 : vector<2x20xf32>
    %12 = math.exp %11 : vector<2x20xf32>
    %cst_9 = arith.constant 1.000000e+00 : f32
    %13 = vector.broadcast %cst_9 : f32 to vector<2x20xf32>
    %14 = arith.addf %13, %12 : vector<2x20xf32>
    %cst_10 = arith.constant 1.000000e+00 : f32
    %15 = vector.broadcast %cst_10 : f32 to vector<2x20xf32>
    %16 = arith.divf %15, %14 : vector<2x20xf32>
    %c40 = arith.constant 40 : index
    %c0_11 = arith.constant 0 : index
    %17 = vector.load %arg2[%c40, %c0_11] : memref<848x128xf32, #tpu.memory_space<vmem>>, vector<20x10xf32>
    %cst_12 = arith.constant dense<0.000000e+00> : vector<2x10xf32>
    %18 = tpu.matmul %16, %17, %cst_12 {dimension_numbers = #tpu.dot_dimension_numbers<[1], [0], [0], [1], [0, 0, 1, 1], [], []>} : vector<2x20xf32>, vector<20x10xf32>, vector<2x10xf32> -> vector<2x10xf32>
    %c1 = arith.constant 1 : index
    %c0_13 = arith.constant 0 : index
    %19 = vector.load %arg3[%c1, %c0_13] : memref<32x128xf32, #tpu.memory_space<vmem>>, vector<1x10xf32>
    %20 = vector.broadcast %19 : vector<1x10xf32> to vector<2x10xf32>
    %21 = arith.addf %18, %20 : vector<2x10xf32>
    %cst_14 = arith.constant 0.000000e+00 : f32
    %22 = vector.broadcast %cst_14 : f32 to vector<2x10xf32>
    %23 = arith.subf %22, %21 : vector<2x10xf32>
    %24 = math.exp %23 : vector<2x10xf32>
    %cst_15 = arith.constant 1.000000e+00 : f32
    %25 = vector.broadcast %cst_15 : f32 to vector<2x10xf32>
    %26 = arith.addf %25, %24 : vector<2x10xf32>
    %cst_16 = arith.constant 1.000000e+00 : f32
    %27 = vector.broadcast %cst_16 : f32 to vector<2x10xf32>
    %28 = arith.divf %27, %26 : vector<2x10xf32>
    %c64 = arith.constant 64 : index
    %c0_17 = arith.constant 0 : index
    %29 = vector.load %arg2[%c64, %c0_17] : memref<848x128xf32, #tpu.memory_space<vmem>>, vector<10x20xf32>
    %cst_18 = arith.constant dense<0.000000e+00> : vector<2x20xf32>
    %30 = tpu.matmul %28, %29, %cst_18 {dimension_numbers = #tpu.dot_dimension_numbers<[1], [0], [0], [1], [0, 0, 1, 1], [], []>} : vector<2x10xf32>, vector<10x20xf32>, vector<2x20xf32> -> vector<2x20xf32>
    %c2 = arith.constant 2 : index
    %c0_19 = arith.constant 0 : index
    %31 = vector.load %arg3[%c2, %c0_19] : memref<32x128xf32, #tpu.memory_space<vmem>>, vector<1x20xf32>
    %32 = vector.broadcast %31 : vector<1x20xf32> to vector<2x20xf32>
    %33 = arith.addf %30, %32 : vector<2x20xf32>
    %cst_20 = arith.constant 0.000000e+00 : f32
    %34 = vector.broadcast %cst_20 : f32 to vector<2x20xf32>
    %35 = arith.subf %34, %33 : vector<2x20xf32>
    %36 = math.exp %35 : vector<2x20xf32>
    %cst_21 = arith.constant 1.000000e+00 : f32
    %37 = vector.broadcast %cst_21 : f32 to vector<2x20xf32>
    %38 = arith.addf %37, %36 : vector<2x20xf32>
    %cst_22 = arith.constant 1.000000e+00 : f32
    %39 = vector.broadcast %cst_22 : f32 to vector<2x20xf32>
    %40 = arith.divf %39, %38 : vector<2x20xf32>
    %c80 = arith.constant 80 : index
    %c0_23 = arith.constant 0 : index
    %41 = vector.load %arg2[%c80, %c0_23] : memref<848x128xf32, #tpu.memory_space<vmem>>, vector<20x64xf32>
    %cst_24 = arith.constant dense<0.000000e+00> : vector<2x64xf32>
    %42 = tpu.matmul %40, %41, %cst_24 {dimension_numbers = #tpu.dot_dimension_numbers<[1], [0], [0], [1], [0, 0, 1, 1], [], []>} : vector<2x20xf32>, vector<20x64xf32>, vector<2x64xf32> -> vector<2x64xf32>
    %c3 = arith.constant 3 : index
    %c0_25 = arith.constant 0 : index
    %43 = vector.load %arg3[%c3, %c0_25] : memref<32x128xf32, #tpu.memory_space<vmem>>, vector<1x64xf32>
    %44 = vector.broadcast %43 : vector<1x64xf32> to vector<2x64xf32>
    %45 = arith.addf %42, %44 : vector<2x64xf32>
    %c104 = arith.constant 104 : index
    %c0_26 = arith.constant 0 : index
    %46 = vector.load %arg2[%c104, %c0_26] : memref<848x128xf32, #tpu.memory_space<vmem>>, vector<40x64xf32>
    %cst_27 = arith.constant dense<0.000000e+00> : vector<256x64xf32>
    %47 = tpu.matmul %0, %46, %cst_27 {dimension_numbers = #tpu.dot_dimension_numbers<[1], [0], [0], [1], [0, 0, 1, 1], [], []>} : vector<256x40xf32>, vector<40x64xf32>, vector<256x64xf32> -> vector<256x64xf32>
    %c0_28 = arith.constant 0 : index
    %c0_29 = arith.constant 0 : index
    %48 = vector.load %arg5[%c0_28, %c0_29] : memref<256x64xf32, #tpu.memory_space<vmem>>, vector<256x64xf32>
    tpu.vector_store %arg5[%c0_28, %c0_29], %47 {strides = array<i32>} : memref<256x64xf32, #tpu.memory_space<vmem>>, vector<256x64xf32>,
    %c4 = arith.constant 4 : index
    %c0_30 = arith.constant 0 : index
    %49 = vector.load %arg3[%c4, %c0_30] : memref<32x128xf32, #tpu.memory_space<vmem>>, vector<1x64xf32>
    %c5 = arith.constant 5 : index
    %c0_31 = arith.constant 0 : index
    %50 = vector.load %arg3[%c5, %c0_31] : memref<32x128xf32, #tpu.memory_space<vmem>>, vector<1x64xf32>
    %c0_32 = arith.constant 0 : index
    %c0_33 = arith.constant 0 : index
    %51 = vector.load %arg5[%c0_32, %c0_33] : memref<256x64xf32, #tpu.memory_space<vmem>>, vector<256x64xf32>
    %cst_34 = arith.constant dense<0.000000e+00> : vector<8x64xf32>
    %52 = tpu.matmul %1, %51, %cst_34 {dimension_numbers = #tpu.dot_dimension_numbers<[1], [0], [0], [1], [0, 0, 1, 1], [], []>} : vector<8x256xf32>, vector<256x64xf32>, vector<8x64xf32> -> vector<8x64xf32>
    %53 = vector.extract_strided_slice %52 {offsets = [4, 0], sizes = [1, 64], strides = [1, 1]} : vector<8x64xf32> to vector<1x64xf32>
    %54 = arith.mulf %51, %51 : vector<256x64xf32>
    %cst_35 = arith.constant dense<0.000000e+00> : vector<8x64xf32>
    %55 = tpu.matmul %1, %54, %cst_35 {dimension_numbers = #tpu.dot_dimension_numbers<[1], [0], [0], [1], [0, 0, 1, 1], [], []>} : vector<8x256xf32>, vector<256x64xf32>, vector<8x64xf32> -> vector<8x64xf32>
    %56 = vector.extract_strided_slice %55 {offsets = [4, 0], sizes = [1, 64], strides = [1, 1]} : vector<8x64xf32> to vector<1x64xf32>
    %57 = arith.mulf %53, %53 : vector<1x64xf32>
    %58 = arith.subf %56, %57 : vector<1x64xf32>
    %cst_36 = arith.constant 1.000000e-03 : f32
    %59 = vector.broadcast %cst_36 : f32 to vector<1x64xf32>
    %60 = arith.addf %58, %59 : vector<1x64xf32>
    %61 = math.rsqrt %60 : vector<1x64xf32>
    %62 = arith.mulf %61, %49 : vector<1x64xf32>
    %63 = arith.mulf %53, %62 : vector<1x64xf32>
    %64 = arith.subf %50, %63 : vector<1x64xf32>
    %65 = vector.broadcast %62 : vector<1x64xf32> to vector<256x64xf32>
    %66 = arith.mulf %51, %65 : vector<256x64xf32>
    %67 = vector.broadcast %64 : vector<1x64xf32> to vector<256x64xf32>
    %68 = arith.addf %66, %67 : vector<256x64xf32>
    %cst_37 = arith.constant 0.000000e+00 : f32
    %69 = vector.broadcast %cst_37 : f32 to vector<256x64xf32>
    %70 = arith.maximumf %68, %69 : vector<256x64xf32>
    %71 = vector.broadcast %2 : vector<256x1xf32> to vector<256x64xf32>
    %72 = arith.mulf %70, %71 : vector<256x64xf32>
    %c144 = arith.constant 144 : index
    %c0_38 = arith.constant 0 : index
    %73 = vector.load %arg2[%c144, %c0_38] : memref<848x128xf32, #tpu.memory_space<vmem>>, vector<64x128xf32>
    %cst_39 = arith.constant dense<0.000000e+00> : vector<256x128xf32>
    %74 = tpu.matmul %72, %73, %cst_39 {dimension_numbers = #tpu.dot_dimension_numbers<[1], [0], [0], [1], [0, 0, 1, 1], [], []>} : vector<256x64xf32>, vector<64x128xf32>, vector<256x128xf32> -> vector<256x128xf32>
    %c0_40 = arith.constant 0 : index
    %c0_41 = arith.constant 0 : index
    %75 = vector.load %arg6[%c0_40, %c0_41] : memref<256x128xf32, #tpu.memory_space<vmem>>, vector<256x128xf32>
    tpu.vector_store %arg6[%c0_40, %c0_41], %74 {strides = array<i32>} : memref<256x128xf32, #tpu.memory_space<vmem>>, vector<256x128xf32>,
    %c4_42 = arith.constant 4 : index
    %c0_43 = arith.constant 0 : index
    %76 = vector.load %arg6[%c4_42, %c0_43] : memref<256x128xf32, #tpu.memory_space<vmem>>, vector<224x128xf32>
    %c16 = arith.constant 16 : index
    %c0_44 = arith.constant 0 : index
    %77 = vector.load %arg3[%c16, %c0_44] : memref<32x128xf32, #tpu.memory_space<vmem>>, vector<1x128xf32>
    %78 = vector.broadcast %77 : vector<1x128xf32> to vector<224x128xf32>
    %79 = arith.mulf %76, %78 : vector<224x128xf32>
    %c5_45 = arith.constant 5 : index
    %c0_46 = arith.constant 0 : index
    %80 = vector.load %arg6[%c5_45, %c0_46] : memref<256x128xf32, #tpu.memory_space<vmem>>, vector<224x128xf32>
    %c17 = arith.constant 17 : index
    %c0_47 = arith.constant 0 : index
    %81 = vector.load %arg3[%c17, %c0_47] : memref<32x128xf32, #tpu.memory_space<vmem>>, vector<1x128xf32>
    %82 = vector.broadcast %81 : vector<1x128xf32> to vector<224x128xf32>
    %83 = arith.mulf %80, %82 : vector<224x128xf32>
    %84 = arith.addf %79, %83 : vector<224x128xf32>
    %c6 = arith.constant 6 : index
    %c0_48 = arith.constant 0 : index
    %85 = vector.load %arg6[%c6, %c0_48] : memref<256x128xf32, #tpu.memory_space<vmem>>, vector<224x128xf32>
    %c18 = arith.constant 18 : index
    %c0_49 = arith.constant 0 : index
    %86 = vector.load %arg3[%c18, %c0_49] : memref<32x128xf32, #tpu.memory_space<vmem>>, vector<1x128xf32>
    %87 = vector.broadcast %86 : vector<1x128xf32> to vector<224x128xf32>
    %88 = arith.mulf %85, %87 : vector<224x128xf32>
    %89 = arith.addf %84, %88 : vector<224x128xf32>
    %c0_50 = arith.constant 0 : index
    %c0_51 = arith.constant 0 : index
    %90 = vector.load %arg7[%c0_50, %c0_51] : memref<224x128xf32, #tpu.memory_space<vmem>>, vector<224x128xf32>
    tpu.vector_store %arg7[%c0_50, %c0_51], %89 {strides = array<i32>} : memref<224x128xf32, #tpu.memory_space<vmem>>, vector<224x128xf32>,
    %c15 = arith.constant 15 : index
    %c0_52 = arith.constant 0 : index
    %91 = vector.load %arg6[%c15, %c0_52] : memref<256x128xf32, #tpu.memory_space<vmem>>, vector<224x128xf32>
    %c19 = arith.constant 19 : index
    %c0_53 = arith.constant 0 : index
    %92 = vector.load %arg3[%c19, %c0_53] : memref<32x128xf32, #tpu.memory_space<vmem>>, vector<1x128xf32>
    %93 = vector.broadcast %92 : vector<1x128xf32> to vector<224x128xf32>
    %94 = arith.mulf %91, %93 : vector<224x128xf32>
    %c16_54 = arith.constant 16 : index
    %c0_55 = arith.constant 0 : index
    %95 = vector.load %arg6[%c16_54, %c0_55] : memref<256x128xf32, #tpu.memory_space<vmem>>, vector<224x128xf32>
    %c20 = arith.constant 20 : index
    %c0_56 = arith.constant 0 : index
    %96 = vector.load %arg3[%c20, %c0_56] : memref<32x128xf32, #tpu.memory_space<vmem>>, vector<1x128xf32>
    %97 = vector.broadcast %96 : vector<1x128xf32> to vector<224x128xf32>
    %98 = arith.mulf %95, %97 : vector<224x128xf32>
    %99 = arith.addf %94, %98 : vector<224x128xf32>
    %c17_57 = arith.constant 17 : index
    %c0_58 = arith.constant 0 : index
    %100 = vector.load %arg6[%c17_57, %c0_58] : memref<256x128xf32, #tpu.memory_space<vmem>>, vector<224x128xf32>
    %c21 = arith.constant 21 : index
    %c0_59 = arith.constant 0 : index
    %101 = vector.load %arg3[%c21, %c0_59] : memref<32x128xf32, #tpu.memory_space<vmem>>, vector<1x128xf32>
    %102 = vector.broadcast %101 : vector<1x128xf32> to vector<224x128xf32>
    %103 = arith.mulf %100, %102 : vector<224x128xf32>
    %104 = arith.addf %99, %103 : vector<224x128xf32>
    %c0_60 = arith.constant 0 : index
    %c0_61 = arith.constant 0 : index
    %105 = vector.load %arg7[%c0_60, %c0_61] : memref<224x128xf32, #tpu.memory_space<vmem>>, vector<224x128xf32>
    %106 = arith.addf %105, %104 : vector<224x128xf32>
    %c0_62 = arith.constant 0 : index
    %c0_63 = arith.constant 0 : index
    %107 = vector.load %arg7[%c0_62, %c0_63] : memref<224x128xf32, #tpu.memory_space<vmem>>, vector<224x128xf32>
    tpu.vector_store %arg7[%c0_62, %c0_63], %106 {strides = array<i32>} : memref<224x128xf32, #tpu.memory_space<vmem>>, vector<224x128xf32>,
    %c26 = arith.constant 26 : index
    %c0_64 = arith.constant 0 : index
    %108 = vector.load %arg6[%c26, %c0_64] : memref<256x128xf32, #tpu.memory_space<vmem>>, vector<224x128xf32>
    %c22 = arith.constant 22 : index
    %c0_65 = arith.constant 0 : index
    %109 = vector.load %arg3[%c22, %c0_65] : memref<32x128xf32, #tpu.memory_space<vmem>>, vector<1x128xf32>
    %110 = vector.broadcast %109 : vector<1x128xf32> to vector<224x128xf32>
    %111 = arith.mulf %108, %110 : vector<224x128xf32>
    %c27 = arith.constant 27 : index
    %c0_66 = arith.constant 0 : index
    %112 = vector.load %arg6[%c27, %c0_66] : memref<256x128xf32, #tpu.memory_space<vmem>>, vector<224x128xf32>
    %c23 = arith.constant 23 : index
    %c0_67 = arith.constant 0 : index
    %113 = vector.load %arg3[%c23, %c0_67] : memref<32x128xf32, #tpu.memory_space<vmem>>, vector<1x128xf32>
    %114 = vector.broadcast %113 : vector<1x128xf32> to vector<224x128xf32>
    %115 = arith.mulf %112, %114 : vector<224x128xf32>
    %116 = arith.addf %111, %115 : vector<224x128xf32>
    %c28 = arith.constant 28 : index
    %c0_68 = arith.constant 0 : index
    %117 = vector.load %arg6[%c28, %c0_68] : memref<256x128xf32, #tpu.memory_space<vmem>>, vector<224x128xf32>
    %c24 = arith.constant 24 : index
    %c0_69 = arith.constant 0 : index
    %118 = vector.load %arg3[%c24, %c0_69] : memref<32x128xf32, #tpu.memory_space<vmem>>, vector<1x128xf32>
    %119 = vector.broadcast %118 : vector<1x128xf32> to vector<224x128xf32>
    %120 = arith.mulf %117, %119 : vector<224x128xf32>
    %121 = arith.addf %116, %120 : vector<224x128xf32>
    %c0_70 = arith.constant 0 : index
    %c0_71 = arith.constant 0 : index
    %122 = vector.load %arg7[%c0_70, %c0_71] : memref<224x128xf32, #tpu.memory_space<vmem>>, vector<224x128xf32>
    %123 = arith.addf %122, %121 : vector<224x128xf32>
    %c0_72 = arith.constant 0 : index
    %c0_73 = arith.constant 0 : index
    %124 = vector.load %arg7[%c0_72, %c0_73] : memref<224x128xf32, #tpu.memory_space<vmem>>, vector<224x128xf32>
    tpu.vector_store %arg7[%c0_72, %c0_73], %123 {strides = array<i32>} : memref<224x128xf32, #tpu.memory_space<vmem>>, vector<224x128xf32>,
    %c0_74 = arith.constant 0 : index
    %c0_75 = arith.constant 0 : index
    %125 = vector.load %arg7[%c0_74, %c0_75] : memref<224x128xf32, #tpu.memory_space<vmem>>, vector<224x128xf32>
    %c464 = arith.constant 464 : index
    %c0_76 = arith.constant 0 : index
    %126 = vector.load %arg2[%c464, %c0_76] : memref<848x128xf32, #tpu.memory_space<vmem>>, vector<128x64xf32>
    %cst_77 = arith.constant dense<0.000000e+00> : vector<224x64xf32>
    %127 = tpu.matmul %125, %126, %cst_77 {dimension_numbers = #tpu.dot_dimension_numbers<[1], [0], [0], [1], [0, 0, 1, 1], [], []>} : vector<224x128xf32>, vector<128x64xf32>, vector<224x64xf32> -> vector<224x64xf32>
    %c16_78 = arith.constant 16 : index
    %c0_79 = arith.constant 0 : index
    %128 = vector.load %arg5[%c16_78, %c0_79] : memref<256x64xf32, #tpu.memory_space<vmem>>, vector<224x64xf32>
    %129 = arith.addf %128, %127 : vector<224x64xf32>
    %c16_80 = arith.constant 16 : index
    %c0_81 = arith.constant 0 : index
    %130 = vector.load %arg5[%c16_80, %c0_81] : memref<256x64xf32, #tpu.memory_space<vmem>>, vector<224x64xf32>
    tpu.vector_store %arg5[%c16_80, %c0_81], %129 {strides = array<i32>} : memref<256x64xf32, #tpu.memory_space<vmem>>, vector<224x64xf32>,
    %c6_82 = arith.constant 6 : index
    %c0_83 = arith.constant 0 : index
    %131 = vector.load %arg3[%c6_82, %c0_83] : memref<32x128xf32, #tpu.memory_space<vmem>>, vector<1x64xf32>
    %c7 = arith.constant 7 : index
    %c0_84 = arith.constant 0 : index
    %132 = vector.load %arg3[%c7, %c0_84] : memref<32x128xf32, #tpu.memory_space<vmem>>, vector<1x64xf32>
    %c0_85 = arith.constant 0 : index
    %c0_86 = arith.constant 0 : index
    %133 = vector.load %arg5[%c0_85, %c0_86] : memref<256x64xf32, #tpu.memory_space<vmem>>, vector<256x64xf32>
    %cst_87 = arith.constant dense<0.000000e+00> : vector<8x64xf32>
    %134 = tpu.matmul %1, %133, %cst_87 {dimension_numbers = #tpu.dot_dimension_numbers<[1], [0], [0], [1], [0, 0, 1, 1], [], []>} : vector<8x256xf32>, vector<256x64xf32>, vector<8x64xf32> -> vector<8x64xf32>
    %135 = vector.extract_strided_slice %134 {offsets = [4, 0], sizes = [1, 64], strides = [1, 1]} : vector<8x64xf32> to vector<1x64xf32>
    %136 = arith.mulf %133, %133 : vector<256x64xf32>
    %cst_88 = arith.constant dense<0.000000e+00> : vector<8x64xf32>
    %137 = tpu.matmul %1, %136, %cst_88 {dimension_numbers = #tpu.dot_dimension_numbers<[1], [0], [0], [1], [0, 0, 1, 1], [], []>} : vector<8x256xf32>, vector<256x64xf32>, vector<8x64xf32> -> vector<8x64xf32>
    %138 = vector.extract_strided_slice %137 {offsets = [4, 0], sizes = [1, 64], strides = [1, 1]} : vector<8x64xf32> to vector<1x64xf32>
    %139 = arith.mulf %135, %135 : vector<1x64xf32>
    %140 = arith.subf %138, %139 : vector<1x64xf32>
    %cst_89 = arith.constant 1.000000e-03 : f32
    %141 = vector.broadcast %cst_89 : f32 to vector<1x64xf32>
    %142 = arith.addf %140, %141 : vector<1x64xf32>
    %143 = math.rsqrt %142 : vector<1x64xf32>
    %144 = arith.mulf %143, %131 : vector<1x64xf32>
    %145 = arith.mulf %135, %144 : vector<1x64xf32>
    %146 = arith.subf %132, %145 : vector<1x64xf32>
    %147 = vector.broadcast %144 : vector<1x64xf32> to vector<256x64xf32>
    %148 = arith.mulf %133, %147 : vector<256x64xf32>
    %149 = vector.broadcast %146 : vector<1x64xf32> to vector<256x64xf32>
    %150 = arith.addf %148, %149 : vector<256x64xf32>
    %cst_90 = arith.constant 0.000000e+00 : f32
    %151 = vector.broadcast %cst_90 : f32 to vector<256x64xf32>
    %152 = arith.maximumf %150, %151 : vector<256x64xf32>
    %153 = vector.broadcast %2 : vector<256x1xf32> to vector<256x64xf32>
    %154 = arith.mulf %152, %153 : vector<256x64xf32>
    %c208 = arith.constant 208 : index
    %c0_91 = arith.constant 0 : index
    %155 = vector.load %arg2[%c208, %c0_91] : memref<848x128xf32, #tpu.memory_space<vmem>>, vector<64x128xf32>
    %cst_92 = arith.constant dense<0.000000e+00> : vector<256x128xf32>
    %156 = tpu.matmul %154, %155, %cst_92 {dimension_numbers = #tpu.dot_dimension_numbers<[1], [0], [0], [1], [0, 0, 1, 1], [], []>} : vector<256x64xf32>, vector<64x128xf32>, vector<256x128xf32> -> vector<256x128xf32>
    %c0_93 = arith.constant 0 : index
    %c0_94 = arith.constant 0 : index
    %157 = vector.load %arg6[%c0_93, %c0_94] : memref<256x128xf32, #tpu.memory_space<vmem>>, vector<256x128xf32>
    tpu.vector_store %arg6[%c0_93, %c0_94], %156 {strides = array<i32>} : memref<256x128xf32, #tpu.memory_space<vmem>>, vector<256x128xf32>,
    %c4_95 = arith.constant 4 : index
    %c0_96 = arith.constant 0 : index
    %158 = vector.load %arg6[%c4_95, %c0_96] : memref<256x128xf32, #tpu.memory_space<vmem>>, vector<224x128xf32>
    %c16_97 = arith.constant 16 : index
    %c0_98 = arith.constant 0 : index
    %159 = vector.load %arg3[%c16_97, %c0_98] : memref<32x128xf32, #tpu.memory_space<vmem>>, vector<1x128xf32>
    %160 = vector.broadcast %159 : vector<1x128xf32> to vector<224x128xf32>
    %161 = arith.mulf %158, %160 : vector<224x128xf32>
    %c5_99 = arith.constant 5 : index
    %c0_100 = arith.constant 0 : index
    %162 = vector.load %arg6[%c5_99, %c0_100] : memref<256x128xf32, #tpu.memory_space<vmem>>, vector<224x128xf32>
    %c17_101 = arith.constant 17 : index
    %c0_102 = arith.constant 0 : index
    %163 = vector.load %arg3[%c17_101, %c0_102] : memref<32x128xf32, #tpu.memory_space<vmem>>, vector<1x128xf32>
    %164 = vector.broadcast %163 : vector<1x128xf32> to vector<224x128xf32>
    %165 = arith.mulf %162, %164 : vector<224x128xf32>
    %166 = arith.addf %161, %165 : vector<224x128xf32>
    %c6_103 = arith.constant 6 : index
    %c0_104 = arith.constant 0 : index
    %167 = vector.load %arg6[%c6_103, %c0_104] : memref<256x128xf32, #tpu.memory_space<vmem>>, vector<224x128xf32>
    %c18_105 = arith.constant 18 : index
    %c0_106 = arith.constant 0 : index
    %168 = vector.load %arg3[%c18_105, %c0_106] : memref<32x128xf32, #tpu.memory_space<vmem>>, vector<1x128xf32>
    %169 = vector.broadcast %168 : vector<1x128xf32> to vector<224x128xf32>
    %170 = arith.mulf %167, %169 : vector<224x128xf32>
    %171 = arith.addf %166, %170 : vector<224x128xf32>
    %c0_107 = arith.constant 0 : index
    %c0_108 = arith.constant 0 : index
    %172 = vector.load %arg7[%c0_107, %c0_108] : memref<224x128xf32, #tpu.memory_space<vmem>>, vector<224x128xf32>
    tpu.vector_store %arg7[%c0_107, %c0_108], %171 {strides = array<i32>} : memref<224x128xf32, #tpu.memory_space<vmem>>, vector<224x128xf32>,
    %c15_109 = arith.constant 15 : index
    %c0_110 = arith.constant 0 : index
    %173 = vector.load %arg6[%c15_109, %c0_110] : memref<256x128xf32, #tpu.memory_space<vmem>>, vector<224x128xf32>
    %c19_111 = arith.constant 19 : index
    %c0_112 = arith.constant 0 : index
    %174 = vector.load %arg3[%c19_111, %c0_112] : memref<32x128xf32, #tpu.memory_space<vmem>>, vector<1x128xf32>
    %175 = vector.broadcast %174 : vector<1x128xf32> to vector<224x128xf32>
    %176 = arith.mulf %173, %175 : vector<224x128xf32>
    %c16_113 = arith.constant 16 : index
    %c0_114 = arith.constant 0 : index
    %177 = vector.load %arg6[%c16_113, %c0_114] : memref<256x128xf32, #tpu.memory_space<vmem>>, vector<224x128xf32>
    %c20_115 = arith.constant 20 : index
    %c0_116 = arith.constant 0 : index
    %178 = vector.load %arg3[%c20_115, %c0_116] : memref<32x128xf32, #tpu.memory_space<vmem>>, vector<1x128xf32>
    %179 = vector.broadcast %178 : vector<1x128xf32> to vector<224x128xf32>
    %180 = arith.mulf %177, %179 : vector<224x128xf32>
    %181 = arith.addf %176, %180 : vector<224x128xf32>
    %c17_117 = arith.constant 17 : index
    %c0_118 = arith.constant 0 : index
    %182 = vector.load %arg6[%c17_117, %c0_118] : memref<256x128xf32, #tpu.memory_space<vmem>>, vector<224x128xf32>
    %c21_119 = arith.constant 21 : index
    %c0_120 = arith.constant 0 : index
    %183 = vector.load %arg3[%c21_119, %c0_120] : memref<32x128xf32, #tpu.memory_space<vmem>>, vector<1x128xf32>
    %184 = vector.broadcast %183 : vector<1x128xf32> to vector<224x128xf32>
    %185 = arith.mulf %182, %184 : vector<224x128xf32>
    %186 = arith.addf %181, %185 : vector<224x128xf32>
    %c0_121 = arith.constant 0 : index
    %c0_122 = arith.constant 0 : index
    %187 = vector.load %arg7[%c0_121, %c0_122] : memref<224x128xf32, #tpu.memory_space<vmem>>, vector<224x128xf32>
    %188 = arith.addf %187, %186 : vector<224x128xf32>
    %c0_123 = arith.constant 0 : index
    %c0_124 = arith.constant 0 : index
    %189 = vector.load %arg7[%c0_123, %c0_124] : memref<224x128xf32, #tpu.memory_space<vmem>>, vector<224x128xf32>
    tpu.vector_store %arg7[%c0_123, %c0_124], %188 {strides = array<i32>} : memref<224x128xf32, #tpu.memory_space<vmem>>, vector<224x128xf32>,
    %c26_125 = arith.constant 26 : index
    %c0_126 = arith.constant 0 : index
    %190 = vector.load %arg6[%c26_125, %c0_126] : memref<256x128xf32, #tpu.memory_space<vmem>>, vector<224x128xf32>
    %c22_127 = arith.constant 22 : index
    %c0_128 = arith.constant 0 : index
    %191 = vector.load %arg3[%c22_127, %c0_128] : memref<32x128xf32, #tpu.memory_space<vmem>>, vector<1x128xf32>
    %192 = vector.broadcast %191 : vector<1x128xf32> to vector<224x128xf32>
    %193 = arith.mulf %190, %192 : vector<224x128xf32>
    %c27_129 = arith.constant 27 : index
    %c0_130 = arith.constant 0 : index
    %194 = vector.load %arg6[%c27_129, %c0_130] : memref<256x128xf32, #tpu.memory_space<vmem>>, vector<224x128xf32>
    %c23_131 = arith.constant 23 : index
    %c0_132 = arith.constant 0 : index
    %195 = vector.load %arg3[%c23_131, %c0_132] : memref<32x128xf32, #tpu.memory_space<vmem>>, vector<1x128xf32>
    %196 = vector.broadcast %195 : vector<1x128xf32> to vector<224x128xf32>
    %197 = arith.mulf %194, %196 : vector<224x128xf32>
    %198 = arith.addf %193, %197 : vector<224x128xf32>
    %c28_133 = arith.constant 28 : index
    %c0_134 = arith.constant 0 : index
    %199 = vector.load %arg6[%c28_133, %c0_134] : memref<256x128xf32, #tpu.memory_space<vmem>>, vector<224x128xf32>
    %c24_135 = arith.constant 24 : index
    %c0_136 = arith.constant 0 : index
    %200 = vector.load %arg3[%c24_135, %c0_136] : memref<32x128xf32, #tpu.memory_space<vmem>>, vector<1x128xf32>
    %201 = vector.broadcast %200 : vector<1x128xf32> to vector<224x128xf32>
    %202 = arith.mulf %199, %201 : vector<224x128xf32>
    %203 = arith.addf %198, %202 : vector<224x128xf32>
    %c0_137 = arith.constant 0 : index
    %c0_138 = arith.constant 0 : index
    %204 = vector.load %arg7[%c0_137, %c0_138] : memref<224x128xf32, #tpu.memory_space<vmem>>, vector<224x128xf32>
    %205 = arith.addf %204, %203 : vector<224x128xf32>
    %c0_139 = arith.constant 0 : index
    %c0_140 = arith.constant 0 : index
    %206 = vector.load %arg7[%c0_139, %c0_140] : memref<224x128xf32, #tpu.memory_space<vmem>>, vector<224x128xf32>
    tpu.vector_store %arg7[%c0_139, %c0_140], %205 {strides = array<i32>} : memref<224x128xf32, #tpu.memory_space<vmem>>, vector<224x128xf32>,
    %c0_141 = arith.constant 0 : index
    %c0_142 = arith.constant 0 : index
    %207 = vector.load %arg7[%c0_141, %c0_142] : memref<224x128xf32, #tpu.memory_space<vmem>>, vector<224x128xf32>
    %c592 = arith.constant 592 : index
    %c0_143 = arith.constant 0 : index
    %208 = vector.load %arg2[%c592, %c0_143] : memref<848x128xf32, #tpu.memory_space<vmem>>, vector<128x64xf32>
    %cst_144 = arith.constant dense<0.000000e+00> : vector<224x64xf32>
    %209 = tpu.matmul %207, %208, %cst_144 {dimension_numbers = #tpu.dot_dimension_numbers<[1], [0], [0], [1], [0, 0, 1, 1], [], []>} : vector<224x128xf32>, vector<128x64xf32>, vector<224x64xf32> -> vector<224x64xf32>
    %c16_145 = arith.constant 16 : index
    %c0_146 = arith.constant 0 : index
    %210 = vector.load %arg5[%c16_145, %c0_146] : memref<256x64xf32, #tpu.memory_space<vmem>>, vector<224x64xf32>
    %211 = arith.addf %210, %209 : vector<224x64xf32>
    %c16_147 = arith.constant 16 : index
    %c0_148 = arith.constant 0 : index
    %212 = vector.load %arg5[%c16_147, %c0_148] : memref<256x64xf32, #tpu.memory_space<vmem>>, vector<224x64xf32>
    tpu.vector_store %arg5[%c16_147, %c0_148], %211 {strides = array<i32>} : memref<256x64xf32, #tpu.memory_space<vmem>>, vector<224x64xf32>,
    %c8 = arith.constant 8 : index
    %c0_149 = arith.constant 0 : index
    %213 = vector.load %arg3[%c8, %c0_149] : memref<32x128xf32, #tpu.memory_space<vmem>>, vector<1x64xf32>
    %c9 = arith.constant 9 : index
    %c0_150 = arith.constant 0 : index
    %214 = vector.load %arg3[%c9, %c0_150] : memref<32x128xf32, #tpu.memory_space<vmem>>, vector<1x64xf32>
    %c0_151 = arith.constant 0 : index
    %c0_152 = arith.constant 0 : index
    %215 = vector.load %arg5[%c0_151, %c0_152] : memref<256x64xf32, #tpu.memory_space<vmem>>, vector<256x64xf32>
    %cst_153 = arith.constant dense<0.000000e+00> : vector<8x64xf32>
    %216 = tpu.matmul %1, %215, %cst_153 {dimension_numbers = #tpu.dot_dimension_numbers<[1], [0], [0], [1], [0, 0, 1, 1], [], []>} : vector<8x256xf32>, vector<256x64xf32>, vector<8x64xf32> -> vector<8x64xf32>
    %217 = vector.extract_strided_slice %216 {offsets = [4, 0], sizes = [1, 64], strides = [1, 1]} : vector<8x64xf32> to vector<1x64xf32>
    %218 = arith.mulf %215, %215 : vector<256x64xf32>
    %cst_154 = arith.constant dense<0.000000e+00> : vector<8x64xf32>
    %219 = tpu.matmul %1, %218, %cst_154 {dimension_numbers = #tpu.dot_dimension_numbers<[1], [0], [0], [1], [0, 0, 1, 1], [], []>} : vector<8x256xf32>, vector<256x64xf32>, vector<8x64xf32> -> vector<8x64xf32>
    %220 = vector.extract_strided_slice %219 {offsets = [4, 0], sizes = [1, 64], strides = [1, 1]} : vector<8x64xf32> to vector<1x64xf32>
    %221 = arith.mulf %217, %217 : vector<1x64xf32>
    %222 = arith.subf %220, %221 : vector<1x64xf32>
    %cst_155 = arith.constant 1.000000e-03 : f32
    %223 = vector.broadcast %cst_155 : f32 to vector<1x64xf32>
    %224 = arith.addf %222, %223 : vector<1x64xf32>
    %225 = math.rsqrt %224 : vector<1x64xf32>
    %226 = arith.mulf %225, %213 : vector<1x64xf32>
    %227 = arith.mulf %217, %226 : vector<1x64xf32>
    %228 = arith.subf %214, %227 : vector<1x64xf32>
    %229 = vector.broadcast %226 : vector<1x64xf32> to vector<256x64xf32>
    %230 = arith.mulf %215, %229 : vector<256x64xf32>
    %231 = vector.broadcast %228 : vector<1x64xf32> to vector<256x64xf32>
    %232 = arith.addf %230, %231 : vector<256x64xf32>
    %cst_156 = arith.constant 0.000000e+00 : f32
    %233 = vector.broadcast %cst_156 : f32 to vector<256x64xf32>
    %234 = arith.maximumf %232, %233 : vector<256x64xf32>
    %235 = vector.broadcast %2 : vector<256x1xf32> to vector<256x64xf32>
    %236 = arith.mulf %234, %235 : vector<256x64xf32>
    %c272 = arith.constant 272 : index
    %c0_157 = arith.constant 0 : index
    %237 = vector.load %arg2[%c272, %c0_157] : memref<848x128xf32, #tpu.memory_space<vmem>>, vector<64x128xf32>
    %cst_158 = arith.constant dense<0.000000e+00> : vector<256x128xf32>
    %238 = tpu.matmul %236, %237, %cst_158 {dimension_numbers = #tpu.dot_dimension_numbers<[1], [0], [0], [1], [0, 0, 1, 1], [], []>} : vector<256x64xf32>, vector<64x128xf32>, vector<256x128xf32> -> vector<256x128xf32>
    %c0_159 = arith.constant 0 : index
    %c0_160 = arith.constant 0 : index
    %239 = vector.load %arg6[%c0_159, %c0_160] : memref<256x128xf32, #tpu.memory_space<vmem>>, vector<256x128xf32>
    tpu.vector_store %arg6[%c0_159, %c0_160], %238 {strides = array<i32>} : memref<256x128xf32, #tpu.memory_space<vmem>>, vector<256x128xf32>,
    %c4_161 = arith.constant 4 : index
    %c0_162 = arith.constant 0 : index
    %240 = vector.load %arg6[%c4_161, %c0_162] : memref<256x128xf32, #tpu.memory_space<vmem>>, vector<224x128xf32>
    %c16_163 = arith.constant 16 : index
    %c0_164 = arith.constant 0 : index
    %241 = vector.load %arg3[%c16_163, %c0_164] : memref<32x128xf32, #tpu.memory_space<vmem>>, vector<1x128xf32>
    %242 = vector.broadcast %241 : vector<1x128xf32> to vector<224x128xf32>
    %243 = arith.mulf %240, %242 : vector<224x128xf32>
    %c5_165 = arith.constant 5 : index
    %c0_166 = arith.constant 0 : index
    %244 = vector.load %arg6[%c5_165, %c0_166] : memref<256x128xf32, #tpu.memory_space<vmem>>, vector<224x128xf32>
    %c17_167 = arith.constant 17 : index
    %c0_168 = arith.constant 0 : index
    %245 = vector.load %arg3[%c17_167, %c0_168] : memref<32x128xf32, #tpu.memory_space<vmem>>, vector<1x128xf32>
    %246 = vector.broadcast %245 : vector<1x128xf32> to vector<224x128xf32>
    %247 = arith.mulf %244, %246 : vector<224x128xf32>
    %248 = arith.addf %243, %247 : vector<224x128xf32>
    %c6_169 = arith.constant 6 : index
    %c0_170 = arith.constant 0 : index
    %249 = vector.load %arg6[%c6_169, %c0_170] : memref<256x128xf32, #tpu.memory_space<vmem>>, vector<224x128xf32>
    %c18_171 = arith.constant 18 : index
    %c0_172 = arith.constant 0 : index
    %250 = vector.load %arg3[%c18_171, %c0_172] : memref<32x128xf32, #tpu.memory_space<vmem>>, vector<1x128xf32>
    %251 = vector.broadcast %250 : vector<1x128xf32> to vector<224x128xf32>
    %252 = arith.mulf %249, %251 : vector<224x128xf32>
    %253 = arith.addf %248, %252 : vector<224x128xf32>
    %c0_173 = arith.constant 0 : index
    %c0_174 = arith.constant 0 : index
    %254 = vector.load %arg7[%c0_173, %c0_174] : memref<224x128xf32, #tpu.memory_space<vmem>>, vector<224x128xf32>
    tpu.vector_store %arg7[%c0_173, %c0_174], %253 {strides = array<i32>} : memref<224x128xf32, #tpu.memory_space<vmem>>, vector<224x128xf32>,
    %c15_175 = arith.constant 15 : index
    %c0_176 = arith.constant 0 : index
    %255 = vector.load %arg6[%c15_175, %c0_176] : memref<256x128xf32, #tpu.memory_space<vmem>>, vector<224x128xf32>
    %c19_177 = arith.constant 19 : index
    %c0_178 = arith.constant 0 : index
    %256 = vector.load %arg3[%c19_177, %c0_178] : memref<32x128xf32, #tpu.memory_space<vmem>>, vector<1x128xf32>
    %257 = vector.broadcast %256 : vector<1x128xf32> to vector<224x128xf32>
    %258 = arith.mulf %255, %257 : vector<224x128xf32>
    %c16_179 = arith.constant 16 : index
    %c0_180 = arith.constant 0 : index
    %259 = vector.load %arg6[%c16_179, %c0_180] : memref<256x128xf32, #tpu.memory_space<vmem>>, vector<224x128xf32>
    %c20_181 = arith.constant 20 : index
    %c0_182 = arith.constant 0 : index
    %260 = vector.load %arg3[%c20_181, %c0_182] : memref<32x128xf32, #tpu.memory_space<vmem>>, vector<1x128xf32>
    %261 = vector.broadcast %260 : vector<1x128xf32> to vector<224x128xf32>
    %262 = arith.mulf %259, %261 : vector<224x128xf32>
    %263 = arith.addf %258, %262 : vector<224x128xf32>
    %c17_183 = arith.constant 17 : index
    %c0_184 = arith.constant 0 : index
    %264 = vector.load %arg6[%c17_183, %c0_184] : memref<256x128xf32, #tpu.memory_space<vmem>>, vector<224x128xf32>
    %c21_185 = arith.constant 21 : index
    %c0_186 = arith.constant 0 : index
    %265 = vector.load %arg3[%c21_185, %c0_186] : memref<32x128xf32, #tpu.memory_space<vmem>>, vector<1x128xf32>
    %266 = vector.broadcast %265 : vector<1x128xf32> to vector<224x128xf32>
    %267 = arith.mulf %264, %266 : vector<224x128xf32>
    %268 = arith.addf %263, %267 : vector<224x128xf32>
    %c0_187 = arith.constant 0 : index
    %c0_188 = arith.constant 0 : index
    %269 = vector.load %arg7[%c0_187, %c0_188] : memref<224x128xf32, #tpu.memory_space<vmem>>, vector<224x128xf32>
    %270 = arith.addf %269, %268 : vector<224x128xf32>
    %c0_189 = arith.constant 0 : index
    %c0_190 = arith.constant 0 : index
    %271 = vector.load %arg7[%c0_189, %c0_190] : memref<224x128xf32, #tpu.memory_space<vmem>>, vector<224x128xf32>
    tpu.vector_store %arg7[%c0_189, %c0_190], %270 {strides = array<i32>} : memref<224x128xf32, #tpu.memory_space<vmem>>, vector<224x128xf32>,
    %c26_191 = arith.constant 26 : index
    %c0_192 = arith.constant 0 : index
    %272 = vector.load %arg6[%c26_191, %c0_192] : memref<256x128xf32, #tpu.memory_space<vmem>>, vector<224x128xf32>
    %c22_193 = arith.constant 22 : index
    %c0_194 = arith.constant 0 : index
    %273 = vector.load %arg3[%c22_193, %c0_194] : memref<32x128xf32, #tpu.memory_space<vmem>>, vector<1x128xf32>
    %274 = vector.broadcast %273 : vector<1x128xf32> to vector<224x128xf32>
    %275 = arith.mulf %272, %274 : vector<224x128xf32>
    %c27_195 = arith.constant 27 : index
    %c0_196 = arith.constant 0 : index
    %276 = vector.load %arg6[%c27_195, %c0_196] : memref<256x128xf32, #tpu.memory_space<vmem>>, vector<224x128xf32>
    %c23_197 = arith.constant 23 : index
    %c0_198 = arith.constant 0 : index
    %277 = vector.load %arg3[%c23_197, %c0_198] : memref<32x128xf32, #tpu.memory_space<vmem>>, vector<1x128xf32>
    %278 = vector.broadcast %277 : vector<1x128xf32> to vector<224x128xf32>
    %279 = arith.mulf %276, %278 : vector<224x128xf32>
    %280 = arith.addf %275, %279 : vector<224x128xf32>
    %c28_199 = arith.constant 28 : index
    %c0_200 = arith.constant 0 : index
    %281 = vector.load %arg6[%c28_199, %c0_200] : memref<256x128xf32, #tpu.memory_space<vmem>>, vector<224x128xf32>
    %c24_201 = arith.constant 24 : index
    %c0_202 = arith.constant 0 : index
    %282 = vector.load %arg3[%c24_201, %c0_202] : memref<32x128xf32, #tpu.memory_space<vmem>>, vector<1x128xf32>
    %283 = vector.broadcast %282 : vector<1x128xf32> to vector<224x128xf32>
    %284 = arith.mulf %281, %283 : vector<224x128xf32>
    %285 = arith.addf %280, %284 : vector<224x128xf32>
    %c0_203 = arith.constant 0 : index
    %c0_204 = arith.constant 0 : index
    %286 = vector.load %arg7[%c0_203, %c0_204] : memref<224x128xf32, #tpu.memory_space<vmem>>, vector<224x128xf32>
    %287 = arith.addf %286, %285 : vector<224x128xf32>
    %c0_205 = arith.constant 0 : index
    %c0_206 = arith.constant 0 : index
    %288 = vector.load %arg7[%c0_205, %c0_206] : memref<224x128xf32, #tpu.memory_space<vmem>>, vector<224x128xf32>
    tpu.vector_store %arg7[%c0_205, %c0_206], %287 {strides = array<i32>} : memref<224x128xf32, #tpu.memory_space<vmem>>, vector<224x128xf32>,
    %c0_207 = arith.constant 0 : index
    %c0_208 = arith.constant 0 : index
    %289 = vector.load %arg7[%c0_207, %c0_208] : memref<224x128xf32, #tpu.memory_space<vmem>>, vector<224x128xf32>
    %c720 = arith.constant 720 : index
    %c0_209 = arith.constant 0 : index
    %290 = vector.load %arg2[%c720, %c0_209] : memref<848x128xf32, #tpu.memory_space<vmem>>, vector<128x64xf32>
    %cst_210 = arith.constant dense<0.000000e+00> : vector<224x64xf32>
    %291 = tpu.matmul %289, %290, %cst_210 {dimension_numbers = #tpu.dot_dimension_numbers<[1], [0], [0], [1], [0, 0, 1, 1], [], []>} : vector<224x128xf32>, vector<128x64xf32>, vector<224x64xf32> -> vector<224x64xf32>
    %c16_211 = arith.constant 16 : index
    %c0_212 = arith.constant 0 : index
    %292 = vector.load %arg5[%c16_211, %c0_212] : memref<256x64xf32, #tpu.memory_space<vmem>>, vector<224x64xf32>
    %293 = arith.addf %292, %291 : vector<224x64xf32>
    %c16_213 = arith.constant 16 : index
    %c0_214 = arith.constant 0 : index
    %294 = vector.load %arg5[%c16_213, %c0_214] : memref<256x64xf32, #tpu.memory_space<vmem>>, vector<224x64xf32>
    tpu.vector_store %arg5[%c16_213, %c0_214], %293 {strides = array<i32>} : memref<256x64xf32, #tpu.memory_space<vmem>>, vector<224x64xf32>,
    %c0_215 = arith.constant 0 : index
    %c0_216 = arith.constant 0 : index
    %295 = vector.load %arg5[%c0_215, %c0_216] : memref<256x64xf32, #tpu.memory_space<vmem>>, vector<256x64xf32>
    %cst_217 = arith.constant dense<0.000000e+00> : vector<8x64xf32>
    %296 = tpu.matmul %1, %295, %cst_217 {dimension_numbers = #tpu.dot_dimension_numbers<[1], [0], [0], [1], [0, 0, 1, 1], [], []>} : vector<8x256xf32>, vector<256x64xf32>, vector<8x64xf32> -> vector<8x64xf32>
    %297 = vector.extract_strided_slice %296 {offsets = [0, 0], sizes = [2, 64], strides = [1, 1]} : vector<8x64xf32> to vector<2x64xf32>
    %c10 = arith.constant 10 : index
    %c0_218 = arith.constant 0 : index
    %298 = vector.load %arg3[%c10, %c0_218] : memref<32x128xf32, #tpu.memory_space<vmem>>, vector<1x64xf32>
    %299 = vector.broadcast %298 : vector<1x64xf32> to vector<2x64xf32>
    %300 = arith.addf %297, %299 : vector<2x64xf32>
    %c336 = arith.constant 336 : index
    %c0_219 = arith.constant 0 : index
    %301 = vector.load %arg2[%c336, %c0_219] : memref<848x128xf32, #tpu.memory_space<vmem>>, vector<64x3xf32>
    %cst_220 = arith.constant dense<0.000000e+00> : vector<2x3xf32>
    %302 = tpu.matmul %45, %301, %cst_220 {dimension_numbers = #tpu.dot_dimension_numbers<[1], [0], [0], [1], [0, 0, 1, 1], [], []>} : vector<2x64xf32>, vector<64x3xf32>, vector<2x3xf32> -> vector<2x3xf32>
    %c400 = arith.constant 400 : index
    %c0_221 = arith.constant 0 : index
    %303 = vector.load %arg2[%c400, %c0_221] : memref<848x128xf32, #tpu.memory_space<vmem>>, vector<64x3xf32>
    %cst_222 = arith.constant dense<0.000000e+00> : vector<2x3xf32>
    %304 = tpu.matmul %300, %303, %cst_222 {dimension_numbers = #tpu.dot_dimension_numbers<[1], [0], [0], [1], [0, 0, 1, 1], [], []>} : vector<2x64xf32>, vector<64x3xf32>, vector<2x3xf32> -> vector<2x3xf32>
    %305 = arith.addf %302, %304 : vector<2x3xf32>
    %c11 = arith.constant 11 : index
    %c0_223 = arith.constant 0 : index
    %306 = vector.load %arg3[%c11, %c0_223] : memref<32x128xf32, #tpu.memory_space<vmem>>, vector<1x3xf32>
    %307 = vector.broadcast %306 : vector<1x3xf32> to vector<2x3xf32>
    %308 = arith.addf %305, %307 : vector<2x3xf32>
    %c0_224 = arith.constant 0 : index
    %c0_225 = arith.constant 0 : index
    %309 = vector.load %arg4[%c0_224, %c0_225] : memref<2x3xf32, #tpu.memory_space<vmem>>, vector<2x3xf32>
    tpu.vector_store %arg4[%c0_224, %c0_225], %308 {strides = array<i32>} : memref<2x3xf32, #tpu.memory_space<vmem>>, vector<2x3xf32>,
    return
  }
}

</mosaic_0001>

<llo_original>
// kernel: sae_3dcnn_forward.1
$region0: #{sae_3dcnn_forward.1}
  #allocation0 [shape = 'u32[]', space=smem, size = 0x4, offset = 0x4, fixed_abs, tag = 'smem constant byte address 0x4 - core index']
  #allocation1 [shape = 'u32[144,128]{1,0:T(1,128)}', space=vmem, size = 0x12000, scoped, tag = 'internal scratch']
  #allocation2 [shape = 'f32[256,64]{1,0:T(8,128)}', space=vmem, size = 0x20000, scoped, tag = 'scratch operand']
  #allocation3 [shape = 'f32[256,128]{1,0:T(8,128)}', space=vmem, size = 0x20000, scoped, tag = 'scratch operand']
  #allocation4 [shape = 'f32[224,128]{1,0:T(8,128)}', space=vmem, size = 0x1c000, scoped, tag = 'scratch operand']
  %s0 = inlined_call_operand.vmem [shape: f32[256,40], index: 0, kind: input, shape index: {}]
  %s1 = inlined_call_operand.vmem [shape: f32[8,256], index: 1, kind: input, shape index: {}]
  %s2 = inlined_call_operand.vmem [shape: f32[848,128], index: 2, kind: input, shape index: {}]
  %s3 = inlined_call_operand.vmem [shape: f32[32,128], index: 3, kind: input, shape index: {}]
  %s4 = inlined_call_operand.hbm [shape: f32[2,3], index: 4, kind: output, shape index: {}]
  %s5 = sld [smem:[#allocation0]]
  $region26: #{sae_3dcnn_forward.1} parent=0
    _
  %s7 = ssub.s32 1, %s5
  %s8 = scalar_select 0, %s7, %s5
  $region1: #{sae_3dcnn_forward.1} parent=0
    #allocation5 [shape = 'u8[1024]{0}', space=vmem, size = 0x400, scoped, tag = 'output window, operand 0, single buffered']
    #allocation6 [shape = 's32[1]{0}', space=sflag, size = 0x4, scoped, tag = 'scoped memory for sae_3dcnn_forward.1']
    %9 = vsyncpa [#allocation6], 0
    // Predicated region
    $region2: #{sae_3dcnn_forward.1} parent=1 // pred_check
      _
    $region3: #{sae_3dcnn_forward.1} parent=1 // pred_check_branch
      %11 = sbr.rel (0) target = $region5
    $region4: #{sae_3dcnn_forward.1} parent=1 // pred_region
      _
    $region5: #{sae_3dcnn_forward.1} parent=1 // pred_fallthru
      _
    // Predicated region
    $region6: #{sae_3dcnn_forward.1} parent=1 // pred_check
      _
    $region7: #{sae_3dcnn_forward.1} parent=1 // pred_check_branch
      %13 = sbr.rel (0) target = $region9
    $region8: #{sae_3dcnn_forward.1} parent=1 // pred_region
      _
    $region9: #{sae_3dcnn_forward.1} parent=1 // pred_fallthru
      _
    // Predicated region
    $region10: #{sae_3dcnn_forward.1} parent=1 // pred_check
      _
    $region11: #{sae_3dcnn_forward.1} parent=1 // pred_check_branch
      %15 = sbr.rel (0) target = $region13
    $region12: #{sae_3dcnn_forward.1} parent=1 // pred_region
      _
    $region13: #{sae_3dcnn_forward.1} parent=1 // pred_fallthru
      _
    // Predicated region
    $region14: #{sae_3dcnn_forward.1} parent=1 // pred_check
      _
    $region15: #{sae_3dcnn_forward.1} parent=1 // pred_check_branch
      %17 = sbr.rel (0) target = $region17
    $region16: #{sae_3dcnn_forward.1} parent=1 // pred_region
      _
    $region17: #{sae_3dcnn_forward.1} parent=1 // pred_fallthru
      _
    %v18 = vld [vmem:[%s0] sm:$0xff]
    %v19 = vld [vmem:[%s0 + $0x8] sm:$0xff]
    %v20 = vld [vmem:[%s0 + $0x10] sm:$0xff]
    %v21 = vld [vmem:[%s0 + $0x18] sm:$0xff]
    %v22 = vld [vmem:[%s0 + $0x20] sm:$0xff]
    %v23 = vld [vmem:[%s0 + $0x28] sm:$0xff]
    %v24 = vld [vmem:[%s0 + $0x30] sm:$0xff]
    %v25 = vld [vmem:[%s0 + $0x38] sm:$0xff]
    %v26 = vld [vmem:[%s0 + $0x40] sm:$0xff]
    %v27 = vld [vmem:[%s0 + $0x48] sm:$0xff]
    %v28 = vld [vmem:[%s0 + $0x50] sm:$0xff]
    %v29 = vld [vmem:[%s0 + $0x58] sm:$0xff]
    %v30 = vld [vmem:[%s0 + $0x60] sm:$0xff]
    %v31 = vld [vmem:[%s0 + $0x68] sm:$0xff]
    %v32 = vld [vmem:[%s0 + $0x70] sm:$0xff]
    %v33 = vld [vmem:[%s0 + $0x78] sm:$0xff]
    %v34 = vld [vmem:[%s0 + $0x80] sm:$0xff]
    %v35 = vld [vmem:[%s0 + $0x88] sm:$0xff]
    %v36 = vld [vmem:[%s0 + $0x90] sm:$0xff]
    %v37 = vld [vmem:[%s0 + $0x98] sm:$0xff]
    %v38 = vld [vmem:[%s0 + $0xa0] sm:$0xff]
    %v39 = vld [vmem:[%s0 + $0xa8] sm:$0xff]
    %v40 = vld [vmem:[%s0 + $0xb0] sm:$0xff]
    %v41 = vld [vmem:[%s0 + $0xb8] sm:$0xff]
    %v42 = vld [vmem:[%s0 + $0xc0] sm:$0xff]
    %v43 = vld [vmem:[%s0 + $0xc8] sm:$0xff]
    %v44 = vld [vmem:[%s0 + $0xd0] sm:$0xff]
    %v45 = vld [vmem:[%s0 + $0xd8] sm:$0xff]
    %v46 = vld [vmem:[%s0 + $0xe0] sm:$0xff]
    %v47 = vld [vmem:[%s0 + $0xe8] sm:$0xff]
    %v48 = vld [vmem:[%s0 + $0xf0] sm:$0xff]
    %v49 = vld [vmem:[%s0 + $0xf8] sm:$0xff]
    %v50 = vld [vmem:[%s1] sm:$0xff]
    %v51 = vld [vmem:[%s1 + $0x8] sm:$0xff]
    %52 = vmatprep.subr.mxu0 0.0
    %53 = vmatpush1.msra.mxu0 %v18
    %54 = vmatprep.subr.mxu0 0.0
    %55 = vmatpush1.msra.mxu0 %v19
    %56 = vmatprep.subr.mxu0 0.0
    %57 = vmatpush1.msra.mxu0 %v20
    %58 = vmatprep.subr.mxu0 0.0
    %59 = vmatpush1.msra.mxu0 %v21
    %60 = vmatprep.subr.mxu0 0.0
    %61 = vmatpush1.msra.mxu0 %v22
    %62 = vmatprep.subr.mxu0 0.0
    %63 = vmatpush1.msra.mxu0 %v23
    %64 = vmatprep.subr.mxu0 0.0
    %65 = vmatpush1.msra.mxu0 %v24
    %66 = vmatprep.subr.mxu0 0.0
    %67 = vmatpush1.msra.mxu0 %v25
    %68 = vmatprep.subr.mxu0 0.0
    %69 = vmatpush1.msra.mxu0 %v26
    %70 = vmatprep.subr.mxu0 0.0
    %71 = vmatpush1.msra.mxu0 %v27
    %72 = vmatprep.subr.mxu0 0.0
    %73 = vmatpush1.msra.mxu0 %v28
    %74 = vmatprep.subr.mxu0 0.0
    %75 = vmatpush1.msra.mxu0 %v29
    %76 = vmatprep.subr.mxu0 0.0
    %77 = vmatpush1.msra.mxu0 %v30
    %78 = vmatprep.subr.mxu0 0.0
    %79 = vmatpush1.msra.mxu0 %v31
    %80 = vmatprep.subr.mxu0 0.0
    %81 = vmatpush1.msra.mxu0 %v32
    %82 = vmatprep.subr.mxu0 0.0
    %83 = vmatpush1.msra.mxu0 %v33
    %84 = vmatprep.subr.mxu0 0.0
    %85 = vmatpush1.msra.mxu0 %v34
    %86 = vmatprep.subr.mxu0 0.0
    %87 = vmatpush1.msra.mxu0 %v35
    %88 = vmatprep.subr.mxu0 0.0
    %89 = vmatpush1.msra.mxu0 %v36
    %90 = vmatprep.subr.mxu0 0.0
    %91 = vmatpush1.msra.mxu0 %v37
    %92 = vmatprep.subr.mxu0 0.0
    %93 = vmatpush1.msra.mxu0 %v38
    %94 = vmatprep.subr.mxu0 0.0
    %95 = vmatpush1.msra.mxu0 %v39
    %96 = vmatprep.subr.mxu0 0.0
    %97 = vmatpush1.msra.mxu0 %v40
    %98 = vmatprep.subr.mxu0 0.0
    %99 = vmatpush1.msra.mxu0 %v41
    %100 = vmatprep.subr.mxu0 0.0
    %101 = vmatpush1.msra.mxu0 %v42
    %102 = vmatprep.subr.mxu0 0.0
    %103 = vmatpush1.msra.mxu0 %v43
    %104 = vmatprep.subr.mxu0 0.0
    %105 = vmatpush1.msra.mxu0 %v44
    %106 = vmatprep.subr.mxu0 0.0
    %107 = vmatpush1.msra.mxu0 %v45
    %108 = vmatprep.subr.mxu0 0.0
    %109 = vmatpush1.msra.mxu0 %v46
    %110 = vmatprep.subr.mxu0 0.0
    %111 = vmatpush1.msra.mxu0 %v47
    %112 = vmatprep.subr.mxu0 0.0
    %113 = vmatpush1.msra.mxu0 %v48
    %114 = vmatprep.subr.mxu0 0.0
    %115 = vmatpush1.msra.mxu0 %v49
    %116 = vmatprep.mubr.f32.mxu0 %v51
    %117 = vmatmul.mubr.f32.gmra.mrb[0].mxu0 %v50
    %v118 = vpop.f32.mrb[0].mxu0
    %v119 = vadd.f32 0.0, %v118
    %v120 = vpop.f32.mrb[0].mxu0
    %121 = vdwg.mxu0
    %v122 = vld [vmem:[%s2] sm:$0xff]
    %v123 = vld [vmem:[%s2 + $0x8] sm:$0xff]
    %v124 = vld [vmem:[%s2 + $0x10] sm:$0xff]
    %v125 = vld [vmem:[%s2 + $0x18] sm:$0xff]
    %v126 = vld [vmem:[%s2 + $0x20] sm:$0xff]
    %v127 = vld [vmem:[%s3] sm:$0x1]
    %v128 = vlaneseq
    %v129 = vshrl.u32 %v128, 7
    %v130 = vsub.s32 0, %v129
    %v131 = vrot.slane %v127, %v130
    %v133 = vrot.slane %v119, 2
    %vm134 = vcmask 326656
    %v135 = vsel %vm134, %v133, 0
    %137 = vmatprep.subr.mxu0 0.0
    %138 = vmatpush1.msra.mxu0 %v122
    %139 = vmatprep.subr.mxu0 0.0
    %140 = vmatpush1.msra.mxu0 %v123
    %141 = vmatprep.subr.mxu0 0.0
    %142 = vmatpush1.msra.mxu0 %v124
    %143 = vmatprep.subr.mxu0 0.0
    %144 = vmatpush1.msra.mxu0 %v125
    %145 = vmatprep.subr.mxu0 0.0
    %146 = vmatpush1.msra.mxu0 %v126
    %147 = vmatprep.subr.mxu0 0.0
    %148 = vmatpush1.msra.mxu0 0.0
    %149 = vmatprep.subr.mxu0 0.0
    %150 = vmatpush1.msra.mxu0 0.0
    %151 = vmatprep.subr.mxu0 0.0
    %152 = vmatpush1.msra.mxu0 0.0
    %153 = vmatprep.subr.mxu0 0.0
    %154 = vmatpush1.msra.mxu0 0.0
    %155 = vmatprep.subr.mxu0 0.0
    %156 = vmatpush1.msra.mxu0 0.0
    %157 = vmatprep.subr.mxu0 0.0
    %158 = vmatpush1.msra.mxu0 0.0
    %159 = vmatprep.subr.mxu0 0.0
    %160 = vmatpush1.msra.mxu0 0.0
    %161 = vmatprep.subr.mxu0 0.0
    %162 = vmatpush1.msra.mxu0 0.0
    %163 = vmatprep.subr.mxu0 0.0
    %164 = vmatpush1.msra.mxu0 0.0
    %165 = vmatprep.subr.mxu0 0.0
    %166 = vmatpush1.msra.mxu0 0.0
    %167 = vmatprep.subr.mxu0 0.0
    %168 = vmatpush1.msra.mxu0 0.0
    %169 = vmatprep.subr.mxu0 0.0
    %170 = vmatpush1.msra.mxu0 0.0
    %171 = vmatprep.subr.mxu0 0.0
    %172 = vmatpush1.msra.mxu0 0.0
    %173 = vmatprep.subr.mxu0 0.0
    %174 = vmatpush1.msra.mxu0 0.0
    %175 = vmatprep.subr.mxu0 0.0
    %176 = vmatpush1.msra.mxu0 0.0
    %177 = vmatprep.subr.mxu0 0.0
    %178 = vmatpush1.msra.mxu0 0.0
    %179 = vmatprep.subr.mxu0 0.0
    %180 = vmatpush1.msra.mxu0 0.0
    %181 = vmatprep.subr.mxu0 0.0
    %182 = vmatpush1.msra.mxu0 0.0
    %183 = vmatprep.subr.mxu0 0.0
    %184 = vmatpush1.msra.mxu0 0.0
    %185 = vmatprep.subr.mxu0 0.0
    %186 = vmatpush1.msra.mxu0 0.0
    %187 = vmatprep.subr.mxu0 0.0
    %188 = vmatpush1.msra.mxu0 0.0
    %189 = vmatprep.subr.mxu0 0.0
    %190 = vmatpush1.msra.mxu0 0.0
    %191 = vmatprep.subr.mxu0 0.0
    %192 = vmatpush1.msra.mxu0 0.0
    %193 = vmatprep.subr.mxu0 0.0
    %194 = vmatpush1.msra.mxu0 0.0
    %195 = vmatprep.subr.mxu0 0.0
    %196 = vmatpush1.msra.mxu0 0.0
    %197 = vmatprep.subr.mxu0 0.0
    %198 = vmatpush1.msra.mxu0 0.0
    %199 = vmatprep.subr.mxu0 0.0
    %200 = vmatpush1.msra.mxu0 0.0
    %201 = vmatprep.mubr.f32.mxu0 0.0
    %202 = vmatmul.mubr.f32.gmra.mrb[0].mxu0 %v135
    %v203 = vpop.f32.mrb[0].mxu0
    %v204 = vadd.f32 %v131, %v203
    %v205 = vpop.f32.mrb[0].mxu0
    %206 = vdwg.mxu0
    %v207 = vsub.f32 0.0, %v204
    %v208 = vmul.f32 %v207, 1.442695
    %v209 = vpow.pop %v208
    %v210 = vadd.f32 %v209, 1.0
    %v211 = vrcp.pop %v210
    %v212 = vmul.f32 1.0, %v211
    %v213 = vld [vmem:[%s2 + $0x28] sm:$0xff]
    %v214 = vld [vmem:[%s2 + $0x30] sm:$0xff]
    %v215 = vld [vmem:[%s2 + $0x38] sm:$0xf]
    %v216 = vld [vmem:[%s3 + $0x1] sm:$0x1]
    %v217 = vlaneseq
    %v218 = vshrl.u32 %v217, 7
    %v219 = vsub.s32 0, %v218
    %v220 = vrot.slane %v216, %v219
    %vm221 = vcmask 162816
    %v223 = vsel %vm221, %v212, 0
    %vm225 = vcmask 1043456
    %v227 = vsel %vm225, %v215, 0
    %229 = vmatprep.subr.mxu0 0.0
    %230 = vmatpush1.msra.mxu0 %v213
    %231 = vmatprep.subr.mxu0 0.0
    %232 = vmatpush1.msra.mxu0 %v214
    %233 = vmatprep.subr.mxu0 0.0
    %234 = vmatpush1.msra.mxu0 %v227
    %235 = vmatprep.subr.mxu0 0.0
    %236 = vmatpush1.msra.mxu0 0.0
    %237 = vmatprep.subr.mxu0 0.0
    %238 = vmatpush1.msra.mxu0 0.0
    %239 = vmatprep.subr.mxu0 0.0
    %240 = vmatpush1.msra.mxu0 0.0
    %241 = vmatprep.subr.mxu0 0.0
    %242 = vmatpush1.msra.mxu0 0.0
    %243 = vmatprep.subr.mxu0 0.0
    %244 = vmatpush1.msra.mxu0 0.0
    %245 = vmatprep.subr.mxu0 0.0
    %246 = vmatpush1.msra.mxu0 0.0
    %247 = vmatprep.subr.mxu0 0.0
    %248 = vmatpush1.msra.mxu0 0.0
    %249 = vmatprep.subr.mxu0 0.0
    %250 = vmatpush1.msra.mxu0 0.0
    %251 = vmatprep.subr.mxu0 0.0
    %252 = vmatpush1.msra.mxu0 0.0
    %253 = vmatprep.subr.mxu0 0.0
    %254 = vmatpush1.msra.mxu0 0.0
    %255 = vmatprep.subr.mxu0 0.0
    %256 = vmatpush1.msra.mxu0 0.0
    %257 = vmatprep.subr.mxu0 0.0
    %258 = vmatpush1.msra.mxu0 0.0
    %259 = vmatprep.subr.mxu0 0.0
    %260 = vmatpush1.msra.mxu0 0.0
    %261 = vmatprep.subr.mxu0 0.0
    %262 = vmatpush1.msra.mxu0 0.0
    %263 = vmatprep.subr.mxu0 0.0
    %264 = vmatpush1.msra.mxu0 0.0
    %265 = vmatprep.subr.mxu0 0.0
    %266 = vmatpush1.msra.mxu0 0.0
    %267 = vmatprep.subr.mxu0 0.0
    %268 = vmatpush1.msra.mxu0 0.0
    %269 = vmatprep.subr.mxu0 0.0
    %270 = vmatpush1.msra.mxu0 0.0
    %271 = vmatprep.subr.mxu0 0.0
    %272 = vmatpush1.msra.mxu0 0.0
    %273 = vmatprep.subr.mxu0 0.0
    %274 = vmatpush1.msra.mxu0 0.0
    %275 = vmatprep.subr.mxu0 0.0
    %276 = vmatpush1.msra.mxu0 0.0
    %277 = vmatprep.subr.mxu0 0.0
    %278 = vmatpush1.msra.mxu0 0.0
    %279 = vmatprep.subr.mxu0 0.0
    %280 = vmatpush1.msra.mxu0 0.0
    %281 = vmatprep.subr.mxu0 0.0
    %282 = vmatpush1.msra.mxu0 0.0
    %283 = vmatprep.subr.mxu0 0.0
    %284 = vmatpush1.msra.mxu0 0.0
    %285 = vmatprep.subr.mxu0 0.0
    %286 = vmatpush1.msra.mxu0 0.0
    %287 = vmatprep.subr.mxu0 0.0
    %288 = vmatpush1.msra.mxu0 0.0
    %289 = vmatprep.subr.mxu0 0.0
    %290 = vmatpush1.msra.mxu0 0.0
    %291 = vmatprep.subr.mxu0 0.0
    %292 = vmatpush1.msra.mxu0 0.0
    %293 = vmatprep.mubr.f32.mxu0 0.0
    %294 = vmatmul.mubr.f32.gmra.mrb[0].mxu0 %v223
    %v295 = vpop.f32.mrb[0].mxu0
    %v296 = vadd.f32 %v220, %v295
    %v297 = vpop.f32.mrb[0].mxu0
    %298 = vdwg.mxu0
    %v299 = vsub.f32 0.0, %v296
    %v300 = vmul.f32 %v299, 1.442695
    %v301 = vpow.pop %v300
    %v302 = vadd.f32 %v301, 1.0
    %v303 = vrcp.pop %v302
    %v304 = vmul.f32 1.0, %v303
    %v305 = vld [vmem:[%s2 + $0x40] sm:$0xff]
    %v306 = vld [vmem:[%s2 + $0x48] sm:$0x3]
    %v307 = vld [vmem:[%s3 + $0x2] sm:$0x1]
    %v308 = vlaneseq
    %v309 = vshrl.u32 %v308, 7
    %v310 = vsub.s32 0, %v309
    %v311 = vrot.slane %v307, %v310
    %vm312 = vcmask 80896
    %v314 = vsel %vm312, %v304, 0
    %vm316 = vcmask 1041408
    %v318 = vsel %vm316, %v306, 0
    %320 = vmatprep.subr.mxu0 0.0
    %321 = vmatpush1.msra.mxu0 %v305
    %322 = vmatprep.subr.mxu0 0.0
    %323 = vmatpush1.msra.mxu0 %v318
    %324 = vmatprep.subr.mxu0 0.0
    %325 = vmatpush1.msra.mxu0 0.0
    %326 = vmatprep.subr.mxu0 0.0
    %327 = vmatpush1.msra.mxu0 0.0
    %328 = vmatprep.subr.mxu0 0.0
    %329 = vmatpush1.msra.mxu0 0.0
    %330 = vmatprep.subr.mxu0 0.0
    %331 = vmatpush1.msra.mxu0 0.0
    %332 = vmatprep.subr.mxu0 0.0
    %333 = vmatpush1.msra.mxu0 0.0
    %334 = vmatprep.subr.mxu0 0.0
    %335 = vmatpush1.msra.mxu0 0.0
    %336 = vmatprep.subr.mxu0 0.0
    %337 = vmatpush1.msra.mxu0 0.0
    %338 = vmatprep.subr.mxu0 0.0
    %339 = vmatpush1.msra.mxu0 0.0
    %340 = vmatprep.subr.mxu0 0.0
    %341 = vmatpush1.msra.mxu0 0.0
    %342 = vmatprep.subr.mxu0 0.0
    %343 = vmatpush1.msra.mxu0 0.0
    %344 = vmatprep.subr.mxu0 0.0
    %345 = vmatpush1.msra.mxu0 0.0
    %346 = vmatprep.subr.mxu0 0.0
    %347 = vmatpush1.msra.mxu0 0.0
    %348 = vmatprep.subr.mxu0 0.0
    %349 = vmatpush1.msra.mxu0 0.0
    %350 = vmatprep.subr.mxu0 0.0
    %351 = vmatpush1.msra.mxu0 0.0
    %352 = vmatprep.subr.mxu0 0.0
    %353 = vmatpush1.msra.mxu0 0.0
    %354 = vmatprep.subr.mxu0 0.0
    %355 = vmatpush1.msra.mxu0 0.0
    %356 = vmatprep.subr.mxu0 0.0
    %357 = vmatpush1.msra.mxu0 0.0
    %358 = vmatprep.subr.mxu0 0.0
    %359 = vmatpush1.msra.mxu0 0.0
    %360 = vmatprep.subr.mxu0 0.0
    %361 = vmatpush1.msra.mxu0 0.0
    %362 = vmatprep.subr.mxu0 0.0
    %363 = vmatpush1.msra.mxu0 0.0
    %364 = vmatprep.subr.mxu0 0.0
    %365 = vmatpush1.msra.mxu0 0.0
    %366 = vmatprep.subr.mxu0 0.0
    %367 = vmatpush1.msra.mxu0 0.0
    %368 = vmatprep.subr.mxu0 0.0
    %369 = vmatpush1.msra.mxu0 0.0
    %370 = vmatprep.subr.mxu0 0.0
    %371 = vmatpush1.msra.mxu0 0.0
    %372 = vmatprep.subr.mxu0 0.0
    %373 = vmatpush1.msra.mxu0 0.0
    %374 = vmatprep.subr.mxu0 0.0
    %375 = vmatpush1.msra.mxu0 0.0
    %376 = vmatprep.subr.mxu0 0.0
    %377 = vmatpush1.msra.mxu0 0.0
    %378 = vmatprep.subr.mxu0 0.0
    %379 = vmatpush1.msra.mxu0 0.0
    %380 = vmatprep.subr.mxu0 0.0
    %381 = vmatpush1.msra.mxu0 0.0
    %382 = vmatprep.subr.mxu0 0.0
    %383 = vmatpush1.msra.mxu0 0.0
    %384 = vmatprep.mubr.f32.mxu0 0.0
    %385 = vmatmul.mubr.f32.gmra.mrb[0].mxu0 %v314
    %v386 = vpop.f32.mrb[0].mxu0
    %v387 = vadd.f32 %v311, %v386
    %v388 = vpop.f32.mrb[0].mxu0
    %389 = vdwg.mxu0
    %v390 = vsub.f32 0.0, %v387
    %v391 = vmul.f32 %v390, 1.442695
    %v392 = vpow.pop %v391
    %v393 = vadd.f32 %v392, 1.0
    %v394 = vrcp.pop %v393
    %v395 = vmul.f32 1.0, %v394
    %v396 = vld [vmem:[%s2 + $0x50] sm:$0xff]
    %v397 = vld [vmem:[%s2 + $0x58] sm:$0xff]
    %v398 = vld [vmem:[%s2 + $0x60] sm:$0xf]
    %v399 = vld [vmem:[%s3 + $0x3] sm:$0x1]
    %v400 = vlaneseq
    %v401 = vshrl.u32 %v400, 7
    %v402 = vsub.s32 0, %v401
    %v403 = vrot.slane %v399, %v402
    %v405 = vsel %vm221, %v395, 0
    %v408 = vsel %vm225, %v398, 0
    %410 = vmatprep.subr.mxu0 0.0
    %411 = vmatpush1.msra.mxu0 %v396
    %412 = vmatprep.subr.mxu0 0.0
    %413 = vmatpush1.msra.mxu0 %v397
    %414 = vmatprep.subr.mxu0 0.0
    %415 = vmatpush1.msra.mxu0 %v408
    %416 = vmatprep.subr.mxu0 0.0
    %417 = vmatpush1.msra.mxu0 0.0
    %418 = vmatprep.subr.mxu0 0.0
    %419 = vmatpush1.msra.mxu0 0.0
    %420 = vmatprep.subr.mxu0 0.0
    %421 = vmatpush1.msra.mxu0 0.0
    %422 = vmatprep.subr.mxu0 0.0
    %423 = vmatpush1.msra.mxu0 0.0
    %424 = vmatprep.subr.mxu0 0.0
    %425 = vmatpush1.msra.mxu0 0.0
    %426 = vmatprep.subr.mxu0 0.0
    %427 = vmatpush1.msra.mxu0 0.0
    %428 = vmatprep.subr.mxu0 0.0
    %429 = vmatpush1.msra.mxu0 0.0
    %430 = vmatprep.subr.mxu0 0.0
    %431 = vmatpush1.msra.mxu0 0.0
    %432 = vmatprep.subr.mxu0 0.0
    %433 = vmatpush1.msra.mxu0 0.0
    %434 = vmatprep.subr.mxu0 0.0
    %435 = vmatpush1.msra.mxu0 0.0
    %436 = vmatprep.subr.mxu0 0.0
    %437 = vmatpush1.msra.mxu0 0.0
    %438 = vmatprep.subr.mxu0 0.0
    %439 = vmatpush1.msra.mxu0 0.0
    %440 = vmatprep.subr.mxu0 0.0
    %441 = vmatpush1.msra.mxu0 0.0
    %442 = vmatprep.subr.mxu0 0.0
    %443 = vmatpush1.msra.mxu0 0.0
    %444 = vmatprep.subr.mxu0 0.0
    %445 = vmatpush1.msra.mxu0 0.0
    %446 = vmatprep.subr.mxu0 0.0
    %447 = vmatpush1.msra.mxu0 0.0
    %448 = vmatprep.subr.mxu0 0.0
    %449 = vmatpush1.msra.mxu0 0.0
    %450 = vmatprep.subr.mxu0 0.0
    %451 = vmatpush1.msra.mxu0 0.0
    %452 = vmatprep.subr.mxu0 0.0
    %453 = vmatpush1.msra.mxu0 0.0
    %454 = vmatprep.subr.mxu0 0.0
    %455 = vmatpush1.msra.mxu0 0.0
    %456 = vmatprep.subr.mxu0 0.0
    %457 = vmatpush1.msra.mxu0 0.0
    %458 = vmatprep.subr.mxu0 0.0
    %459 = vmatpush1.msra.mxu0 0.0
    %460 = vmatprep.subr.mxu0 0.0
    %461 = vmatpush1.msra.mxu0 0.0
    %462 = vmatprep.subr.mxu0 0.0
    %463 = vmatpush1.msra.mxu0 0.0
    %464 = vmatprep.subr.mxu0 0.0
    %465 = vmatpush1.msra.mxu0 0.0
    %466 = vmatprep.subr.mxu0 0.0
    %467 = vmatpush1.msra.mxu0 0.0
    %468 = vmatprep.subr.mxu0 0.0
    %469 = vmatpush1.msra.mxu0 0.0
    %470 = vmatprep.subr.mxu0 0.0
    %471 = vmatpush1.msra.mxu0 0.0
    %472 = vmatprep.subr.mxu0 0.0
    %473 = vmatpush1.msra.mxu0 0.0
    %474 = vmatprep.mubr.f32.mxu0 0.0
    %475 = vmatmul.mubr.f32.gmra.mrb[0].mxu0 %v405
    %v476 = vpop.f32.mrb[0].mxu0
    %v477 = vadd.f32 %v403, %v476
    %v478 = vpop.f32.mrb[0].mxu0
    %479 = vdwg.mxu0
    %v480 = vld [vmem:[%s2 + $0x68] sm:$0xff]
    %v481 = vld [vmem:[%s2 + $0x70] sm:$0xff]
    %v482 = vld [vmem:[%s2 + $0x78] sm:$0xff]
    %v483 = vld [vmem:[%s2 + $0x80] sm:$0xff]
    %v484 = vld [vmem:[%s2 + $0x88] sm:$0xff]
    %v486 = vsel %vm134, %v18, 0
    %v489 = vsel %vm134, %v19, 0
    %v492 = vsel %vm134, %v20, 0
    %v495 = vsel %vm134, %v21, 0
    %v498 = vsel %vm134, %v22, 0
    %v501 = vsel %vm134, %v23, 0
    %v504 = vsel %vm134, %v24, 0
    %v507 = vsel %vm134, %v25, 0
    %v510 = vsel %vm134, %v26, 0
    %v513 = vsel %vm134, %v27, 0
    %v516 = vsel %vm134, %v28, 0
    %v519 = vsel %vm134, %v29, 0
    %v522 = vsel %vm134, %v30, 0
    %v525 = vsel %vm134, %v31, 0
    %v528 = vsel %vm134, %v32, 0
    %v531 = vsel %vm134, %v33, 0
    %v534 = vsel %vm134, %v34, 0
    %v537 = vsel %vm134, %v35, 0
    %v540 = vsel %vm134, %v36, 0
    %v543 = vsel %vm134, %v37, 0
    %v546 = vsel %vm134, %v38, 0
    %v549 = vsel %vm134, %v39, 0
    %v552 = vsel %vm134, %v40, 0
    %v555 = vsel %vm134, %v41, 0
    %v558 = vsel %vm134, %v42, 0
    %v561 = vsel %vm134, %v43, 0
    %v564 = vsel %vm134, %v44, 0
    %v567 = vsel %vm134, %v45, 0
    %v570 = vsel %vm134, %v46, 0
    %v573 = vsel %vm134, %v47, 0
    %v576 = vsel %vm134, %v48, 0
    %v579 = vsel %vm134, %v49, 0
    %581 = vmatprep.subr.mxu0 0.0
    %582 = vmatpush1.msra.mxu0 %v480
    %583 = vmatprep.subr.mxu0 0.0
    %584 = vmatpush1.msra.mxu0 %v481
    %585 = vmatprep.subr.mxu0 0.0
    %586 = vmatpush1.msra.mxu0 %v482
    %587 = vmatprep.subr.mxu0 0.0
    %588 = vmatpush1.msra.mxu0 %v483
    %589 = vmatprep.subr.mxu0 0.0
    %590 = vmatpush1.msra.mxu0 %v484
    %591 = vmatprep.subr.mxu0 0.0
    %592 = vmatpush1.msra.mxu0 0.0
    %593 = vmatprep.subr.mxu0 0.0
    %594 = vmatpush1.msra.mxu0 0.0
    %595 = vmatprep.subr.mxu0 0.0
    %596 = vmatpush1.msra.mxu0 0.0
    %597 = vmatprep.subr.mxu0 0.0
    %598 = vmatpush1.msra.mxu0 0.0
    %599 = vmatprep.subr.mxu0 0.0
    %600 = vmatpush1.msra.mxu0 0.0
    %601 = vmatprep.subr.mxu0 0.0
    %602 = vmatpush1.msra.mxu0 0.0
    %603 = vmatprep.subr.mxu0 0.0
    %604 = vmatpush1.msra.mxu0 0.0
    %605 = vmatprep.subr.mxu0 0.0
    %606 = vmatpush1.msra.mxu0 0.0
    %607 = vmatprep.subr.mxu0 0.0
    %608 = vmatpush1.msra.mxu0 0.0
    %609 = vmatprep.subr.mxu0 0.0
    %610 = vmatpush1.msra.mxu0 0.0
    %611 = vmatprep.subr.mxu0 0.0
    %612 = vmatpush1.msra.mxu0 0.0
    %613 = vmatprep.subr.mxu0 0.0
    %614 = vmatpush1.msra.mxu0 0.0
    %615 = vmatprep.subr.mxu0 0.0
    %616 = vmatpush1.msra.mxu0 0.0
    %617 = vmatprep.subr.mxu0 0.0
    %618 = vmatpush1.msra.mxu0 0.0
    %619 = vmatprep.subr.mxu0 0.0
    %620 = vmatpush1.msra.mxu0 0.0
    %621 = vmatprep.subr.mxu0 0.0
    %622 = vmatpush1.msra.mxu0 0.0
    %623 = vmatprep.subr.mxu0 0.0
    %624 = vmatpush1.msra.mxu0 0.0
    %625 = vmatprep.subr.mxu0 0.0
    %626 = vmatpush1.msra.mxu0 0.0
    %627 = vmatprep.subr.mxu0 0.0
    %628 = vmatpush1.msra.mxu0 0.0
    %629 = vmatprep.subr.mxu0 0.0
    %630 = vmatpush1.msra.mxu0 0.0
    %631 = vmatprep.subr.mxu0 0.0
    %632 = vmatpush1.msra.mxu0 0.0
    %633 = vmatprep.subr.mxu0 0.0
    %634 = vmatpush1.msra.mxu0 0.0
    %635 = vmatprep.subr.mxu0 0.0
    %636 = vmatpush1.msra.mxu0 0.0
    %637 = vmatprep.subr.mxu0 0.0
    %638 = vmatpush1.msra.mxu0 0.0
    %639 = vmatprep.subr.mxu0 0.0
    %640 = vmatpush1.msra.mxu0 0.0
    %641 = vmatprep.subr.mxu0 0.0
    %642 = vmatpush1.msra.mxu0 0.0
    %643 = vmatprep.subr.mxu0 0.0
    %644 = vmatpush1.msra.mxu0 0.0
    %645 = vmatprep.mubr.f32.mxu0 0.0
    %646 = vmatmul.mubr.f32.gmra.mrb[0].mxu0 %v486
    %v647 = vpop.f32.mrb[0].mxu0
    %v648 = vadd.f32 0.0, %v647
    %v649 = vpop.f32.mrb[0].mxu0
    %650 = vmatprep.mubr.f32.mxu0 0.0
    %651 = vmatmul.mubr.f32.gmra.mrb[0].mxu0 %v489
    %v652 = vpop.f32.mrb[0].mxu0
    %v653 = vadd.f32 0.0, %v652
    %v654 = vpop.f32.mrb[0].mxu0
    %655 = vmatprep.mubr.f32.mxu0 0.0
    %656 = vmatmul.mubr.f32.gmra.mrb[0].mxu0 %v492
    %v657 = vpop.f32.mrb[0].mxu0
    %v658 = vadd.f32 0.0, %v657
    %v659 = vpop.f32.mrb[0].mxu0
    %660 = vmatprep.mubr.f32.mxu0 0.0
    %661 = vmatmul.mubr.f32.gmra.mrb[0].mxu0 %v495
    %v662 = vpop.f32.mrb[0].mxu0
    %v663 = vadd.f32 0.0, %v662
    %v664 = vpop.f32.mrb[0].mxu0
    %665 = vmatprep.mubr.f32.mxu0 0.0
    %666 = vmatmul.mubr.f32.gmra.mrb[0].mxu0 %v498
    %v667 = vpop.f32.mrb[0].mxu0
    %v668 = vadd.f32 0.0, %v667
    %v669 = vpop.f32.mrb[0].mxu0
    %670 = vmatprep.mubr.f32.mxu0 0.0
    %671 = vmatmul.mubr.f32.gmra.mrb[0].mxu0 %v501
    %v672 = vpop.f32.mrb[0].mxu0
    %v673 = vadd.f32 0.0, %v672
    %v674 = vpop.f32.mrb[0].mxu0
    %675 = vmatprep.mubr.f32.mxu0 0.0
    %676 = vmatmul.mubr.f32.gmra.mrb[0].mxu0 %v504
    %v677 = vpop.f32.mrb[0].mxu0
    %v678 = vadd.f32 0.0, %v677
    %v679 = vpop.f32.mrb[0].mxu0
    %680 = vmatprep.mubr.f32.mxu0 0.0
    %681 = vmatmul.mubr.f32.gmra.mrb[0].mxu0 %v507
    %v682 = vpop.f32.mrb[0].mxu0
    %v683 = vadd.f32 0.0, %v682
    %v684 = vpop.f32.mrb[0].mxu0
    %685 = vmatprep.mubr.f32.mxu0 0.0
    %686 = vmatmul.mubr.f32.gmra.mrb[0].mxu0 %v510
    %v687 = vpop.f32.mrb[0].mxu0
    %v688 = vadd.f32 0.0, %v687
    %v689 = vpop.f32.mrb[0].mxu0
    %690 = vmatprep.mubr.f32.mxu0 0.0
    %691 = vmatmul.mubr.f32.gmra.mrb[0].mxu0 %v513
    %v692 = vpop.f32.mrb[0].mxu0
    %v693 = vadd.f32 0.0, %v692
    %v694 = vpop.f32.mrb[0].mxu0
    %695 = vmatprep.mubr.f32.mxu0 0.0
    %696 = vmatmul.mubr.f32.gmra.mrb[0].mxu0 %v516
    %v697 = vpop.f32.mrb[0].mxu0
    %v698 = vadd.f32 0.0, %v697
    %v699 = vpop.f32.mrb[0].mxu0
    %700 = vmatprep.mubr.f32.mxu0 0.0
    %701 = vmatmul.mubr.f32.gmra.mrb[0].mxu0 %v519
    %v702 = vpop.f32.mrb[0].mxu0
    %v703 = vadd.f32 0.0, %v702
    %v704 = vpop.f32.mrb[0].mxu0
    %705 = vmatprep.mubr.f32.mxu0 0.0
    %706 = vmatmul.mubr.f32.gmra.mrb[0].mxu0 %v522
    %v707 = vpop.f32.mrb[0].mxu0
    %v708 = vadd.f32 0.0, %v707
    %v709 = vpop.f32.mrb[0].mxu0
    %710 = vmatprep.mubr.f32.mxu0 0.0
    %711 = vmatmul.mubr.f32.gmra.mrb[0].mxu0 %v525
    %v712 = vpop.f32.mrb[0].mxu0
    %v713 = vadd.f32 0.0, %v712
    %v714 = vpop.f32.mrb[0].mxu0
    %715 = vmatprep.mubr.f32.mxu0 0.0
    %716 = vmatmul.mubr.f32.gmra.mrb[0].mxu0 %v528
    %v717 = vpop.f32.mrb[0].mxu0
    %v718 = vadd.f32 0.0, %v717
    %v719 = vpop.f32.mrb[0].mxu0
    %720 = vmatprep.mubr.f32.mxu0 0.0
    %721 = vmatmul.mubr.f32.gmra.mrb[0].mxu0 %v531
    %v722 = vpop.f32.mrb[0].mxu0
    %v723 = vadd.f32 0.0, %v722
    %v724 = vpop.f32.mrb[0].mxu0
    %725 = vmatprep.mubr.f32.mxu0 0.0
    %726 = vmatmul.mubr.f32.gmra.mrb[0].mxu0 %v534
    %v727 = vpop.f32.mrb[0].mxu0
    %v728 = vadd.f32 0.0, %v727
    %v729 = vpop.f32.mrb[0].mxu0
    %730 = vmatprep.mubr.f32.mxu0 0.0
    %731 = vmatmul.mubr.f32.gmra.mrb[0].mxu0 %v537
    %v732 = vpop.f32.mrb[0].mxu0
    %v733 = vadd.f32 0.0, %v732
    %v734 = vpop.f32.mrb[0].mxu0
    %735 = vmatprep.mubr.f32.mxu0 0.0
    %736 = vmatmul.mubr.f32.gmra.mrb[0].mxu0 %v540
    %v737 = vpop.f32.mrb[0].mxu0
    %v738 = vadd.f32 0.0, %v737
    %v739 = vpop.f32.mrb[0].mxu0
    %740 = vmatprep.mubr.f32.mxu0 0.0
    %741 = vmatmul.mubr.f32.gmra.mrb[0].mxu0 %v543
    %v742 = vpop.f32.mrb[0].mxu0
    %v743 = vadd.f32 0.0, %v742
    %v744 = vpop.f32.mrb[0].mxu0
    %745 = vmatprep.mubr.f32.mxu0 0.0
    %746 = vmatmul.mubr.f32.gmra.mrb[0].mxu0 %v546
    %v747 = vpop.f32.mrb[0].mxu0
    %v748 = vadd.f32 0.0, %v747
    %v749 = vpop.f32.mrb[0].mxu0
    %750 = vmatprep.mubr.f32.mxu0 0.0
    %751 = vmatmul.mubr.f32.gmra.mrb[0].mxu0 %v549
    %v752 = vpop.f32.mrb[0].mxu0
    %v753 = vadd.f32 0.0, %v752
    %v754 = vpop.f32.mrb[0].mxu0
    %755 = vmatprep.mubr.f32.mxu0 0.0
    %756 = vmatmul.mubr.f32.gmra.mrb[0].mxu0 %v552
    %v757 = vpop.f32.mrb[0].mxu0
    %v758 = vadd.f32 0.0, %v757
    %v759 = vpop.f32.mrb[0].mxu0
    %760 = vmatprep.mubr.f32.mxu0 0.0
    %761 = vmatmul.mubr.f32.gmra.mrb[0].mxu0 %v555
    %v762 = vpop.f32.mrb[0].mxu0
    %v763 = vadd.f32 0.0, %v762
    %v764 = vpop.f32.mrb[0].mxu0
    %765 = vmatprep.mubr.f32.mxu0 0.0
    %766 = vmatmul.mubr.f32.gmra.mrb[0].mxu0 %v558
    %v767 = vpop.f32.mrb[0].mxu0
    %v768 = vadd.f32 0.0, %v767
    %v769 = vpop.f32.mrb[0].mxu0
    %770 = vmatprep.mubr.f32.mxu0 0.0
    %771 = vmatmul.mubr.f32.gmra.mrb[0].mxu0 %v561
    %v772 = vpop.f32.mrb[0].mxu0
    %v773 = vadd.f32 0.0, %v772
    %v774 = vpop.f32.mrb[0].mxu0
    %775 = vmatprep.mubr.f32.mxu0 0.0
    %776 = vmatmul.mubr.f32.gmra.mrb[0].mxu0 %v564
    %v777 = vpop.f32.mrb[0].mxu0
    %v778 = vadd.f32 0.0, %v777
    %v779 = vpop.f32.mrb[0].mxu0
    %780 = vmatprep.mubr.f32.mxu0 0.0
    %781 = vmatmul.mubr.f32.gmra.mrb[0].mxu0 %v567
    %v782 = vpop.f32.mrb[0].mxu0
    %v783 = vadd.f32 0.0, %v782
    %v784 = vpop.f32.mrb[0].mxu0
    %785 = vmatprep.mubr.f32.mxu0 0.0
    %786 = vmatmul.mubr.f32.gmra.mrb[0].mxu0 %v570
    %v787 = vpop.f32.mrb[0].mxu0
    %v788 = vadd.f32 0.0, %v787
    %v789 = vpop.f32.mrb[0].mxu0
    %790 = vmatprep.mubr.f32.mxu0 0.0
    %791 = vmatmul.mubr.f32.gmra.mrb[0].mxu0 %v573
    %v792 = vpop.f32.mrb[0].mxu0
    %v793 = vadd.f32 0.0, %v792
    %v794 = vpop.f32.mrb[0].mxu0
    %795 = vmatprep.mubr.f32.mxu0 0.0
    %796 = vmatmul.mubr.f32.gmra.mrb[0].mxu0 %v576
    %v797 = vpop.f32.mrb[0].mxu0
    %v798 = vadd.f32 0.0, %v797
    %v799 = vpop.f32.mrb[0].mxu0
    %800 = vmatprep.mubr.f32.mxu0 0.0
    %801 = vmatmul.mubr.f32.gmra.mrb[0].mxu0 %v579
    %v802 = vpop.f32.mrb[0].mxu0
    %v803 = vadd.f32 0.0, %v802
    %v804 = vpop.f32.mrb[0].mxu0
    %805 = vdwg.mxu0
    %vm806 = vcmask 523264
    %807 = vst.msk [vmem:[#allocation2] sm:$0xff] %vm806, %v648
    %808 = vst.msk [vmem:[#allocation2 + $0x8] sm:$0xff] %vm806, %v653
    %809 = vst.msk [vmem:[#allocation2 + $0x10] sm:$0xff] %vm806, %v658
    %810 = vst.msk [vmem:[#allocation2 + $0x18] sm:$0xff] %vm806, %v663
    %811 = vst.msk [vmem:[#allocation2 + $0x20] sm:$0xff] %vm806, %v668
    %812 = vst.msk [vmem:[#allocation2 + $0x28] sm:$0xff] %vm806, %v673
    %813 = vst.msk [vmem:[#allocation2 + $0x30] sm:$0xff] %vm806, %v678
    %814 = vst.msk [vmem:[#allocation2 + $0x38] sm:$0xff] %vm806, %v683
    %815 = vst.msk [vmem:[#allocation2 + $0x40] sm:$0xff] %vm806, %v688
    %816 = vst.msk [vmem:[#allocation2 + $0x48] sm:$0xff] %vm806, %v693
    %817 = vst.msk [vmem:[#allocation2 + $0x50] sm:$0xff] %vm806, %v698
    %818 = vst.msk [vmem:[#allocation2 + $0x58] sm:$0xff] %vm806, %v703
    %819 = vst.msk [vmem:[#allocation2 + $0x60] sm:$0xff] %vm806, %v708
    %820 = vst.msk [vmem:[#allocation2 + $0x68] sm:$0xff] %vm806, %v713
    %821 = vst.msk [vmem:[#allocation2 + $0x70] sm:$0xff] %vm806, %v718
    %822 = vst.msk [vmem:[#allocation2 + $0x78] sm:$0xff] %vm806, %v723
    %823 = vst.msk [vmem:[#allocation2 + $0x80] sm:$0xff] %vm806, %v728
    %824 = vst.msk [vmem:[#allocation2 + $0x88] sm:$0xff] %vm806, %v733
    %825 = vst.msk [vmem:[#allocation2 + $0x90] sm:$0xff] %vm806, %v738
    %826 = vst.msk [vmem:[#allocation2 + $0x98] sm:$0xff] %vm806, %v743
    %827 = vst.msk [vmem:[#allocation2 + $0xa0] sm:$0xff] %vm806, %v748
    %828 = vst.msk [vmem:[#allocation2 + $0xa8] sm:$0xff] %vm806, %v753
    %829 = vst.msk [vmem:[#allocation2 + $0xb0] sm:$0xff] %vm806, %v758
    %830 = vst.msk [vmem:[#allocation2 + $0xb8] sm:$0xff] %vm806, %v763
    %831 = vst.msk [vmem:[#allocation2 + $0xc0] sm:$0xff] %vm806, %v768
    %832 = vst.msk [vmem:[#allocation2 + $0xc8] sm:$0xff] %vm806, %v773
    %833 = vst.msk [vmem:[#allocation2 + $0xd0] sm:$0xff] %vm806, %v778
    %834 = vst.msk [vmem:[#allocation2 + $0xd8] sm:$0xff] %vm806, %v783
    %835 = vst.msk [vmem:[#allocation2 + $0xe0] sm:$0xff] %vm806, %v788
    %836 = vst.msk [vmem:[#allocation2 + $0xe8] sm:$0xff] %vm806, %v793
    %837 = vst.msk [vmem:[#allocation2 + $0xf0] sm:$0xff] %vm806, %v798
    %838 = vst.msk [vmem:[#allocation2 + $0xf8] sm:$0xff] %vm806, %v803
    %v839 = vld [vmem:[%s3 + $0x4] sm:$0x1]
    %v840 = vld [vmem:[%s3 + $0x5] sm:$0x1]
    %v841 = vld [vmem:[#allocation2] sm:$0xff]
    %v842 = vld [vmem:[#allocation2 + $0x8] sm:$0xff]
    %v843 = vld [vmem:[#allocation2 + $0x10] sm:$0xff]
    %v844 = vld [vmem:[#allocation2 + $0x18] sm:$0xff]
    %v845 = vld [vmem:[#allocation2 + $0x20] sm:$0xff]
    %v846 = vld [vmem:[#allocation2 + $0x28] sm:$0xff]
    %v847 = vld [vmem:[#allocation2 + $0x30] sm:$0xff]
    %v848 = vld [vmem:[#allocation2 + $0x38] sm:$0xff]
    %v849 = vld [vmem:[#allocation2 + $0x40] sm:$0xff]
    %v850 = vld [vmem:[#allocation2 + $0x48] sm:$0xff]
    %v851 = vld [vmem:[#allocation2 + $0x50] sm:$0xff]
    %v852 = vld [vmem:[#allocation2 + $0x58] sm:$0xff]
    %v853 = vld [vmem:[#allocation2 + $0x60] sm:$0xff]
    %v854 = vld [vmem:[#allocation2 + $0x68] sm:$0xff]
    %v855 = vld [vmem:[#allocation2 + $0x70] sm:$0xff]
    %v856 = vld [vmem:[#allocation2 + $0x78] sm:$0xff]
    %v857 = vld [vmem:[#allocation2 + $0x80] sm:$0xff]
    %v858 = vld [vmem:[#allocation2 + $0x88] sm:$0xff]
    %v859 = vld [vmem:[#allocation2 + $0x90] sm:$0xff]
    %v860 = vld [vmem:[#allocation2 + $0x98] sm:$0xff]
    %v861 = vld [vmem:[#allocation2 + $0xa0] sm:$0xff]
    %v862 = vld [vmem:[#allocation2 + $0xa8] sm:$0xff]
    %v863 = vld [vmem:[#allocation2 + $0xb0] sm:$0xff]
    %v864 = vld [vmem:[#allocation2 + $0xb8] sm:$0xff]
    %v865 = vld [vmem:[#allocation2 + $0xc0] sm:$0xff]
    %v866 = vld [vmem:[#allocation2 + $0xc8] sm:$0xff]
    %v867 = vld [vmem:[#allocation2 + $0xd0] sm:$0xff]
    %v868 = vld [vmem:[#allocation2 + $0xd8] sm:$0xff]
    %v869 = vld [vmem:[#allocation2 + $0xe0] sm:$0xff]
    %v870 = vld [vmem:[#allocation2 + $0xe8] sm:$0xff]
    %v871 = vld [vmem:[#allocation2 + $0xf0] sm:$0xff]
    %v872 = vld [vmem:[#allocation2 + $0xf8] sm:$0xff]
    %873 = vmatprep.subr.mxu0 0.0
    %874 = vmatpush1.msra.mxu0 %v841
    %875 = vmatprep.subr.mxu0 0.0
    %876 = vmatpush1.msra.mxu0 %v842
    %877 = vmatprep.subr.mxu0 0.0
    %878 = vmatpush1.msra.mxu0 %v843
    %879 = vmatprep.subr.mxu0 0.0
    %880 = vmatpush1.msra.mxu0 %v844
    %881 = vmatprep.subr.mxu0 0.0
    %882 = vmatpush1.msra.mxu0 %v845
    %883 = vmatprep.subr.mxu0 0.0
    %884 = vmatpush1.msra.mxu0 %v846
    %885 = vmatprep.subr.mxu0 0.0
    %886 = vmatpush1.msra.mxu0 %v847
    %887 = vmatprep.subr.mxu0 0.0
    %888 = vmatpush1.msra.mxu0 %v848
    %889 = vmatprep.subr.mxu0 0.0
    %890 = vmatpush1.msra.mxu0 %v849
    %891 = vmatprep.subr.mxu0 0.0
    %892 = vmatpush1.msra.mxu0 %v850
    %893 = vmatprep.subr.mxu0 0.0
    %894 = vmatpush1.msra.mxu0 %v851
    %895 = vmatprep.subr.mxu0 0.0
    %896 = vmatpush1.msra.mxu0 %v852
    %897 = vmatprep.subr.mxu0 0.0
    %898 = vmatpush1.msra.mxu0 %v853
    %899 = vmatprep.subr.mxu0 0.0
    %900 = vmatpush1.msra.mxu0 %v854
    %901 = vmatprep.subr.mxu0 0.0
    %902 = vmatpush1.msra.mxu0 %v855
    %903 = vmatprep.subr.mxu0 0.0
    %904 = vmatpush1.msra.mxu0 %v856
    %905 = vmatprep.subr.mxu0 0.0
    %906 = vmatpush1.msra.mxu0 %v857
    %907 = vmatprep.subr.mxu0 0.0
    %908 = vmatpush1.msra.mxu0 %v858
    %909 = vmatprep.subr.mxu0 0.0
    %910 = vmatpush1.msra.mxu0 %v859
    %911 = vmatprep.subr.mxu0 0.0
    %912 = vmatpush1.msra.mxu0 %v860
    %913 = vmatprep.subr.mxu0 0.0
    %914 = vmatpush1.msra.mxu0 %v861
    %915 = vmatprep.subr.mxu0 0.0
    %916 = vmatpush1.msra.mxu0 %v862
    %917 = vmatprep.subr.mxu0 0.0
    %918 = vmatpush1.msra.mxu0 %v863
    %919 = vmatprep.subr.mxu0 0.0
    %920 = vmatpush1.msra.mxu0 %v864
    %921 = vmatprep.subr.mxu0 0.0
    %922 = vmatpush1.msra.mxu0 %v865
    %923 = vmatprep.subr.mxu0 0.0
    %924 = vmatpush1.msra.mxu0 %v866
    %925 = vmatprep.subr.mxu0 0.0
    %926 = vmatpush1.msra.mxu0 %v867
    %927 = vmatprep.subr.mxu0 0.0
    %928 = vmatpush1.msra.mxu0 %v868
    %929 = vmatprep.subr.mxu0 0.0
    %930 = vmatpush1.msra.mxu0 %v869
    %931 = vmatprep.subr.mxu0 0.0
    %932 = vmatpush1.msra.mxu0 %v870
    %933 = vmatprep.subr.mxu0 0.0
    %934 = vmatpush1.msra.mxu0 %v871
    %935 = vmatprep.subr.mxu0 0.0
    %936 = vmatpush1.msra.mxu0 %v872
    %937 = vmatprep.mubr.f32.mxu0 %v51
    %938 = vmatmul.mubr.f32.gmra.mrb[0].mxu0 %v50
    %v939 = vpop.f32.mrb[0].mxu0
    %v940 = vadd.f32 0.0, %v939
    %v941 = vpop.f32.mrb[0].mxu0
    %942 = vdwg.mxu0
    %v943 = vmul.f32 %v841, %v841
    %v944 = vmul.f32 %v842, %v842
    %v945 = vmul.f32 %v843, %v843
    %v946 = vmul.f32 %v844, %v844
    %v947 = vmul.f32 %v845, %v845
    %v948 = vmul.f32 %v846, %v846
    %v949 = vmul.f32 %v847, %v847
    %v950 = vmul.f32 %v848, %v848
    %v951 = vmul.f32 %v849, %v849
    %v952 = vmul.f32 %v850, %v850
    %v953 = vmul.f32 %v851, %v851
    %v954 = vmul.f32 %v852, %v852
    %v955 = vmul.f32 %v853, %v853
    %v956 = vmul.f32 %v854, %v854
    %v957 = vmul.f32 %v855, %v855
    %v958 = vmul.f32 %v856, %v856
    %v959 = vmul.f32 %v857, %v857
    %v960 = vmul.f32 %v858, %v858
    %v961 = vmul.f32 %v859, %v859
    %v962 = vmul.f32 %v860, %v860
    %v963 = vmul.f32 %v861, %v861
    %v964 = vmul.f32 %v862, %v862
    %v965 = vmul.f32 %v863, %v863
    %v966 = vmul.f32 %v864, %v864
    %v967 = vmul.f32 %v865, %v865
    %v968 = vmul.f32 %v866, %v866
    %v969 = vmul.f32 %v867, %v867
    %v970 = vmul.f32 %v868, %v868
    %v971 = vmul.f32 %v869, %v869
    %v972 = vmul.f32 %v870, %v870
    %v973 = vmul.f32 %v871, %v871
    %v974 = vmul.f32 %v872, %v872
    %975 = vmatprep.subr.mxu0 0.0
    %976 = vmatpush1.msra.mxu0 %v943
    %977 = vmatprep.subr.mxu0 0.0
    %978 = vmatpush1.msra.mxu0 %v944
    %979 = vmatprep.subr.mxu0 0.0
    %980 = vmatpush1.msra.mxu0 %v945
    %981 = vmatprep.subr.mxu0 0.0
    %982 = vmatpush1.msra.mxu0 %v946
    %983 = vmatprep.subr.mxu0 0.0
    %984 = vmatpush1.msra.mxu0 %v947
    %985 = vmatprep.subr.mxu0 0.0
    %986 = vmatpush1.msra.mxu0 %v948
    %987 = vmatprep.subr.mxu0 0.0
    %988 = vmatpush1.msra.mxu0 %v949
    %989 = vmatprep.subr.mxu0 0.0
    %990 = vmatpush1.msra.mxu0 %v950
    %991 = vmatprep.subr.mxu0 0.0
    %992 = vmatpush1.msra.mxu0 %v951
    %993 = vmatprep.subr.mxu0 0.0
    %994 = vmatpush1.msra.mxu0 %v952
    %995 = vmatprep.subr.mxu0 0.0
    %996 = vmatpush1.msra.mxu0 %v953
    %997 = vmatprep.subr.mxu0 0.0
    %998 = vmatpush1.msra.mxu0 %v954
    %999 = vmatprep.subr.mxu0 0.0
    %1000 = vmatpush1.msra.mxu0 %v955
    %1001 = vmatprep.subr.mxu0 0.0
    %1002 = vmatpush1.msra.mxu0 %v956
    %1003 = vmatprep.subr.mxu0 0.0
    %1004 = vmatpush1.msra.mxu0 %v957
    %1005 = vmatprep.subr.mxu0 0.0
    %1006 = vmatpush1.msra.mxu0 %v958
    %1007 = vmatprep.subr.mxu0 0.0
    %1008 = vmatpush1.msra.mxu0 %v959
    %1009 = vmatprep.subr.mxu0 0.0
    %1010 = vmatpush1.msra.mxu0 %v960
    %1011 = vmatprep.subr.mxu0 0.0
    %1012 = vmatpush1.msra.mxu0 %v961
    %1013 = vmatprep.subr.mxu0 0.0
    %1014 = vmatpush1.msra.mxu0 %v962
    %1015 = vmatprep.subr.mxu0 0.0
    %1016 = vmatpush1.msra.mxu0 %v963
    %1017 = vmatprep.subr.mxu0 0.0
    %1018 = vmatpush1.msra.mxu0 %v964
    %1019 = vmatprep.subr.mxu0 0.0
    %1020 = vmatpush1.msra.mxu0 %v965
    %1021 = vmatprep.subr.mxu0 0.0
    %1022 = vmatpush1.msra.mxu0 %v966
    %1023 = vmatprep.subr.mxu0 0.0
    %1024 = vmatpush1.msra.mxu0 %v967
    %1025 = vmatprep.subr.mxu0 0.0
    %1026 = vmatpush1.msra.mxu0 %v968
    %1027 = vmatprep.subr.mxu0 0.0
    %1028 = vmatpush1.msra.mxu0 %v969
    %1029 = vmatprep.subr.mxu0 0.0
    %1030 = vmatpush1.msra.mxu0 %v970
    %1031 = vmatprep.subr.mxu0 0.0
    %1032 = vmatpush1.msra.mxu0 %v971
    %1033 = vmatprep.subr.mxu0 0.0
    %1034 = vmatpush1.msra.mxu0 %v972
    %1035 = vmatprep.subr.mxu0 0.0
    %1036 = vmatpush1.msra.mxu0 %v973
    %1037 = vmatprep.subr.mxu0 0.0
    %1038 = vmatpush1.msra.mxu0 %v974
    %1039 = vmatprep.mubr.f32.mxu0 %v51
    %1040 = vmatmul.mubr.f32.gmra.mrb[0].mxu0 %v50
    %v1041 = vpop.f32.mrb[0].mxu0
    %v1042 = vadd.f32 0.0, %v1041
    %v1043 = vpop.f32.mrb[0].mxu0
    %1044 = vdwg.mxu0
    %v1045 = vmul.f32 %v940, %v940
    %v1046 = vsub.f32 %v1042, %v1045
    %v1047 = vadd.f32 %v1046, 0.001
    %v1048 = vrsqrt.pop %v1047
    %v1050 = vrot.slane %v839, 4
    %v1052 = vmul.f32 %v1048, %v1050
    %v1053 = vmul.f32 %v940, %v1052
    %v1055 = vrot.slane %v1053, 4
    %v1057 = vsub.f32 %v840, %v1055
    %v1058 = vlaneseq
    %v1059 = vshrl.u32 %v1058, 7
    %v1060 = vsub.s32 4, %v1059
    %v1061 = vrot.slane %v1052, %v1060
    %v1062 = vmul.f32 %v841, %v1061
    %v1063 = vmul.f32 %v842, %v1061
    %v1064 = vmul.f32 %v843, %v1061
    %v1065 = vmul.f32 %v844, %v1061
    %v1066 = vmul.f32 %v845, %v1061
    %v1067 = vmul.f32 %v846, %v1061
    %v1068 = vmul.f32 %v847, %v1061
    %v1069 = vmul.f32 %v848, %v1061
    %v1070 = vmul.f32 %v849, %v1061
    %v1071 = vmul.f32 %v850, %v1061
    %v1072 = vmul.f32 %v851, %v1061
    %v1073 = vmul.f32 %v852, %v1061
    %v1074 = vmul.f32 %v853, %v1061
    %v1075 = vmul.f32 %v854, %v1061
    %v1076 = vmul.f32 %v855, %v1061
    %v1077 = vmul.f32 %v856, %v1061
    %v1078 = vmul.f32 %v857, %v1061
    %v1079 = vmul.f32 %v858, %v1061
    %v1080 = vmul.f32 %v859, %v1061
    %v1081 = vmul.f32 %v860, %v1061
    %v1082 = vmul.f32 %v861, %v1061
    %v1083 = vmul.f32 %v862, %v1061
    %v1084 = vmul.f32 %v863, %v1061
    %v1085 = vmul.f32 %v864, %v1061
    %v1086 = vmul.f32 %v865, %v1061
    %v1087 = vmul.f32 %v866, %v1061
    %v1088 = vmul.f32 %v867, %v1061
    %v1089 = vmul.f32 %v868, %v1061
    %v1090 = vmul.f32 %v869, %v1061
    %v1091 = vmul.f32 %v870, %v1061
    %v1092 = vmul.f32 %v871, %v1061
    %v1093 = vmul.f32 %v872, %v1061
    %v1094 = vlaneseq
    %v1095 = vshrl.u32 %v1094, 7
    %v1096 = vsub.s32 0, %v1095
    %v1097 = vrot.slane %v1057, %v1096
    %v1098 = vadd.f32 %v1062, %v1097
    %v1099 = vadd.f32 %v1063, %v1097
    %v1100 = vadd.f32 %v1064, %v1097
    %v1101 = vadd.f32 %v1065, %v1097
    %v1102 = vadd.f32 %v1066, %v1097
    %v1103 = vadd.f32 %v1067, %v1097
    %v1104 = vadd.f32 %v1068, %v1097
    %v1105 = vadd.f32 %v1069, %v1097
    %v1106 = vadd.f32 %v1070, %v1097
    %v1107 = vadd.f32 %v1071, %v1097
    %v1108 = vadd.f32 %v1072, %v1097
    %v1109 = vadd.f32 %v1073, %v1097
    %v1110 = vadd.f32 %v1074, %v1097
    %v1111 = vadd.f32 %v1075, %v1097
    %v1112 = vadd.f32 %v1076, %v1097
    %v1113 = vadd.f32 %v1077, %v1097
    %v1114 = vadd.f32 %v1078, %v1097
    %v1115 = vadd.f32 %v1079, %v1097
    %v1116 = vadd.f32 %v1080, %v1097
    %v1117 = vadd.f32 %v1081, %v1097
    %v1118 = vadd.f32 %v1082, %v1097
    %v1119 = vadd.f32 %v1083, %v1097
    %v1120 = vadd.f32 %v1084, %v1097
    %v1121 = vadd.f32 %v1085, %v1097
    %v1122 = vadd.f32 %v1086, %v1097
    %v1123 = vadd.f32 %v1087, %v1097
    %v1124 = vadd.f32 %v1088, %v1097
    %v1125 = vadd.f32 %v1089, %v1097
    %v1126 = vadd.f32 %v1090, %v1097
    %v1127 = vadd.f32 %v1091, %v1097
    %v1128 = vadd.f32 %v1092, %v1097
    %v1129 = vadd.f32 %v1093, %v1097
    %v1130 = vmax.f32 %v1098, 0.0
    %v1131 = vmax.f32 %v1099, 0.0
    %v1132 = vmax.f32 %v1100, 0.0
    %v1133 = vmax.f32 %v1101, 0.0
    %v1134 = vmax.f32 %v1102, 0.0
    %v1135 = vmax.f32 %v1103, 0.0
    %v1136 = vmax.f32 %v1104, 0.0
    %v1137 = vmax.f32 %v1105, 0.0
    %v1138 = vmax.f32 %v1106, 0.0
    %v1139 = vmax.f32 %v1107, 0.0
    %v1140 = vmax.f32 %v1108, 0.0
    %v1141 = vmax.f32 %v1109, 0.0
    %v1142 = vmax.f32 %v1110, 0.0
    %v1143 = vmax.f32 %v1111, 0.0
    %v1144 = vmax.f32 %v1112, 0.0
    %v1145 = vmax.f32 %v1113, 0.0
    %v1146 = vmax.f32 %v1114, 0.0
    %v1147 = vmax.f32 %v1115, 0.0
    %v1148 = vmax.f32 %v1116, 0.0
    %v1149 = vmax.f32 %v1117, 0.0
    %v1150 = vmax.f32 %v1118, 0.0
    %v1151 = vmax.f32 %v1119, 0.0
    %v1152 = vmax.f32 %v1120, 0.0
    %v1153 = vmax.f32 %v1121, 0.0
    %v1154 = vmax.f32 %v1122, 0.0
    %v1155 = vmax.f32 %v1123, 0.0
    %v1156 = vmax.f32 %v1124, 0.0
    %v1157 = vmax.f32 %v1125, 0.0
    %v1158 = vmax.f32 %v1126, 0.0
    %v1159 = vmax.f32 %v1127, 0.0
    %v1160 = vmax.f32 %v1128, 0.0
    %v1161 = vmax.f32 %v1129, 0.0
    %1162 = vset.pattern.permute.xlu0 33
    %1163 = vperm.xlu0 %1162, %v18
    %v1164 = vpop.permute.xlu0 %1163
    %1166 = vset.pattern.permute.xlu0 33
    %1167 = vperm.xlu0 %1166, %v19
    %v1168 = vpop.permute.xlu0 %1167
    %1170 = vset.pattern.permute.xlu0 33
    %1171 = vperm.xlu0 %1170, %v20
    %v1172 = vpop.permute.xlu0 %1171
    %1174 = vset.pattern.permute.xlu0 33
    %1175 = vperm.xlu0 %1174, %v21
    %v1176 = vpop.permute.xlu0 %1175
    %1178 = vset.pattern.permute.xlu0 33
    %1179 = vperm.xlu0 %1178, %v22
    %v1180 = vpop.permute.xlu0 %1179
    %1182 = vset.pattern.permute.xlu0 33
    %1183 = vperm.xlu0 %1182, %v23
    %v1184 = vpop.permute.xlu0 %1183
    %1186 = vset.pattern.permute.xlu0 33
    %1187 = vperm.xlu0 %1186, %v24
    %v1188 = vpop.permute.xlu0 %1187
    %1190 = vset.pattern.permute.xlu0 33
    %1191 = vperm.xlu0 %1190, %v25
    %v1192 = vpop.permute.xlu0 %1191
    %1194 = vset.pattern.permute.xlu0 33
    %1195 = vperm.xlu0 %1194, %v26
    %v1196 = vpop.permute.xlu0 %1195
    %1198 = vset.pattern.permute.xlu0 33
    %1199 = vperm.xlu0 %1198, %v27
    %v1200 = vpop.permute.xlu0 %1199
    %1202 = vset.pattern.permute.xlu0 33
    %1203 = vperm.xlu0 %1202, %v28
    %v1204 = vpop.permute.xlu0 %1203
    %1206 = vset.pattern.permute.xlu0 33
    %1207 = vperm.xlu0 %1206, %v29
    %v1208 = vpop.permute.xlu0 %1207
    %1210 = vset.pattern.permute.xlu0 33
    %1211 = vperm.xlu0 %1210, %v30
    %v1212 = vpop.permute.xlu0 %1211
    %1214 = vset.pattern.permute.xlu0 33
    %1215 = vperm.xlu0 %1214, %v31
    %v1216 = vpop.permute.xlu0 %1215
    %1218 = vset.pattern.permute.xlu0 33
    %1219 = vperm.xlu0 %1218, %v32
    %v1220 = vpop.permute.xlu0 %1219
    %1222 = vset.pattern.permute.xlu0 33
    %1223 = vperm.xlu0 %1222, %v33
    %v1224 = vpop.permute.xlu0 %1223
    %1226 = vset.pattern.permute.xlu0 33
    %1227 = vperm.xlu0 %1226, %v34
    %v1228 = vpop.permute.xlu0 %1227
    %1230 = vset.pattern.permute.xlu0 33
    %1231 = vperm.xlu0 %1230, %v35
    %v1232 = vpop.permute.xlu0 %1231
    %1234 = vset.pattern.permute.xlu0 33
    %1235 = vperm.xlu0 %1234, %v36
    %v1236 = vpop.permute.xlu0 %1235
    %1238 = vset.pattern.permute.xlu0 33
    %1239 = vperm.xlu0 %1238, %v37
    %v1240 = vpop.permute.xlu0 %1239
    %1242 = vset.pattern.permute.xlu0 33
    %1243 = vperm.xlu0 %1242, %v38
    %v1244 = vpop.permute.xlu0 %1243
    %1246 = vset.pattern.permute.xlu0 33
    %1247 = vperm.xlu0 %1246, %v39
    %v1248 = vpop.permute.xlu0 %1247
    %1250 = vset.pattern.permute.xlu0 33
    %1251 = vperm.xlu0 %1250, %v40
    %v1252 = vpop.permute.xlu0 %1251
    %1254 = vset.pattern.permute.xlu0 33
    %1255 = vperm.xlu0 %1254, %v41
    %v1256 = vpop.permute.xlu0 %1255
    %1258 = vset.pattern.permute.xlu0 33
    %1259 = vperm.xlu0 %1258, %v42
    %v1260 = vpop.permute.xlu0 %1259
    %1262 = vset.pattern.permute.xlu0 33
    %1263 = vperm.xlu0 %1262, %v43
    %v1264 = vpop.permute.xlu0 %1263
    %1266 = vset.pattern.permute.xlu0 33
    %1267 = vperm.xlu0 %1266, %v44
    %v1268 = vpop.permute.xlu0 %1267
    %1270 = vset.pattern.permute.xlu0 33
    %1271 = vperm.xlu0 %1270, %v45
    %v1272 = vpop.permute.xlu0 %1271
    %1274 = vset.pattern.permute.xlu0 33
    %1275 = vperm.xlu0 %1274, %v46
    %v1276 = vpop.permute.xlu0 %1275
    %1278 = vset.pattern.permute.xlu0 33
    %1279 = vperm.xlu0 %1278, %v47
    %v1280 = vpop.permute.xlu0 %1279
    %1282 = vset.pattern.permute.xlu0 33
    %1283 = vperm.xlu0 %1282, %v48
    %v1284 = vpop.permute.xlu0 %1283
    %1286 = vset.pattern.permute.xlu0 33
    %1287 = vperm.xlu0 %1286, %v49
    %v1288 = vpop.permute.xlu0 %1287
    %v1290 = vmul.f32 %v1130, %v1164
    %v1291 = vmul.f32 %v1131, %v1168
    %v1292 = vmul.f32 %v1132, %v1172
    %v1293 = vmul.f32 %v1133, %v1176
    %v1294 = vmul.f32 %v1134, %v1180
    %v1295 = vmul.f32 %v1135, %v1184
    %v1296 = vmul.f32 %v1136, %v1188
    %v1297 = vmul.f32 %v1137, %v1192
    %v1298 = vmul.f32 %v1138, %v1196
    %v1299 = vmul.f32 %v1139, %v1200
    %v1300 = vmul.f32 %v1140, %v1204
    %v1301 = vmul.f32 %v1141, %v1208
    %v1302 = vmul.f32 %v1142, %v1212
    %v1303 = vmul.f32 %v1143, %v1216
    %v1304 = vmul.f32 %v1144, %v1220
    %v1305 = vmul.f32 %v1145, %v1224
    %v1306 = vmul.f32 %v1146, %v1228
    %v1307 = vmul.f32 %v1147, %v1232
    %v1308 = vmul.f32 %v1148, %v1236
    %v1309 = vmul.f32 %v1149, %v1240
    %v1310 = vmul.f32 %v1150, %v1244
    %v1311 = vmul.f32 %v1151, %v1248
    %v1312 = vmul.f32 %v1152, %v1252
    %v1313 = vmul.f32 %v1153, %v1256
    %v1314 = vmul.f32 %v1154, %v1260
    %v1315 = vmul.f32 %v1155, %v1264
    %v1316 = vmul.f32 %v1156, %v1268
    %v1317 = vmul.f32 %v1157, %v1272
    %v1318 = vmul.f32 %v1158, %v1276
    %v1319 = vmul.f32 %v1159, %v1280
    %v1320 = vmul.f32 %v1160, %v1284
    %v1321 = vmul.f32 %v1161, %v1288
    %v1322 = vld [vmem:[%s2 + $0x90] sm:$0xff]
    %v1323 = vld [vmem:[%s2 + $0x98] sm:$0xff]
    %v1324 = vld [vmem:[%s2 + $0xa0] sm:$0xff]
    %v1325 = vld [vmem:[%s2 + $0xa8] sm:$0xff]
    %v1326 = vld [vmem:[%s2 + $0xb0] sm:$0xff]
    %v1327 = vld [vmem:[%s2 + $0xb8] sm:$0xff]
    %v1328 = vld [vmem:[%s2 + $0xc0] sm:$0xff]
    %v1329 = vld [vmem:[%s2 + $0xc8] sm:$0xff]
    %v1331 = vsel %vm806, %v1290, 0
    %v1334 = vsel %vm806, %v1291, 0
    %v1337 = vsel %vm806, %v1292, 0
    %v1340 = vsel %vm806, %v1293, 0
    %v1343 = vsel %vm806, %v1294, 0
    %v1346 = vsel %vm806, %v1295, 0
    %v1349 = vsel %vm806, %v1296, 0
    %v1352 = vsel %vm806, %v1297, 0
    %v1355 = vsel %vm806, %v1298, 0
    %v1358 = vsel %vm806, %v1299, 0
    %v1361 = vsel %vm806, %v1300, 0
    %v1364 = vsel %vm806, %v1301, 0
    %v1367 = vsel %vm806, %v1302, 0
    %v1370 = vsel %vm806, %v1303, 0
    %v1373 = vsel %vm806, %v1304, 0
    %v1376 = vsel %vm806, %v1305, 0
    %v1379 = vsel %vm806, %v1306, 0
    %v1382 = vsel %vm806, %v1307, 0
    %v1385 = vsel %vm806, %v1308, 0
    %v1388 = vsel %vm806, %v1309, 0
    %v1391 = vsel %vm806, %v1310, 0
    %v1394 = vsel %vm806, %v1311, 0
    %v1397 = vsel %vm806, %v1312, 0
    %v1400 = vsel %vm806, %v1313, 0
    %v1403 = vsel %vm806, %v1314, 0
    %v1406 = vsel %vm806, %v1315, 0
    %v1409 = vsel %vm806, %v1316, 0
    %v1412 = vsel %vm806, %v1317, 0
    %v1415 = vsel %vm806, %v1318, 0
    %v1418 = vsel %vm806, %v1319, 0
    %v1421 = vsel %vm806, %v1320, 0
    %v1424 = vsel %vm806, %v1321, 0
    %1426 = vmatprep.subr.mxu0 0.0
    %1427 = vmatpush1.msra.mxu0 %v1322
    %1428 = vmatprep.subr.mxu0 0.0
    %1429 = vmatpush1.msra.mxu0 %v1323
    %1430 = vmatprep.subr.mxu0 0.0
    %1431 = vmatpush1.msra.mxu0 %v1324
    %1432 = vmatprep.subr.mxu0 0.0
    %1433 = vmatpush1.msra.mxu0 %v1325
    %1434 = vmatprep.subr.mxu0 0.0
    %1435 = vmatpush1.msra.mxu0 %v1326
    %1436 = vmatprep.subr.mxu0 0.0
    %1437 = vmatpush1.msra.mxu0 %v1327
    %1438 = vmatprep.subr.mxu0 0.0
    %1439 = vmatpush1.msra.mxu0 %v1328
    %1440 = vmatprep.subr.mxu0 0.0
    %1441 = vmatpush1.msra.mxu0 %v1329
    %1442 = vmatprep.subr.mxu0 0.0
    %1443 = vmatpush1.msra.mxu0 0.0
    %1444 = vmatprep.subr.mxu0 0.0
    %1445 = vmatpush1.msra.mxu0 0.0
    %1446 = vmatprep.subr.mxu0 0.0
    %1447 = vmatpush1.msra.mxu0 0.0
    %1448 = vmatprep.subr.mxu0 0.0
    %1449 = vmatpush1.msra.mxu0 0.0
    %1450 = vmatprep.subr.mxu0 0.0
    %1451 = vmatpush1.msra.mxu0 0.0
    %1452 = vmatprep.subr.mxu0 0.0
    %1453 = vmatpush1.msra.mxu0 0.0
    %1454 = vmatprep.subr.mxu0 0.0
    %1455 = vmatpush1.msra.mxu0 0.0
    %1456 = vmatprep.subr.mxu0 0.0
    %1457 = vmatpush1.msra.mxu0 0.0
    %1458 = vmatprep.subr.mxu0 0.0
    %1459 = vmatpush1.msra.mxu0 0.0
    %1460 = vmatprep.subr.mxu0 0.0
    %1461 = vmatpush1.msra.mxu0 0.0
    %1462 = vmatprep.subr.mxu0 0.0
    %1463 = vmatpush1.msra.mxu0 0.0
    %1464 = vmatprep.subr.mxu0 0.0
    %1465 = vmatpush1.msra.mxu0 0.0
    %1466 = vmatprep.subr.mxu0 0.0
    %1467 = vmatpush1.msra.mxu0 0.0
    %1468 = vmatprep.subr.mxu0 0.0
    %1469 = vmatpush1.msra.mxu0 0.0
    %1470 = vmatprep.subr.mxu0 0.0
    %1471 = vmatpush1.msra.mxu0 0.0
    %1472 = vmatprep.subr.mxu0 0.0
    %1473 = vmatpush1.msra.mxu0 0.0
    %1474 = vmatprep.subr.mxu0 0.0
    %1475 = vmatpush1.msra.mxu0 0.0
    %1476 = vmatprep.subr.mxu0 0.0
    %1477 = vmatpush1.msra.mxu0 0.0
    %1478 = vmatprep.subr.mxu0 0.0
    %1479 = vmatpush1.msra.mxu0 0.0
    %1480 = vmatprep.subr.mxu0 0.0
    %1481 = vmatpush1.msra.mxu0 0.0
    %1482 = vmatprep.subr.mxu0 0.0
    %1483 = vmatpush1.msra.mxu0 0.0
    %1484 = vmatprep.subr.mxu0 0.0
    %1485 = vmatpush1.msra.mxu0 0.0
    %1486 = vmatprep.subr.mxu0 0.0
    %1487 = vmatpush1.msra.mxu0 0.0
    %1488 = vmatprep.subr.mxu0 0.0
    %1489 = vmatpush1.msra.mxu0 0.0
    %1490 = vmatprep.mubr.f32.mxu0 0.0
    %1491 = vmatmul.mubr.f32.gmra.mrb[0].mxu0 %v1331
    %v1492 = vpop.f32.mrb[0].mxu0
    %v1493 = vadd.f32 0.0, %v1492
    %v1494 = vpop.f32.mrb[0].mxu0
    %1495 = vmatprep.mubr.f32.mxu0 0.0
    %1496 = vmatmul.mubr.f32.gmra.mrb[0].mxu0 %v1334
    %v1497 = vpop.f32.mrb[0].mxu0
    %v1498 = vadd.f32 0.0, %v1497
    %v1499 = vpop.f32.mrb[0].mxu0
    %1500 = vmatprep.mubr.f32.mxu0 0.0
    %1501 = vmatmul.mubr.f32.gmra.mrb[0].mxu0 %v1337
    %v1502 = vpop.f32.mrb[0].mxu0
    %v1503 = vadd.f32 0.0, %v1502
    %v1504 = vpop.f32.mrb[0].mxu0
    %1505 = vmatprep.mubr.f32.mxu0 0.0
    %1506 = vmatmul.mubr.f32.gmra.mrb[0].mxu0 %v1340
    %v1507 = vpop.f32.mrb[0].mxu0
    %v1508 = vadd.f32 0.0, %v1507
    %v1509 = vpop.f32.mrb[0].mxu0
    %1510 = vmatprep.mubr.f32.mxu0 0.0
    %1511 = vmatmul.mubr.f32.gmra.mrb[0].mxu0 %v1343
    %v1512 = vpop.f32.mrb[0].mxu0
    %v1513 = vadd.f32 0.0, %v1512
    %v1514 = vpop.f32.mrb[0].mxu0
    %1515 = vmatprep.mubr.f32.mxu0 0.0
    %1516 = vmatmul.mubr.f32.gmra.mrb[0].mxu0 %v1346
    %v1517 = vpop.f32.mrb[0].mxu0
    %v1518 = vadd.f32 0.0, %v1517
    %v1519 = vpop.f32.mrb[0].mxu0
    %1520 = vmatprep.mubr.f32.mxu0 0.0
    %1521 = vmatmul.mubr.f32.gmra.mrb[0].mxu0 %v1349
    %v1522 = vpop.f32.mrb[0].mxu0
    %v1523 = vadd.f32 0.0, %v1522
    %v1524 = vpop.f32.mrb[0].mxu0
    %1525 = vmatprep.mubr.f32.mxu0 0.0
    %1526 = vmatmul.mubr.f32.gmra.mrb[0].mxu0 %v1352
    %v1527 = vpop.f32.mrb[0].mxu0
    %v1528 = vadd.f32 0.0, %v1527
    %v1529 = vpop.f32.mrb[0].mxu0
    %1530 = vmatprep.mubr.f32.mxu0 0.0
    %1531 = vmatmul.mubr.f32.gmra.mrb[0].mxu0 %v1355
    %v1532 = vpop.f32.mrb[0].mxu0
    %v1533 = vadd.f32 0.0, %v1532
    %v1534 = vpop.f32.mrb[0].mxu0
    %1535 = vmatprep.mubr.f32.mxu0 0.0
    %1536 = vmatmul.mubr.f32.gmra.mrb[0].mxu0 %v1358
    %v1537 = vpop.f32.mrb[0].mxu0
    %v1538 = vadd.f32 0.0, %v1537
    %v1539 = vpop.f32.mrb[0].mxu0
    %1540 = vmatprep.mubr.f32.mxu0 0.0
    %1541 = vmatmul.mubr.f32.gmra.mrb[0].mxu0 %v1361
    %v1542 = vpop.f32.mrb[0].mxu0
    %v1543 = vadd.f32 0.0, %v1542
    %v1544 = vpop.f32.mrb[0].mxu0
    %1545 = vmatprep.mubr.f32.mxu0 0.0
    %1546 = vmatmul.mubr.f32.gmra.mrb[0].mxu0 %v1364
    %v1547 = vpop.f32.mrb[0].mxu0
    %v1548 = vadd.f32 0.0, %v1547
    %v1549 = vpop.f32.mrb[0].mxu0
    %1550 = vmatprep.mubr.f32.mxu0 0.0
    %1551 = vmatmul.mubr.f32.gmra.mrb[0].mxu0 %v1367
    %v1552 = vpop.f32.mrb[0].mxu0
    %v1553 = vadd.f32 0.0, %v1552
    %v1554 = vpop.f32.mrb[0].mxu0
    %1555 = vmatprep.mubr.f32.mxu0 0.0
    %1556 = vmatmul.mubr.f32.gmra.mrb[0].mxu0 %v1370
    %v1557 = vpop.f32.mrb[0].mxu0
    %v1558 = vadd.f32 0.0, %v1557
    %v1559 = vpop.f32.mrb[0].mxu0
    %1560 = vmatprep.mubr.f32.mxu0 0.0
    %1561 = vmatmul.mubr.f32.gmra.mrb[0].mxu0 %v1373
    %v1562 = vpop.f32.mrb[0].mxu0
    %v1563 = vadd.f32 0.0, %v1562
    %v1564 = vpop.f32.mrb[0].mxu0
    %1565 = vmatprep.mubr.f32.mxu0 0.0
    %1566 = vmatmul.mubr.f32.gmra.mrb[0].mxu0 %v1376
    %v1567 = vpop.f32.mrb[0].mxu0
    %v1568 = vadd.f32 0.0, %v1567
    %v1569 = vpop.f32.mrb[0].mxu0
    %1570 = vmatprep.mubr.f32.mxu0 0.0
    %1571 = vmatmul.mubr.f32.gmra.mrb[0].mxu0 %v1379
    %v1572 = vpop.f32.mrb[0].mxu0
    %v1573 = vadd.f32 0.0, %v1572
    %v1574 = vpop.f32.mrb[0].mxu0
    %1575 = vmatprep.mubr.f32.mxu0 0.0
    %1576 = vmatmul.mubr.f32.gmra.mrb[0].mxu0 %v1382
    %v1577 = vpop.f32.mrb[0].mxu0
    %v1578 = vadd.f32 0.0, %v1577
    %v1579 = vpop.f32.mrb[0].mxu0
    %1580 = vmatprep.mubr.f32.mxu0 0.0
    %1581 = vmatmul.mubr.f32.gmra.mrb[0].mxu0 %v1385
    %v1582 = vpop.f32.mrb[0].mxu0
    %v1583 = vadd.f32 0.0, %v1582
    %v1584 = vpop.f32.mrb[0].mxu0
    %1585 = vmatprep.mubr.f32.mxu0 0.0
    %1586 = vmatmul.mubr.f32.gmra.mrb[0].mxu0 %v1388
    %v1587 = vpop.f32.mrb[0].mxu0
    %v1588 = vadd.f32 0.0, %v1587
    %v1589 = vpop.f32.mrb[0].mxu0
    %1590 = vmatprep.mubr.f32.mxu0 0.0
    %1591 = vmatmul.mubr.f32.gmra.mrb[0].mxu0 %v1391
    %v1592 = vpop.f32.mrb[0].mxu0
    %v1593 = vadd.f32 0.0, %v1592
    %v1594 = vpop.f32.mrb[0].mxu0
    %1595 = vmatprep.mubr.f32.mxu0 0.0
    %1596 = vmatmul.mubr.f32.gmra.mrb[0].mxu0 %v1394
    %v1597 = vpop.f32.mrb[0].mxu0
    %v1598 = vadd.f32 0.0, %v1597
    %v1599 = vpop.f32.mrb[0].mxu0
    %1600 = vmatprep.mubr.f32.mxu0 0.0
    %1601 = vmatmul.mubr.f32.gmra.mrb[0].mxu0 %v1397
    %v1602 = vpop.f32.mrb[0].mxu0
    %v1603 = vadd.f32 0.0, %v1602
    %v1604 = vpop.f32.mrb[0].mxu0
    %1605 = vmatprep.mubr.f32.mxu0 0.0
    %1606 = vmatmul.mubr.f32.gmra.mrb[0].mxu0 %v1400
    %v1607 = vpop.f32.mrb[0].mxu0
    %v1608 = vadd.f32 0.0, %v1607
    %v1609 = vpop.f32.mrb[0].mxu0
    %1610 = vmatprep.mubr.f32.mxu0 0.0
    %1611 = vmatmul.mubr.f32.gmra.mrb[0].mxu0 %v1403
    %v1612 = vpop.f32.mrb[0].mxu0
    %v1613 = vadd.f32 0.0, %v1612
    %v1614 = vpop.f32.mrb[0].mxu0
    %1615 = vmatprep.mubr.f32.mxu0 0.0
    %1616 = vmatmul.mubr.f32.gmra.mrb[0].mxu0 %v1406
    %v1617 = vpop.f32.mrb[0].mxu0
    %v1618 = vadd.f32 0.0, %v1617
    %v1619 = vpop.f32.mrb[0].mxu0
    %1620 = vmatprep.mubr.f32.mxu0 0.0
    %1621 = vmatmul.mubr.f32.gmra.mrb[0].mxu0 %v1409
    %v1622 = vpop.f32.mrb[0].mxu0
    %v1623 = vadd.f32 0.0, %v1622
    %v1624 = vpop.f32.mrb[0].mxu0
    %1625 = vmatprep.mubr.f32.mxu0 0.0
    %1626 = vmatmul.mubr.f32.gmra.mrb[0].mxu0 %v1412
    %v1627 = vpop.f32.mrb[0].mxu0
    %v1628 = vadd.f32 0.0, %v1627
    %v1629 = vpop.f32.mrb[0].mxu0
    %1630 = vmatprep.mubr.f32.mxu0 0.0
    %1631 = vmatmul.mubr.f32.gmra.mrb[0].mxu0 %v1415
    %v1632 = vpop.f32.mrb[0].mxu0
    %v1633 = vadd.f32 0.0, %v1632
    %v1634 = vpop.f32.mrb[0].mxu0
    %1635 = vmatprep.mubr.f32.mxu0 0.0
    %1636 = vmatmul.mubr.f32.gmra.mrb[0].mxu0 %v1418
    %v1637 = vpop.f32.mrb[0].mxu0
    %v1638 = vadd.f32 0.0, %v1637
    %v1639 = vpop.f32.mrb[0].mxu0
    %1640 = vmatprep.mubr.f32.mxu0 0.0
    %1641 = vmatmul.mubr.f32.gmra.mrb[0].mxu0 %v1421
    %v1642 = vpop.f32.mrb[0].mxu0
    %v1643 = vadd.f32 0.0, %v1642
    %v1644 = vpop.f32.mrb[0].mxu0
    %1645 = vmatprep.mubr.f32.mxu0 0.0
    %1646 = vmatmul.mubr.f32.gmra.mrb[0].mxu0 %v1424
    %v1647 = vpop.f32.mrb[0].mxu0
    %v1648 = vadd.f32 0.0, %v1647
    %v1649 = vpop.f32.mrb[0].mxu0
    %1650 = vdwg.mxu0
    %1651 = vst [vmem:[#allocation3] sm:$0xff] %v1493
    %1652 = vst [vmem:[#allocation3 + $0x8] sm:$0xff] %v1498
    %1653 = vst [vmem:[#allocation3 + $0x10] sm:$0xff] %v1503
    %1654 = vst [vmem:[#allocation3 + $0x18] sm:$0xff] %v1508
    %1655 = vst [vmem:[#allocation3 + $0x20] sm:$0xff] %v1513
    %1656 = vst [vmem:[#allocation3 + $0x28] sm:$0xff] %v1518
    %1657 = vst [vmem:[#allocation3 + $0x30] sm:$0xff] %v1523
    %1658 = vst [vmem:[#allocation3 + $0x38] sm:$0xff] %v1528
    %1659 = vst [vmem:[#allocation3 + $0x40] sm:$0xff] %v1533
    %1660 = vst [vmem:[#allocation3 + $0x48] sm:$0xff] %v1538
    %1661 = vst [vmem:[#allocation3 + $0x50] sm:$0xff] %v1543
    %1662 = vst [vmem:[#allocation3 + $0x58] sm:$0xff] %v1548
    %1663 = vst [vmem:[#allocation3 + $0x60] sm:$0xff] %v1553
    %1664 = vst [vmem:[#allocation3 + $0x68] sm:$0xff] %v1558
    %1665 = vst [vmem:[#allocation3 + $0x70] sm:$0xff] %v1563
    %1666 = vst [vmem:[#allocation3 + $0x78] sm:$0xff] %v1568
    %1667 = vst [vmem:[#allocation3 + $0x80] sm:$0xff] %v1573
    %1668 = vst [vmem:[#allocation3 + $0x88] sm:$0xff] %v1578
    %1669 = vst [vmem:[#allocation3 + $0x90] sm:$0xff] %v1583
    %1670 = vst [vmem:[#allocation3 + $0x98] sm:$0xff] %v1588
    %1671 = vst [vmem:[#allocation3 + $0xa0] sm:$0xff] %v1593
    %1672 = vst [vmem:[#allocation3 + $0xa8] sm:$0xff] %v1598
    %1673 = vst [vmem:[#allocation3 + $0xb0] sm:$0xff] %v1603
    %1674 = vst [vmem:[#allocation3 + $0xb8] sm:$0xff] %v1608
    %1675 = vst [vmem:[#allocation3 + $0xc0] sm:$0xff] %v1613
    %1676 = vst [vmem:[#allocation3 + $0xc8] sm:$0xff] %v1618
    %1677 = vst [vmem:[#allocation3 + $0xd0] sm:$0xff] %v1623
    %1678 = vst [vmem:[#allocation3 + $0xd8] sm:$0xff] %v1628
    %1679 = vst [vmem:[#allocation3 + $0xe0] sm:$0xff] %v1633
    %1680 = vst [vmem:[#allocation3 + $0xe8] sm:$0xff] %v1638
    %1681 = vst [vmem:[#allocation3 + $0xf0] sm:$0xff] %v1643
    %1682 = vst [vmem:[#allocation3 + $0xf8] sm:$0xff] %v1648
    %v1683 = vld [vmem:[#allocation3 + $0x4] sm:$0xff]
    %v1684 = vld [vmem:[#allocation3 + $0xc] sm:$0xff]
    %v1685 = vld [vmem:[#allocation3 + $0x14] sm:$0xff]
    %v1686 = vld [vmem:[#allocation3 + $0x1c] sm:$0xff]
    %v1687 = vld [vmem:[#allocation3 + $0x24] sm:$0xff]
    %v1688 = vld [vmem:[#allocation3 + $0x2c] sm:$0xff]
    %v1689 = vld [vmem:[#allocation3 + $0x34] sm:$0xff]
    %v1690 = vld [vmem:[#allocation3 + $0x3c] sm:$0xff]
    %v1691 = vld [vmem:[#allocation3 + $0x44] sm:$0xff]
    %v1692 = vld [vmem:[#allocation3 + $0x4c] sm:$0xff]
    %v1693 = vld [vmem:[#allocation3 + $0x54] sm:$0xff]
    %v1694 = vld [vmem:[#allocation3 + $0x5c] sm:$0xff]
    %v1695 = vld [vmem:[#allocation3 + $0x64] sm:$0xff]
    %v1696 = vld [vmem:[#allocation3 + $0x6c] sm:$0xff]
    %v1697 = vld [vmem:[#allocation3 + $0x74] sm:$0xff]
    %v1698 = vld [vmem:[#allocation3 + $0x7c] sm:$0xff]
    %v1699 = vld [vmem:[#allocation3 + $0x84] sm:$0xff]
    %v1700 = vld [vmem:[#allocation3 + $0x8c] sm:$0xff]
    %v1701 = vld [vmem:[#allocation3 + $0x94] sm:$0xff]
    %v1702 = vld [vmem:[#allocation3 + $0x9c] sm:$0xff]
    %v1703 = vld [vmem:[#allocation3 + $0xa4] sm:$0xff]
    %v1704 = vld [vmem:[#allocation3 + $0xac] sm:$0xff]
    %v1705 = vld [vmem:[#allocation3 + $0xb4] sm:$0xff]
    %v1706 = vld [vmem:[#allocation3 + $0xbc] sm:$0xff]
    %v1707 = vld [vmem:[#allocation3 + $0xc4] sm:$0xff]
    %v1708 = vld [vmem:[#allocation3 + $0xcc] sm:$0xff]
    %v1709 = vld [vmem:[#allocation3 + $0xd4] sm:$0xff]
    %v1710 = vld [vmem:[#allocation3 + $0xdc] sm:$0xff]
    %v1711 = vld [vmem:[%s3 + $0x10] sm:$0x1]
    %v1712 = vlaneseq
    %v1713 = vshrl.u32 %v1712, 7
    %v1714 = vsub.s32 0, %v1713
    %v1715 = vrot.slane %v1711, %v1714
    %v1716 = vmul.f32 %v1683, %v1715
    %v1717 = vmul.f32 %v1684, %v1715
    %v1718 = vmul.f32 %v1685, %v1715
    %v1719 = vmul.f32 %v1686, %v1715
    %v1720 = vmul.f32 %v1687, %v1715
    %v1721 = vmul.f32 %v1688, %v1715
    %v1722 = vmul.f32 %v1689, %v1715
    %v1723 = vmul.f32 %v1690, %v1715
    %v1724 = vmul.f32 %v1691, %v1715
    %v1725 = vmul.f32 %v1692, %v1715
    %v1726 = vmul.f32 %v1693, %v1715
    %v1727 = vmul.f32 %v1694, %v1715
    %v1728 = vmul.f32 %v1695, %v1715
    %v1729 = vmul.f32 %v1696, %v1715
    %v1730 = vmul.f32 %v1697, %v1715
    %v1731 = vmul.f32 %v1698, %v1715
    %v1732 = vmul.f32 %v1699, %v1715
    %v1733 = vmul.f32 %v1700, %v1715
    %v1734 = vmul.f32 %v1701, %v1715
    %v1735 = vmul.f32 %v1702, %v1715
    %v1736 = vmul.f32 %v1703, %v1715
    %v1737 = vmul.f32 %v1704, %v1715
    %v1738 = vmul.f32 %v1705, %v1715
    %v1739 = vmul.f32 %v1706, %v1715
    %v1740 = vmul.f32 %v1707, %v1715
    %v1741 = vmul.f32 %v1708, %v1715
    %v1742 = vmul.f32 %v1709, %v1715
    %v1743 = vmul.f32 %v1710, %v1715
    %v1744 = vld [vmem:[#allocation3 + $0x5] sm:$0xff]
    %v1745 = vld [vmem:[#allocation3 + $0xd] sm:$0xff]
    %v1746 = vld [vmem:[#allocation3 + $0x15] sm:$0xff]
    %v1747 = vld [vmem:[#allocation3 + $0x1d] sm:$0xff]
    %v1748 = vld [vmem:[#allocation3 + $0x25] sm:$0xff]
    %v1749 = vld [vmem:[#allocation3 + $0x2d] sm:$0xff]
    %v1750 = vld [vmem:[#allocation3 + $0x35] sm:$0xff]
    %v1751 = vld [vmem:[#allocation3 + $0x3d] sm:$0xff]
    %v1752 = vld [vmem:[#allocation3 + $0x45] sm:$0xff]
    %v1753 = vld [vmem:[#allocation3 + $0x4d] sm:$0xff]
    %v1754 = vld [vmem:[#allocation3 + $0x55] sm:$0xff]
    %v1755 = vld [vmem:[#allocation3 + $0x5d] sm:$0xff]
    %v1756 = vld [vmem:[#allocation3 + $0x65] sm:$0xff]
    %v1757 = vld [vmem:[#allocation3 + $0x6d] sm:$0xff]
    %v1758 = vld [vmem:[#allocation3 + $0x75] sm:$0xff]
    %v1759 = vld [vmem:[#allocation3 + $0x7d] sm:$0xff]
    %v1760 = vld [vmem:[#allocation3 + $0x85] sm:$0xff]
    %v1761 = vld [vmem:[#allocation3 + $0x8d] sm:$0xff]
    %v1762 = vld [vmem:[#allocation3 + $0x95] sm:$0xff]
    %v1763 = vld [vmem:[#allocation3 + $0x9d] sm:$0xff]
    %v1764 = vld [vmem:[#allocation3 + $0xa5] sm:$0xff]
    %v1765 = vld [vmem:[#allocation3 + $0xad] sm:$0xff]
    %v1766 = vld [vmem:[#allocation3 + $0xb5] sm:$0xff]
    %v1767 = vld [vmem:[#allocation3 + $0xbd] sm:$0xff]
    %v1768 = vld [vmem:[#allocation3 + $0xc5] sm:$0xff]
    %v1769 = vld [vmem:[#allocation3 + $0xcd] sm:$0xff]
    %v1770 = vld [vmem:[#allocation3 + $0xd5] sm:$0xff]
    %v1771 = vld [vmem:[#allocation3 + $0xdd] sm:$0xff]
    %v1772 = vld [vmem:[%s3 + $0x11] sm:$0x1]
    %v1773 = vlaneseq
    %v1774 = vshrl.u32 %v1773, 7
    %v1775 = vsub.s32 0, %v1774
    %v1776 = vrot.slane %v1772, %v1775
    %v1777 = vmul.f32 %v1744, %v1776
    %v1778 = vmul.f32 %v1745, %v1776
    %v1779 = vmul.f32 %v1746, %v1776
    %v1780 = vmul.f32 %v1747, %v1776
    %v1781 = vmul.f32 %v1748, %v1776
    %v1782 = vmul.f32 %v1749, %v1776
    %v1783 = vmul.f32 %v1750, %v1776
    %v1784 = vmul.f32 %v1751, %v1776
    %v1785 = vmul.f32 %v1752, %v1776
    %v1786 = vmul.f32 %v1753, %v1776
    %v1787 = vmul.f32 %v1754, %v1776
    %v1788 = vmul.f32 %v1755, %v1776
    %v1789 = vmul.f32 %v1756, %v1776
    %v1790 = vmul.f32 %v1757, %v1776
    %v1791 = vmul.f32 %v1758, %v1776
    %v1792 = vmul.f32 %v1759, %v1776
    %v1793 = vmul.f32 %v1760, %v1776
    %v1794 = vmul.f32 %v1761, %v1776
    %v1795 = vmul.f32 %v1762, %v1776
    %v1796 = vmul.f32 %v1763, %v1776
    %v1797 = vmul.f32 %v1764, %v1776
    %v1798 = vmul.f32 %v1765, %v1776
    %v1799 = vmul.f32 %v1766, %v1776
    %v1800 = vmul.f32 %v1767, %v1776
    %v1801 = vmul.f32 %v1768, %v1776
    %v1802 = vmul.f32 %v1769, %v1776
    %v1803 = vmul.f32 %v1770, %v1776
    %v1804 = vmul.f32 %v1771, %v1776
    %v1805 = vadd.f32 %v1716, %v1777
    %v1806 = vadd.f32 %v1717, %v1778
    %v1807 = vadd.f32 %v1718, %v1779
    %v1808 = vadd.f32 %v1719, %v1780
    %v1809 = vadd.f32 %v1720, %v1781
    %v1810 = vadd.f32 %v1721, %v1782
    %v1811 = vadd.f32 %v1722, %v1783
    %v1812 = vadd.f32 %v1723, %v1784
    %v1813 = vadd.f32 %v1724, %v1785
    %v1814 = vadd.f32 %v1725, %v1786
    %v1815 = vadd.f32 %v1726, %v1787
    %v1816 = vadd.f32 %v1727, %v1788
    %v1817 = vadd.f32 %v1728, %v1789
    %v1818 = vadd.f32 %v1729, %v1790
    %v1819 = vadd.f32 %v1730, %v1791
    %v1820 = vadd.f32 %v1731, %v1792
    %v1821 = vadd.f32 %v1732, %v1793
    %v1822 = vadd.f32 %v1733, %v1794
    %v1823 = vadd.f32 %v1734, %v1795
    %v1824 = vadd.f32 %v1735, %v1796
    %v1825 = vadd.f32 %v1736, %v1797
    %v1826 = vadd.f32 %v1737, %v1798
    %v1827 = vadd.f32 %v1738, %v1799
    %v1828 = vadd.f32 %v1739, %v1800
    %v1829 = vadd.f32 %v1740, %v1801
    %v1830 = vadd.f32 %v1741, %v1802
    %v1831 = vadd.f32 %v1742, %v1803
    %v1832 = vadd.f32 %v1743, %v1804
    %v1833 = vld [vmem:[#allocation3 + $0x6] sm:$0xff]
    %v1834 = vld [vmem:[#allocation3 + $0xe] sm:$0xff]
    %v1835 = vld [vmem:[#allocation3 + $0x16] sm:$0xff]
    %v1836 = vld [vmem:[#allocation3 + $0x1e] sm:$0xff]
    %v1837 = vld [vmem:[#allocation3 + $0x26] sm:$0xff]
    %v1838 = vld [vmem:[#allocation3 + $0x2e] sm:$0xff]
    %v1839 = vld [vmem:[#allocation3 + $0x36] sm:$0xff]
    %v1840 = vld [vmem:[#allocation3 + $0x3e] sm:$0xff]
    %v1841 = vld [vmem:[#allocation3 + $0x46] sm:$0xff]
    %v1842 = vld [vmem:[#allocation3 + $0x4e] sm:$0xff]
    %v1843 = vld [vmem:[#allocation3 + $0x56] sm:$0xff]
    %v1844 = vld [vmem:[#allocation3 + $0x5e] sm:$0xff]
    %v1845 = vld [vmem:[#allocation3 + $0x66] sm:$0xff]
    %v1846 = vld [vmem:[#allocation3 + $0x6e] sm:$0xff]
    %v1847 = vld [vmem:[#allocation3 + $0x76] sm:$0xff]
    %v1848 = vld [vmem:[#allocation3 + $0x7e] sm:$0xff]
    %v1849 = vld [vmem:[#allocation3 + $0x86] sm:$0xff]
    %v1850 = vld [vmem:[#allocation3 + $0x8e] sm:$0xff]
    %v1851 = vld [vmem:[#allocation3 + $0x96] sm:$0xff]
    %v1852 = vld [vmem:[#allocation3 + $0x9e] sm:$0xff]
    %v1853 = vld [vmem:[#allocation3 + $0xa6] sm:$0xff]
    %v1854 = vld [vmem:[#allocation3 + $0xae] sm:$0xff]
    %v1855 = vld [vmem:[#allocation3 + $0xb6] sm:$0xff]
    %v1856 = vld [vmem:[#allocation3 + $0xbe] sm:$0xff]
    %v1857 = vld [vmem:[#allocation3 + $0xc6] sm:$0xff]
    %v1858 = vld [vmem:[#allocation3 + $0xce] sm:$0xff]
    %v1859 = vld [vmem:[#allocation3 + $0xd6] sm:$0xff]
    %v1860 = vld [vmem:[#allocation3 + $0xde] sm:$0xff]
    %v1861 = vld [vmem:[%s3 + $0x12] sm:$0x1]
    %v1862 = vlaneseq
    %v1863 = vshrl.u32 %v1862, 7
    %v1864 = vsub.s32 0, %v1863
    %v1865 = vrot.slane %v1861, %v1864
    %v1866 = vmul.f32 %v1833, %v1865
    %v1867 = vmul.f32 %v1834, %v1865
    %v1868 = vmul.f32 %v1835, %v1865
    %v1869 = vmul.f32 %v1836, %v1865
    %v1870 = vmul.f32 %v1837, %v1865
    %v1871 = vmul.f32 %v1838, %v1865
    %v1872 = vmul.f32 %v1839, %v1865
    %v1873 = vmul.f32 %v1840, %v1865
    %v1874 = vmul.f32 %v1841, %v1865
    %v1875 = vmul.f32 %v1842, %v1865
    %v1876 = vmul.f32 %v1843, %v1865
    %v1877 = vmul.f32 %v1844, %v1865
    %v1878 = vmul.f32 %v1845, %v1865
    %v1879 = vmul.f32 %v1846, %v1865
    %v1880 = vmul.f32 %v1847, %v1865
    %v1881 = vmul.f32 %v1848, %v1865
    %v1882 = vmul.f32 %v1849, %v1865
    %v1883 = vmul.f32 %v1850, %v1865
    %v1884 = vmul.f32 %v1851, %v1865
    %v1885 = vmul.f32 %v1852, %v1865
    %v1886 = vmul.f32 %v1853, %v1865
    %v1887 = vmul.f32 %v1854, %v1865
    %v1888 = vmul.f32 %v1855, %v1865
    %v1889 = vmul.f32 %v1856, %v1865
    %v1890 = vmul.f32 %v1857, %v1865
    %v1891 = vmul.f32 %v1858, %v1865
    %v1892 = vmul.f32 %v1859, %v1865
    %v1893 = vmul.f32 %v1860, %v1865
    %v1894 = vadd.f32 %v1805, %v1866
    %v1895 = vadd.f32 %v1806, %v1867
    %v1896 = vadd.f32 %v1807, %v1868
    %v1897 = vadd.f32 %v1808, %v1869
    %v1898 = vadd.f32 %v1809, %v1870
    %v1899 = vadd.f32 %v1810, %v1871
    %v1900 = vadd.f32 %v1811, %v1872
    %v1901 = vadd.f32 %v1812, %v1873
    %v1902 = vadd.f32 %v1813, %v1874
    %v1903 = vadd.f32 %v1814, %v1875
    %v1904 = vadd.f32 %v1815, %v1876
    %v1905 = vadd.f32 %v1816, %v1877
    %v1906 = vadd.f32 %v1817, %v1878
    %v1907 = vadd.f32 %v1818, %v1879
    %v1908 = vadd.f32 %v1819, %v1880
    %v1909 = vadd.f32 %v1820, %v1881
    %v1910 = vadd.f32 %v1821, %v1882
    %v1911 = vadd.f32 %v1822, %v1883
    %v1912 = vadd.f32 %v1823, %v1884
    %v1913 = vadd.f32 %v1824, %v1885
    %v1914 = vadd.f32 %v1825, %v1886
    %v1915 = vadd.f32 %v1826, %v1887
    %v1916 = vadd.f32 %v1827, %v1888
    %v1917 = vadd.f32 %v1828, %v1889
    %v1918 = vadd.f32 %v1829, %v1890
    %v1919 = vadd.f32 %v1830, %v1891
    %v1920 = vadd.f32 %v1831, %v1892
    %v1921 = vadd.f32 %v1832, %v1893
    %1922 = vst [vmem:[#allocation4] sm:$0xff] %v1894
    %1923 = vst [vmem:[#allocation4 + $0x8] sm:$0xff] %v1895
    %1924 = vst [vmem:[#allocation4 + $0x10] sm:$0xff] %v1896
    %1925 = vst [vmem:[#allocation4 + $0x18] sm:$0xff] %v1897
    %1926 = vst [vmem:[#allocation4 + $0x20] sm:$0xff] %v1898
    %1927 = vst [vmem:[#allocation4 + $0x28] sm:$0xff] %v1899
    %1928 = vst [vmem:[#allocation4 + $0x30] sm:$0xff] %v1900
    %1929 = vst [vmem:[#allocation4 + $0x38] sm:$0xff] %v1901
    %1930 = vst [vmem:[#allocation4 + $0x40] sm:$0xff] %v1902
    %1931 = vst [vmem:[#allocation4 + $0x48] sm:$0xff] %v1903
    %1932 = vst [vmem:[#allocation4 + $0x50] sm:$0xff] %v1904
    %1933 = vst [vmem:[#allocation4 + $0x58] sm:$0xff] %v1905
    %1934 = vst [vmem:[#allocation4 + $0x60] sm:$0xff] %v1906
    %1935 = vst [vmem:[#allocation4 + $0x68] sm:$0xff] %v1907
    %1936 = vst [vmem:[#allocation4 + $0x70] sm:$0xff] %v1908
    %1937 = vst [vmem:[#allocation4 + $0x78] sm:$0xff] %v1909
    %1938 = vst [vmem:[#allocation4 + $0x80] sm:$0xff] %v1910
    %1939 = vst [vmem:[#allocation4 + $0x88] sm:$0xff] %v1911
    %1940 = vst [vmem:[#allocation4 + $0x90] sm:$0xff] %v1912
    %1941 = vst [vmem:[#allocation4 + $0x98] sm:$0xff] %v1913
    %1942 = vst [vmem:[#allocation4 + $0xa0] sm:$0xff] %v1914
    %1943 = vst [vmem:[#allocation4 + $0xa8] sm:$0xff] %v1915
    %1944 = vst [vmem:[#allocation4 + $0xb0] sm:$0xff] %v1916
    %1945 = vst [vmem:[#allocation4 + $0xb8] sm:$0xff] %v1917
    %1946 = vst [vmem:[#allocation4 + $0xc0] sm:$0xff] %v1918
    %1947 = vst [vmem:[#allocation4 + $0xc8] sm:$0xff] %v1919
    %1948 = vst [vmem:[#allocation4 + $0xd0] sm:$0xff] %v1920
    %1949 = vst [vmem:[#allocation4 + $0xd8] sm:$0xff] %v1921
    %v1950 = vld [vmem:[#allocation3 + $0xf] sm:$0xff]
    %v1951 = vld [vmem:[#allocation3 + $0x17] sm:$0xff]
    %v1952 = vld [vmem:[#allocation3 + $0x1f] sm:$0xff]
    %v1953 = vld [vmem:[#allocation3 + $0x27] sm:$0xff]
    %v1954 = vld [vmem:[#allocation3 + $0x2f] sm:$0xff]
    %v1955 = vld [vmem:[#allocation3 + $0x37] sm:$0xff]
    %v1956 = vld [vmem:[#allocation3 + $0x3f] sm:$0xff]
    %v1957 = vld [vmem:[#allocation3 + $0x47] sm:$0xff]
    %v1958 = vld [vmem:[#allocation3 + $0x4f] sm:$0xff]
    %v1959 = vld [vmem:[#allocation3 + $0x57] sm:$0xff]
    %v1960 = vld [vmem:[#allocation3 + $0x5f] sm:$0xff]
    %v1961 = vld [vmem:[#allocation3 + $0x67] sm:$0xff]
    %v1962 = vld [vmem:[#allocation3 + $0x6f] sm:$0xff]
    %v1963 = vld [vmem:[#allocation3 + $0x77] sm:$0xff]
    %v1964 = vld [vmem:[#allocation3 + $0x7f] sm:$0xff]
    %v1965 = vld [vmem:[#allocation3 + $0x87] sm:$0xff]
    %v1966 = vld [vmem:[#allocation3 + $0x8f] sm:$0xff]
    %v1967 = vld [vmem:[#allocation3 + $0x97] sm:$0xff]
    %v1968 = vld [vmem:[#allocation3 + $0x9f] sm:$0xff]
    %v1969 = vld [vmem:[#allocation3 + $0xa7] sm:$0xff]
    %v1970 = vld [vmem:[#allocation3 + $0xaf] sm:$0xff]
    %v1971 = vld [vmem:[#allocation3 + $0xb7] sm:$0xff]
    %v1972 = vld [vmem:[#allocation3 + $0xbf] sm:$0xff]
    %v1973 = vld [vmem:[#allocation3 + $0xc7] sm:$0xff]
    %v1974 = vld [vmem:[#allocation3 + $0xcf] sm:$0xff]
    %v1975 = vld [vmem:[#allocation3 + $0xd7] sm:$0xff]
    %v1976 = vld [vmem:[#allocation3 + $0xdf] sm:$0xff]
    %v1977 = vld [vmem:[#allocation3 + $0xe7] sm:$0xff]
    %v1978 = vld [vmem:[%s3 + $0x13] sm:$0x1]
    %v1979 = vlaneseq
    %v1980 = vshrl.u32 %v1979, 7
    %v1981 = vsub.s32 0, %v1980
    %v1982 = vrot.slane %v1978, %v1981
    %v1983 = vmul.f32 %v1950, %v1982
    %v1984 = vmul.f32 %v1951, %v1982
    %v1985 = vmul.f32 %v1952, %v1982
    %v1986 = vmul.f32 %v1953, %v1982
    %v1987 = vmul.f32 %v1954, %v1982
    %v1988 = vmul.f32 %v1955, %v1982
    %v1989 = vmul.f32 %v1956, %v1982
    %v1990 = vmul.f32 %v1957, %v1982
    %v1991 = vmul.f32 %v1958, %v1982
    %v1992 = vmul.f32 %v1959, %v1982
    %v1993 = vmul.f32 %v1960, %v1982
    %v1994 = vmul.f32 %v1961, %v1982
    %v1995 = vmul.f32 %v1962, %v1982
    %v1996 = vmul.f32 %v1963, %v1982
    %v1997 = vmul.f32 %v1964, %v1982
    %v1998 = vmul.f32 %v1965, %v1982
    %v1999 = vmul.f32 %v1966, %v1982
    %v2000 = vmul.f32 %v1967, %v1982
    %v2001 = vmul.f32 %v1968, %v1982
    %v2002 = vmul.f32 %v1969, %v1982
    %v2003 = vmul.f32 %v1970, %v1982
    %v2004 = vmul.f32 %v1971, %v1982
    %v2005 = vmul.f32 %v1972, %v1982
    %v2006 = vmul.f32 %v1973, %v1982
    %v2007 = vmul.f32 %v1974, %v1982
    %v2008 = vmul.f32 %v1975, %v1982
    %v2009 = vmul.f32 %v1976, %v1982
    %v2010 = vmul.f32 %v1977, %v1982
    %v2011 = vld [vmem:[#allocation3 + $0x10] sm:$0xff]
    %v2012 = vld [vmem:[#allocation3 + $0x18] sm:$0xff]
    %v2013 = vld [vmem:[#allocation3 + $0x20] sm:$0xff]
    %v2014 = vld [vmem:[#allocation3 + $0x28] sm:$0xff]
    %v2015 = vld [vmem:[#allocation3 + $0x30] sm:$0xff]
    %v2016 = vld [vmem:[#allocation3 + $0x38] sm:$0xff]
    %v2017 = vld [vmem:[#allocation3 + $0x40] sm:$0xff]
    %v2018 = vld [vmem:[#allocation3 + $0x48] sm:$0xff]
    %v2019 = vld [vmem:[#allocation3 + $0x50] sm:$0xff]
    %v2020 = vld [vmem:[#allocation3 + $0x58] sm:$0xff]
    %v2021 = vld [vmem:[#allocation3 + $0x60] sm:$0xff]
    %v2022 = vld [vmem:[#allocation3 + $0x68] sm:$0xff]
    %v2023 = vld [vmem:[#allocation3 + $0x70] sm:$0xff]
    %v2024 = vld [vmem:[#allocation3 + $0x78] sm:$0xff]
    %v2025 = vld [vmem:[#allocation3 + $0x80] sm:$0xff]
    %v2026 = vld [vmem:[#allocation3 + $0x88] sm:$0xff]
    %v2027 = vld [vmem:[#allocation3 + $0x90] sm:$0xff]
    %v2028 = vld [vmem:[#allocation3 + $0x98] sm:$0xff]
    %v2029 = vld [vmem:[#allocation3 + $0xa0] sm:$0xff]
    %v2030 = vld [vmem:[#allocation3 + $0xa8] sm:$0xff]
    %v2031 = vld [vmem:[#allocation3 + $0xb0] sm:$0xff]
    %v2032 = vld [vmem:[#allocation3 + $0xb8] sm:$0xff]
    %v2033 = vld [vmem:[#allocation3 + $0xc0] sm:$0xff]
    %v2034 = vld [vmem:[#allocation3 + $0xc8] sm:$0xff]
    %v2035 = vld [vmem:[#allocation3 + $0xd0] sm:$0xff]
    %v2036 = vld [vmem:[#allocation3 + $0xd8] sm:$0xff]
    %v2037 = vld [vmem:[#allocation3 + $0xe0] sm:$0xff]
    %v2038 = vld [vmem:[#allocation3 + $0xe8] sm:$0xff]
    %v2039 = vld [vmem:[%s3 + $0x14] sm:$0x1]
    %v2040 = vlaneseq
    %v2041 = vshrl.u32 %v2040, 7
    %v2042 = vsub.s32 0, %v2041
    %v2043 = vrot.slane %v2039, %v2042
    %v2044 = vmul.f32 %v2011, %v2043
    %v2045 = vmul.f32 %v2012, %v2043
    %v2046 = vmul.f32 %v2013, %v2043
    %v2047 = vmul.f32 %v2014, %v2043
    %v2048 = vmul.f32 %v2015, %v2043
    %v2049 = vmul.f32 %v2016, %v2043
    %v2050 = vmul.f32 %v2017, %v2043
    %v2051 = vmul.f32 %v2018, %v2043
    %v2052 = vmul.f32 %v2019, %v2043
    %v2053 = vmul.f32 %v2020, %v2043
    %v2054 = vmul.f32 %v2021, %v2043
    %v2055 = vmul.f32 %v2022, %v2043
    %v2056 = vmul.f32 %v2023, %v2043
    %v2057 = vmul.f32 %v2024, %v2043
    %v2058 = vmul.f32 %v2025, %v2043
    %v2059 = vmul.f32 %v2026, %v2043
    %v2060 = vmul.f32 %v2027, %v2043
    %v2061 = vmul.f32 %v2028, %v2043
    %v2062 = vmul.f32 %v2029, %v2043
    %v2063 = vmul.f32 %v2030, %v2043
    %v2064 = vmul.f32 %v2031, %v2043
    %v2065 = vmul.f32 %v2032, %v2043
    %v2066 = vmul.f32 %v2033, %v2043
    %v2067 = vmul.f32 %v2034, %v2043
    %v2068 = vmul.f32 %v2035, %v2043
    %v2069 = vmul.f32 %v2036, %v2043
    %v2070 = vmul.f32 %v2037, %v2043
    %v2071 = vmul.f32 %v2038, %v2043
    %v2072 = vadd.f32 %v1983, %v2044
    %v2073 = vadd.f32 %v1984, %v2045
    %v2074 = vadd.f32 %v1985, %v2046
    %v2075 = vadd.f32 %v1986, %v2047
    %v2076 = vadd.f32 %v1987, %v2048
    %v2077 = vadd.f32 %v1988, %v2049
    %v2078 = vadd.f32 %v1989, %v2050
    %v2079 = vadd.f32 %v1990, %v2051
    %v2080 = vadd.f32 %v1991, %v2052
    %v2081 = vadd.f32 %v1992, %v2053
    %v2082 = vadd.f32 %v1993, %v2054
    %v2083 = vadd.f32 %v1994, %v2055
    %v2084 = vadd.f32 %v1995, %v2056
    %v2085 = vadd.f32 %v1996, %v2057
    %v2086 = vadd.f32 %v1997, %v2058
    %v2087 = vadd.f32 %v1998, %v2059
    %v2088 = vadd.f32 %v1999, %v2060
    %v2089 = vadd.f32 %v2000, %v2061
    %v2090 = vadd.f32 %v2001, %v2062
    %v2091 = vadd.f32 %v2002, %v2063
    %v2092 = vadd.f32 %v2003, %v2064
    %v2093 = vadd.f32 %v2004, %v2065
    %v2094 = vadd.f32 %v2005, %v2066
    %v2095 = vadd.f32 %v2006, %v2067
    %v2096 = vadd.f32 %v2007, %v2068
    %v2097 = vadd.f32 %v2008, %v2069
    %v2098 = vadd.f32 %v2009, %v2070
    %v2099 = vadd.f32 %v2010, %v2071
    %v2100 = vld [vmem:[#allocation3 + $0x11] sm:$0xff]
    %v2101 = vld [vmem:[#allocation3 + $0x19] sm:$0xff]
    %v2102 = vld [vmem:[#allocation3 + $0x21] sm:$0xff]
    %v2103 = vld [vmem:[#allocation3 + $0x29] sm:$0xff]
    %v2104 = vld [vmem:[#allocation3 + $0x31] sm:$0xff]
    %v2105 = vld [vmem:[#allocation3 + $0x39] sm:$0xff]
    %v2106 = vld [vmem:[#allocation3 + $0x41] sm:$0xff]
    %v2107 = vld [vmem:[#allocation3 + $0x49] sm:$0xff]
    %v2108 = vld [vmem:[#allocation3 + $0x51] sm:$0xff]
    %v2109 = vld [vmem:[#allocation3 + $0x59] sm:$0xff]
    %v2110 = vld [vmem:[#allocation3 + $0x61] sm:$0xff]
    %v2111 = vld [vmem:[#allocation3 + $0x69] sm:$0xff]
    %v2112 = vld [vmem:[#allocation3 + $0x71] sm:$0xff]
    %v2113 = vld [vmem:[#allocation3 + $0x79] sm:$0xff]
    %v2114 = vld [vmem:[#allocation3 + $0x81] sm:$0xff]
    %v2115 = vld [vmem:[#allocation3 + $0x89] sm:$0xff]
    %v2116 = vld [vmem:[#allocation3 + $0x91] sm:$0xff]
    %v2117 = vld [vmem:[#allocation3 + $0x99] sm:$0xff]
    %v2118 = vld [vmem:[#allocation3 + $0xa1] sm:$0xff]
    %v2119 = vld [vmem:[#allocation3 + $0xa9] sm:$0xff]
    %v2120 = vld [vmem:[#allocation3 + $0xb1] sm:$0xff]
    %v2121 = vld [vmem:[#allocation3 + $0xb9] sm:$0xff]
    %v2122 = vld [vmem:[#allocation3 + $0xc1] sm:$0xff]
    %v2123 = vld [vmem:[#allocation3 + $0xc9] sm:$0xff]
    %v2124 = vld [vmem:[#allocation3 + $0xd1] sm:$0xff]
    %v2125 = vld [vmem:[#allocation3 + $0xd9] sm:$0xff]
    %v2126 = vld [vmem:[#allocation3 + $0xe1] sm:$0xff]
    %v2127 = vld [vmem:[#allocation3 + $0xe9] sm:$0xff]
    %v2128 = vld [vmem:[%s3 + $0x15] sm:$0x1]
    %v2129 = vlaneseq
    %v2130 = vshrl.u32 %v2129, 7
    %v2131 = vsub.s32 0, %v2130
    %v2132 = vrot.slane %v2128, %v2131
    %v2133 = vmul.f32 %v2100, %v2132
    %v2134 = vmul.f32 %v2101, %v2132
    %v2135 = vmul.f32 %v2102, %v2132
    %v2136 = vmul.f32 %v2103, %v2132
    %v2137 = vmul.f32 %v2104, %v2132
    %v2138 = vmul.f32 %v2105, %v2132
    %v2139 = vmul.f32 %v2106, %v2132
    %v2140 = vmul.f32 %v2107, %v2132
    %v2141 = vmul.f32 %v2108, %v2132
    %v2142 = vmul.f32 %v2109, %v2132
    %v2143 = vmul.f32 %v2110, %v2132
    %v2144 = vmul.f32 %v2111, %v2132
    %v2145 = vmul.f32 %v2112, %v2132
    %v2146 = vmul.f32 %v2113, %v2132
    %v2147 = vmul.f32 %v2114, %v2132
    %v2148 = vmul.f32 %v2115, %v2132
    %v2149 = vmul.f32 %v2116, %v2132
    %v2150 = vmul.f32 %v2117, %v2132
    %v2151 = vmul.f32 %v2118, %v2132
    %v2152 = vmul.f32 %v2119, %v2132
    %v2153 = vmul.f32 %v2120, %v2132
    %v2154 = vmul.f32 %v2121, %v2132
    %v2155 = vmul.f32 %v2122, %v2132
    %v2156 = vmul.f32 %v2123, %v2132
    %v2157 = vmul.f32 %v2124, %v2132
    %v2158 = vmul.f32 %v2125, %v2132
    %v2159 = vmul.f32 %v2126, %v2132
    %v2160 = vmul.f32 %v2127, %v2132
    %v2161 = vadd.f32 %v2072, %v2133
    %v2162 = vadd.f32 %v2073, %v2134
    %v2163 = vadd.f32 %v2074, %v2135
    %v2164 = vadd.f32 %v2075, %v2136
    %v2165 = vadd.f32 %v2076, %v2137
    %v2166 = vadd.f32 %v2077, %v2138
    %v2167 = vadd.f32 %v2078, %v2139
    %v2168 = vadd.f32 %v2079, %v2140
    %v2169 = vadd.f32 %v2080, %v2141
    %v2170 = vadd.f32 %v2081, %v2142
    %v2171 = vadd.f32 %v2082, %v2143
    %v2172 = vadd.f32 %v2083, %v2144
    %v2173 = vadd.f32 %v2084, %v2145
    %v2174 = vadd.f32 %v2085, %v2146
    %v2175 = vadd.f32 %v2086, %v2147
    %v2176 = vadd.f32 %v2087, %v2148
    %v2177 = vadd.f32 %v2088, %v2149
    %v2178 = vadd.f32 %v2089, %v2150
    %v2179 = vadd.f32 %v2090, %v2151
    %v2180 = vadd.f32 %v2091, %v2152
    %v2181 = vadd.f32 %v2092, %v2153
    %v2182 = vadd.f32 %v2093, %v2154
    %v2183 = vadd.f32 %v2094, %v2155
    %v2184 = vadd.f32 %v2095, %v2156
    %v2185 = vadd.f32 %v2096, %v2157
    %v2186 = vadd.f32 %v2097, %v2158
    %v2187 = vadd.f32 %v2098, %v2159
    %v2188 = vadd.f32 %v2099, %v2160
    %v2189 = vld [vmem:[#allocation4] sm:$0xff]
    %v2190 = vld [vmem:[#allocation4 + $0x8] sm:$0xff]
    %v2191 = vld [vmem:[#allocation4 + $0x10] sm:$0xff]
    %v2192 = vld [vmem:[#allocation4 + $0x18] sm:$0xff]
    %v2193 = vld [vmem:[#allocation4 + $0x20] sm:$0xff]
    %v2194 = vld [vmem:[#allocation4 + $0x28] sm:$0xff]
    %v2195 = vld [vmem:[#allocation4 + $0x30] sm:$0xff]
    %v2196 = vld [vmem:[#allocation4 + $0x38] sm:$0xff]
    %v2197 = vld [vmem:[#allocation4 + $0x40] sm:$0xff]
    %v2198 = vld [vmem:[#allocation4 + $0x48] sm:$0xff]
    %v2199 = vld [vmem:[#allocation4 + $0x50] sm:$0xff]
    %v2200 = vld [vmem:[#allocation4 + $0x58] sm:$0xff]
    %v2201 = vld [vmem:[#allocation4 + $0x60] sm:$0xff]
    %v2202 = vld [vmem:[#allocation4 + $0x68] sm:$0xff]
    %v2203 = vld [vmem:[#allocation4 + $0x70] sm:$0xff]
    %v2204 = vld [vmem:[#allocation4 + $0x78] sm:$0xff]
    %v2205 = vld [vmem:[#allocation4 + $0x80] sm:$0xff]
    %v2206 = vld [vmem:[#allocation4 + $0x88] sm:$0xff]
    %v2207 = vld [vmem:[#allocation4 + $0x90] sm:$0xff]
    %v2208 = vld [vmem:[#allocation4 + $0x98] sm:$0xff]
    %v2209 = vld [vmem:[#allocation4 + $0xa0] sm:$0xff]
    %v2210 = vld [vmem:[#allocation4 + $0xa8] sm:$0xff]
    %v2211 = vld [vmem:[#allocation4 + $0xb0] sm:$0xff]
    %v2212 = vld [vmem:[#allocation4 + $0xb8] sm:$0xff]
    %v2213 = vld [vmem:[#allocation4 + $0xc0] sm:$0xff]
    %v2214 = vld [vmem:[#allocation4 + $0xc8] sm:$0xff]
    %v2215 = vld [vmem:[#allocation4 + $0xd0] sm:$0xff]
    %v2216 = vld [vmem:[#allocation4 + $0xd8] sm:$0xff]
    %v2217 = vadd.f32 %v2189, %v2161
    %v2218 = vadd.f32 %v2190, %v2162
    %v2219 = vadd.f32 %v2191, %v2163
    %v2220 = vadd.f32 %v2192, %v2164
    %v2221 = vadd.f32 %v2193, %v2165
    %v2222 = vadd.f32 %v2194, %v2166
    %v2223 = vadd.f32 %v2195, %v2167
    %v2224 = vadd.f32 %v2196, %v2168
    %v2225 = vadd.f32 %v2197, %v2169
    %v2226 = vadd.f32 %v2198, %v2170
    %v2227 = vadd.f32 %v2199, %v2171
    %v2228 = vadd.f32 %v2200, %v2172
    %v2229 = vadd.f32 %v2201, %v2173
    %v2230 = vadd.f32 %v2202, %v2174
    %v2231 = vadd.f32 %v2203, %v2175
    %v2232 = vadd.f32 %v2204, %v2176
    %v2233 = vadd.f32 %v2205, %v2177
    %v2234 = vadd.f32 %v2206, %v2178
    %v2235 = vadd.f32 %v2207, %v2179
    %v2236 = vadd.f32 %v2208, %v2180
    %v2237 = vadd.f32 %v2209, %v2181
    %v2238 = vadd.f32 %v2210, %v2182
    %v2239 = vadd.f32 %v2211, %v2183
    %v2240 = vadd.f32 %v2212, %v2184
    %v2241 = vadd.f32 %v2213, %v2185
    %v2242 = vadd.f32 %v2214, %v2186
    %v2243 = vadd.f32 %v2215, %v2187
    %v2244 = vadd.f32 %v2216, %v2188
    %2245 = vst [vmem:[#allocation4] sm:$0xff] %v2217
    %2246 = vst [vmem:[#allocation4 + $0x8] sm:$0xff] %v2218
    %2247 = vst [vmem:[#allocation4 + $0x10] sm:$0xff] %v2219
    %2248 = vst [vmem:[#allocation4 + $0x18] sm:$0xff] %v2220
    %2249 = vst [vmem:[#allocation4 + $0x20] sm:$0xff] %v2221
    %2250 = vst [vmem:[#allocation4 + $0x28] sm:$0xff] %v2222
    %2251 = vst [vmem:[#allocation4 + $0x30] sm:$0xff] %v2223
    %2252 = vst [vmem:[#allocation4 + $0x38] sm:$0xff] %v2224
    %2253 = vst [vmem:[#allocation4 + $0x40] sm:$0xff] %v2225
    %2254 = vst [vmem:[#allocation4 + $0x48] sm:$0xff] %v2226
    %2255 = vst [vmem:[#allocation4 + $0x50] sm:$0xff] %v2227
    %2256 = vst [vmem:[#allocation4 + $0x58] sm:$0xff] %v2228
    %2257 = vst [vmem:[#allocation4 + $0x60] sm:$0xff] %v2229
    %2258 = vst [vmem:[#allocation4 + $0x68] sm:$0xff] %v2230
    %2259 = vst [vmem:[#allocation4 + $0x70] sm:$0xff] %v2231
    %2260 = vst [vmem:[#allocation4 + $0x78] sm:$0xff] %v2232
    %2261 = vst [vmem:[#allocation4 + $0x80] sm:$0xff] %v2233
    %2262 = vst [vmem:[#allocation4 + $0x88] sm:$0xff] %v2234
    %2263 = vst [vmem:[#allocation4 + $0x90] sm:$0xff] %v2235
    %2264 = vst [vmem:[#allocation4 + $0x98] sm:$0xff] %v2236
    %2265 = vst [vmem:[#allocation4 + $0xa0] sm:$0xff] %v2237
    %2266 = vst [vmem:[#allocation4 + $0xa8] sm:$0xff] %v2238
    %2267 = vst [vmem:[#allocation4 + $0xb0] sm:$0xff] %v2239
    %2268 = vst [vmem:[#allocation4 + $0xb8] sm:$0xff] %v2240
    %2269 = vst [vmem:[#allocation4 + $0xc0] sm:$0xff] %v2241
    %2270 = vst [vmem:[#allocation4 + $0xc8] sm:$0xff] %v2242
    %2271 = vst [vmem:[#allocation4 + $0xd0] sm:$0xff] %v2243
    %2272 = vst [vmem:[#allocation4 + $0xd8] sm:$0xff] %v2244
    %v2273 = vld [vmem:[#allocation3 + $0x1a] sm:$0xff]
    %v2274 = vld [vmem:[#allocation3 + $0x22] sm:$0xff]
    %v2275 = vld [vmem:[#allocation3 + $0x2a] sm:$0xff]
    %v2276 = vld [vmem:[#allocation3 + $0x32] sm:$0xff]
    %v2277 = vld [vmem:[#allocation3 + $0x3a] sm:$0xff]
    %v2278 = vld [vmem:[#allocation3 + $0x42] sm:$0xff]
    %v2279 = vld [vmem:[#allocation3 + $0x4a] sm:$0xff]
    %v2280 = vld [vmem:[#allocation3 + $0x52] sm:$0xff]
    %v2281 = vld [vmem:[#allocation3 + $0x5a] sm:$0xff]
    %v2282 = vld [vmem:[#allocation3 + $0x62] sm:$0xff]
    %v2283 = vld [vmem:[#allocation3 + $0x6a] sm:$0xff]
    %v2284 = vld [vmem:[#allocation3 + $0x72] sm:$0xff]
    %v2285 = vld [vmem:[#allocation3 + $0x7a] sm:$0xff]
    %v2286 = vld [vmem:[#allocation3 + $0x82] sm:$0xff]
    %v2287 = vld [vmem:[#allocation3 + $0x8a] sm:$0xff]
    %v2288 = vld [vmem:[#allocation3 + $0x92] sm:$0xff]
    %v2289 = vld [vmem:[#allocation3 + $0x9a] sm:$0xff]
    %v2290 = vld [vmem:[#allocation3 + $0xa2] sm:$0xff]
    %v2291 = vld [vmem:[#allocation3 + $0xaa] sm:$0xff]
    %v2292 = vld [vmem:[#allocation3 + $0xb2] sm:$0xff]
    %v2293 = vld [vmem:[#allocation3 + $0xba] sm:$0xff]
    %v2294 = vld [vmem:[#allocation3 + $0xc2] sm:$0xff]
    %v2295 = vld [vmem:[#allocation3 + $0xca] sm:$0xff]
    %v2296 = vld [vmem:[#allocation3 + $0xd2] sm:$0xff]
    %v2297 = vld [vmem:[#allocation3 + $0xda] sm:$0xff]
    %v2298 = vld [vmem:[#allocation3 + $0xe2] sm:$0xff]
    %v2299 = vld [vmem:[#allocation3 + $0xea] sm:$0xff]
    %v2300 = vld [vmem:[#allocation3 + $0xf2] sm:$0xff]
    %v2301 = vld [vmem:[%s3 + $0x16] sm:$0x1]
    %v2302 = vlaneseq
    %v2303 = vshrl.u32 %v2302, 7
    %v2304 = vsub.s32 0, %v2303
    %v2305 = vrot.slane %v2301, %v2304
    %v2306 = vmul.f32 %v2273, %v2305
    %v2307 = vmul.f32 %v2274, %v2305
    %v2308 = vmul.f32 %v2275, %v2305
    %v2309 = vmul.f32 %v2276, %v2305
    %v2310 = vmul.f32 %v2277, %v2305
    %v2311 = vmul.f32 %v2278, %v2305
    %v2312 = vmul.f32 %v2279, %v2305
    %v2313 = vmul.f32 %v2280, %v2305
    %v2314 = vmul.f32 %v2281, %v2305
    %v2315 = vmul.f32 %v2282, %v2305
    %v2316 = vmul.f32 %v2283, %v2305
    %v2317 = vmul.f32 %v2284, %v2305
    %v2318 = vmul.f32 %v2285, %v2305
    %v2319 = vmul.f32 %v2286, %v2305
    %v2320 = vmul.f32 %v2287, %v2305
    %v2321 = vmul.f32 %v2288, %v2305
    %v2322 = vmul.f32 %v2289, %v2305
    %v2323 = vmul.f32 %v2290, %v2305
    %v2324 = vmul.f32 %v2291, %v2305
    %v2325 = vmul.f32 %v2292, %v2305
    %v2326 = vmul.f32 %v2293, %v2305
    %v2327 = vmul.f32 %v2294, %v2305
    %v2328 = vmul.f32 %v2295, %v2305
    %v2329 = vmul.f32 %v2296, %v2305
    %v2330 = vmul.f32 %v2297, %v2305
    %v2331 = vmul.f32 %v2298, %v2305
    %v2332 = vmul.f32 %v2299, %v2305
    %v2333 = vmul.f32 %v2300, %v2305
    %v2334 = vld [vmem:[#allocation3 + $0x1b] sm:$0xff]
    %v2335 = vld [vmem:[#allocation3 + $0x23] sm:$0xff]
    %v2336 = vld [vmem:[#allocation3 + $0x2b] sm:$0xff]
    %v2337 = vld [vmem:[#allocation3 + $0x33] sm:$0xff]
    %v2338 = vld [vmem:[#allocation3 + $0x3b] sm:$0xff]
    %v2339 = vld [vmem:[#allocation3 + $0x43] sm:$0xff]
    %v2340 = vld [vmem:[#allocation3 + $0x4b] sm:$0xff]
    %v2341 = vld [vmem:[#allocation3 + $0x53] sm:$0xff]
    %v2342 = vld [vmem:[#allocation3 + $0x5b] sm:$0xff]
    %v2343 = vld [vmem:[#allocation3 + $0x63] sm:$0xff]
    %v2344 = vld [vmem:[#allocation3 + $0x6b] sm:$0xff]
    %v2345 = vld [vmem:[#allocation3 + $0x73] sm:$0xff]
    %v2346 = vld [vmem:[#allocation3 + $0x7b] sm:$0xff]
    %v2347 = vld [vmem:[#allocation3 + $0x83] sm:$0xff]
    %v2348 = vld [vmem:[#allocation3 + $0x8b] sm:$0xff]
    %v2349 = vld [vmem:[#allocation3 + $0x93] sm:$0xff]
    %v2350 = vld [vmem:[#allocation3 + $0x9b] sm:$0xff]
    %v2351 = vld [vmem:[#allocation3 + $0xa3] sm:$0xff]
    %v2352 = vld [vmem:[#allocation3 + $0xab] sm:$0xff]
    %v2353 = vld [vmem:[#allocation3 + $0xb3] sm:$0xff]
    %v2354 = vld [vmem:[#allocation3 + $0xbb] sm:$0xff]
    %v2355 = vld [vmem:[#allocation3 + $0xc3] sm:$0xff]
    %v2356 = vld [vmem:[#allocation3 + $0xcb] sm:$0xff]
    %v2357 = vld [vmem:[#allocation3 + $0xd3] sm:$0xff]
    %v2358 = vld [vmem:[#allocation3 + $0xdb] sm:$0xff]
    %v2359 = vld [vmem:[#allocation3 + $0xe3] sm:$0xff]
    %v2360 = vld [vmem:[#allocation3 + $0xeb] sm:$0xff]
    %v2361 = vld [vmem:[#allocation3 + $0xf3] sm:$0xff]
    %v2362 = vld [vmem:[%s3 + $0x17] sm:$0x1]
    %v2363 = vlaneseq
    %v2364 = vshrl.u32 %v2363, 7
    %v2365 = vsub.s32 0, %v2364
    %v2366 = vrot.slane %v2362, %v2365
    %v2367 = vmul.f32 %v2334, %v2366
    %v2368 = vmul.f32 %v2335, %v2366
    %v2369 = vmul.f32 %v2336, %v2366
    %v2370 = vmul.f32 %v2337, %v2366
    %v2371 = vmul.f32 %v2338, %v2366
    %v2372 = vmul.f32 %v2339, %v2366
    %v2373 = vmul.f32 %v2340, %v2366
    %v2374 = vmul.f32 %v2341, %v2366
    %v2375 = vmul.f32 %v2342, %v2366
    %v2376 = vmul.f32 %v2343, %v2366
    %v2377 = vmul.f32 %v2344, %v2366
    %v2378 = vmul.f32 %v2345, %v2366
    %v2379 = vmul.f32 %v2346, %v2366
    %v2380 = vmul.f32 %v2347, %v2366
    %v2381 = vmul.f32 %v2348, %v2366
    %v2382 = vmul.f32 %v2349, %v2366
    %v2383 = vmul.f32 %v2350, %v2366
    %v2384 = vmul.f32 %v2351, %v2366
    %v2385 = vmul.f32 %v2352, %v2366
    %v2386 = vmul.f32 %v2353, %v2366
    %v2387 = vmul.f32 %v2354, %v2366
    %v2388 = vmul.f32 %v2355, %v2366
    %v2389 = vmul.f32 %v2356, %v2366
    %v2390 = vmul.f32 %v2357, %v2366
    %v2391 = vmul.f32 %v2358, %v2366
    %v2392 = vmul.f32 %v2359, %v2366
    %v2393 = vmul.f32 %v2360, %v2366
    %v2394 = vmul.f32 %v2361, %v2366
    %v2395 = vadd.f32 %v2306, %v2367
    %v2396 = vadd.f32 %v2307, %v2368
    %v2397 = vadd.f32 %v2308, %v2369
    %v2398 = vadd.f32 %v2309, %v2370
    %v2399 = vadd.f32 %v2310, %v2371
    %v2400 = vadd.f32 %v2311, %v2372
    %v2401 = vadd.f32 %v2312, %v2373
    %v2402 = vadd.f32 %v2313, %v2374
    %v2403 = vadd.f32 %v2314, %v2375
    %v2404 = vadd.f32 %v2315, %v2376
    %v2405 = vadd.f32 %v2316, %v2377
    %v2406 = vadd.f32 %v2317, %v2378
    %v2407 = vadd.f32 %v2318, %v2379
    %v2408 = vadd.f32 %v2319, %v2380
    %v2409 = vadd.f32 %v2320, %v2381
    %v2410 = vadd.f32 %v2321, %v2382
    %v2411 = vadd.f32 %v2322, %v2383
    %v2412 = vadd.f32 %v2323, %v2384
    %v2413 = vadd.f32 %v2324, %v2385
    %v2414 = vadd.f32 %v2325, %v2386
    %v2415 = vadd.f32 %v2326, %v2387
    %v2416 = vadd.f32 %v2327, %v2388
    %v2417 = vadd.f32 %v2328, %v2389
    %v2418 = vadd.f32 %v2329, %v2390
    %v2419 = vadd.f32 %v2330, %v2391
    %v2420 = vadd.f32 %v2331, %v2392
    %v2421 = vadd.f32 %v2332, %v2393
    %v2422 = vadd.f32 %v2333, %v2394
    %v2423 = vld [vmem:[#allocation3 + $0x1c] sm:$0xff]
    %v2424 = vld [vmem:[#allocation3 + $0x24] sm:$0xff]
    %v2425 = vld [vmem:[#allocation3 + $0x2c] sm:$0xff]
    %v2426 = vld [vmem:[#allocation3 + $0x34] sm:$0xff]
    %v2427 = vld [vmem:[#allocation3 + $0x3c] sm:$0xff]
    %v2428 = vld [vmem:[#allocation3 + $0x44] sm:$0xff]
    %v2429 = vld [vmem:[#allocation3 + $0x4c] sm:$0xff]
    %v2430 = vld [vmem:[#allocation3 + $0x54] sm:$0xff]
    %v2431 = vld [vmem:[#allocation3 + $0x5c] sm:$0xff]
    %v2432 = vld [vmem:[#allocation3 + $0x64] sm:$0xff]
    %v2433 = vld [vmem:[#allocation3 + $0x6c] sm:$0xff]
    %v2434 = vld [vmem:[#allocation3 + $0x74] sm:$0xff]
    %v2435 = vld [vmem:[#allocation3 + $0x7c] sm:$0xff]
    %v2436 = vld [vmem:[#allocation3 + $0x84] sm:$0xff]
    %v2437 = vld [vmem:[#allocation3 + $0x8c] sm:$0xff]
    %v2438 = vld [vmem:[#allocation3 + $0x94] sm:$0xff]
    %v2439 = vld [vmem:[#allocation3 + $0x9c] sm:$0xff]
    %v2440 = vld [vmem:[#allocation3 + $0xa4] sm:$0xff]
    %v2441 = vld [vmem:[#allocation3 + $0xac] sm:$0xff]
    %v2442 = vld [vmem:[#allocation3 + $0xb4] sm:$0xff]
    %v2443 = vld [vmem:[#allocation3 + $0xbc] sm:$0xff]
    %v2444 = vld [vmem:[#allocation3 + $0xc4] sm:$0xff]
    %v2445 = vld [vmem:[#allocation3 + $0xcc] sm:$0xff]
    %v2446 = vld [vmem:[#allocation3 + $0xd4] sm:$0xff]
    %v2447 = vld [vmem:[#allocation3 + $0xdc] sm:$0xff]
    %v2448 = vld [vmem:[#allocation3 + $0xe4] sm:$0xff]
    %v2449 = vld [vmem:[#allocation3 + $0xec] sm:$0xff]
    %v2450 = vld [vmem:[#allocation3 + $0xf4] sm:$0xff]
    %v2451 = vld [vmem:[%s3 + $0x18] sm:$0x1]
    %v2452 = vlaneseq
    %v2453 = vshrl.u32 %v2452, 7
    %v2454 = vsub.s32 0, %v2453
    %v2455 = vrot.slane %v2451, %v2454
    %v2456 = vmul.f32 %v2423, %v2455
    %v2457 = vmul.f32 %v2424, %v2455
    %v2458 = vmul.f32 %v2425, %v2455
    %v2459 = vmul.f32 %v2426, %v2455
    %v2460 = vmul.f32 %v2427, %v2455
    %v2461 = vmul.f32 %v2428, %v2455
    %v2462 = vmul.f32 %v2429, %v2455
    %v2463 = vmul.f32 %v2430, %v2455
    %v2464 = vmul.f32 %v2431, %v2455
    %v2465 = vmul.f32 %v2432, %v2455
    %v2466 = vmul.f32 %v2433, %v2455
    %v2467 = vmul.f32 %v2434, %v2455
    %v2468 = vmul.f32 %v2435, %v2455
    %v2469 = vmul.f32 %v2436, %v2455
    %v2470 = vmul.f32 %v2437, %v2455
    %v2471 = vmul.f32 %v2438, %v2455
    %v2472 = vmul.f32 %v2439, %v2455
    %v2473 = vmul.f32 %v2440, %v2455
    %v2474 = vmul.f32 %v2441, %v2455
    %v2475 = vmul.f32 %v2442, %v2455
    %v2476 = vmul.f32 %v2443, %v2455
    %v2477 = vmul.f32 %v2444, %v2455
    %v2478 = vmul.f32 %v2445, %v2455
    %v2479 = vmul.f32 %v2446, %v2455
    %v2480 = vmul.f32 %v2447, %v2455
    %v2481 = vmul.f32 %v2448, %v2455
    %v2482 = vmul.f32 %v2449, %v2455
    %v2483 = vmul.f32 %v2450, %v2455
    %v2484 = vadd.f32 %v2395, %v2456
    %v2485 = vadd.f32 %v2396, %v2457
    %v2486 = vadd.f32 %v2397, %v2458
    %v2487 = vadd.f32 %v2398, %v2459
    %v2488 = vadd.f32 %v2399, %v2460
    %v2489 = vadd.f32 %v2400, %v2461
    %v2490 = vadd.f32 %v2401, %v2462
    %v2491 = vadd.f32 %v2402, %v2463
    %v2492 = vadd.f32 %v2403, %v2464
    %v2493 = vadd.f32 %v2404, %v2465
    %v2494 = vadd.f32 %v2405, %v2466
    %v2495 = vadd.f32 %v2406, %v2467
    %v2496 = vadd.f32 %v2407, %v2468
    %v2497 = vadd.f32 %v2408, %v2469
    %v2498 = vadd.f32 %v2409, %v2470
    %v2499 = vadd.f32 %v2410, %v2471
    %v2500 = vadd.f32 %v2411, %v2472
    %v2501 = vadd.f32 %v2412, %v2473
    %v2502 = vadd.f32 %v2413, %v2474
    %v2503 = vadd.f32 %v2414, %v2475
    %v2504 = vadd.f32 %v2415, %v2476
    %v2505 = vadd.f32 %v2416, %v2477
    %v2506 = vadd.f32 %v2417, %v2478
    %v2507 = vadd.f32 %v2418, %v2479
    %v2508 = vadd.f32 %v2419, %v2480
    %v2509 = vadd.f32 %v2420, %v2481
    %v2510 = vadd.f32 %v2421, %v2482
    %v2511 = vadd.f32 %v2422, %v2483
    %v2512 = vld [vmem:[#allocation4] sm:$0xff]
    %v2513 = vld [vmem:[#allocation4 + $0x8] sm:$0xff]
    %v2514 = vld [vmem:[#allocation4 + $0x10] sm:$0xff]
    %v2515 = vld [vmem:[#allocation4 + $0x18] sm:$0xff]
    %v2516 = vld [vmem:[#allocation4 + $0x20] sm:$0xff]
    %v2517 = vld [vmem:[#allocation4 + $0x28] sm:$0xff]
    %v2518 = vld [vmem:[#allocation4 + $0x30] sm:$0xff]
    %v2519 = vld [vmem:[#allocation4 + $0x38] sm:$0xff]
    %v2520 = vld [vmem:[#allocation4 + $0x40] sm:$0xff]
    %v2521 = vld [vmem:[#allocation4 + $0x48] sm:$0xff]
    %v2522 = vld [vmem:[#allocation4 + $0x50] sm:$0xff]
    %v2523 = vld [vmem:[#allocation4 + $0x58] sm:$0xff]
    %v2524 = vld [vmem:[#allocation4 + $0x60] sm:$0xff]
    %v2525 = vld [vmem:[#allocation4 + $0x68] sm:$0xff]
    %v2526 = vld [vmem:[#allocation4 + $0x70] sm:$0xff]
    %v2527 = vld [vmem:[#allocation4 + $0x78] sm:$0xff]
    %v2528 = vld [vmem:[#allocation4 + $0x80] sm:$0xff]
    %v2529 = vld [vmem:[#allocation4 + $0x88] sm:$0xff]
    %v2530 = vld [vmem:[#allocation4 + $0x90] sm:$0xff]
    %v2531 = vld [vmem:[#allocation4 + $0x98] sm:$0xff]
    %v2532 = vld [vmem:[#allocation4 + $0xa0] sm:$0xff]
    %v2533 = vld [vmem:[#allocation4 + $0xa8] sm:$0xff]
    %v2534 = vld [vmem:[#allocation4 + $0xb0] sm:$0xff]
    %v2535 = vld [vmem:[#allocation4 + $0xb8] sm:$0xff]
    %v2536 = vld [vmem:[#allocation4 + $0xc0] sm:$0xff]
    %v2537 = vld [vmem:[#allocation4 + $0xc8] sm:$0xff]
    %v2538 = vld [vmem:[#allocation4 + $0xd0] sm:$0xff]
    %v2539 = vld [vmem:[#allocation4 + $0xd8] sm:$0xff]
    %v2540 = vadd.f32 %v2512, %v2484
    %v2541 = vadd.f32 %v2513, %v2485
    %v2542 = vadd.f32 %v2514, %v2486
    %v2543 = vadd.f32 %v2515, %v2487
    %v2544 = vadd.f32 %v2516, %v2488
    %v2545 = vadd.f32 %v2517, %v2489
    %v2546 = vadd.f32 %v2518, %v2490
    %v2547 = vadd.f32 %v2519, %v2491
    %v2548 = vadd.f32 %v2520, %v2492
    %v2549 = vadd.f32 %v2521, %v2493
    %v2550 = vadd.f32 %v2522, %v2494
    %v2551 = vadd.f32 %v2523, %v2495
    %v2552 = vadd.f32 %v2524, %v2496
    %v2553 = vadd.f32 %v2525, %v2497
    %v2554 = vadd.f32 %v2526, %v2498
    %v2555 = vadd.f32 %v2527, %v2499
    %v2556 = vadd.f32 %v2528, %v2500
    %v2557 = vadd.f32 %v2529, %v2501
    %v2558 = vadd.f32 %v2530, %v2502
    %v2559 = vadd.f32 %v2531, %v2503
    %v2560 = vadd.f32 %v2532, %v2504
    %v2561 = vadd.f32 %v2533, %v2505
    %v2562 = vadd.f32 %v2534, %v2506
    %v2563 = vadd.f32 %v2535, %v2507
    %v2564 = vadd.f32 %v2536, %v2508
    %v2565 = vadd.f32 %v2537, %v2509
    %v2566 = vadd.f32 %v2538, %v2510
    %v2567 = vadd.f32 %v2539, %v2511
    %2568 = vst [vmem:[#allocation4] sm:$0xff] %v2540
    %2569 = vst [vmem:[#allocation4 + $0x8] sm:$0xff] %v2541
    %2570 = vst [vmem:[#allocation4 + $0x10] sm:$0xff] %v2542
    %2571 = vst [vmem:[#allocation4 + $0x18] sm:$0xff] %v2543
    %2572 = vst [vmem:[#allocation4 + $0x20] sm:$0xff] %v2544
    %2573 = vst [vmem:[#allocation4 + $0x28] sm:$0xff] %v2545
    %2574 = vst [vmem:[#allocation4 + $0x30] sm:$0xff] %v2546
    %2575 = vst [vmem:[#allocation4 + $0x38] sm:$0xff] %v2547
    %2576 = vst [vmem:[#allocation4 + $0x40] sm:$0xff] %v2548
    %2577 = vst [vmem:[#allocation4 + $0x48] sm:$0xff] %v2549
    %2578 = vst [vmem:[#allocation4 + $0x50] sm:$0xff] %v2550
    %2579 = vst [vmem:[#allocation4 + $0x58] sm:$0xff] %v2551
    %2580 = vst [vmem:[#allocation4 + $0x60] sm:$0xff] %v2552
    %2581 = vst [vmem:[#allocation4 + $0x68] sm:$0xff] %v2553
    %2582 = vst [vmem:[#allocation4 + $0x70] sm:$0xff] %v2554
    %2583 = vst [vmem:[#allocation4 + $0x78] sm:$0xff] %v2555
    %2584 = vst [vmem:[#allocation4 + $0x80] sm:$0xff] %v2556
    %2585 = vst [vmem:[#allocation4 + $0x88] sm:$0xff] %v2557
    %2586 = vst [vmem:[#allocation4 + $0x90] sm:$0xff] %v2558
    %2587 = vst [vmem:[#allocation4 + $0x98] sm:$0xff] %v2559
    %2588 = vst [vmem:[#allocation4 + $0xa0] sm:$0xff] %v2560
    %2589 = vst [vmem:[#allocation4 + $0xa8] sm:$0xff] %v2561
    %2590 = vst [vmem:[#allocation4 + $0xb0] sm:$0xff] %v2562
    %2591 = vst [vmem:[#allocation4 + $0xb8] sm:$0xff] %v2563
    %2592 = vst [vmem:[#allocation4 + $0xc0] sm:$0xff] %v2564
    %2593 = vst [vmem:[#allocation4 + $0xc8] sm:$0xff] %v2565
    %2594 = vst [vmem:[#allocation4 + $0xd0] sm:$0xff] %v2566
    %2595 = vst [vmem:[#allocation4 + $0xd8] sm:$0xff] %v2567
    %v2596 = vld [vmem:[#allocation4] sm:$0xff]
    %v2597 = vld [vmem:[#allocation4 + $0x8] sm:$0xff]
    %v2598 = vld [vmem:[#allocation4 + $0x10] sm:$0xff]
    %v2599 = vld [vmem:[#allocation4 + $0x18] sm:$0xff]
    %v2600 = vld [vmem:[#allocation4 + $0x20] sm:$0xff]
    %v2601 = vld [vmem:[#allocation4 + $0x28] sm:$0xff]
    %v2602 = vld [vmem:[#allocation4 + $0x30] sm:$0xff]
    %v2603 = vld [vmem:[#allocation4 + $0x38] sm:$0xff]
    %v2604 = vld [vmem:[#allocation4 + $0x40] sm:$0xff]
    %v2605 = vld [vmem:[#allocation4 + $0x48] sm:$0xff]
    %v2606 = vld [vmem:[#allocation4 + $0x50] sm:$0xff]
    %v2607 = vld [vmem:[#allocation4 + $0x58] sm:$0xff]
    %v2608 = vld [vmem:[#allocation4 + $0x60] sm:$0xff]
    %v2609 = vld [vmem:[#allocation4 + $0x68] sm:$0xff]
    %v2610 = vld [vmem:[#allocation4 + $0x70] sm:$0xff]
    %v2611 = vld [vmem:[#allocation4 + $0x78] sm:$0xff]
    %v2612 = vld [vmem:[#allocation4 + $0x80] sm:$0xff]
    %v2613 = vld [vmem:[#allocation4 + $0x88] sm:$0xff]
    %v2614 = vld [vmem:[#allocation4 + $0x90] sm:$0xff]
    %v2615 = vld [vmem:[#allocation4 + $0x98] sm:$0xff]
    %v2616 = vld [vmem:[#allocation4 + $0xa0] sm:$0xff]
    %v2617 = vld [vmem:[#allocation4 + $0xa8] sm:$0xff]
    %v2618 = vld [vmem:[#allocation4 + $0xb0] sm:$0xff]
    %v2619 = vld [vmem:[#allocation4 + $0xb8] sm:$0xff]
    %v2620 = vld [vmem:[#allocation4 + $0xc0] sm:$0xff]
    %v2621 = vld [vmem:[#allocation4 + $0xc8] sm:$0xff]
    %v2622 = vld [vmem:[#allocation4 + $0xd0] sm:$0xff]
    %v2623 = vld [vmem:[#allocation4 + $0xd8] sm:$0xff]
    %v2624 = vld [vmem:[%s2 + $0x1d0] sm:$0xff]
    %v2625 = vld [vmem:[%s2 + $0x1d8] sm:$0xff]
    %v2626 = vld [vmem:[%s2 + $0x1e0] sm:$0xff]
    %v2627 = vld [vmem:[%s2 + $0x1e8] sm:$0xff]
    %v2628 = vld [vmem:[%s2 + $0x1f0] sm:$0xff]
    %v2629 = vld [vmem:[%s2 + $0x1f8] sm:$0xff]
    %v2630 = vld [vmem:[%s2 + $0x200] sm:$0xff]
    %v2631 = vld [vmem:[%s2 + $0x208] sm:$0xff]
    %v2632 = vld [vmem:[%s2 + $0x210] sm:$0xff]
    %v2633 = vld [vmem:[%s2 + $0x218] sm:$0xff]
    %v2634 = vld [vmem:[%s2 + $0x220] sm:$0xff]
    %v2635 = vld [vmem:[%s2 + $0x228] sm:$0xff]
    %v2636 = vld [vmem:[%s2 + $0x230] sm:$0xff]
    %v2637 = vld [vmem:[%s2 + $0x238] sm:$0xff]
    %v2638 = vld [vmem:[%s2 + $0x240] sm:$0xff]
    %v2639 = vld [vmem:[%s2 + $0x248] sm:$0xff]
    %2640 = vmatprep.subr.mxu0 0.0
    %2641 = vmatpush1.msra.mxu0 %v2624
    %2642 = vmatprep.subr.mxu0 0.0
    %2643 = vmatpush1.msra.mxu0 %v2625
    %2644 = vmatprep.subr.mxu0 0.0
    %2645 = vmatpush1.msra.mxu0 %v2626
    %2646 = vmatprep.subr.mxu0 0.0
    %2647 = vmatpush1.msra.mxu0 %v2627
    %2648 = vmatprep.subr.mxu0 0.0
    %2649 = vmatpush1.msra.mxu0 %v2628
    %2650 = vmatprep.subr.mxu0 0.0
    %2651 = vmatpush1.msra.mxu0 %v2629
    %2652 = vmatprep.subr.mxu0 0.0
    %2653 = vmatpush1.msra.mxu0 %v2630
    %2654 = vmatprep.subr.mxu0 0.0
    %2655 = vmatpush1.msra.mxu0 %v2631
    %2656 = vmatprep.subr.mxu0 0.0
    %2657 = vmatpush1.msra.mxu0 %v2632
    %2658 = vmatprep.subr.mxu0 0.0
    %2659 = vmatpush1.msra.mxu0 %v2633
    %2660 = vmatprep.subr.mxu0 0.0
    %2661 = vmatpush1.msra.mxu0 %v2634
    %2662 = vmatprep.subr.mxu0 0.0
    %2663 = vmatpush1.msra.mxu0 %v2635
    %2664 = vmatprep.subr.mxu0 0.0
    %2665 = vmatpush1.msra.mxu0 %v2636
    %2666 = vmatprep.subr.mxu0 0.0
    %2667 = vmatpush1.msra.mxu0 %v2637
    %2668 = vmatprep.subr.mxu0 0.0
    %2669 = vmatpush1.msra.mxu0 %v2638
    %2670 = vmatprep.subr.mxu0 0.0
    %2671 = vmatpush1.msra.mxu0 %v2639
    %2672 = vmatprep.subr.mxu0 0.0
    %2673 = vmatpush1.msra.mxu0 0.0
    %2674 = vmatprep.subr.mxu0 0.0
    %2675 = vmatpush1.msra.mxu0 0.0
    %2676 = vmatprep.subr.mxu0 0.0
    %2677 = vmatpush1.msra.mxu0 0.0
    %2678 = vmatprep.subr.mxu0 0.0
    %2679 = vmatpush1.msra.mxu0 0.0
    %2680 = vmatprep.subr.mxu0 0.0
    %2681 = vmatpush1.msra.mxu0 0.0
    %2682 = vmatprep.subr.mxu0 0.0
    %2683 = vmatpush1.msra.mxu0 0.0
    %2684 = vmatprep.subr.mxu0 0.0
    %2685 = vmatpush1.msra.mxu0 0.0
    %2686 = vmatprep.subr.mxu0 0.0
    %2687 = vmatpush1.msra.mxu0 0.0
    %2688 = vmatprep.subr.mxu0 0.0
    %2689 = vmatpush1.msra.mxu0 0.0
    %2690 = vmatprep.subr.mxu0 0.0
    %2691 = vmatpush1.msra.mxu0 0.0
    %2692 = vmatprep.subr.mxu0 0.0
    %2693 = vmatpush1.msra.mxu0 0.0
    %2694 = vmatprep.subr.mxu0 0.0
    %2695 = vmatpush1.msra.mxu0 0.0
    %2696 = vmatprep.subr.mxu0 0.0
    %2697 = vmatpush1.msra.mxu0 0.0
    %2698 = vmatprep.subr.mxu0 0.0
    %2699 = vmatpush1.msra.mxu0 0.0
    %2700 = vmatprep.subr.mxu0 0.0
    %2701 = vmatpush1.msra.mxu0 0.0
    %2702 = vmatprep.subr.mxu0 0.0
    %2703 = vmatpush1.msra.mxu0 0.0
    %2704 = vmatprep.mubr.f32.mxu0 0.0
    %2705 = vmatmul.mubr.f32.gmra.mrb[0].mxu0 %v2596
    %v2706 = vpop.f32.mrb[0].mxu0
    %v2707 = vadd.f32 0.0, %v2706
    %v2708 = vpop.f32.mrb[0].mxu0
    %2709 = vmatprep.mubr.f32.mxu0 0.0
    %2710 = vmatmul.mubr.f32.gmra.mrb[0].mxu0 %v2597
    %v2711 = vpop.f32.mrb[0].mxu0
    %v2712 = vadd.f32 0.0, %v2711
    %v2713 = vpop.f32.mrb[0].mxu0
    %2714 = vmatprep.mubr.f32.mxu0 0.0
    %2715 = vmatmul.mubr.f32.gmra.mrb[0].mxu0 %v2598
    %v2716 = vpop.f32.mrb[0].mxu0
    %v2717 = vadd.f32 0.0, %v2716
    %v2718 = vpop.f32.mrb[0].mxu0
    %2719 = vmatprep.mubr.f32.mxu0 0.0
    %2720 = vmatmul.mubr.f32.gmra.mrb[0].mxu0 %v2599
    %v2721 = vpop.f32.mrb[0].mxu0
    %v2722 = vadd.f32 0.0, %v2721
    %v2723 = vpop.f32.mrb[0].mxu0
    %2724 = vmatprep.mubr.f32.mxu0 0.0
    %2725 = vmatmul.mubr.f32.gmra.mrb[0].mxu0 %v2600
    %v2726 = vpop.f32.mrb[0].mxu0
    %v2727 = vadd.f32 0.0, %v2726
    %v2728 = vpop.f32.mrb[0].mxu0
    %2729 = vmatprep.mubr.f32.mxu0 0.0
    %2730 = vmatmul.mubr.f32.gmra.mrb[0].mxu0 %v2601
    %v2731 = vpop.f32.mrb[0].mxu0
    %v2732 = vadd.f32 0.0, %v2731
    %v2733 = vpop.f32.mrb[0].mxu0
    %2734 = vmatprep.mubr.f32.mxu0 0.0
    %2735 = vmatmul.mubr.f32.gmra.mrb[0].mxu0 %v2602
    %v2736 = vpop.f32.mrb[0].mxu0
    %v2737 = vadd.f32 0.0, %v2736
    %v2738 = vpop.f32.mrb[0].mxu0
    %2739 = vmatprep.mubr.f32.mxu0 0.0
    %2740 = vmatmul.mubr.f32.gmra.mrb[0].mxu0 %v2603
    %v2741 = vpop.f32.mrb[0].mxu0
    %v2742 = vadd.f32 0.0, %v2741
    %v2743 = vpop.f32.mrb[0].mxu0
    %2744 = vmatprep.mubr.f32.mxu0 0.0
    %2745 = vmatmul.mubr.f32.gmra.mrb[0].mxu0 %v2604
    %v2746 = vpop.f32.mrb[0].mxu0
    %v2747 = vadd.f32 0.0, %v2746
    %v2748 = vpop.f32.mrb[0].mxu0
    %2749 = vmatprep.mubr.f32.mxu0 0.0
    %2750 = vmatmul.mubr.f32.gmra.mrb[0].mxu0 %v2605
    %v2751 = vpop.f32.mrb[0].mxu0
    %v2752 = vadd.f32 0.0, %v2751
    %v2753 = vpop.f32.mrb[0].mxu0
    %2754 = vmatprep.mubr.f32.mxu0 0.0
    %2755 = vmatmul.mubr.f32.gmra.mrb[0].mxu0 %v2606
    %v2756 = vpop.f32.mrb[0].mxu0
    %v2757 = vadd.f32 0.0, %v2756
    %v2758 = vpop.f32.mrb[0].mxu0
    %2759 = vmatprep.mubr.f32.mxu0 0.0
    %2760 = vmatmul.mubr.f32.gmra.mrb[0].mxu0 %v2607
    %v2761 = vpop.f32.mrb[0].mxu0
    %v2762 = vadd.f32 0.0, %v2761
    %v2763 = vpop.f32.mrb[0].mxu0
    %2764 = vmatprep.mubr.f32.mxu0 0.0
    %2765 = vmatmul.mubr.f32.gmra.mrb[0].mxu0 %v2608
    %v2766 = vpop.f32.mrb[0].mxu0
    %v2767 = vadd.f32 0.0, %v2766
    %v2768 = vpop.f32.mrb[0].mxu0
    %2769 = vmatprep.mubr.f32.mxu0 0.0
    %2770 = vmatmul.mubr.f32.gmra.mrb[0].mxu0 %v2609
    %v2771 = vpop.f32.mrb[0].mxu0
    %v2772 = vadd.f32 0.0, %v2771
    %v2773 = vpop.f32.mrb[0].mxu0
    %2774 = vmatprep.mubr.f32.mxu0 0.0
    %2775 = vmatmul.mubr.f32.gmra.mrb[0].mxu0 %v2610
    %v2776 = vpop.f32.mrb[0].mxu0
    %v2777 = vadd.f32 0.0, %v2776
    %v2778 = vpop.f32.mrb[0].mxu0
    %2779 = vmatprep.mubr.f32.mxu0 0.0
    %2780 = vmatmul.mubr.f32.gmra.mrb[0].mxu0 %v2611
    %v2781 = vpop.f32.mrb[0].mxu0
    %v2782 = vadd.f32 0.0, %v2781
    %v2783 = vpop.f32.mrb[0].mxu0
    %2784 = vmatprep.mubr.f32.mxu0 0.0
    %2785 = vmatmul.mubr.f32.gmra.mrb[0].mxu0 %v2612
    %v2786 = vpop.f32.mrb[0].mxu0
    %v2787 = vadd.f32 0.0, %v2786
    %v2788 = vpop.f32.mrb[0].mxu0
    %2789 = vmatprep.mubr.f32.mxu0 0.0
    %2790 = vmatmul.mubr.f32.gmra.mrb[0].mxu0 %v2613
    %v2791 = vpop.f32.mrb[0].mxu0
    %v2792 = vadd.f32 0.0, %v2791
    %v2793 = vpop.f32.mrb[0].mxu0
    %2794 = vmatprep.mubr.f32.mxu0 0.0
    %2795 = vmatmul.mubr.f32.gmra.mrb[0].mxu0 %v2614
    %v2796 = vpop.f32.mrb[0].mxu0
    %v2797 = vadd.f32 0.0, %v2796
    %v2798 = vpop.f32.mrb[0].mxu0
    %2799 = vmatprep.mubr.f32.mxu0 0.0
    %2800 = vmatmul.mubr.f32.gmra.mrb[0].mxu0 %v2615
    %v2801 = vpop.f32.mrb[0].mxu0
    %v2802 = vadd.f32 0.0, %v2801
    %v2803 = vpop.f32.mrb[0].mxu0
    %2804 = vmatprep.mubr.f32.mxu0 0.0
    %2805 = vmatmul.mubr.f32.gmra.mrb[0].mxu0 %v2616
    %v2806 = vpop.f32.mrb[0].mxu0
    %v2807 = vadd.f32 0.0, %v2806
    %v2808 = vpop.f32.mrb[0].mxu0
    %2809 = vmatprep.mubr.f32.mxu0 0.0
    %2810 = vmatmul.mubr.f32.gmra.mrb[0].mxu0 %v2617
    %v2811 = vpop.f32.mrb[0].mxu0
    %v2812 = vadd.f32 0.0, %v2811
    %v2813 = vpop.f32.mrb[0].mxu0
    %2814 = vmatprep.mubr.f32.mxu0 0.0
    %2815 = vmatmul.mubr.f32.gmra.mrb[0].mxu0 %v2618
    %v2816 = vpop.f32.mrb[0].mxu0
    %v2817 = vadd.f32 0.0, %v2816
    %v2818 = vpop.f32.mrb[0].mxu0
    %2819 = vmatprep.mubr.f32.mxu0 0.0
    %2820 = vmatmul.mubr.f32.gmra.mrb[0].mxu0 %v2619
    %v2821 = vpop.f32.mrb[0].mxu0
    %v2822 = vadd.f32 0.0, %v2821
    %v2823 = vpop.f32.mrb[0].mxu0
    %2824 = vmatprep.mubr.f32.mxu0 0.0
    %2825 = vmatmul.mubr.f32.gmra.mrb[0].mxu0 %v2620
    %v2826 = vpop.f32.mrb[0].mxu0
    %v2827 = vadd.f32 0.0, %v2826
    %v2828 = vpop.f32.mrb[0].mxu0
    %2829 = vmatprep.mubr.f32.mxu0 0.0
    %2830 = vmatmul.mubr.f32.gmra.mrb[0].mxu0 %v2621
    %v2831 = vpop.f32.mrb[0].mxu0
    %v2832 = vadd.f32 0.0, %v2831
    %v2833 = vpop.f32.mrb[0].mxu0
    %2834 = vmatprep.mubr.f32.mxu0 0.0
    %2835 = vmatmul.mubr.f32.gmra.mrb[0].mxu0 %v2622
    %v2836 = vpop.f32.mrb[0].mxu0
    %v2837 = vadd.f32 0.0, %v2836
    %v2838 = vpop.f32.mrb[0].mxu0
    %2839 = vmatprep.mubr.f32.mxu0 0.0
    %2840 = vmatmul.mubr.f32.gmra.mrb[0].mxu0 %v2623
    %v2841 = vpop.f32.mrb[0].mxu0
    %v2842 = vadd.f32 0.0, %v2841
    %v2843 = vpop.f32.mrb[0].mxu0
    %2844 = vdwg.mxu0
    %v2845 = vld [vmem:[#allocation2 + $0x10] sm:$0xff]
    %v2846 = vld [vmem:[#allocation2 + $0x18] sm:$0xff]
    %v2847 = vld [vmem:[#allocation2 + $0x20] sm:$0xff]
    %v2848 = vld [vmem:[#allocation2 + $0x28] sm:$0xff]
    %v2849 = vld [vmem:[#allocation2 + $0x30] sm:$0xff]
    %v2850 = vld [vmem:[#allocation2 + $0x38] sm:$0xff]
    %v2851 = vld [vmem:[#allocation2 + $0x40] sm:$0xff]
    %v2852 = vld [vmem:[#allocation2 + $0x48] sm:$0xff]
    %v2853 = vld [vmem:[#allocation2 + $0x50] sm:$0xff]
    %v2854 = vld [vmem:[#allocation2 + $0x58] sm:$0xff]
    %v2855 = vld [vmem:[#allocation2 + $0x60] sm:$0xff]
    %v2856 = vld [vmem:[#allocation2 + $0x68] sm:$0xff]
    %v2857 = vld [vmem:[#allocation2 + $0x70] sm:$0xff]
    %v2858 = vld [vmem:[#allocation2 + $0x78] sm:$0xff]
    %v2859 = vld [vmem:[#allocation2 + $0x80] sm:$0xff]
    %v2860 = vld [vmem:[#allocation2 + $0x88] sm:$0xff]
    %v2861 = vld [vmem:[#allocation2 + $0x90] sm:$0xff]
    %v2862 = vld [vmem:[#allocation2 + $0x98] sm:$0xff]
    %v2863 = vld [vmem:[#allocation2 + $0xa0] sm:$0xff]
    %v2864 = vld [vmem:[#allocation2 + $0xa8] sm:$0xff]
    %v2865 = vld [vmem:[#allocation2 + $0xb0] sm:$0xff]
    %v2866 = vld [vmem:[#allocation2 + $0xb8] sm:$0xff]
    %v2867 = vld [vmem:[#allocation2 + $0xc0] sm:$0xff]
    %v2868 = vld [vmem:[#allocation2 + $0xc8] sm:$0xff]
    %v2869 = vld [vmem:[#allocation2 + $0xd0] sm:$0xff]
    %v2870 = vld [vmem:[#allocation2 + $0xd8] sm:$0xff]
    %v2871 = vld [vmem:[#allocation2 + $0xe0] sm:$0xff]
    %v2872 = vld [vmem:[#allocation2 + $0xe8] sm:$0xff]
    %v2873 = vadd.f32 %v2845, %v2707
    %v2874 = vadd.f32 %v2846, %v2712
    %v2875 = vadd.f32 %v2847, %v2717
    %v2876 = vadd.f32 %v2848, %v2722
    %v2877 = vadd.f32 %v2849, %v2727
    %v2878 = vadd.f32 %v2850, %v2732
    %v2879 = vadd.f32 %v2851, %v2737
    %v2880 = vadd.f32 %v2852, %v2742
    %v2881 = vadd.f32 %v2853, %v2747
    %v2882 = vadd.f32 %v2854, %v2752
    %v2883 = vadd.f32 %v2855, %v2757
    %v2884 = vadd.f32 %v2856, %v2762
    %v2885 = vadd.f32 %v2857, %v2767
    %v2886 = vadd.f32 %v2858, %v2772
    %v2887 = vadd.f32 %v2859, %v2777
    %v2888 = vadd.f32 %v2860, %v2782
    %v2889 = vadd.f32 %v2861, %v2787
    %v2890 = vadd.f32 %v2862, %v2792
    %v2891 = vadd.f32 %v2863, %v2797
    %v2892 = vadd.f32 %v2864, %v2802
    %v2893 = vadd.f32 %v2865, %v2807
    %v2894 = vadd.f32 %v2866, %v2812
    %v2895 = vadd.f32 %v2867, %v2817
    %v2896 = vadd.f32 %v2868, %v2822
    %v2897 = vadd.f32 %v2869, %v2827
    %v2898 = vadd.f32 %v2870, %v2832
    %v2899 = vadd.f32 %v2871, %v2837
    %v2900 = vadd.f32 %v2872, %v2842
    %2901 = vst.msk [vmem:[#allocation2 + $0x10] sm:$0xff] %vm806, %v2873
    %2902 = vst.msk [vmem:[#allocation2 + $0x18] sm:$0xff] %vm806, %v2874
    %2903 = vst.msk [vmem:[#allocation2 + $0x20] sm:$0xff] %vm806, %v2875
    %2904 = vst.msk [vmem:[#allocation2 + $0x28] sm:$0xff] %vm806, %v2876
    %2905 = vst.msk [vmem:[#allocation2 + $0x30] sm:$0xff] %vm806, %v2877
    %2906 = vst.msk [vmem:[#allocation2 + $0x38] sm:$0xff] %vm806, %v2878
    %2907 = vst.msk [vmem:[#allocation2 + $0x40] sm:$0xff] %vm806, %v2879
    %2908 = vst.msk [vmem:[#allocation2 + $0x48] sm:$0xff] %vm806, %v2880
    %2909 = vst.msk [vmem:[#allocation2 + $0x50] sm:$0xff] %vm806, %v2881
    %2910 = vst.msk [vmem:[#allocation2 + $0x58] sm:$0xff] %vm806, %v2882
    %2911 = vst.msk [vmem:[#allocation2 + $0x60] sm:$0xff] %vm806, %v2883
    %2912 = vst.msk [vmem:[#allocation2 + $0x68] sm:$0xff] %vm806, %v2884
    %2913 = vst.msk [vmem:[#allocation2 + $0x70] sm:$0xff] %vm806, %v2885
    %2914 = vst.msk [vmem:[#allocation2 + $0x78] sm:$0xff] %vm806, %v2886
    %2915 = vst.msk [vmem:[#allocation2 + $0x80] sm:$0xff] %vm806, %v2887
    %2916 = vst.msk [vmem:[#allocation2 + $0x88] sm:$0xff] %vm806, %v2888
    %2917 = vst.msk [vmem:[#allocation2 + $0x90] sm:$0xff] %vm806, %v2889
    %2918 = vst.msk [vmem:[#allocation2 + $0x98] sm:$0xff] %vm806, %v2890
    %2919 = vst.msk [vmem:[#allocation2 + $0xa0] sm:$0xff] %vm806, %v2891
    %2920 = vst.msk [vmem:[#allocation2 + $0xa8] sm:$0xff] %vm806, %v2892
    %2921 = vst.msk [vmem:[#allocation2 + $0xb0] sm:$0xff] %vm806, %v2893
    %2922 = vst.msk [vmem:[#allocation2 + $0xb8] sm:$0xff] %vm806, %v2894
    %2923 = vst.msk [vmem:[#allocation2 + $0xc0] sm:$0xff] %vm806, %v2895
    %2924 = vst.msk [vmem:[#allocation2 + $0xc8] sm:$0xff] %vm806, %v2896
    %2925 = vst.msk [vmem:[#allocation2 + $0xd0] sm:$0xff] %vm806, %v2897
    %2926 = vst.msk [vmem:[#allocation2 + $0xd8] sm:$0xff] %vm806, %v2898
    %2927 = vst.msk [vmem:[#allocation2 + $0xe0] sm:$0xff] %vm806, %v2899
    %2928 = vst.msk [vmem:[#allocation2 + $0xe8] sm:$0xff] %vm806, %v2900
    %v2929 = vld [vmem:[%s3 + $0x6] sm:$0x1]
    %v2930 = vld [vmem:[%s3 + $0x7] sm:$0x1]
    %v2931 = vld [vmem:[#allocation2] sm:$0xff]
    %v2932 = vld [vmem:[#allocation2 + $0x8] sm:$0xff]
    %v2933 = vld [vmem:[#allocation2 + $0x10] sm:$0xff]
    %v2934 = vld [vmem:[#allocation2 + $0x18] sm:$0xff]
    %v2935 = vld [vmem:[#allocation2 + $0x20] sm:$0xff]
    %v2936 = vld [vmem:[#allocation2 + $0x28] sm:$0xff]
    %v2937 = vld [vmem:[#allocation2 + $0x30] sm:$0xff]
    %v2938 = vld [vmem:[#allocation2 + $0x38] sm:$0xff]
    %v2939 = vld [vmem:[#allocation2 + $0x40] sm:$0xff]
    %v2940 = vld [vmem:[#allocation2 + $0x48] sm:$0xff]
    %v2941 = vld [vmem:[#allocation2 + $0x50] sm:$0xff]
    %v2942 = vld [vmem:[#allocation2 + $0x58] sm:$0xff]
    %v2943 = vld [vmem:[#allocation2 + $0x60] sm:$0xff]
    %v2944 = vld [vmem:[#allocation2 + $0x68] sm:$0xff]
    %v2945 = vld [vmem:[#allocation2 + $0x70] sm:$0xff]
    %v2946 = vld [vmem:[#allocation2 + $0x78] sm:$0xff]
    %v2947 = vld [vmem:[#allocation2 + $0x80] sm:$0xff]
    %v2948 = vld [vmem:[#allocation2 + $0x88] sm:$0xff]
    %v2949 = vld [vmem:[#allocation2 + $0x90] sm:$0xff]
    %v2950 = vld [vmem:[#allocation2 + $0x98] sm:$0xff]
    %v2951 = vld [vmem:[#allocation2 + $0xa0] sm:$0xff]
    %v2952 = vld [vmem:[#allocation2 + $0xa8] sm:$0xff]
    %v2953 = vld [vmem:[#allocation2 + $0xb0] sm:$0xff]
    %v2954 = vld [vmem:[#allocation2 + $0xb8] sm:$0xff]
    %v2955 = vld [vmem:[#allocation2 + $0xc0] sm:$0xff]
    %v2956 = vld [vmem:[#allocation2 + $0xc8] sm:$0xff]
    %v2957 = vld [vmem:[#allocation2 + $0xd0] sm:$0xff]
    %v2958 = vld [vmem:[#allocation2 + $0xd8] sm:$0xff]
    %v2959 = vld [vmem:[#allocation2 + $0xe0] sm:$0xff]
    %v2960 = vld [vmem:[#allocation2 + $0xe8] sm:$0xff]
    %v2961 = vld [vmem:[#allocation2 + $0xf0] sm:$0xff]
    %v2962 = vld [vmem:[#allocation2 + $0xf8] sm:$0xff]
    %2963 = vmatprep.subr.mxu0 0.0
    %2964 = vmatpush1.msra.mxu0 %v2931
    %2965 = vmatprep.subr.mxu0 0.0
    %2966 = vmatpush1.msra.mxu0 %v2932
    %2967 = vmatprep.subr.mxu0 0.0
    %2968 = vmatpush1.msra.mxu0 %v2933
    %2969 = vmatprep.subr.mxu0 0.0
    %2970 = vmatpush1.msra.mxu0 %v2934
    %2971 = vmatprep.subr.mxu0 0.0
    %2972 = vmatpush1.msra.mxu0 %v2935
    %2973 = vmatprep.subr.mxu0 0.0
    %2974 = vmatpush1.msra.mxu0 %v2936
    %2975 = vmatprep.subr.mxu0 0.0
    %2976 = vmatpush1.msra.mxu0 %v2937
    %2977 = vmatprep.subr.mxu0 0.0
    %2978 = vmatpush1.msra.mxu0 %v2938
    %2979 = vmatprep.subr.mxu0 0.0
    %2980 = vmatpush1.msra.mxu0 %v2939
    %2981 = vmatprep.subr.mxu0 0.0
    %2982 = vmatpush1.msra.mxu0 %v2940
    %2983 = vmatprep.subr.mxu0 0.0
    %2984 = vmatpush1.msra.mxu0 %v2941
    %2985 = vmatprep.subr.mxu0 0.0
    %2986 = vmatpush1.msra.mxu0 %v2942
    %2987 = vmatprep.subr.mxu0 0.0
    %2988 = vmatpush1.msra.mxu0 %v2943
    %2989 = vmatprep.subr.mxu0 0.0
    %2990 = vmatpush1.msra.mxu0 %v2944
    %2991 = vmatprep.subr.mxu0 0.0
    %2992 = vmatpush1.msra.mxu0 %v2945
    %2993 = vmatprep.subr.mxu0 0.0
    %2994 = vmatpush1.msra.mxu0 %v2946
    %2995 = vmatprep.subr.mxu0 0.0
    %2996 = vmatpush1.msra.mxu0 %v2947
    %2997 = vmatprep.subr.mxu0 0.0
    %2998 = vmatpush1.msra.mxu0 %v2948
    %2999 = vmatprep.subr.mxu0 0.0
    %3000 = vmatpush1.msra.mxu0 %v2949
    %3001 = vmatprep.subr.mxu0 0.0
    %3002 = vmatpush1.msra.mxu0 %v2950
    %3003 = vmatprep.subr.mxu0 0.0
    %3004 = vmatpush1.msra.mxu0 %v2951
    %3005 = vmatprep.subr.mxu0 0.0
    %3006 = vmatpush1.msra.mxu0 %v2952
    %3007 = vmatprep.subr.mxu0 0.0
    %3008 = vmatpush1.msra.mxu0 %v2953
    %3009 = vmatprep.subr.mxu0 0.0
    %3010 = vmatpush1.msra.mxu0 %v2954
    %3011 = vmatprep.subr.mxu0 0.0
    %3012 = vmatpush1.msra.mxu0 %v2955
    %3013 = vmatprep.subr.mxu0 0.0
    %3014 = vmatpush1.msra.mxu0 %v2956
    %3015 = vmatprep.subr.mxu0 0.0
    %3016 = vmatpush1.msra.mxu0 %v2957
    %3017 = vmatprep.subr.mxu0 0.0
    %3018 = vmatpush1.msra.mxu0 %v2958
    %3019 = vmatprep.subr.mxu0 0.0
    %3020 = vmatpush1.msra.mxu0 %v2959
    %3021 = vmatprep.subr.mxu0 0.0
    %3022 = vmatpush1.msra.mxu0 %v2960
    %3023 = vmatprep.subr.mxu0 0.0
    %3024 = vmatpush1.msra.mxu0 %v2961
    %3025 = vmatprep.subr.mxu0 0.0
    %3026 = vmatpush1.msra.mxu0 %v2962
    %3027 = vmatprep.mubr.f32.mxu0 %v51
    %3028 = vmatmul.mubr.f32.gmra.mrb[0].mxu0 %v50
    %v3029 = vpop.f32.mrb[0].mxu0
    %v3030 = vadd.f32 0.0, %v3029
    %v3031 = vpop.f32.mrb[0].mxu0
    %3032 = vdwg.mxu0
    %v3033 = vmul.f32 %v2931, %v2931
    %v3034 = vmul.f32 %v2932, %v2932
    %v3035 = vmul.f32 %v2933, %v2933
    %v3036 = vmul.f32 %v2934, %v2934
    %v3037 = vmul.f32 %v2935, %v2935
    %v3038 = vmul.f32 %v2936, %v2936
    %v3039 = vmul.f32 %v2937, %v2937
    %v3040 = vmul.f32 %v2938, %v2938
    %v3041 = vmul.f32 %v2939, %v2939
    %v3042 = vmul.f32 %v2940, %v2940
    %v3043 = vmul.f32 %v2941, %v2941
    %v3044 = vmul.f32 %v2942, %v2942
    %v3045 = vmul.f32 %v2943, %v2943
    %v3046 = vmul.f32 %v2944, %v2944
    %v3047 = vmul.f32 %v2945, %v2945
    %v3048 = vmul.f32 %v2946, %v2946
    %v3049 = vmul.f32 %v2947, %v2947
    %v3050 = vmul.f32 %v2948, %v2948
    %v3051 = vmul.f32 %v2949, %v2949
    %v3052 = vmul.f32 %v2950, %v2950
    %v3053 = vmul.f32 %v2951, %v2951
    %v3054 = vmul.f32 %v2952, %v2952
    %v3055 = vmul.f32 %v2953, %v2953
    %v3056 = vmul.f32 %v2954, %v2954
    %v3057 = vmul.f32 %v2955, %v2955
    %v3058 = vmul.f32 %v2956, %v2956
    %v3059 = vmul.f32 %v2957, %v2957
    %v3060 = vmul.f32 %v2958, %v2958
    %v3061 = vmul.f32 %v2959, %v2959
    %v3062 = vmul.f32 %v2960, %v2960
    %v3063 = vmul.f32 %v2961, %v2961
    %v3064 = vmul.f32 %v2962, %v2962
    %3065 = vmatprep.subr.mxu0 0.0
    %3066 = vmatpush1.msra.mxu0 %v3033
    %3067 = vmatprep.subr.mxu0 0.0
    %3068 = vmatpush1.msra.mxu0 %v3034
    %3069 = vmatprep.subr.mxu0 0.0
    %3070 = vmatpush1.msra.mxu0 %v3035
    %3071 = vmatprep.subr.mxu0 0.0
    %3072 = vmatpush1.msra.mxu0 %v3036
    %3073 = vmatprep.subr.mxu0 0.0
    %3074 = vmatpush1.msra.mxu0 %v3037
    %3075 = vmatprep.subr.mxu0 0.0
    %3076 = vmatpush1.msra.mxu0 %v3038
    %3077 = vmatprep.subr.mxu0 0.0
    %3078 = vmatpush1.msra.mxu0 %v3039
    %3079 = vmatprep.subr.mxu0 0.0
    %3080 = vmatpush1.msra.mxu0 %v3040
    %3081 = vmatprep.subr.mxu0 0.0
    %3082 = vmatpush1.msra.mxu0 %v3041
    %3083 = vmatprep.subr.mxu0 0.0
    %3084 = vmatpush1.msra.mxu0 %v3042
    %3085 = vmatprep.subr.mxu0 0.0
    %3086 = vmatpush1.msra.mxu0 %v3043
    %3087 = vmatprep.subr.mxu0 0.0
    %3088 = vmatpush1.msra.mxu0 %v3044
    %3089 = vmatprep.subr.mxu0 0.0
    %3090 = vmatpush1.msra.mxu0 %v3045
    %3091 = vmatprep.subr.mxu0 0.0
    %3092 = vmatpush1.msra.mxu0 %v3046
    %3093 = vmatprep.subr.mxu0 0.0
    %3094 = vmatpush1.msra.mxu0 %v3047
    %3095 = vmatprep.subr.mxu0 0.0
    %3096 = vmatpush1.msra.mxu0 %v3048
    %3097 = vmatprep.subr.mxu0 0.0
    %3098 = vmatpush1.msra.mxu0 %v3049
    %3099 = vmatprep.subr.mxu0 0.0
    %3100 = vmatpush1.msra.mxu0 %v3050
    %3101 = vmatprep.subr.mxu0 0.0
    %3102 = vmatpush1.msra.mxu0 %v3051
    %3103 = vmatprep.subr.mxu0 0.0
    %3104 = vmatpush1.msra.mxu0 %v3052
    %3105 = vmatprep.subr.mxu0 0.0
    %3106 = vmatpush1.msra.mxu0 %v3053
    %3107 = vmatprep.subr.mxu0 0.0
    %3108 = vmatpush1.msra.mxu0 %v3054
    %3109 = vmatprep.subr.mxu0 0.0
    %3110 = vmatpush1.msra.mxu0 %v3055
    %3111 = vmatprep.subr.mxu0 0.0
    %3112 = vmatpush1.msra.mxu0 %v3056
    %3113 = vmatprep.subr.mxu0 0.0
    %3114 = vmatpush1.msra.mxu0 %v3057
    %3115 = vmatprep.subr.mxu0 0.0
    %3116 = vmatpush1.msra.mxu0 %v3058
    %3117 = vmatprep.subr.mxu0 0.0
    %3118 = vmatpush1.msra.mxu0 %v3059
    %3119 = vmatprep.subr.mxu0 0.0
    %3120 = vmatpush1.msra.mxu0 %v3060
    %3121 = vmatprep.subr.mxu0 0.0
    %3122 = vmatpush1.msra.mxu0 %v3061
    %3123 = vmatprep.subr.mxu0 0.0
    %3124 = vmatpush1.msra.mxu0 %v3062
    %3125 = vmatprep.subr.mxu0 0.0
    %3126 = vmatpush1.msra.mxu0 %v3063
    %3127 = vmatprep.subr.mxu0 0.0
    %3128 = vmatpush1.msra.mxu0 %v3064
    %3129 = vmatprep.mubr.f32.mxu0 %v51
    %3130 = vmatmul.mubr.f32.gmra.mrb[0].mxu0 %v50
    %v3131 = vpop.f32.mrb[0].mxu0
    %v3132 = vadd.f32 0.0, %v3131
    %v3133 = vpop.f32.mrb[0].mxu0
    %3134 = vdwg.mxu0
    %v3135 = vmul.f32 %v3030, %v3030
    %v3136 = vsub.f32 %v3132, %v3135
    %v3137 = vadd.f32 %v3136, 0.001
    %v3138 = vrsqrt.pop %v3137
    %v3140 = vrot.slane %v2929, 4
    %v3142 = vmul.f32 %v3138, %v3140
    %v3143 = vmul.f32 %v3030, %v3142
    %v3145 = vrot.slane %v3143, 4
    %v3147 = vsub.f32 %v2930, %v3145
    %v3148 = vlaneseq
    %v3149 = vshrl.u32 %v3148, 7
    %v3150 = vsub.s32 4, %v3149
    %v3151 = vrot.slane %v3142, %v3150
    %v3152 = vmul.f32 %v2931, %v3151
    %v3153 = vmul.f32 %v2932, %v3151
    %v3154 = vmul.f32 %v2933, %v3151
    %v3155 = vmul.f32 %v2934, %v3151
    %v3156 = vmul.f32 %v2935, %v3151
    %v3157 = vmul.f32 %v2936, %v3151
    %v3158 = vmul.f32 %v2937, %v3151
    %v3159 = vmul.f32 %v2938, %v3151
    %v3160 = vmul.f32 %v2939, %v3151
    %v3161 = vmul.f32 %v2940, %v3151
    %v3162 = vmul.f32 %v2941, %v3151
    %v3163 = vmul.f32 %v2942, %v3151
    %v3164 = vmul.f32 %v2943, %v3151
    %v3165 = vmul.f32 %v2944, %v3151
    %v3166 = vmul.f32 %v2945, %v3151
    %v3167 = vmul.f32 %v2946, %v3151
    %v3168 = vmul.f32 %v2947, %v3151
    %v3169 = vmul.f32 %v2948, %v3151
    %v3170 = vmul.f32 %v2949, %v3151
    %v3171 = vmul.f32 %v2950, %v3151
    %v3172 = vmul.f32 %v2951, %v3151
    %v3173 = vmul.f32 %v2952, %v3151
    %v3174 = vmul.f32 %v2953, %v3151
    %v3175 = vmul.f32 %v2954, %v3151
    %v3176 = vmul.f32 %v2955, %v3151
    %v3177 = vmul.f32 %v2956, %v3151
    %v3178 = vmul.f32 %v2957, %v3151
    %v3179 = vmul.f32 %v2958, %v3151
    %v3180 = vmul.f32 %v2959, %v3151
    %v3181 = vmul.f32 %v2960, %v3151
    %v3182 = vmul.f32 %v2961, %v3151
    %v3183 = vmul.f32 %v2962, %v3151
    %v3184 = vlaneseq
    %v3185 = vshrl.u32 %v3184, 7
    %v3186 = vsub.s32 0, %v3185
    %v3187 = vrot.slane %v3147, %v3186
    %v3188 = vadd.f32 %v3152, %v3187
    %v3189 = vadd.f32 %v3153, %v3187
    %v3190 = vadd.f32 %v3154, %v3187
    %v3191 = vadd.f32 %v3155, %v3187
    %v3192 = vadd.f32 %v3156, %v3187
    %v3193 = vadd.f32 %v3157, %v3187
    %v3194 = vadd.f32 %v3158, %v3187
    %v3195 = vadd.f32 %v3159, %v3187
    %v3196 = vadd.f32 %v3160, %v3187
    %v3197 = vadd.f32 %v3161, %v3187
    %v3198 = vadd.f32 %v3162, %v3187
    %v3199 = vadd.f32 %v3163, %v3187
    %v3200 = vadd.f32 %v3164, %v3187
    %v3201 = vadd.f32 %v3165, %v3187
    %v3202 = vadd.f32 %v3166, %v3187
    %v3203 = vadd.f32 %v3167, %v3187
    %v3204 = vadd.f32 %v3168, %v3187
    %v3205 = vadd.f32 %v3169, %v3187
    %v3206 = vadd.f32 %v3170, %v3187
    %v3207 = vadd.f32 %v3171, %v3187
    %v3208 = vadd.f32 %v3172, %v3187
    %v3209 = vadd.f32 %v3173, %v3187
    %v3210 = vadd.f32 %v3174, %v3187
    %v3211 = vadd.f32 %v3175, %v3187
    %v3212 = vadd.f32 %v3176, %v3187
    %v3213 = vadd.f32 %v3177, %v3187
    %v3214 = vadd.f32 %v3178, %v3187
    %v3215 = vadd.f32 %v3179, %v3187
    %v3216 = vadd.f32 %v3180, %v3187
    %v3217 = vadd.f32 %v3181, %v3187
    %v3218 = vadd.f32 %v3182, %v3187
    %v3219 = vadd.f32 %v3183, %v3187
    %v3220 = vmax.f32 %v3188, 0.0
    %v3221 = vmax.f32 %v3189, 0.0
    %v3222 = vmax.f32 %v3190, 0.0
    %v3223 = vmax.f32 %v3191, 0.0
    %v3224 = vmax.f32 %v3192, 0.0
    %v3225 = vmax.f32 %v3193, 0.0
    %v3226 = vmax.f32 %v3194, 0.0
    %v3227 = vmax.f32 %v3195, 0.0
    %v3228 = vmax.f32 %v3196, 0.0
    %v3229 = vmax.f32 %v3197, 0.0
    %v3230 = vmax.f32 %v3198, 0.0
    %v3231 = vmax.f32 %v3199, 0.0
    %v3232 = vmax.f32 %v3200, 0.0
    %v3233 = vmax.f32 %v3201, 0.0
    %v3234 = vmax.f32 %v3202, 0.0
    %v3235 = vmax.f32 %v3203, 0.0
    %v3236 = vmax.f32 %v3204, 0.0
    %v3237 = vmax.f32 %v3205, 0.0
    %v3238 = vmax.f32 %v3206, 0.0
    %v3239 = vmax.f32 %v3207, 0.0
    %v3240 = vmax.f32 %v3208, 0.0
    %v3241 = vmax.f32 %v3209, 0.0
    %v3242 = vmax.f32 %v3210, 0.0
    %v3243 = vmax.f32 %v3211, 0.0
    %v3244 = vmax.f32 %v3212, 0.0
    %v3245 = vmax.f32 %v3213, 0.0
    %v3246 = vmax.f32 %v3214, 0.0
    %v3247 = vmax.f32 %v3215, 0.0
    %v3248 = vmax.f32 %v3216, 0.0
    %v3249 = vmax.f32 %v3217, 0.0
    %v3250 = vmax.f32 %v3218, 0.0
    %v3251 = vmax.f32 %v3219, 0.0
    %v3252 = vmul.f32 %v3220, %v1164
    %v3253 = vmul.f32 %v3221, %v1168
    %v3254 = vmul.f32 %v3222, %v1172
    %v3255 = vmul.f32 %v3223, %v1176
    %v3256 = vmul.f32 %v3224, %v1180
    %v3257 = vmul.f32 %v3225, %v1184
    %v3258 = vmul.f32 %v3226, %v1188
    %v3259 = vmul.f32 %v3227, %v1192
    %v3260 = vmul.f32 %v3228, %v1196
    %v3261 = vmul.f32 %v3229, %v1200
    %v3262 = vmul.f32 %v3230, %v1204
    %v3263 = vmul.f32 %v3231, %v1208
    %v3264 = vmul.f32 %v3232, %v1212
    %v3265 = vmul.f32 %v3233, %v1216
    %v3266 = vmul.f32 %v3234, %v1220
    %v3267 = vmul.f32 %v3235, %v1224
    %v3268 = vmul.f32 %v3236, %v1228
    %v3269 = vmul.f32 %v3237, %v1232
    %v3270 = vmul.f32 %v3238, %v1236
    %v3271 = vmul.f32 %v3239, %v1240
    %v3272 = vmul.f32 %v3240, %v1244
    %v3273 = vmul.f32 %v3241, %v1248
    %v3274 = vmul.f32 %v3242, %v1252
    %v3275 = vmul.f32 %v3243, %v1256
    %v3276 = vmul.f32 %v3244, %v1260
    %v3277 = vmul.f32 %v3245, %v1264
    %v3278 = vmul.f32 %v3246, %v1268
    %v3279 = vmul.f32 %v3247, %v1272
    %v3280 = vmul.f32 %v3248, %v1276
    %v3281 = vmul.f32 %v3249, %v1280
    %v3282 = vmul.f32 %v3250, %v1284
    %v3283 = vmul.f32 %v3251, %v1288
    %v3284 = vld [vmem:[%s2 + $0xd0] sm:$0xff]
    %v3285 = vld [vmem:[%s2 + $0xd8] sm:$0xff]
    %v3286 = vld [vmem:[%s2 + $0xe0] sm:$0xff]
    %v3287 = vld [vmem:[%s2 + $0xe8] sm:$0xff]
    %v3288 = vld [vmem:[%s2 + $0xf0] sm:$0xff]
    %v3289 = vld [vmem:[%s2 + $0xf8] sm:$0xff]
    %v3290 = vld [vmem:[%s2 + $0x100] sm:$0xff]
    %v3291 = vld [vmem:[%s2 + $0x108] sm:$0xff]
    %v3293 = vsel %vm806, %v3252, 0
    %v3296 = vsel %vm806, %v3253, 0
    %v3299 = vsel %vm806, %v3254, 0
    %v3302 = vsel %vm806, %v3255, 0
    %v3305 = vsel %vm806, %v3256, 0
    %v3308 = vsel %vm806, %v3257, 0
    %v3311 = vsel %vm806, %v3258, 0
    %v3314 = vsel %vm806, %v3259, 0
    %v3317 = vsel %vm806, %v3260, 0
    %v3320 = vsel %vm806, %v3261, 0
    %v3323 = vsel %vm806, %v3262, 0
    %v3326 = vsel %vm806, %v3263, 0
    %v3329 = vsel %vm806, %v3264, 0
    %v3332 = vsel %vm806, %v3265, 0
    %v3335 = vsel %vm806, %v3266, 0
    %v3338 = vsel %vm806, %v3267, 0
    %v3341 = vsel %vm806, %v3268, 0
    %v3344 = vsel %vm806, %v3269, 0
    %v3347 = vsel %vm806, %v3270, 0
    %v3350 = vsel %vm806, %v3271, 0
    %v3353 = vsel %vm806, %v3272, 0
    %v3356 = vsel %vm806, %v3273, 0
    %v3359 = vsel %vm806, %v3274, 0
    %v3362 = vsel %vm806, %v3275, 0
    %v3365 = vsel %vm806, %v3276, 0
    %v3368 = vsel %vm806, %v3277, 0
    %v3371 = vsel %vm806, %v3278, 0
    %v3374 = vsel %vm806, %v3279, 0
    %v3377 = vsel %vm806, %v3280, 0
    %v3380 = vsel %vm806, %v3281, 0
    %v3383 = vsel %vm806, %v3282, 0
    %v3386 = vsel %vm806, %v3283, 0
    %3388 = vmatprep.subr.mxu0 0.0
    %3389 = vmatpush1.msra.mxu0 %v3284
    %3390 = vmatprep.subr.mxu0 0.0
    %3391 = vmatpush1.msra.mxu0 %v3285
    %3392 = vmatprep.subr.mxu0 0.0
    %3393 = vmatpush1.msra.mxu0 %v3286
    %3394 = vmatprep.subr.mxu0 0.0
    %3395 = vmatpush1.msra.mxu0 %v3287
    %3396 = vmatprep.subr.mxu0 0.0
    %3397 = vmatpush1.msra.mxu0 %v3288
    %3398 = vmatprep.subr.mxu0 0.0
    %3399 = vmatpush1.msra.mxu0 %v3289
    %3400 = vmatprep.subr.mxu0 0.0
    %3401 = vmatpush1.msra.mxu0 %v3290
    %3402 = vmatprep.subr.mxu0 0.0
    %3403 = vmatpush1.msra.mxu0 %v3291
    %3404 = vmatprep.subr.mxu0 0.0
    %3405 = vmatpush1.msra.mxu0 0.0
    %3406 = vmatprep.subr.mxu0 0.0
    %3407 = vmatpush1.msra.mxu0 0.0
    %3408 = vmatprep.subr.mxu0 0.0
    %3409 = vmatpush1.msra.mxu0 0.0
    %3410 = vmatprep.subr.mxu0 0.0
    %3411 = vmatpush1.msra.mxu0 0.0
    %3412 = vmatprep.subr.mxu0 0.0
    %3413 = vmatpush1.msra.mxu0 0.0
    %3414 = vmatprep.subr.mxu0 0.0
    %3415 = vmatpush1.msra.mxu0 0.0
    %3416 = vmatprep.subr.mxu0 0.0
    %3417 = vmatpush1.msra.mxu0 0.0
    %3418 = vmatprep.subr.mxu0 0.0
    %3419 = vmatpush1.msra.mxu0 0.0
    %3420 = vmatprep.subr.mxu0 0.0
    %3421 = vmatpush1.msra.mxu0 0.0
    %3422 = vmatprep.subr.mxu0 0.0
    %3423 = vmatpush1.msra.mxu0 0.0
    %3424 = vmatprep.subr.mxu0 0.0
    %3425 = vmatpush1.msra.mxu0 0.0
    %3426 = vmatprep.subr.mxu0 0.0
    %3427 = vmatpush1.msra.mxu0 0.0
    %3428 = vmatprep.subr.mxu0 0.0
    %3429 = vmatpush1.msra.mxu0 0.0
    %3430 = vmatprep.subr.mxu0 0.0
    %3431 = vmatpush1.msra.mxu0 0.0
    %3432 = vmatprep.subr.mxu0 0.0
    %3433 = vmatpush1.msra.mxu0 0.0
    %3434 = vmatprep.subr.mxu0 0.0
    %3435 = vmatpush1.msra.mxu0 0.0
    %3436 = vmatprep.subr.mxu0 0.0
    %3437 = vmatpush1.msra.mxu0 0.0
    %3438 = vmatprep.subr.mxu0 0.0
    %3439 = vmatpush1.msra.mxu0 0.0
    %3440 = vmatprep.subr.mxu0 0.0
    %3441 = vmatpush1.msra.mxu0 0.0
    %3442 = vmatprep.subr.mxu0 0.0
    %3443 = vmatpush1.msra.mxu0 0.0
    %3444 = vmatprep.subr.mxu0 0.0
    %3445 = vmatpush1.msra.mxu0 0.0
    %3446 = vmatprep.subr.mxu0 0.0
    %3447 = vmatpush1.msra.mxu0 0.0
    %3448 = vmatprep.subr.mxu0 0.0
    %3449 = vmatpush1.msra.mxu0 0.0
    %3450 = vmatprep.subr.mxu0 0.0
    %3451 = vmatpush1.msra.mxu0 0.0
    %3452 = vmatprep.mubr.f32.mxu0 0.0
    %3453 = vmatmul.mubr.f32.gmra.mrb[0].mxu0 %v3293
    %v3454 = vpop.f32.mrb[0].mxu0
    %v3455 = vadd.f32 0.0, %v3454
    %v3456 = vpop.f32.mrb[0].mxu0
    %3457 = vmatprep.mubr.f32.mxu0 0.0
    %3458 = vmatmul.mubr.f32.gmra.mrb[0].mxu0 %v3296
    %v3459 = vpop.f32.mrb[0].mxu0
    %v3460 = vadd.f32 0.0, %v3459
    %v3461 = vpop.f32.mrb[0].mxu0
    %3462 = vmatprep.mubr.f32.mxu0 0.0
    %3463 = vmatmul.mubr.f32.gmra.mrb[0].mxu0 %v3299
    %v3464 = vpop.f32.mrb[0].mxu0
    %v3465 = vadd.f32 0.0, %v3464
    %v3466 = vpop.f32.mrb[0].mxu0
    %3467 = vmatprep.mubr.f32.mxu0 0.0
    %3468 = vmatmul.mubr.f32.gmra.mrb[0].mxu0 %v3302
    %v3469 = vpop.f32.mrb[0].mxu0
    %v3470 = vadd.f32 0.0, %v3469
    %v3471 = vpop.f32.mrb[0].mxu0
    %3472 = vmatprep.mubr.f32.mxu0 0.0
    %3473 = vmatmul.mubr.f32.gmra.mrb[0].mxu0 %v3305
    %v3474 = vpop.f32.mrb[0].mxu0
    %v3475 = vadd.f32 0.0, %v3474
    %v3476 = vpop.f32.mrb[0].mxu0
    %3477 = vmatprep.mubr.f32.mxu0 0.0
    %3478 = vmatmul.mubr.f32.gmra.mrb[0].mxu0 %v3308
    %v3479 = vpop.f32.mrb[0].mxu0
    %v3480 = vadd.f32 0.0, %v3479
    %v3481 = vpop.f32.mrb[0].mxu0
    %3482 = vmatprep.mubr.f32.mxu0 0.0
    %3483 = vmatmul.mubr.f32.gmra.mrb[0].mxu0 %v3311
    %v3484 = vpop.f32.mrb[0].mxu0
    %v3485 = vadd.f32 0.0, %v3484
    %v3486 = vpop.f32.mrb[0].mxu0
    %3487 = vmatprep.mubr.f32.mxu0 0.0
    %3488 = vmatmul.mubr.f32.gmra.mrb[0].mxu0 %v3314
    %v3489 = vpop.f32.mrb[0].mxu0
    %v3490 = vadd.f32 0.0, %v3489
    %v3491 = vpop.f32.mrb[0].mxu0
    %3492 = vmatprep.mubr.f32.mxu0 0.0
    %3493 = vmatmul.mubr.f32.gmra.mrb[0].mxu0 %v3317
    %v3494 = vpop.f32.mrb[0].mxu0
    %v3495 = vadd.f32 0.0, %v3494
    %v3496 = vpop.f32.mrb[0].mxu0
    %3497 = vmatprep.mubr.f32.mxu0 0.0
    %3498 = vmatmul.mubr.f32.gmra.mrb[0].mxu0 %v3320
    %v3499 = vpop.f32.mrb[0].mxu0
    %v3500 = vadd.f32 0.0, %v3499
    %v3501 = vpop.f32.mrb[0].mxu0
    %3502 = vmatprep.mubr.f32.mxu0 0.0
    %3503 = vmatmul.mubr.f32.gmra.mrb[0].mxu0 %v3323
    %v3504 = vpop.f32.mrb[0].mxu0
    %v3505 = vadd.f32 0.0, %v3504
    %v3506 = vpop.f32.mrb[0].mxu0
    %3507 = vmatprep.mubr.f32.mxu0 0.0
    %3508 = vmatmul.mubr.f32.gmra.mrb[0].mxu0 %v3326
    %v3509 = vpop.f32.mrb[0].mxu0
    %v3510 = vadd.f32 0.0, %v3509
    %v3511 = vpop.f32.mrb[0].mxu0
    %3512 = vmatprep.mubr.f32.mxu0 0.0
    %3513 = vmatmul.mubr.f32.gmra.mrb[0].mxu0 %v3329
    %v3514 = vpop.f32.mrb[0].mxu0
    %v3515 = vadd.f32 0.0, %v3514
    %v3516 = vpop.f32.mrb[0].mxu0
    %3517 = vmatprep.mubr.f32.mxu0 0.0
    %3518 = vmatmul.mubr.f32.gmra.mrb[0].mxu0 %v3332
    %v3519 = vpop.f32.mrb[0].mxu0
    %v3520 = vadd.f32 0.0, %v3519
    %v3521 = vpop.f32.mrb[0].mxu0
    %3522 = vmatprep.mubr.f32.mxu0 0.0
    %3523 = vmatmul.mubr.f32.gmra.mrb[0].mxu0 %v3335
    %v3524 = vpop.f32.mrb[0].mxu0
    %v3525 = vadd.f32 0.0, %v3524
    %v3526 = vpop.f32.mrb[0].mxu0
    %3527 = vmatprep.mubr.f32.mxu0 0.0
    %3528 = vmatmul.mubr.f32.gmra.mrb[0].mxu0 %v3338
    %v3529 = vpop.f32.mrb[0].mxu0
    %v3530 = vadd.f32 0.0, %v3529
    %v3531 = vpop.f32.mrb[0].mxu0
    %3532 = vmatprep.mubr.f32.mxu0 0.0
    %3533 = vmatmul.mubr.f32.gmra.mrb[0].mxu0 %v3341
    %v3534 = vpop.f32.mrb[0].mxu0
    %v3535 = vadd.f32 0.0, %v3534
    %v3536 = vpop.f32.mrb[0].mxu0
    %3537 = vmatprep.mubr.f32.mxu0 0.0
    %3538 = vmatmul.mubr.f32.gmra.mrb[0].mxu0 %v3344
    %v3539 = vpop.f32.mrb[0].mxu0
    %v3540 = vadd.f32 0.0, %v3539
    %v3541 = vpop.f32.mrb[0].mxu0
    %3542 = vmatprep.mubr.f32.mxu0 0.0
    %3543 = vmatmul.mubr.f32.gmra.mrb[0].mxu0 %v3347
    %v3544 = vpop.f32.mrb[0].mxu0
    %v3545 = vadd.f32 0.0, %v3544
    %v3546 = vpop.f32.mrb[0].mxu0
    %3547 = vmatprep.mubr.f32.mxu0 0.0
    %3548 = vmatmul.mubr.f32.gmra.mrb[0].mxu0 %v3350
    %v3549 = vpop.f32.mrb[0].mxu0
    %v3550 = vadd.f32 0.0, %v3549
    %v3551 = vpop.f32.mrb[0].mxu0
    %3552 = vmatprep.mubr.f32.mxu0 0.0
    %3553 = vmatmul.mubr.f32.gmra.mrb[0].mxu0 %v3353
    %v3554 = vpop.f32.mrb[0].mxu0
    %v3555 = vadd.f32 0.0, %v3554
    %v3556 = vpop.f32.mrb[0].mxu0
    %3557 = vmatprep.mubr.f32.mxu0 0.0
    %3558 = vmatmul.mubr.f32.gmra.mrb[0].mxu0 %v3356
    %v3559 = vpop.f32.mrb[0].mxu0
    %v3560 = vadd.f32 0.0, %v3559
    %v3561 = vpop.f32.mrb[0].mxu0
    %3562 = vmatprep.mubr.f32.mxu0 0.0
    %3563 = vmatmul.mubr.f32.gmra.mrb[0].mxu0 %v3359
    %v3564 = vpop.f32.mrb[0].mxu0
    %v3565 = vadd.f32 0.0, %v3564
    %v3566 = vpop.f32.mrb[0].mxu0
    %3567 = vmatprep.mubr.f32.mxu0 0.0
    %3568 = vmatmul.mubr.f32.gmra.mrb[0].mxu0 %v3362
    %v3569 = vpop.f32.mrb[0].mxu0
    %v3570 = vadd.f32 0.0, %v3569
    %v3571 = vpop.f32.mrb[0].mxu0
    %3572 = vmatprep.mubr.f32.mxu0 0.0
    %3573 = vmatmul.mubr.f32.gmra.mrb[0].mxu0 %v3365
    %v3574 = vpop.f32.mrb[0].mxu0
    %v3575 = vadd.f32 0.0, %v3574
    %v3576 = vpop.f32.mrb[0].mxu0
    %3577 = vmatprep.mubr.f32.mxu0 0.0
    %3578 = vmatmul.mubr.f32.gmra.mrb[0].mxu0 %v3368
    %v3579 = vpop.f32.mrb[0].mxu0
    %v3580 = vadd.f32 0.0, %v3579
    %v3581 = vpop.f32.mrb[0].mxu0
    %3582 = vmatprep.mubr.f32.mxu0 0.0
    %3583 = vmatmul.mubr.f32.gmra.mrb[0].mxu0 %v3371
    %v3584 = vpop.f32.mrb[0].mxu0
    %v3585 = vadd.f32 0.0, %v3584
    %v3586 = vpop.f32.mrb[0].mxu0
    %3587 = vmatprep.mubr.f32.mxu0 0.0
    %3588 = vmatmul.mubr.f32.gmra.mrb[0].mxu0 %v3374
    %v3589 = vpop.f32.mrb[0].mxu0
    %v3590 = vadd.f32 0.0, %v3589
    %v3591 = vpop.f32.mrb[0].mxu0
    %3592 = vmatprep.mubr.f32.mxu0 0.0
    %3593 = vmatmul.mubr.f32.gmra.mrb[0].mxu0 %v3377
    %v3594 = vpop.f32.mrb[0].mxu0
    %v3595 = vadd.f32 0.0, %v3594
    %v3596 = vpop.f32.mrb[0].mxu0
    %3597 = vmatprep.mubr.f32.mxu0 0.0
    %3598 = vmatmul.mubr.f32.gmra.mrb[0].mxu0 %v3380
    %v3599 = vpop.f32.mrb[0].mxu0
    %v3600 = vadd.f32 0.0, %v3599
    %v3601 = vpop.f32.mrb[0].mxu0
    %3602 = vmatprep.mubr.f32.mxu0 0.0
    %3603 = vmatmul.mubr.f32.gmra.mrb[0].mxu0 %v3383
    %v3604 = vpop.f32.mrb[0].mxu0
    %v3605 = vadd.f32 0.0, %v3604
    %v3606 = vpop.f32.mrb[0].mxu0
    %3607 = vmatprep.mubr.f32.mxu0 0.0
    %3608 = vmatmul.mubr.f32.gmra.mrb[0].mxu0 %v3386
    %v3609 = vpop.f32.mrb[0].mxu0
    %v3610 = vadd.f32 0.0, %v3609
    %v3611 = vpop.f32.mrb[0].mxu0
    %3612 = vdwg.mxu0
    %3613 = vst [vmem:[#allocation3] sm:$0xff] %v3455
    %3614 = vst [vmem:[#allocation3 + $0x8] sm:$0xff] %v3460
    %3615 = vst [vmem:[#allocation3 + $0x10] sm:$0xff] %v3465
    %3616 = vst [vmem:[#allocation3 + $0x18] sm:$0xff] %v3470
    %3617 = vst [vmem:[#allocation3 + $0x20] sm:$0xff] %v3475
    %3618 = vst [vmem:[#allocation3 + $0x28] sm:$0xff] %v3480
    %3619 = vst [vmem:[#allocation3 + $0x30] sm:$0xff] %v3485
    %3620 = vst [vmem:[#allocation3 + $0x38] sm:$0xff] %v3490
    %3621 = vst [vmem:[#allocation3 + $0x40] sm:$0xff] %v3495
    %3622 = vst [vmem:[#allocation3 + $0x48] sm:$0xff] %v3500
    %3623 = vst [vmem:[#allocation3 + $0x50] sm:$0xff] %v3505
    %3624 = vst [vmem:[#allocation3 + $0x58] sm:$0xff] %v3510
    %3625 = vst [vmem:[#allocation3 + $0x60] sm:$0xff] %v3515
    %3626 = vst [vmem:[#allocation3 + $0x68] sm:$0xff] %v3520
    %3627 = vst [vmem:[#allocation3 + $0x70] sm:$0xff] %v3525
    %3628 = vst [vmem:[#allocation3 + $0x78] sm:$0xff] %v3530
    %3629 = vst [vmem:[#allocation3 + $0x80] sm:$0xff] %v3535
    %3630 = vst [vmem:[#allocation3 + $0x88] sm:$0xff] %v3540
    %3631 = vst [vmem:[#allocation3 + $0x90] sm:$0xff] %v3545
    %3632 = vst [vmem:[#allocation3 + $0x98] sm:$0xff] %v3550
    %3633 = vst [vmem:[#allocation3 + $0xa0] sm:$0xff] %v3555
    %3634 = vst [vmem:[#allocation3 + $0xa8] sm:$0xff] %v3560
    %3635 = vst [vmem:[#allocation3 + $0xb0] sm:$0xff] %v3565
    %3636 = vst [vmem:[#allocation3 + $0xb8] sm:$0xff] %v3570
    %3637 = vst [vmem:[#allocation3 + $0xc0] sm:$0xff] %v3575
    %3638 = vst [vmem:[#allocation3 + $0xc8] sm:$0xff] %v3580
    %3639 = vst [vmem:[#allocation3 + $0xd0] sm:$0xff] %v3585
    %3640 = vst [vmem:[#allocation3 + $0xd8] sm:$0xff] %v3590
    %3641 = vst [vmem:[#allocation3 + $0xe0] sm:$0xff] %v3595
    %3642 = vst [vmem:[#allocation3 + $0xe8] sm:$0xff] %v3600
    %3643 = vst [vmem:[#allocation3 + $0xf0] sm:$0xff] %v3605
    %3644 = vst [vmem:[#allocation3 + $0xf8] sm:$0xff] %v3610
    %v3645 = vld [vmem:[#allocation3 + $0x4] sm:$0xff]
    %v3646 = vld [vmem:[#allocation3 + $0xc] sm:$0xff]
    %v3647 = vld [vmem:[#allocation3 + $0x14] sm:$0xff]
    %v3648 = vld [vmem:[#allocation3 + $0x1c] sm:$0xff]
    %v3649 = vld [vmem:[#allocation3 + $0x24] sm:$0xff]
    %v3650 = vld [vmem:[#allocation3 + $0x2c] sm:$0xff]
    %v3651 = vld [vmem:[#allocation3 + $0x34] sm:$0xff]
    %v3652 = vld [vmem:[#allocation3 + $0x3c] sm:$0xff]
    %v3653 = vld [vmem:[#allocation3 + $0x44] sm:$0xff]
    %v3654 = vld [vmem:[#allocation3 + $0x4c] sm:$0xff]
    %v3655 = vld [vmem:[#allocation3 + $0x54] sm:$0xff]
    %v3656 = vld [vmem:[#allocation3 + $0x5c] sm:$0xff]
    %v3657 = vld [vmem:[#allocation3 + $0x64] sm:$0xff]
    %v3658 = vld [vmem:[#allocation3 + $0x6c] sm:$0xff]
    %v3659 = vld [vmem:[#allocation3 + $0x74] sm:$0xff]
    %v3660 = vld [vmem:[#allocation3 + $0x7c] sm:$0xff]
    %v3661 = vld [vmem:[#allocation3 + $0x84] sm:$0xff]
    %v3662 = vld [vmem:[#allocation3 + $0x8c] sm:$0xff]
    %v3663 = vld [vmem:[#allocation3 + $0x94] sm:$0xff]
    %v3664 = vld [vmem:[#allocation3 + $0x9c] sm:$0xff]
    %v3665 = vld [vmem:[#allocation3 + $0xa4] sm:$0xff]
    %v3666 = vld [vmem:[#allocation3 + $0xac] sm:$0xff]
    %v3667 = vld [vmem:[#allocation3 + $0xb4] sm:$0xff]
    %v3668 = vld [vmem:[#allocation3 + $0xbc] sm:$0xff]
    %v3669 = vld [vmem:[#allocation3 + $0xc4] sm:$0xff]
    %v3670 = vld [vmem:[#allocation3 + $0xcc] sm:$0xff]
    %v3671 = vld [vmem:[#allocation3 + $0xd4] sm:$0xff]
    %v3672 = vld [vmem:[#allocation3 + $0xdc] sm:$0xff]
    %v3673 = vld [vmem:[%s3 + $0x10] sm:$0x1]
    %v3674 = vlaneseq
    %v3675 = vshrl.u32 %v3674, 7
    %v3676 = vsub.s32 0, %v3675
    %v3677 = vrot.slane %v3673, %v3676
    %v3678 = vmul.f32 %v3645, %v3677
    %v3679 = vmul.f32 %v3646, %v3677
    %v3680 = vmul.f32 %v3647, %v3677
    %v3681 = vmul.f32 %v3648, %v3677
    %v3682 = vmul.f32 %v3649, %v3677
    %v3683 = vmul.f32 %v3650, %v3677
    %v3684 = vmul.f32 %v3651, %v3677
    %v3685 = vmul.f32 %v3652, %v3677
    %v3686 = vmul.f32 %v3653, %v3677
    %v3687 = vmul.f32 %v3654, %v3677
    %v3688 = vmul.f32 %v3655, %v3677
    %v3689 = vmul.f32 %v3656, %v3677
    %v3690 = vmul.f32 %v3657, %v3677
    %v3691 = vmul.f32 %v3658, %v3677
    %v3692 = vmul.f32 %v3659, %v3677
    %v3693 = vmul.f32 %v3660, %v3677
    %v3694 = vmul.f32 %v3661, %v3677
    %v3695 = vmul.f32 %v3662, %v3677
    %v3696 = vmul.f32 %v3663, %v3677
    %v3697 = vmul.f32 %v3664, %v3677
    %v3698 = vmul.f32 %v3665, %v3677
    %v3699 = vmul.f32 %v3666, %v3677
    %v3700 = vmul.f32 %v3667, %v3677
    %v3701 = vmul.f32 %v3668, %v3677
    %v3702 = vmul.f32 %v3669, %v3677
    %v3703 = vmul.f32 %v3670, %v3677
    %v3704 = vmul.f32 %v3671, %v3677
    %v3705 = vmul.f32 %v3672, %v3677
    %v3706 = vld [vmem:[#allocation3 + $0x5] sm:$0xff]
    %v3707 = vld [vmem:[#allocation3 + $0xd] sm:$0xff]
    %v3708 = vld [vmem:[#allocation3 + $0x15] sm:$0xff]
    %v3709 = vld [vmem:[#allocation3 + $0x1d] sm:$0xff]
    %v3710 = vld [vmem:[#allocation3 + $0x25] sm:$0xff]
    %v3711 = vld [vmem:[#allocation3 + $0x2d] sm:$0xff]
    %v3712 = vld [vmem:[#allocation3 + $0x35] sm:$0xff]
    %v3713 = vld [vmem:[#allocation3 + $0x3d] sm:$0xff]
    %v3714 = vld [vmem:[#allocation3 + $0x45] sm:$0xff]
    %v3715 = vld [vmem:[#allocation3 + $0x4d] sm:$0xff]
    %v3716 = vld [vmem:[#allocation3 + $0x55] sm:$0xff]
    %v3717 = vld [vmem:[#allocation3 + $0x5d] sm:$0xff]
    %v3718 = vld [vmem:[#allocation3 + $0x65] sm:$0xff]
    %v3719 = vld [vmem:[#allocation3 + $0x6d] sm:$0xff]
    %v3720 = vld [vmem:[#allocation3 + $0x75] sm:$0xff]
    %v3721 = vld [vmem:[#allocation3 + $0x7d] sm:$0xff]
    %v3722 = vld [vmem:[#allocation3 + $0x85] sm:$0xff]
    %v3723 = vld [vmem:[#allocation3 + $0x8d] sm:$0xff]
    %v3724 = vld [vmem:[#allocation3 + $0x95] sm:$0xff]
    %v3725 = vld [vmem:[#allocation3 + $0x9d] sm:$0xff]
    %v3726 = vld [vmem:[#allocation3 + $0xa5] sm:$0xff]
    %v3727 = vld [vmem:[#allocation3 + $0xad] sm:$0xff]
    %v3728 = vld [vmem:[#allocation3 + $0xb5] sm:$0xff]
    %v3729 = vld [vmem:[#allocation3 + $0xbd] sm:$0xff]
    %v3730 = vld [vmem:[#allocation3 + $0xc5] sm:$0xff]
    %v3731 = vld [vmem:[#allocation3 + $0xcd] sm:$0xff]
    %v3732 = vld [vmem:[#allocation3 + $0xd5] sm:$0xff]
    %v3733 = vld [vmem:[#allocation3 + $0xdd] sm:$0xff]
    %v3734 = vld [vmem:[%s3 + $0x11] sm:$0x1]
    %v3735 = vlaneseq
    %v3736 = vshrl.u32 %v3735, 7
    %v3737 = vsub.s32 0, %v3736
    %v3738 = vrot.slane %v3734, %v3737
    %v3739 = vmul.f32 %v3706, %v3738
    %v3740 = vmul.f32 %v3707, %v3738
    %v3741 = vmul.f32 %v3708, %v3738
    %v3742 = vmul.f32 %v3709, %v3738
    %v3743 = vmul.f32 %v3710, %v3738
    %v3744 = vmul.f32 %v3711, %v3738
    %v3745 = vmul.f32 %v3712, %v3738
    %v3746 = vmul.f32 %v3713, %v3738
    %v3747 = vmul.f32 %v3714, %v3738
    %v3748 = vmul.f32 %v3715, %v3738
    %v3749 = vmul.f32 %v3716, %v3738
    %v3750 = vmul.f32 %v3717, %v3738
    %v3751 = vmul.f32 %v3718, %v3738
    %v3752 = vmul.f32 %v3719, %v3738
    %v3753 = vmul.f32 %v3720, %v3738
    %v3754 = vmul.f32 %v3721, %v3738
    %v3755 = vmul.f32 %v3722, %v3738
    %v3756 = vmul.f32 %v3723, %v3738
    %v3757 = vmul.f32 %v3724, %v3738
    %v3758 = vmul.f32 %v3725, %v3738
    %v3759 = vmul.f32 %v3726, %v3738
    %v3760 = vmul.f32 %v3727, %v3738
    %v3761 = vmul.f32 %v3728, %v3738
    %v3762 = vmul.f32 %v3729, %v3738
    %v3763 = vmul.f32 %v3730, %v3738
    %v3764 = vmul.f32 %v3731, %v3738
    %v3765 = vmul.f32 %v3732, %v3738
    %v3766 = vmul.f32 %v3733, %v3738
    %v3767 = vadd.f32 %v3678, %v3739
    %v3768 = vadd.f32 %v3679, %v3740
    %v3769 = vadd.f32 %v3680, %v3741
    %v3770 = vadd.f32 %v3681, %v3742
    %v3771 = vadd.f32 %v3682, %v3743
    %v3772 = vadd.f32 %v3683, %v3744
    %v3773 = vadd.f32 %v3684, %v3745
    %v3774 = vadd.f32 %v3685, %v3746
    %v3775 = vadd.f32 %v3686, %v3747
    %v3776 = vadd.f32 %v3687, %v3748
    %v3777 = vadd.f32 %v3688, %v3749
    %v3778 = vadd.f32 %v3689, %v3750
    %v3779 = vadd.f32 %v3690, %v3751
    %v3780 = vadd.f32 %v3691, %v3752
    %v3781 = vadd.f32 %v3692, %v3753
    %v3782 = vadd.f32 %v3693, %v3754
    %v3783 = vadd.f32 %v3694, %v3755
    %v3784 = vadd.f32 %v3695, %v3756
    %v3785 = vadd.f32 %v3696, %v3757
    %v3786 = vadd.f32 %v3697, %v3758
    %v3787 = vadd.f32 %v3698, %v3759
    %v3788 = vadd.f32 %v3699, %v3760
    %v3789 = vadd.f32 %v3700, %v3761
    %v3790 = vadd.f32 %v3701, %v3762
    %v3791 = vadd.f32 %v3702, %v3763
    %v3792 = vadd.f32 %v3703, %v3764
    %v3793 = vadd.f32 %v3704, %v3765
    %v3794 = vadd.f32 %v3705, %v3766
    %v3795 = vld [vmem:[#allocation3 + $0x6] sm:$0xff]
    %v3796 = vld [vmem:[#allocation3 + $0xe] sm:$0xff]
    %v3797 = vld [vmem:[#allocation3 + $0x16] sm:$0xff]
    %v3798 = vld [vmem:[#allocation3 + $0x1e] sm:$0xff]
    %v3799 = vld [vmem:[#allocation3 + $0x26] sm:$0xff]
    %v3800 = vld [vmem:[#allocation3 + $0x2e] sm:$0xff]
    %v3801 = vld [vmem:[#allocation3 + $0x36] sm:$0xff]
    %v3802 = vld [vmem:[#allocation3 + $0x3e] sm:$0xff]
    %v3803 = vld [vmem:[#allocation3 + $0x46] sm:$0xff]
    %v3804 = vld [vmem:[#allocation3 + $0x4e] sm:$0xff]
    %v3805 = vld [vmem:[#allocation3 + $0x56] sm:$0xff]
    %v3806 = vld [vmem:[#allocation3 + $0x5e] sm:$0xff]
    %v3807 = vld [vmem:[#allocation3 + $0x66] sm:$0xff]
    %v3808 = vld [vmem:[#allocation3 + $0x6e] sm:$0xff]
    %v3809 = vld [vmem:[#allocation3 + $0x76] sm:$0xff]
    %v3810 = vld [vmem:[#allocation3 + $0x7e] sm:$0xff]
    %v3811 = vld [vmem:[#allocation3 + $0x86] sm:$0xff]
    %v3812 = vld [vmem:[#allocation3 + $0x8e] sm:$0xff]
    %v3813 = vld [vmem:[#allocation3 + $0x96] sm:$0xff]
    %v3814 = vld [vmem:[#allocation3 + $0x9e] sm:$0xff]
    %v3815 = vld [vmem:[#allocation3 + $0xa6] sm:$0xff]
    %v3816 = vld [vmem:[#allocation3 + $0xae] sm:$0xff]
    %v3817 = vld [vmem:[#allocation3 + $0xb6] sm:$0xff]
    %v3818 = vld [vmem:[#allocation3 + $0xbe] sm:$0xff]
    %v3819 = vld [vmem:[#allocation3 + $0xc6] sm:$0xff]
    %v3820 = vld [vmem:[#allocation3 + $0xce] sm:$0xff]
    %v3821 = vld [vmem:[#allocation3 + $0xd6] sm:$0xff]
    %v3822 = vld [vmem:[#allocation3 + $0xde] sm:$0xff]
    %v3823 = vld [vmem:[%s3 + $0x12] sm:$0x1]
    %v3824 = vlaneseq
    %v3825 = vshrl.u32 %v3824, 7
    %v3826 = vsub.s32 0, %v3825
    %v3827 = vrot.slane %v3823, %v3826
    %v3828 = vmul.f32 %v3795, %v3827
    %v3829 = vmul.f32 %v3796, %v3827
    %v3830 = vmul.f32 %v3797, %v3827
    %v3831 = vmul.f32 %v3798, %v3827
    %v3832 = vmul.f32 %v3799, %v3827
    %v3833 = vmul.f32 %v3800, %v3827
    %v3834 = vmul.f32 %v3801, %v3827
    %v3835 = vmul.f32 %v3802, %v3827
    %v3836 = vmul.f32 %v3803, %v3827
    %v3837 = vmul.f32 %v3804, %v3827
    %v3838 = vmul.f32 %v3805, %v3827
    %v3839 = vmul.f32 %v3806, %v3827
    %v3840 = vmul.f32 %v3807, %v3827
    %v3841 = vmul.f32 %v3808, %v3827
    %v3842 = vmul.f32 %v3809, %v3827
    %v3843 = vmul.f32 %v3810, %v3827
    %v3844 = vmul.f32 %v3811, %v3827
    %v3845 = vmul.f32 %v3812, %v3827
    %v3846 = vmul.f32 %v3813, %v3827
    %v3847 = vmul.f32 %v3814, %v3827
    %v3848 = vmul.f32 %v3815, %v3827
    %v3849 = vmul.f32 %v3816, %v3827
    %v3850 = vmul.f32 %v3817, %v3827
    %v3851 = vmul.f32 %v3818, %v3827
    %v3852 = vmul.f32 %v3819, %v3827
    %v3853 = vmul.f32 %v3820, %v3827
    %v3854 = vmul.f32 %v3821, %v3827
    %v3855 = vmul.f32 %v3822, %v3827
    %v3856 = vadd.f32 %v3767, %v3828
    %v3857 = vadd.f32 %v3768, %v3829
    %v3858 = vadd.f32 %v3769, %v3830
    %v3859 = vadd.f32 %v3770, %v3831
    %v3860 = vadd.f32 %v3771, %v3832
    %v3861 = vadd.f32 %v3772, %v3833
    %v3862 = vadd.f32 %v3773, %v3834
    %v3863 = vadd.f32 %v3774, %v3835
    %v3864 = vadd.f32 %v3775, %v3836
    %v3865 = vadd.f32 %v3776, %v3837
    %v3866 = vadd.f32 %v3777, %v3838
    %v3867 = vadd.f32 %v3778, %v3839
    %v3868 = vadd.f32 %v3779, %v3840
    %v3869 = vadd.f32 %v3780, %v3841
    %v3870 = vadd.f32 %v3781, %v3842
    %v3871 = vadd.f32 %v3782, %v3843
    %v3872 = vadd.f32 %v3783, %v3844
    %v3873 = vadd.f32 %v3784, %v3845
    %v3874 = vadd.f32 %v3785, %v3846
    %v3875 = vadd.f32 %v3786, %v3847
    %v3876 = vadd.f32 %v3787, %v3848
    %v3877 = vadd.f32 %v3788, %v3849
    %v3878 = vadd.f32 %v3789, %v3850
    %v3879 = vadd.f32 %v3790, %v3851
    %v3880 = vadd.f32 %v3791, %v3852
    %v3881 = vadd.f32 %v3792, %v3853
    %v3882 = vadd.f32 %v3793, %v3854
    %v3883 = vadd.f32 %v3794, %v3855
    %3884 = vst [vmem:[#allocation4] sm:$0xff] %v3856
    %3885 = vst [vmem:[#allocation4 + $0x8] sm:$0xff] %v3857
    %3886 = vst [vmem:[#allocation4 + $0x10] sm:$0xff] %v3858
    %3887 = vst [vmem:[#allocation4 + $0x18] sm:$0xff] %v3859
    %3888 = vst [vmem:[#allocation4 + $0x20] sm:$0xff] %v3860
    %3889 = vst [vmem:[#allocation4 + $0x28] sm:$0xff] %v3861
    %3890 = vst [vmem:[#allocation4 + $0x30] sm:$0xff] %v3862
    %3891 = vst [vmem:[#allocation4 + $0x38] sm:$0xff] %v3863
    %3892 = vst [vmem:[#allocation4 + $0x40] sm:$0xff] %v3864
    %3893 = vst [vmem:[#allocation4 + $0x48] sm:$0xff] %v3865
    %3894 = vst [vmem:[#allocation4 + $0x50] sm:$0xff] %v3866
    %3895 = vst [vmem:[#allocation4 + $0x58] sm:$0xff] %v3867
    %3896 = vst [vmem:[#allocation4 + $0x60] sm:$0xff] %v3868
    %3897 = vst [vmem:[#allocation4 + $0x68] sm:$0xff] %v3869
    %3898 = vst [vmem:[#allocation4 + $0x70] sm:$0xff] %v3870
    %3899 = vst [vmem:[#allocation4 + $0x78] sm:$0xff] %v3871
    %3900 = vst [vmem:[#allocation4 + $0x80] sm:$0xff] %v3872
    %3901 = vst [vmem:[#allocation4 + $0x88] sm:$0xff] %v3873
    %3902 = vst [vmem:[#allocation4 + $0x90] sm:$0xff] %v3874
    %3903 = vst [vmem:[#allocation4 + $0x98] sm:$0xff] %v3875
    %3904 = vst [vmem:[#allocation4 + $0xa0] sm:$0xff] %v3876
    %3905 = vst [vmem:[#allocation4 + $0xa8] sm:$0xff] %v3877
    %3906 = vst [vmem:[#allocation4 + $0xb0] sm:$0xff] %v3878
    %3907 = vst [vmem:[#allocation4 + $0xb8] sm:$0xff] %v3879
    %3908 = vst [vmem:[#allocation4 + $0xc0] sm:$0xff] %v3880
    %3909 = vst [vmem:[#allocation4 + $0xc8] sm:$0xff] %v3881
    %3910 = vst [vmem:[#allocation4 + $0xd0] sm:$0xff] %v3882
    %3911 = vst [vmem:[#allocation4 + $0xd8] sm:$0xff] %v3883
    %v3912 = vld [vmem:[#allocation3 + $0xf] sm:$0xff]
    %v3913 = vld [vmem:[#allocation3 + $0x17] sm:$0xff]
    %v3914 = vld [vmem:[#allocation3 + $0x1f] sm:$0xff]
    %v3915 = vld [vmem:[#allocation3 + $0x27] sm:$0xff]
    %v3916 = vld [vmem:[#allocation3 + $0x2f] sm:$0xff]
    %v3917 = vld [vmem:[#allocation3 + $0x37] sm:$0xff]
    %v3918 = vld [vmem:[#allocation3 + $0x3f] sm:$0xff]
    %v3919 = vld [vmem:[#allocation3 + $0x47] sm:$0xff]
    %v3920 = vld [vmem:[#allocation3 + $0x4f] sm:$0xff]
    %v3921 = vld [vmem:[#allocation3 + $0x57] sm:$0xff]
    %v3922 = vld [vmem:[#allocation3 + $0x5f] sm:$0xff]
    %v3923 = vld [vmem:[#allocation3 + $0x67] sm:$0xff]
    %v3924 = vld [vmem:[#allocation3 + $0x6f] sm:$0xff]
    %v3925 = vld [vmem:[#allocation3 + $0x77] sm:$0xff]
    %v3926 = vld [vmem:[#allocation3 + $0x7f] sm:$0xff]
    %v3927 = vld [vmem:[#allocation3 + $0x87] sm:$0xff]
    %v3928 = vld [vmem:[#allocation3 + $0x8f] sm:$0xff]
    %v3929 = vld [vmem:[#allocation3 + $0x97] sm:$0xff]
    %v3930 = vld [vmem:[#allocation3 + $0x9f] sm:$0xff]
    %v3931 = vld [vmem:[#allocation3 + $0xa7] sm:$0xff]
    %v3932 = vld [vmem:[#allocation3 + $0xaf] sm:$0xff]
    %v3933 = vld [vmem:[#allocation3 + $0xb7] sm:$0xff]
    %v3934 = vld [vmem:[#allocation3 + $0xbf] sm:$0xff]
    %v3935 = vld [vmem:[#allocation3 + $0xc7] sm:$0xff]
    %v3936 = vld [vmem:[#allocation3 + $0xcf] sm:$0xff]
    %v3937 = vld [vmem:[#allocation3 + $0xd7] sm:$0xff]
    %v3938 = vld [vmem:[#allocation3 + $0xdf] sm:$0xff]
    %v3939 = vld [vmem:[#allocation3 + $0xe7] sm:$0xff]
    %v3940 = vld [vmem:[%s3 + $0x13] sm:$0x1]
    %v3941 = vlaneseq
    %v3942 = vshrl.u32 %v3941, 7
    %v3943 = vsub.s32 0, %v3942
    %v3944 = vrot.slane %v3940, %v3943
    %v3945 = vmul.f32 %v3912, %v3944
    %v3946 = vmul.f32 %v3913, %v3944
    %v3947 = vmul.f32 %v3914, %v3944
    %v3948 = vmul.f32 %v3915, %v3944
    %v3949 = vmul.f32 %v3916, %v3944
    %v3950 = vmul.f32 %v3917, %v3944
    %v3951 = vmul.f32 %v3918, %v3944
    %v3952 = vmul.f32 %v3919, %v3944
    %v3953 = vmul.f32 %v3920, %v3944
    %v3954 = vmul.f32 %v3921, %v3944
    %v3955 = vmul.f32 %v3922, %v3944
    %v3956 = vmul.f32 %v3923, %v3944
    %v3957 = vmul.f32 %v3924, %v3944
    %v3958 = vmul.f32 %v3925, %v3944
    %v3959 = vmul.f32 %v3926, %v3944
    %v3960 = vmul.f32 %v3927, %v3944
    %v3961 = vmul.f32 %v3928, %v3944
    %v3962 = vmul.f32 %v3929, %v3944
    %v3963 = vmul.f32 %v3930, %v3944
    %v3964 = vmul.f32 %v3931, %v3944
    %v3965 = vmul.f32 %v3932, %v3944
    %v3966 = vmul.f32 %v3933, %v3944
    %v3967 = vmul.f32 %v3934, %v3944
    %v3968 = vmul.f32 %v3935, %v3944
    %v3969 = vmul.f32 %v3936, %v3944
    %v3970 = vmul.f32 %v3937, %v3944
    %v3971 = vmul.f32 %v3938, %v3944
    %v3972 = vmul.f32 %v3939, %v3944
    %v3973 = vld [vmem:[#allocation3 + $0x10] sm:$0xff]
    %v3974 = vld [vmem:[#allocation3 + $0x18] sm:$0xff]
    %v3975 = vld [vmem:[#allocation3 + $0x20] sm:$0xff]
    %v3976 = vld [vmem:[#allocation3 + $0x28] sm:$0xff]
    %v3977 = vld [vmem:[#allocation3 + $0x30] sm:$0xff]
    %v3978 = vld [vmem:[#allocation3 + $0x38] sm:$0xff]
    %v3979 = vld [vmem:[#allocation3 + $0x40] sm:$0xff]
    %v3980 = vld [vmem:[#allocation3 + $0x48] sm:$0xff]
    %v3981 = vld [vmem:[#allocation3 + $0x50] sm:$0xff]
    %v3982 = vld [vmem:[#allocation3 + $0x58] sm:$0xff]
    %v3983 = vld [vmem:[#allocation3 + $0x60] sm:$0xff]
    %v3984 = vld [vmem:[#allocation3 + $0x68] sm:$0xff]
    %v3985 = vld [vmem:[#allocation3 + $0x70] sm:$0xff]
    %v3986 = vld [vmem:[#allocation3 + $0x78] sm:$0xff]
    %v3987 = vld [vmem:[#allocation3 + $0x80] sm:$0xff]
    %v3988 = vld [vmem:[#allocation3 + $0x88] sm:$0xff]
    %v3989 = vld [vmem:[#allocation3 + $0x90] sm:$0xff]
    %v3990 = vld [vmem:[#allocation3 + $0x98] sm:$0xff]
    %v3991 = vld [vmem:[#allocation3 + $0xa0] sm:$0xff]
    %v3992 = vld [vmem:[#allocation3 + $0xa8] sm:$0xff]
    %v3993 = vld [vmem:[#allocation3 + $0xb0] sm:$0xff]
    %v3994 = vld [vmem:[#allocation3 + $0xb8] sm:$0xff]
    %v3995 = vld [vmem:[#allocation3 + $0xc0] sm:$0xff]
    %v3996 = vld [vmem:[#allocation3 + $0xc8] sm:$0xff]
    %v3997 = vld [vmem:[#allocation3 + $0xd0] sm:$0xff]
    %v3998 = vld [vmem:[#allocation3 + $0xd8] sm:$0xff]
    %v3999 = vld [vmem:[#allocation3 + $0xe0] sm:$0xff]
    %v4000 = vld [vmem:[#allocation3 + $0xe8] sm:$0xff]
    %v4001 = vld [vmem:[%s3 + $0x14] sm:$0x1]
    %v4002 = vlaneseq
    %v4003 = vshrl.u32 %v4002, 7
    %v4004 = vsub.s32 0, %v4003
    %v4005 = vrot.slane %v4001, %v4004
    %v4006 = vmul.f32 %v3973, %v4005
    %v4007 = vmul.f32 %v3974, %v4005
    %v4008 = vmul.f32 %v3975, %v4005
    %v4009 = vmul.f32 %v3976, %v4005
    %v4010 = vmul.f32 %v3977, %v4005
    %v4011 = vmul.f32 %v3978, %v4005
    %v4012 = vmul.f32 %v3979, %v4005
    %v4013 = vmul.f32 %v3980, %v4005
    %v4014 = vmul.f32 %v3981, %v4005
    %v4015 = vmul.f32 %v3982, %v4005
    %v4016 = vmul.f32 %v3983, %v4005
    %v4017 = vmul.f32 %v3984, %v4005
    %v4018 = vmul.f32 %v3985, %v4005
    %v4019 = vmul.f32 %v3986, %v4005
    %v4020 = vmul.f32 %v3987, %v4005
    %v4021 = vmul.f32 %v3988, %v4005
    %v4022 = vmul.f32 %v3989, %v4005
    %v4023 = vmul.f32 %v3990, %v4005
    %v4024 = vmul.f32 %v3991, %v4005
    %v4025 = vmul.f32 %v3992, %v4005
    %v4026 = vmul.f32 %v3993, %v4005
    %v4027 = vmul.f32 %v3994, %v4005
    %v4028 = vmul.f32 %v3995, %v4005
    %v4029 = vmul.f32 %v3996, %v4005
    %v4030 = vmul.f32 %v3997, %v4005
    %v4031 = vmul.f32 %v3998, %v4005
    %v4032 = vmul.f32 %v3999, %v4005
    %v4033 = vmul.f32 %v4000, %v4005
    %v4034 = vadd.f32 %v3945, %v4006
    %v4035 = vadd.f32 %v3946, %v4007
    %v4036 = vadd.f32 %v3947, %v4008
    %v4037 = vadd.f32 %v3948, %v4009
    %v4038 = vadd.f32 %v3949, %v4010
    %v4039 = vadd.f32 %v3950, %v4011
    %v4040 = vadd.f32 %v3951, %v4012
    %v4041 = vadd.f32 %v3952, %v4013
    %v4042 = vadd.f32 %v3953, %v4014
    %v4043 = vadd.f32 %v3954, %v4015
    %v4044 = vadd.f32 %v3955, %v4016
    %v4045 = vadd.f32 %v3956, %v4017
    %v4046 = vadd.f32 %v3957, %v4018
    %v4047 = vadd.f32 %v3958, %v4019
    %v4048 = vadd.f32 %v3959, %v4020
    %v4049 = vadd.f32 %v3960, %v4021
    %v4050 = vadd.f32 %v3961, %v4022
    %v4051 = vadd.f32 %v3962, %v4023
    %v4052 = vadd.f32 %v3963, %v4024
    %v4053 = vadd.f32 %v3964, %v4025
    %v4054 = vadd.f32 %v3965, %v4026
    %v4055 = vadd.f32 %v3966, %v4027
    %v4056 = vadd.f32 %v3967, %v4028
    %v4057 = vadd.f32 %v3968, %v4029
    %v4058 = vadd.f32 %v3969, %v4030
    %v4059 = vadd.f32 %v3970, %v4031
    %v4060 = vadd.f32 %v3971, %v4032
    %v4061 = vadd.f32 %v3972, %v4033
    %v4062 = vld [vmem:[#allocation3 + $0x11] sm:$0xff]
    %v4063 = vld [vmem:[#allocation3 + $0x19] sm:$0xff]
    %v4064 = vld [vmem:[#allocation3 + $0x21] sm:$0xff]
    %v4065 = vld [vmem:[#allocation3 + $0x29] sm:$0xff]
    %v4066 = vld [vmem:[#allocation3 + $0x31] sm:$0xff]
    %v4067 = vld [vmem:[#allocation3 + $0x39] sm:$0xff]
    %v4068 = vld [vmem:[#allocation3 + $0x41] sm:$0xff]
    %v4069 = vld [vmem:[#allocation3 + $0x49] sm:$0xff]
    %v4070 = vld [vmem:[#allocation3 + $0x51] sm:$0xff]
    %v4071 = vld [vmem:[#allocation3 + $0x59] sm:$0xff]
    %v4072 = vld [vmem:[#allocation3 + $0x61] sm:$0xff]
    %v4073 = vld [vmem:[#allocation3 + $0x69] sm:$0xff]
    %v4074 = vld [vmem:[#allocation3 + $0x71] sm:$0xff]
    %v4075 = vld [vmem:[#allocation3 + $0x79] sm:$0xff]
    %v4076 = vld [vmem:[#allocation3 + $0x81] sm:$0xff]
    %v4077 = vld [vmem:[#allocation3 + $0x89] sm:$0xff]
    %v4078 = vld [vmem:[#allocation3 + $0x91] sm:$0xff]
    %v4079 = vld [vmem:[#allocation3 + $0x99] sm:$0xff]
    %v4080 = vld [vmem:[#allocation3 + $0xa1] sm:$0xff]
    %v4081 = vld [vmem:[#allocation3 + $0xa9] sm:$0xff]
    %v4082 = vld [vmem:[#allocation3 + $0xb1] sm:$0xff]
    %v4083 = vld [vmem:[#allocation3 + $0xb9] sm:$0xff]
    %v4084 = vld [vmem:[#allocation3 + $0xc1] sm:$0xff]
    %v4085 = vld [vmem:[#allocation3 + $0xc9] sm:$0xff]
    %v4086 = vld [vmem:[#allocation3 + $0xd1] sm:$0xff]
    %v4087 = vld [vmem:[#allocation3 + $0xd9] sm:$0xff]
    %v4088 = vld [vmem:[#allocation3 + $0xe1] sm:$0xff]
    %v4089 = vld [vmem:[#allocation3 + $0xe9] sm:$0xff]
    %v4090 = vld [vmem:[%s3 + $0x15] sm:$0x1]
    %v4091 = vlaneseq
    %v4092 = vshrl.u32 %v4091, 7
    %v4093 = vsub.s32 0, %v4092
    %v4094 = vrot.slane %v4090, %v4093
    %v4095 = vmul.f32 %v4062, %v4094
    %v4096 = vmul.f32 %v4063, %v4094
    %v4097 = vmul.f32 %v4064, %v4094
    %v4098 = vmul.f32 %v4065, %v4094
    %v4099 = vmul.f32 %v4066, %v4094
    %v4100 = vmul.f32 %v4067, %v4094
    %v4101 = vmul.f32 %v4068, %v4094
    %v4102 = vmul.f32 %v4069, %v4094
    %v4103 = vmul.f32 %v4070, %v4094
    %v4104 = vmul.f32 %v4071, %v4094
    %v4105 = vmul.f32 %v4072, %v4094
    %v4106 = vmul.f32 %v4073, %v4094
    %v4107 = vmul.f32 %v4074, %v4094
    %v4108 = vmul.f32 %v4075, %v4094
    %v4109 = vmul.f32 %v4076, %v4094
    %v4110 = vmul.f32 %v4077, %v4094
    %v4111 = vmul.f32 %v4078, %v4094
    %v4112 = vmul.f32 %v4079, %v4094
    %v4113 = vmul.f32 %v4080, %v4094
    %v4114 = vmul.f32 %v4081, %v4094
    %v4115 = vmul.f32 %v4082, %v4094
    %v4116 = vmul.f32 %v4083, %v4094
    %v4117 = vmul.f32 %v4084, %v4094
    %v4118 = vmul.f32 %v4085, %v4094
    %v4119 = vmul.f32 %v4086, %v4094
    %v4120 = vmul.f32 %v4087, %v4094
    %v4121 = vmul.f32 %v4088, %v4094
    %v4122 = vmul.f32 %v4089, %v4094
    %v4123 = vadd.f32 %v4034, %v4095
    %v4124 = vadd.f32 %v4035, %v4096
    %v4125 = vadd.f32 %v4036, %v4097
    %v4126 = vadd.f32 %v4037, %v4098
    %v4127 = vadd.f32 %v4038, %v4099
    %v4128 = vadd.f32 %v4039, %v4100
    %v4129 = vadd.f32 %v4040, %v4101
    %v4130 = vadd.f32 %v4041, %v4102
    %v4131 = vadd.f32 %v4042, %v4103
    %v4132 = vadd.f32 %v4043, %v4104
    %v4133 = vadd.f32 %v4044, %v4105
    %v4134 = vadd.f32 %v4045, %v4106
    %v4135 = vadd.f32 %v4046, %v4107
    %v4136 = vadd.f32 %v4047, %v4108
    %v4137 = vadd.f32 %v4048, %v4109
    %v4138 = vadd.f32 %v4049, %v4110
    %v4139 = vadd.f32 %v4050, %v4111
    %v4140 = vadd.f32 %v4051, %v4112
    %v4141 = vadd.f32 %v4052, %v4113
    %v4142 = vadd.f32 %v4053, %v4114
    %v4143 = vadd.f32 %v4054, %v4115
    %v4144 = vadd.f32 %v4055, %v4116
    %v4145 = vadd.f32 %v4056, %v4117
    %v4146 = vadd.f32 %v4057, %v4118
    %v4147 = vadd.f32 %v4058, %v4119
    %v4148 = vadd.f32 %v4059, %v4120
    %v4149 = vadd.f32 %v4060, %v4121
    %v4150 = vadd.f32 %v4061, %v4122
    %v4151 = vld [vmem:[#allocation4] sm:$0xff]
    %v4152 = vld [vmem:[#allocation4 + $0x8] sm:$0xff]
    %v4153 = vld [vmem:[#allocation4 + $0x10] sm:$0xff]
    %v4154 = vld [vmem:[#allocation4 + $0x18] sm:$0xff]
    %v4155 = vld [vmem:[#allocation4 + $0x20] sm:$0xff]
    %v4156 = vld [vmem:[#allocation4 + $0x28] sm:$0xff]
    %v4157 = vld [vmem:[#allocation4 + $0x30] sm:$0xff]
    %v4158 = vld [vmem:[#allocation4 + $0x38] sm:$0xff]
    %v4159 = vld [vmem:[#allocation4 + $0x40] sm:$0xff]
    %v4160 = vld [vmem:[#allocation4 + $0x48] sm:$0xff]
    %v4161 = vld [vmem:[#allocation4 + $0x50] sm:$0xff]
    %v4162 = vld [vmem:[#allocation4 + $0x58] sm:$0xff]
    %v4163 = vld [vmem:[#allocation4 + $0x60] sm:$0xff]
    %v4164 = vld [vmem:[#allocation4 + $0x68] sm:$0xff]
    %v4165 = vld [vmem:[#allocation4 + $0x70] sm:$0xff]
    %v4166 = vld [vmem:[#allocation4 + $0x78] sm:$0xff]
    %v4167 = vld [vmem:[#allocation4 + $0x80] sm:$0xff]
    %v4168 = vld [vmem:[#allocation4 + $0x88] sm:$0xff]
    %v4169 = vld [vmem:[#allocation4 + $0x90] sm:$0xff]
    %v4170 = vld [vmem:[#allocation4 + $0x98] sm:$0xff]
    %v4171 = vld [vmem:[#allocation4 + $0xa0] sm:$0xff]
    %v4172 = vld [vmem:[#allocation4 + $0xa8] sm:$0xff]
    %v4173 = vld [vmem:[#allocation4 + $0xb0] sm:$0xff]
    %v4174 = vld [vmem:[#allocation4 + $0xb8] sm:$0xff]
    %v4175 = vld [vmem:[#allocation4 + $0xc0] sm:$0xff]
    %v4176 = vld [vmem:[#allocation4 + $0xc8] sm:$0xff]
    %v4177 = vld [vmem:[#allocation4 + $0xd0] sm:$0xff]
    %v4178 = vld [vmem:[#allocation4 + $0xd8] sm:$0xff]
    %v4179 = vadd.f32 %v4151, %v4123
    %v4180 = vadd.f32 %v4152, %v4124
    %v4181 = vadd.f32 %v4153, %v4125
    %v4182 = vadd.f32 %v4154, %v4126
    %v4183 = vadd.f32 %v4155, %v4127
    %v4184 = vadd.f32 %v4156, %v4128
    %v4185 = vadd.f32 %v4157, %v4129
    %v4186 = vadd.f32 %v4158, %v4130
    %v4187 = vadd.f32 %v4159, %v4131
    %v4188 = vadd.f32 %v4160, %v4132
    %v4189 = vadd.f32 %v4161, %v4133
    %v4190 = vadd.f32 %v4162, %v4134
    %v4191 = vadd.f32 %v4163, %v4135
    %v4192 = vadd.f32 %v4164, %v4136
    %v4193 = vadd.f32 %v4165, %v4137
    %v4194 = vadd.f32 %v4166, %v4138
    %v4195 = vadd.f32 %v4167, %v4139
    %v4196 = vadd.f32 %v4168, %v4140
    %v4197 = vadd.f32 %v4169, %v4141
    %v4198 = vadd.f32 %v4170, %v4142
    %v4199 = vadd.f32 %v4171, %v4143
    %v4200 = vadd.f32 %v4172, %v4144
    %v4201 = vadd.f32 %v4173, %v4145
    %v4202 = vadd.f32 %v4174, %v4146
    %v4203 = vadd.f32 %v4175, %v4147
    %v4204 = vadd.f32 %v4176, %v4148
    %v4205 = vadd.f32 %v4177, %v4149
    %v4206 = vadd.f32 %v4178, %v4150
    %4207 = vst [vmem:[#allocation4] sm:$0xff] %v4179
    %4208 = vst [vmem:[#allocation4 + $0x8] sm:$0xff] %v4180
    %4209 = vst [vmem:[#allocation4 + $0x10] sm:$0xff] %v4181
    %4210 = vst [vmem:[#allocation4 + $0x18] sm:$0xff] %v4182
    %4211 = vst [vmem:[#allocation4 + $0x20] sm:$0xff] %v4183
    %4212 = vst [vmem:[#allocation4 + $0x28] sm:$0xff] %v4184
    %4213 = vst [vmem:[#allocation4 + $0x30] sm:$0xff] %v4185
    %4214 = vst [vmem:[#allocation4 + $0x38] sm:$0xff] %v4186
    %4215 = vst [vmem:[#allocation4 + $0x40] sm:$0xff] %v4187
    %4216 = vst [vmem:[#allocation4 + $0x48] sm:$0xff] %v4188
    %4217 = vst [vmem:[#allocation4 + $0x50] sm:$0xff] %v4189
    %4218 = vst [vmem:[#allocation4 + $0x58] sm:$0xff] %v4190
    %4219 = vst [vmem:[#allocation4 + $0x60] sm:$0xff] %v4191
    %4220 = vst [vmem:[#allocation4 + $0x68] sm:$0xff] %v4192
    %4221 = vst [vmem:[#allocation4 + $0x70] sm:$0xff] %v4193
    %4222 = vst [vmem:[#allocation4 + $0x78] sm:$0xff] %v4194
    %4223 = vst [vmem:[#allocation4 + $0x80] sm:$0xff] %v4195
    %4224 = vst [vmem:[#allocation4 + $0x88] sm:$0xff] %v4196
    %4225 = vst [vmem:[#allocation4 + $0x90] sm:$0xff] %v4197
    %4226 = vst [vmem:[#allocation4 + $0x98] sm:$0xff] %v4198
    %4227 = vst [vmem:[#allocation4 + $0xa0] sm:$0xff] %v4199
    %4228 = vst [vmem:[#allocation4 + $0xa8] sm:$0xff] %v4200
    %4229 = vst [vmem:[#allocation4 + $0xb0] sm:$0xff] %v4201
    %4230 = vst [vmem:[#allocation4 + $0xb8] sm:$0xff] %v4202
    %4231 = vst [vmem:[#allocation4 + $0xc0] sm:$0xff] %v4203
    %4232 = vst [vmem:[#allocation4 + $0xc8] sm:$0xff] %v4204
    %4233 = vst [vmem:[#allocation4 + $0xd0] sm:$0xff] %v4205
    %4234 = vst [vmem:[#allocation4 + $0xd8] sm:$0xff] %v4206
    %v4235 = vld [vmem:[#allocation3 + $0x1a] sm:$0xff]
    %v4236 = vld [vmem:[#allocation3 + $0x22] sm:$0xff]
    %v4237 = vld [vmem:[#allocation3 + $0x2a] sm:$0xff]
    %v4238 = vld [vmem:[#allocation3 + $0x32] sm:$0xff]
    %v4239 = vld [vmem:[#allocation3 + $0x3a] sm:$0xff]
    %v4240 = vld [vmem:[#allocation3 + $0x42] sm:$0xff]
    %v4241 = vld [vmem:[#allocation3 + $0x4a] sm:$0xff]
    %v4242 = vld [vmem:[#allocation3 + $0x52] sm:$0xff]
    %v4243 = vld [vmem:[#allocation3 + $0x5a] sm:$0xff]
    %v4244 = vld [vmem:[#allocation3 + $0x62] sm:$0xff]
    %v4245 = vld [vmem:[#allocation3 + $0x6a] sm:$0xff]
    %v4246 = vld [vmem:[#allocation3 + $0x72] sm:$0xff]
    %v4247 = vld [vmem:[#allocation3 + $0x7a] sm:$0xff]
    %v4248 = vld [vmem:[#allocation3 + $0x82] sm:$0xff]
    %v4249 = vld [vmem:[#allocation3 + $0x8a] sm:$0xff]
    %v4250 = vld [vmem:[#allocation3 + $0x92] sm:$0xff]
    %v4251 = vld [vmem:[#allocation3 + $0x9a] sm:$0xff]
    %v4252 = vld [vmem:[#allocation3 + $0xa2] sm:$0xff]
    %v4253 = vld [vmem:[#allocation3 + $0xaa] sm:$0xff]
    %v4254 = vld [vmem:[#allocation3 + $0xb2] sm:$0xff]
    %v4255 = vld [vmem:[#allocation3 + $0xba] sm:$0xff]
    %v4256 = vld [vmem:[#allocation3 + $0xc2] sm:$0xff]
    %v4257 = vld [vmem:[#allocation3 + $0xca] sm:$0xff]
    %v4258 = vld [vmem:[#allocation3 + $0xd2] sm:$0xff]
    %v4259 = vld [vmem:[#allocation3 + $0xda] sm:$0xff]
    %v4260 = vld [vmem:[#allocation3 + $0xe2] sm:$0xff]
    %v4261 = vld [vmem:[#allocation3 + $0xea] sm:$0xff]
    %v4262 = vld [vmem:[#allocation3 + $0xf2] sm:$0xff]
    %v4263 = vld [vmem:[%s3 + $0x16] sm:$0x1]
    %v4264 = vlaneseq
    %v4265 = vshrl.u32 %v4264, 7
    %v4266 = vsub.s32 0, %v4265
    %v4267 = vrot.slane %v4263, %v4266
    %v4268 = vmul.f32 %v4235, %v4267
    %v4269 = vmul.f32 %v4236, %v4267
    %v4270 = vmul.f32 %v4237, %v4267
    %v4271 = vmul.f32 %v4238, %v4267
    %v4272 = vmul.f32 %v4239, %v4267
    %v4273 = vmul.f32 %v4240, %v4267
    %v4274 = vmul.f32 %v4241, %v4267
    %v4275 = vmul.f32 %v4242, %v4267
    %v4276 = vmul.f32 %v4243, %v4267
    %v4277 = vmul.f32 %v4244, %v4267
    %v4278 = vmul.f32 %v4245, %v4267
    %v4279 = vmul.f32 %v4246, %v4267
    %v4280 = vmul.f32 %v4247, %v4267
    %v4281 = vmul.f32 %v4248, %v4267
    %v4282 = vmul.f32 %v4249, %v4267
    %v4283 = vmul.f32 %v4250, %v4267
    %v4284 = vmul.f32 %v4251, %v4267
    %v4285 = vmul.f32 %v4252, %v4267
    %v4286 = vmul.f32 %v4253, %v4267
    %v4287 = vmul.f32 %v4254, %v4267
    %v4288 = vmul.f32 %v4255, %v4267
    %v4289 = vmul.f32 %v4256, %v4267
    %v4290 = vmul.f32 %v4257, %v4267
    %v4291 = vmul.f32 %v4258, %v4267
    %v4292 = vmul.f32 %v4259, %v4267
    %v4293 = vmul.f32 %v4260, %v4267
    %v4294 = vmul.f32 %v4261, %v4267
    %v4295 = vmul.f32 %v4262, %v4267
    %v4296 = vld [vmem:[#allocation3 + $0x1b] sm:$0xff]
    %v4297 = vld [vmem:[#allocation3 + $0x23] sm:$0xff]
    %v4298 = vld [vmem:[#allocation3 + $0x2b] sm:$0xff]
    %v4299 = vld [vmem:[#allocation3 + $0x33] sm:$0xff]
    %v4300 = vld [vmem:[#allocation3 + $0x3b] sm:$0xff]
    %v4301 = vld [vmem:[#allocation3 + $0x43] sm:$0xff]
    %v4302 = vld [vmem:[#allocation3 + $0x4b] sm:$0xff]
    %v4303 = vld [vmem:[#allocation3 + $0x53] sm:$0xff]
    %v4304 = vld [vmem:[#allocation3 + $0x5b] sm:$0xff]
    %v4305 = vld [vmem:[#allocation3 + $0x63] sm:$0xff]
    %v4306 = vld [vmem:[#allocation3 + $0x6b] sm:$0xff]
    %v4307 = vld [vmem:[#allocation3 + $0x73] sm:$0xff]
    %v4308 = vld [vmem:[#allocation3 + $0x7b] sm:$0xff]
    %v4309 = vld [vmem:[#allocation3 + $0x83] sm:$0xff]
    %v4310 = vld [vmem:[#allocation3 + $0x8b] sm:$0xff]
    %v4311 = vld [vmem:[#allocation3 + $0x93] sm:$0xff]
    %v4312 = vld [vmem:[#allocation3 + $0x9b] sm:$0xff]
    %v4313 = vld [vmem:[#allocation3 + $0xa3] sm:$0xff]
    %v4314 = vld [vmem:[#allocation3 + $0xab] sm:$0xff]
    %v4315 = vld [vmem:[#allocation3 + $0xb3] sm:$0xff]
    %v4316 = vld [vmem:[#allocation3 + $0xbb] sm:$0xff]
    %v4317 = vld [vmem:[#allocation3 + $0xc3] sm:$0xff]
    %v4318 = vld [vmem:[#allocation3 + $0xcb] sm:$0xff]
    %v4319 = vld [vmem:[#allocation3 + $0xd3] sm:$0xff]
    %v4320 = vld [vmem:[#allocation3 + $0xdb] sm:$0xff]
    %v4321 = vld [vmem:[#allocation3 + $0xe3] sm:$0xff]
    %v4322 = vld [vmem:[#allocation3 + $0xeb] sm:$0xff]
    %v4323 = vld [vmem:[#allocation3 + $0xf3] sm:$0xff]
    %v4324 = vld [vmem:[%s3 + $0x17] sm:$0x1]
    %v4325 = vlaneseq
    %v4326 = vshrl.u32 %v4325, 7
    %v4327 = vsub.s32 0, %v4326
    %v4328 = vrot.slane %v4324, %v4327
    %v4329 = vmul.f32 %v4296, %v4328
    %v4330 = vmul.f32 %v4297, %v4328
    %v4331 = vmul.f32 %v4298, %v4328
    %v4332 = vmul.f32 %v4299, %v4328
    %v4333 = vmul.f32 %v4300, %v4328
    %v4334 = vmul.f32 %v4301, %v4328
    %v4335 = vmul.f32 %v4302, %v4328
    %v4336 = vmul.f32 %v4303, %v4328
    %v4337 = vmul.f32 %v4304, %v4328
    %v4338 = vmul.f32 %v4305, %v4328
    %v4339 = vmul.f32 %v4306, %v4328
    %v4340 = vmul.f32 %v4307, %v4328
    %v4341 = vmul.f32 %v4308, %v4328
    %v4342 = vmul.f32 %v4309, %v4328
    %v4343 = vmul.f32 %v4310, %v4328
    %v4344 = vmul.f32 %v4311, %v4328
    %v4345 = vmul.f32 %v4312, %v4328
    %v4346 = vmul.f32 %v4313, %v4328
    %v4347 = vmul.f32 %v4314, %v4328
    %v4348 = vmul.f32 %v4315, %v4328
    %v4349 = vmul.f32 %v4316, %v4328
    %v4350 = vmul.f32 %v4317, %v4328
    %v4351 = vmul.f32 %v4318, %v4328
    %v4352 = vmul.f32 %v4319, %v4328
    %v4353 = vmul.f32 %v4320, %v4328
    %v4354 = vmul.f32 %v4321, %v4328
    %v4355 = vmul.f32 %v4322, %v4328
    %v4356 = vmul.f32 %v4323, %v4328
    %v4357 = vadd.f32 %v4268, %v4329
    %v4358 = vadd.f32 %v4269, %v4330
    %v4359 = vadd.f32 %v4270, %v4331
    %v4360 = vadd.f32 %v4271, %v4332
    %v4361 = vadd.f32 %v4272, %v4333
    %v4362 = vadd.f32 %v4273, %v4334
    %v4363 = vadd.f32 %v4274, %v4335
    %v4364 = vadd.f32 %v4275, %v4336
    %v4365 = vadd.f32 %v4276, %v4337
    %v4366 = vadd.f32 %v4277, %v4338
    %v4367 = vadd.f32 %v4278, %v4339
    %v4368 = vadd.f32 %v4279, %v4340
    %v4369 = vadd.f32 %v4280, %v4341
    %v4370 = vadd.f32 %v4281, %v4342
    %v4371 = vadd.f32 %v4282, %v4343
    %v4372 = vadd.f32 %v4283, %v4344
    %v4373 = vadd.f32 %v4284, %v4345
    %v4374 = vadd.f32 %v4285, %v4346
    %v4375 = vadd.f32 %v4286, %v4347
    %v4376 = vadd.f32 %v4287, %v4348
    %v4377 = vadd.f32 %v4288, %v4349
    %v4378 = vadd.f32 %v4289, %v4350
    %v4379 = vadd.f32 %v4290, %v4351
    %v4380 = vadd.f32 %v4291, %v4352
    %v4381 = vadd.f32 %v4292, %v4353
    %v4382 = vadd.f32 %v4293, %v4354
    %v4383 = vadd.f32 %v4294, %v4355
    %v4384 = vadd.f32 %v4295, %v4356
    %v4385 = vld [vmem:[#allocation3 + $0x1c] sm:$0xff]
    %v4386 = vld [vmem:[#allocation3 + $0x24] sm:$0xff]
    %v4387 = vld [vmem:[#allocation3 + $0x2c] sm:$0xff]
    %v4388 = vld [vmem:[#allocation3 + $0x34] sm:$0xff]
    %v4389 = vld [vmem:[#allocation3 + $0x3c] sm:$0xff]
    %v4390 = vld [vmem:[#allocation3 + $0x44] sm:$0xff]
    %v4391 = vld [vmem:[#allocation3 + $0x4c] sm:$0xff]
    %v4392 = vld [vmem:[#allocation3 + $0x54] sm:$0xff]
    %v4393 = vld [vmem:[#allocation3 + $0x5c] sm:$0xff]
    %v4394 = vld [vmem:[#allocation3 + $0x64] sm:$0xff]
    %v4395 = vld [vmem:[#allocation3 + $0x6c] sm:$0xff]
    %v4396 = vld [vmem:[#allocation3 + $0x74] sm:$0xff]
    %v4397 = vld [vmem:[#allocation3 + $0x7c] sm:$0xff]
    %v4398 = vld [vmem:[#allocation3 + $0x84] sm:$0xff]
    %v4399 = vld [vmem:[#allocation3 + $0x8c] sm:$0xff]
    %v4400 = vld [vmem:[#allocation3 + $0x94] sm:$0xff]
    %v4401 = vld [vmem:[#allocation3 + $0x9c] sm:$0xff]
    %v4402 = vld [vmem:[#allocation3 + $0xa4] sm:$0xff]
    %v4403 = vld [vmem:[#allocation3 + $0xac] sm:$0xff]
    %v4404 = vld [vmem:[#allocation3 + $0xb4] sm:$0xff]
    %v4405 = vld [vmem:[#allocation3 + $0xbc] sm:$0xff]
    %v4406 = vld [vmem:[#allocation3 + $0xc4] sm:$0xff]
    %v4407 = vld [vmem:[#allocation3 + $0xcc] sm:$0xff]
    %v4408 = vld [vmem:[#allocation3 + $0xd4] sm:$0xff]
    %v4409 = vld [vmem:[#allocation3 + $0xdc] sm:$0xff]
    %v4410 = vld [vmem:[#allocation3 + $0xe4] sm:$0xff]
    %v4411 = vld [vmem:[#allocation3 + $0xec] sm:$0xff]
    %v4412 = vld [vmem:[#allocation3 + $0xf4] sm:$0xff]
    %v4413 = vld [vmem:[%s3 + $0x18] sm:$0x1]
    %v4414 = vlaneseq
    %v4415 = vshrl.u32 %v4414, 7
    %v4416 = vsub.s32 0, %v4415
    %v4417 = vrot.slane %v4413, %v4416
    %v4418 = vmul.f32 %v4385, %v4417
    %v4419 = vmul.f32 %v4386, %v4417
    %v4420 = vmul.f32 %v4387, %v4417
    %v4421 = vmul.f32 %v4388, %v4417
    %v4422 = vmul.f32 %v4389, %v4417
    %v4423 = vmul.f32 %v4390, %v4417
    %v4424 = vmul.f32 %v4391, %v4417
    %v4425 = vmul.f32 %v4392, %v4417
    %v4426 = vmul.f32 %v4393, %v4417
    %v4427 = vmul.f32 %v4394, %v4417
    %v4428 = vmul.f32 %v4395, %v4417
    %v4429 = vmul.f32 %v4396, %v4417
    %v4430 = vmul.f32 %v4397, %v4417
    %v4431 = vmul.f32 %v4398, %v4417
    %v4432 = vmul.f32 %v4399, %v4417
    %v4433 = vmul.f32 %v4400, %v4417
    %v4434 = vmul.f32 %v4401, %v4417
    %v4435 = vmul.f32 %v4402, %v4417
    %v4436 = vmul.f32 %v4403, %v4417
    %v4437 = vmul.f32 %v4404, %v4417
    %v4438 = vmul.f32 %v4405, %v4417
    %v4439 = vmul.f32 %v4406, %v4417
    %v4440 = vmul.f32 %v4407, %v4417
    %v4441 = vmul.f32 %v4408, %v4417
    %v4442 = vmul.f32 %v4409, %v4417
    %v4443 = vmul.f32 %v4410, %v4417
    %v4444 = vmul.f32 %v4411, %v4417
    %v4445 = vmul.f32 %v4412, %v4417
    %v4446 = vadd.f32 %v4357, %v4418
    %v4447 = vadd.f32 %v4358, %v4419
    %v4448 = vadd.f32 %v4359, %v4420
    %v4449 = vadd.f32 %v4360, %v4421
    %v4450 = vadd.f32 %v4361, %v4422
    %v4451 = vadd.f32 %v4362, %v4423
    %v4452 = vadd.f32 %v4363, %v4424
    %v4453 = vadd.f32 %v4364, %v4425
    %v4454 = vadd.f32 %v4365, %v4426
    %v4455 = vadd.f32 %v4366, %v4427
    %v4456 = vadd.f32 %v4367, %v4428
    %v4457 = vadd.f32 %v4368, %v4429
    %v4458 = vadd.f32 %v4369, %v4430
    %v4459 = vadd.f32 %v4370, %v4431
    %v4460 = vadd.f32 %v4371, %v4432
    %v4461 = vadd.f32 %v4372, %v4433
    %v4462 = vadd.f32 %v4373, %v4434
    %v4463 = vadd.f32 %v4374, %v4435
    %v4464 = vadd.f32 %v4375, %v4436
    %v4465 = vadd.f32 %v4376, %v4437
    %v4466 = vadd.f32 %v4377, %v4438
    %v4467 = vadd.f32 %v4378, %v4439
    %v4468 = vadd.f32 %v4379, %v4440
    %v4469 = vadd.f32 %v4380, %v4441
    %v4470 = vadd.f32 %v4381, %v4442
    %v4471 = vadd.f32 %v4382, %v4443
    %v4472 = vadd.f32 %v4383, %v4444
    %v4473 = vadd.f32 %v4384, %v4445
    %v4474 = vld [vmem:[#allocation4] sm:$0xff]
    %v4475 = vld [vmem:[#allocation4 + $0x8] sm:$0xff]
    %v4476 = vld [vmem:[#allocation4 + $0x10] sm:$0xff]
    %v4477 = vld [vmem:[#allocation4 + $0x18] sm:$0xff]
    %v4478 = vld [vmem:[#allocation4 + $0x20] sm:$0xff]
    %v4479 = vld [vmem:[#allocation4 + $0x28] sm:$0xff]
    %v4480 = vld [vmem:[#allocation4 + $0x30] sm:$0xff]
    %v4481 = vld [vmem:[#allocation4 + $0x38] sm:$0xff]
    %v4482 = vld [vmem:[#allocation4 + $0x40] sm:$0xff]
    %v4483 = vld [vmem:[#allocation4 + $0x48] sm:$0xff]
    %v4484 = vld [vmem:[#allocation4 + $0x50] sm:$0xff]
    %v4485 = vld [vmem:[#allocation4 + $0x58] sm:$0xff]
    %v4486 = vld [vmem:[#allocation4 + $0x60] sm:$0xff]
    %v4487 = vld [vmem:[#allocation4 + $0x68] sm:$0xff]
    %v4488 = vld [vmem:[#allocation4 + $0x70] sm:$0xff]
    %v4489 = vld [vmem:[#allocation4 + $0x78] sm:$0xff]
    %v4490 = vld [vmem:[#allocation4 + $0x80] sm:$0xff]
    %v4491 = vld [vmem:[#allocation4 + $0x88] sm:$0xff]
    %v4492 = vld [vmem:[#allocation4 + $0x90] sm:$0xff]
    %v4493 = vld [vmem:[#allocation4 + $0x98] sm:$0xff]
    %v4494 = vld [vmem:[#allocation4 + $0xa0] sm:$0xff]
    %v4495 = vld [vmem:[#allocation4 + $0xa8] sm:$0xff]
    %v4496 = vld [vmem:[#allocation4 + $0xb0] sm:$0xff]
    %v4497 = vld [vmem:[#allocation4 + $0xb8] sm:$0xff]
    %v4498 = vld [vmem:[#allocation4 + $0xc0] sm:$0xff]
    %v4499 = vld [vmem:[#allocation4 + $0xc8] sm:$0xff]
    %v4500 = vld [vmem:[#allocation4 + $0xd0] sm:$0xff]
    %v4501 = vld [vmem:[#allocation4 + $0xd8] sm:$0xff]
    %v4502 = vadd.f32 %v4474, %v4446
    %v4503 = vadd.f32 %v4475, %v4447
    %v4504 = vadd.f32 %v4476, %v4448
    %v4505 = vadd.f32 %v4477, %v4449
    %v4506 = vadd.f32 %v4478, %v4450
    %v4507 = vadd.f32 %v4479, %v4451
    %v4508 = vadd.f32 %v4480, %v4452
    %v4509 = vadd.f32 %v4481, %v4453
    %v4510 = vadd.f32 %v4482, %v4454
    %v4511 = vadd.f32 %v4483, %v4455
    %v4512 = vadd.f32 %v4484, %v4456
    %v4513 = vadd.f32 %v4485, %v4457
    %v4514 = vadd.f32 %v4486, %v4458
    %v4515 = vadd.f32 %v4487, %v4459
    %v4516 = vadd.f32 %v4488, %v4460
    %v4517 = vadd.f32 %v4489, %v4461
    %v4518 = vadd.f32 %v4490, %v4462
    %v4519 = vadd.f32 %v4491, %v4463
    %v4520 = vadd.f32 %v4492, %v4464
    %v4521 = vadd.f32 %v4493, %v4465
    %v4522 = vadd.f32 %v4494, %v4466
    %v4523 = vadd.f32 %v4495, %v4467
    %v4524 = vadd.f32 %v4496, %v4468
    %v4525 = vadd.f32 %v4497, %v4469
    %v4526 = vadd.f32 %v4498, %v4470
    %v4527 = vadd.f32 %v4499, %v4471
    %v4528 = vadd.f32 %v4500, %v4472
    %v4529 = vadd.f32 %v4501, %v4473
    %4530 = vst [vmem:[#allocation4] sm:$0xff] %v4502
    %4531 = vst [vmem:[#allocation4 + $0x8] sm:$0xff] %v4503
    %4532 = vst [vmem:[#allocation4 + $0x10] sm:$0xff] %v4504
    %4533 = vst [vmem:[#allocation4 + $0x18] sm:$0xff] %v4505
    %4534 = vst [vmem:[#allocation4 + $0x20] sm:$0xff] %v4506
    %4535 = vst [vmem:[#allocation4 + $0x28] sm:$0xff] %v4507
    %4536 = vst [vmem:[#allocation4 + $0x30] sm:$0xff] %v4508
    %4537 = vst [vmem:[#allocation4 + $0x38] sm:$0xff] %v4509
    %4538 = vst [vmem:[#allocation4 + $0x40] sm:$0xff] %v4510
    %4539 = vst [vmem:[#allocation4 + $0x48] sm:$0xff] %v4511
    %4540 = vst [vmem:[#allocation4 + $0x50] sm:$0xff] %v4512
    %4541 = vst [vmem:[#allocation4 + $0x58] sm:$0xff] %v4513
    %4542 = vst [vmem:[#allocation4 + $0x60] sm:$0xff] %v4514
    %4543 = vst [vmem:[#allocation4 + $0x68] sm:$0xff] %v4515
    %4544 = vst [vmem:[#allocation4 + $0x70] sm:$0xff] %v4516
    %4545 = vst [vmem:[#allocation4 + $0x78] sm:$0xff] %v4517
    %4546 = vst [vmem:[#allocation4 + $0x80] sm:$0xff] %v4518
    %4547 = vst [vmem:[#allocation4 + $0x88] sm:$0xff] %v4519
    %4548 = vst [vmem:[#allocation4 + $0x90] sm:$0xff] %v4520
    %4549 = vst [vmem:[#allocation4 + $0x98] sm:$0xff] %v4521
    %4550 = vst [vmem:[#allocation4 + $0xa0] sm:$0xff] %v4522
    %4551 = vst [vmem:[#allocation4 + $0xa8] sm:$0xff] %v4523
    %4552 = vst [vmem:[#allocation4 + $0xb0] sm:$0xff] %v4524
    %4553 = vst [vmem:[#allocation4 + $0xb8] sm:$0xff] %v4525
    %4554 = vst [vmem:[#allocation4 + $0xc0] sm:$0xff] %v4526
    %4555 = vst [vmem:[#allocation4 + $0xc8] sm:$0xff] %v4527
    %4556 = vst [vmem:[#allocation4 + $0xd0] sm:$0xff] %v4528
    %4557 = vst [vmem:[#allocation4 + $0xd8] sm:$0xff] %v4529
    %v4558 = vld [vmem:[#allocation4] sm:$0xff]
    %v4559 = vld [vmem:[#allocation4 + $0x8] sm:$0xff]
    %v4560 = vld [vmem:[#allocation4 + $0x10] sm:$0xff]
    %v4561 = vld [vmem:[#allocation4 + $0x18] sm:$0xff]
    %v4562 = vld [vmem:[#allocation4 + $0x20] sm:$0xff]
    %v4563 = vld [vmem:[#allocation4 + $0x28] sm:$0xff]
    %v4564 = vld [vmem:[#allocation4 + $0x30] sm:$0xff]
    %v4565 = vld [vmem:[#allocation4 + $0x38] sm:$0xff]
    %v4566 = vld [vmem:[#allocation4 + $0x40] sm:$0xff]
    %v4567 = vld [vmem:[#allocation4 + $0x48] sm:$0xff]
    %v4568 = vld [vmem:[#allocation4 + $0x50] sm:$0xff]
    %v4569 = vld [vmem:[#allocation4 + $0x58] sm:$0xff]
    %v4570 = vld [vmem:[#allocation4 + $0x60] sm:$0xff]
    %v4571 = vld [vmem:[#allocation4 + $0x68] sm:$0xff]
    %v4572 = vld [vmem:[#allocation4 + $0x70] sm:$0xff]
    %v4573 = vld [vmem:[#allocation4 + $0x78] sm:$0xff]
    %v4574 = vld [vmem:[#allocation4 + $0x80] sm:$0xff]
    %v4575 = vld [vmem:[#allocation4 + $0x88] sm:$0xff]
    %v4576 = vld [vmem:[#allocation4 + $0x90] sm:$0xff]
    %v4577 = vld [vmem:[#allocation4 + $0x98] sm:$0xff]
    %v4578 = vld [vmem:[#allocation4 + $0xa0] sm:$0xff]
    %v4579 = vld [vmem:[#allocation4 + $0xa8] sm:$0xff]
    %v4580 = vld [vmem:[#allocation4 + $0xb0] sm:$0xff]
    %v4581 = vld [vmem:[#allocation4 + $0xb8] sm:$0xff]
    %v4582 = vld [vmem:[#allocation4 + $0xc0] sm:$0xff]
    %v4583 = vld [vmem:[#allocation4 + $0xc8] sm:$0xff]
    %v4584 = vld [vmem:[#allocation4 + $0xd0] sm:$0xff]
    %v4585 = vld [vmem:[#allocation4 + $0xd8] sm:$0xff]
    %v4586 = vld [vmem:[%s2 + $0x250] sm:$0xff]
    %v4587 = vld [vmem:[%s2 + $0x258] sm:$0xff]
    %v4588 = vld [vmem:[%s2 + $0x260] sm:$0xff]
    %v4589 = vld [vmem:[%s2 + $0x268] sm:$0xff]
    %v4590 = vld [vmem:[%s2 + $0x270] sm:$0xff]
    %v4591 = vld [vmem:[%s2 + $0x278] sm:$0xff]
    %v4592 = vld [vmem:[%s2 + $0x280] sm:$0xff]
    %v4593 = vld [vmem:[%s2 + $0x288] sm:$0xff]
    %v4594 = vld [vmem:[%s2 + $0x290] sm:$0xff]
    %v4595 = vld [vmem:[%s2 + $0x298] sm:$0xff]
    %v4596 = vld [vmem:[%s2 + $0x2a0] sm:$0xff]
    %v4597 = vld [vmem:[%s2 + $0x2a8] sm:$0xff]
    %v4598 = vld [vmem:[%s2 + $0x2b0] sm:$0xff]
    %v4599 = vld [vmem:[%s2 + $0x2b8] sm:$0xff]
    %v4600 = vld [vmem:[%s2 + $0x2c0] sm:$0xff]
    %v4601 = vld [vmem:[%s2 + $0x2c8] sm:$0xff]
    %4602 = vmatprep.subr.mxu0 0.0
    %4603 = vmatpush1.msra.mxu0 %v4586
    %4604 = vmatprep.subr.mxu0 0.0
    %4605 = vmatpush1.msra.mxu0 %v4587
    %4606 = vmatprep.subr.mxu0 0.0
    %4607 = vmatpush1.msra.mxu0 %v4588
    %4608 = vmatprep.subr.mxu0 0.0
    %4609 = vmatpush1.msra.mxu0 %v4589
    %4610 = vmatprep.subr.mxu0 0.0
    %4611 = vmatpush1.msra.mxu0 %v4590
    %4612 = vmatprep.subr.mxu0 0.0
    %4613 = vmatpush1.msra.mxu0 %v4591
    %4614 = vmatprep.subr.mxu0 0.0
    %4615 = vmatpush1.msra.mxu0 %v4592
    %4616 = vmatprep.subr.mxu0 0.0
    %4617 = vmatpush1.msra.mxu0 %v4593
    %4618 = vmatprep.subr.mxu0 0.0
    %4619 = vmatpush1.msra.mxu0 %v4594
    %4620 = vmatprep.subr.mxu0 0.0
    %4621 = vmatpush1.msra.mxu0 %v4595
    %4622 = vmatprep.subr.mxu0 0.0
    %4623 = vmatpush1.msra.mxu0 %v4596
    %4624 = vmatprep.subr.mxu0 0.0
    %4625 = vmatpush1.msra.mxu0 %v4597
    %4626 = vmatprep.subr.mxu0 0.0
    %4627 = vmatpush1.msra.mxu0 %v4598
    %4628 = vmatprep.subr.mxu0 0.0
    %4629 = vmatpush1.msra.mxu0 %v4599
    %4630 = vmatprep.subr.mxu0 0.0
    %4631 = vmatpush1.msra.mxu0 %v4600
    %4632 = vmatprep.subr.mxu0 0.0
    %4633 = vmatpush1.msra.mxu0 %v4601
    %4634 = vmatprep.subr.mxu0 0.0
    %4635 = vmatpush1.msra.mxu0 0.0
    %4636 = vmatprep.subr.mxu0 0.0
    %4637 = vmatpush1.msra.mxu0 0.0
    %4638 = vmatprep.subr.mxu0 0.0
    %4639 = vmatpush1.msra.mxu0 0.0
    %4640 = vmatprep.subr.mxu0 0.0
    %4641 = vmatpush1.msra.mxu0 0.0
    %4642 = vmatprep.subr.mxu0 0.0
    %4643 = vmatpush1.msra.mxu0 0.0
    %4644 = vmatprep.subr.mxu0 0.0
    %4645 = vmatpush1.msra.mxu0 0.0
    %4646 = vmatprep.subr.mxu0 0.0
    %4647 = vmatpush1.msra.mxu0 0.0
    %4648 = vmatprep.subr.mxu0 0.0
    %4649 = vmatpush1.msra.mxu0 0.0
    %4650 = vmatprep.subr.mxu0 0.0
    %4651 = vmatpush1.msra.mxu0 0.0
    %4652 = vmatprep.subr.mxu0 0.0
    %4653 = vmatpush1.msra.mxu0 0.0
    %4654 = vmatprep.subr.mxu0 0.0
    %4655 = vmatpush1.msra.mxu0 0.0
    %4656 = vmatprep.subr.mxu0 0.0
    %4657 = vmatpush1.msra.mxu0 0.0
    %4658 = vmatprep.subr.mxu0 0.0
    %4659 = vmatpush1.msra.mxu0 0.0
    %4660 = vmatprep.subr.mxu0 0.0
    %4661 = vmatpush1.msra.mxu0 0.0
    %4662 = vmatprep.subr.mxu0 0.0
    %4663 = vmatpush1.msra.mxu0 0.0
    %4664 = vmatprep.subr.mxu0 0.0
    %4665 = vmatpush1.msra.mxu0 0.0
    %4666 = vmatprep.mubr.f32.mxu0 0.0
    %4667 = vmatmul.mubr.f32.gmra.mrb[0].mxu0 %v4558
    %v4668 = vpop.f32.mrb[0].mxu0
    %v4669 = vadd.f32 0.0, %v4668
    %v4670 = vpop.f32.mrb[0].mxu0
    %4671 = vmatprep.mubr.f32.mxu0 0.0
    %4672 = vmatmul.mubr.f32.gmra.mrb[0].mxu0 %v4559
    %v4673 = vpop.f32.mrb[0].mxu0
    %v4674 = vadd.f32 0.0, %v4673
    %v4675 = vpop.f32.mrb[0].mxu0
    %4676 = vmatprep.mubr.f32.mxu0 0.0
    %4677 = vmatmul.mubr.f32.gmra.mrb[0].mxu0 %v4560
    %v4678 = vpop.f32.mrb[0].mxu0
    %v4679 = vadd.f32 0.0, %v4678
    %v4680 = vpop.f32.mrb[0].mxu0
    %4681 = vmatprep.mubr.f32.mxu0 0.0
    %4682 = vmatmul.mubr.f32.gmra.mrb[0].mxu0 %v4561
    %v4683 = vpop.f32.mrb[0].mxu0
    %v4684 = vadd.f32 0.0, %v4683
    %v4685 = vpop.f32.mrb[0].mxu0
    %4686 = vmatprep.mubr.f32.mxu0 0.0
    %4687 = vmatmul.mubr.f32.gmra.mrb[0].mxu0 %v4562
    %v4688 = vpop.f32.mrb[0].mxu0
    %v4689 = vadd.f32 0.0, %v4688
    %v4690 = vpop.f32.mrb[0].mxu0
    %4691 = vmatprep.mubr.f32.mxu0 0.0
    %4692 = vmatmul.mubr.f32.gmra.mrb[0].mxu0 %v4563
    %v4693 = vpop.f32.mrb[0].mxu0
    %v4694 = vadd.f32 0.0, %v4693
    %v4695 = vpop.f32.mrb[0].mxu0
    %4696 = vmatprep.mubr.f32.mxu0 0.0
    %4697 = vmatmul.mubr.f32.gmra.mrb[0].mxu0 %v4564
    %v4698 = vpop.f32.mrb[0].mxu0
    %v4699 = vadd.f32 0.0, %v4698
    %v4700 = vpop.f32.mrb[0].mxu0
    %4701 = vmatprep.mubr.f32.mxu0 0.0
    %4702 = vmatmul.mubr.f32.gmra.mrb[0].mxu0 %v4565
    %v4703 = vpop.f32.mrb[0].mxu0
    %v4704 = vadd.f32 0.0, %v4703
    %v4705 = vpop.f32.mrb[0].mxu0
    %4706 = vmatprep.mubr.f32.mxu0 0.0
    %4707 = vmatmul.mubr.f32.gmra.mrb[0].mxu0 %v4566
    %v4708 = vpop.f32.mrb[0].mxu0
    %v4709 = vadd.f32 0.0, %v4708
    %v4710 = vpop.f32.mrb[0].mxu0
    %4711 = vmatprep.mubr.f32.mxu0 0.0
    %4712 = vmatmul.mubr.f32.gmra.mrb[0].mxu0 %v4567
    %v4713 = vpop.f32.mrb[0].mxu0
    %v4714 = vadd.f32 0.0, %v4713
    %v4715 = vpop.f32.mrb[0].mxu0
    %4716 = vmatprep.mubr.f32.mxu0 0.0
    %4717 = vmatmul.mubr.f32.gmra.mrb[0].mxu0 %v4568
    %v4718 = vpop.f32.mrb[0].mxu0
    %v4719 = vadd.f32 0.0, %v4718
    %v4720 = vpop.f32.mrb[0].mxu0
    %4721 = vmatprep.mubr.f32.mxu0 0.0
    %4722 = vmatmul.mubr.f32.gmra.mrb[0].mxu0 %v4569
    %v4723 = vpop.f32.mrb[0].mxu0
    %v4724 = vadd.f32 0.0, %v4723
    %v4725 = vpop.f32.mrb[0].mxu0
    %4726 = vmatprep.mubr.f32.mxu0 0.0
    %4727 = vmatmul.mubr.f32.gmra.mrb[0].mxu0 %v4570
    %v4728 = vpop.f32.mrb[0].mxu0
    %v4729 = vadd.f32 0.0, %v4728
    %v4730 = vpop.f32.mrb[0].mxu0
    %4731 = vmatprep.mubr.f32.mxu0 0.0
    %4732 = vmatmul.mubr.f32.gmra.mrb[0].mxu0 %v4571
    %v4733 = vpop.f32.mrb[0].mxu0
    %v4734 = vadd.f32 0.0, %v4733
    %v4735 = vpop.f32.mrb[0].mxu0
    %4736 = vmatprep.mubr.f32.mxu0 0.0
    %4737 = vmatmul.mubr.f32.gmra.mrb[0].mxu0 %v4572
    %v4738 = vpop.f32.mrb[0].mxu0
    %v4739 = vadd.f32 0.0, %v4738
    %v4740 = vpop.f32.mrb[0].mxu0
    %4741 = vmatprep.mubr.f32.mxu0 0.0
    %4742 = vmatmul.mubr.f32.gmra.mrb[0].mxu0 %v4573
    %v4743 = vpop.f32.mrb[0].mxu0
    %v4744 = vadd.f32 0.0, %v4743
    %v4745 = vpop.f32.mrb[0].mxu0
    %4746 = vmatprep.mubr.f32.mxu0 0.0
    %4747 = vmatmul.mubr.f32.gmra.mrb[0].mxu0 %v4574
    %v4748 = vpop.f32.mrb[0].mxu0
    %v4749 = vadd.f32 0.0, %v4748
    %v4750 = vpop.f32.mrb[0].mxu0
    %4751 = vmatprep.mubr.f32.mxu0 0.0
    %4752 = vmatmul.mubr.f32.gmra.mrb[0].mxu0 %v4575
    %v4753 = vpop.f32.mrb[0].mxu0
    %v4754 = vadd.f32 0.0, %v4753
    %v4755 = vpop.f32.mrb[0].mxu0
    %4756 = vmatprep.mubr.f32.mxu0 0.0
    %4757 = vmatmul.mubr.f32.gmra.mrb[0].mxu0 %v4576
    %v4758 = vpop.f32.mrb[0].mxu0
    %v4759 = vadd.f32 0.0, %v4758
    %v4760 = vpop.f32.mrb[0].mxu0
    %4761 = vmatprep.mubr.f32.mxu0 0.0
    %4762 = vmatmul.mubr.f32.gmra.mrb[0].mxu0 %v4577
    %v4763 = vpop.f32.mrb[0].mxu0
    %v4764 = vadd.f32 0.0, %v4763
    %v4765 = vpop.f32.mrb[0].mxu0
    %4766 = vmatprep.mubr.f32.mxu0 0.0
    %4767 = vmatmul.mubr.f32.gmra.mrb[0].mxu0 %v4578
    %v4768 = vpop.f32.mrb[0].mxu0
    %v4769 = vadd.f32 0.0, %v4768
    %v4770 = vpop.f32.mrb[0].mxu0
    %4771 = vmatprep.mubr.f32.mxu0 0.0
    %4772 = vmatmul.mubr.f32.gmra.mrb[0].mxu0 %v4579
    %v4773 = vpop.f32.mrb[0].mxu0
    %v4774 = vadd.f32 0.0, %v4773
    %v4775 = vpop.f32.mrb[0].mxu0
    %4776 = vmatprep.mubr.f32.mxu0 0.0
    %4777 = vmatmul.mubr.f32.gmra.mrb[0].mxu0 %v4580
    %v4778 = vpop.f32.mrb[0].mxu0
    %v4779 = vadd.f32 0.0, %v4778
    %v4780 = vpop.f32.mrb[0].mxu0
    %4781 = vmatprep.mubr.f32.mxu0 0.0
    %4782 = vmatmul.mubr.f32.gmra.mrb[0].mxu0 %v4581
    %v4783 = vpop.f32.mrb[0].mxu0
    %v4784 = vadd.f32 0.0, %v4783
    %v4785 = vpop.f32.mrb[0].mxu0
    %4786 = vmatprep.mubr.f32.mxu0 0.0
    %4787 = vmatmul.mubr.f32.gmra.mrb[0].mxu0 %v4582
    %v4788 = vpop.f32.mrb[0].mxu0
    %v4789 = vadd.f32 0.0, %v4788
    %v4790 = vpop.f32.mrb[0].mxu0
    %4791 = vmatprep.mubr.f32.mxu0 0.0
    %4792 = vmatmul.mubr.f32.gmra.mrb[0].mxu0 %v4583
    %v4793 = vpop.f32.mrb[0].mxu0
    %v4794 = vadd.f32 0.0, %v4793
    %v4795 = vpop.f32.mrb[0].mxu0
    %4796 = vmatprep.mubr.f32.mxu0 0.0
    %4797 = vmatmul.mubr.f32.gmra.mrb[0].mxu0 %v4584
    %v4798 = vpop.f32.mrb[0].mxu0
    %v4799 = vadd.f32 0.0, %v4798
    %v4800 = vpop.f32.mrb[0].mxu0
    %4801 = vmatprep.mubr.f32.mxu0 0.0
    %4802 = vmatmul.mubr.f32.gmra.mrb[0].mxu0 %v4585
    %v4803 = vpop.f32.mrb[0].mxu0
    %v4804 = vadd.f32 0.0, %v4803
    %v4805 = vpop.f32.mrb[0].mxu0
    %4806 = vdwg.mxu0
    %v4807 = vld [vmem:[#allocation2 + $0x10] sm:$0xff]
    %v4808 = vld [vmem:[#allocation2 + $0x18] sm:$0xff]
    %v4809 = vld [vmem:[#allocation2 + $0x20] sm:$0xff]
    %v4810 = vld [vmem:[#allocation2 + $0x28] sm:$0xff]
    %v4811 = vld [vmem:[#allocation2 + $0x30] sm:$0xff]
    %v4812 = vld [vmem:[#allocation2 + $0x38] sm:$0xff]
    %v4813 = vld [vmem:[#allocation2 + $0x40] sm:$0xff]
    %v4814 = vld [vmem:[#allocation2 + $0x48] sm:$0xff]
    %v4815 = vld [vmem:[#allocation2 + $0x50] sm:$0xff]
    %v4816 = vld [vmem:[#allocation2 + $0x58] sm:$0xff]
    %v4817 = vld [vmem:[#allocation2 + $0x60] sm:$0xff]
    %v4818 = vld [vmem:[#allocation2 + $0x68] sm:$0xff]
    %v4819 = vld [vmem:[#allocation2 + $0x70] sm:$0xff]
    %v4820 = vld [vmem:[#allocation2 + $0x78] sm:$0xff]
    %v4821 = vld [vmem:[#allocation2 + $0x80] sm:$0xff]
    %v4822 = vld [vmem:[#allocation2 + $0x88] sm:$0xff]
    %v4823 = vld [vmem:[#allocation2 + $0x90] sm:$0xff]
    %v4824 = vld [vmem:[#allocation2 + $0x98] sm:$0xff]
    %v4825 = vld [vmem:[#allocation2 + $0xa0] sm:$0xff]
    %v4826 = vld [vmem:[#allocation2 + $0xa8] sm:$0xff]
    %v4827 = vld [vmem:[#allocation2 + $0xb0] sm:$0xff]
    %v4828 = vld [vmem:[#allocation2 + $0xb8] sm:$0xff]
    %v4829 = vld [vmem:[#allocation2 + $0xc0] sm:$0xff]
    %v4830 = vld [vmem:[#allocation2 + $0xc8] sm:$0xff]
    %v4831 = vld [vmem:[#allocation2 + $0xd0] sm:$0xff]
    %v4832 = vld [vmem:[#allocation2 + $0xd8] sm:$0xff]
    %v4833 = vld [vmem:[#allocation2 + $0xe0] sm:$0xff]
    %v4834 = vld [vmem:[#allocation2 + $0xe8] sm:$0xff]
    %v4835 = vadd.f32 %v4807, %v4669
    %v4836 = vadd.f32 %v4808, %v4674
    %v4837 = vadd.f32 %v4809, %v4679
    %v4838 = vadd.f32 %v4810, %v4684
    %v4839 = vadd.f32 %v4811, %v4689
    %v4840 = vadd.f32 %v4812, %v4694
    %v4841 = vadd.f32 %v4813, %v4699
    %v4842 = vadd.f32 %v4814, %v4704
    %v4843 = vadd.f32 %v4815, %v4709
    %v4844 = vadd.f32 %v4816, %v4714
    %v4845 = vadd.f32 %v4817, %v4719
    %v4846 = vadd.f32 %v4818, %v4724
    %v4847 = vadd.f32 %v4819, %v4729
    %v4848 = vadd.f32 %v4820, %v4734
    %v4849 = vadd.f32 %v4821, %v4739
    %v4850 = vadd.f32 %v4822, %v4744
    %v4851 = vadd.f32 %v4823, %v4749
    %v4852 = vadd.f32 %v4824, %v4754
    %v4853 = vadd.f32 %v4825, %v4759
    %v4854 = vadd.f32 %v4826, %v4764
    %v4855 = vadd.f32 %v4827, %v4769
    %v4856 = vadd.f32 %v4828, %v4774
    %v4857 = vadd.f32 %v4829, %v4779
    %v4858 = vadd.f32 %v4830, %v4784
    %v4859 = vadd.f32 %v4831, %v4789
    %v4860 = vadd.f32 %v4832, %v4794
    %v4861 = vadd.f32 %v4833, %v4799
    %v4862 = vadd.f32 %v4834, %v4804
    %4863 = vst.msk [vmem:[#allocation2 + $0x10] sm:$0xff] %vm806, %v4835
    %4864 = vst.msk [vmem:[#allocation2 + $0x18] sm:$0xff] %vm806, %v4836
    %4865 = vst.msk [vmem:[#allocation2 + $0x20] sm:$0xff] %vm806, %v4837
    %4866 = vst.msk [vmem:[#allocation2 + $0x28] sm:$0xff] %vm806, %v4838
    %4867 = vst.msk [vmem:[#allocation2 + $0x30] sm:$0xff] %vm806, %v4839
    %4868 = vst.msk [vmem:[#allocation2 + $0x38] sm:$0xff] %vm806, %v4840
    %4869 = vst.msk [vmem:[#allocation2 + $0x40] sm:$0xff] %vm806, %v4841
    %4870 = vst.msk [vmem:[#allocation2 + $0x48] sm:$0xff] %vm806, %v4842
    %4871 = vst.msk [vmem:[#allocation2 + $0x50] sm:$0xff] %vm806, %v4843
    %4872 = vst.msk [vmem:[#allocation2 + $0x58] sm:$0xff] %vm806, %v4844
    %4873 = vst.msk [vmem:[#allocation2 + $0x60] sm:$0xff] %vm806, %v4845
    %4874 = vst.msk [vmem:[#allocation2 + $0x68] sm:$0xff] %vm806, %v4846
    %4875 = vst.msk [vmem:[#allocation2 + $0x70] sm:$0xff] %vm806, %v4847
    %4876 = vst.msk [vmem:[#allocation2 + $0x78] sm:$0xff] %vm806, %v4848
    %4877 = vst.msk [vmem:[#allocation2 + $0x80] sm:$0xff] %vm806, %v4849
    %4878 = vst.msk [vmem:[#allocation2 + $0x88] sm:$0xff] %vm806, %v4850
    %4879 = vst.msk [vmem:[#allocation2 + $0x90] sm:$0xff] %vm806, %v4851
    %4880 = vst.msk [vmem:[#allocation2 + $0x98] sm:$0xff] %vm806, %v4852
    %4881 = vst.msk [vmem:[#allocation2 + $0xa0] sm:$0xff] %vm806, %v4853
    %4882 = vst.msk [vmem:[#allocation2 + $0xa8] sm:$0xff] %vm806, %v4854
    %4883 = vst.msk [vmem:[#allocation2 + $0xb0] sm:$0xff] %vm806, %v4855
    %4884 = vst.msk [vmem:[#allocation2 + $0xb8] sm:$0xff] %vm806, %v4856
    %4885 = vst.msk [vmem:[#allocation2 + $0xc0] sm:$0xff] %vm806, %v4857
    %4886 = vst.msk [vmem:[#allocation2 + $0xc8] sm:$0xff] %vm806, %v4858
    %4887 = vst.msk [vmem:[#allocation2 + $0xd0] sm:$0xff] %vm806, %v4859
    %4888 = vst.msk [vmem:[#allocation2 + $0xd8] sm:$0xff] %vm806, %v4860
    %4889 = vst.msk [vmem:[#allocation2 + $0xe0] sm:$0xff] %vm806, %v4861
    %4890 = vst.msk [vmem:[#allocation2 + $0xe8] sm:$0xff] %vm806, %v4862
    %v4891 = vld [vmem:[%s3 + $0x8] sm:$0x1]
    %v4892 = vld [vmem:[%s3 + $0x9] sm:$0x1]
    %v4893 = vld [vmem:[#allocation2] sm:$0xff]
    %v4894 = vld [vmem:[#allocation2 + $0x8] sm:$0xff]
    %v4895 = vld [vmem:[#allocation2 + $0x10] sm:$0xff]
    %v4896 = vld [vmem:[#allocation2 + $0x18] sm:$0xff]
    %v4897 = vld [vmem:[#allocation2 + $0x20] sm:$0xff]
    %v4898 = vld [vmem:[#allocation2 + $0x28] sm:$0xff]
    %v4899 = vld [vmem:[#allocation2 + $0x30] sm:$0xff]
    %v4900 = vld [vmem:[#allocation2 + $0x38] sm:$0xff]
    %v4901 = vld [vmem:[#allocation2 + $0x40] sm:$0xff]
    %v4902 = vld [vmem:[#allocation2 + $0x48] sm:$0xff]
    %v4903 = vld [vmem:[#allocation2 + $0x50] sm:$0xff]
    %v4904 = vld [vmem:[#allocation2 + $0x58] sm:$0xff]
    %v4905 = vld [vmem:[#allocation2 + $0x60] sm:$0xff]
    %v4906 = vld [vmem:[#allocation2 + $0x68] sm:$0xff]
    %v4907 = vld [vmem:[#allocation2 + $0x70] sm:$0xff]
    %v4908 = vld [vmem:[#allocation2 + $0x78] sm:$0xff]
    %v4909 = vld [vmem:[#allocation2 + $0x80] sm:$0xff]
    %v4910 = vld [vmem:[#allocation2 + $0x88] sm:$0xff]
    %v4911 = vld [vmem:[#allocation2 + $0x90] sm:$0xff]
    %v4912 = vld [vmem:[#allocation2 + $0x98] sm:$0xff]
    %v4913 = vld [vmem:[#allocation2 + $0xa0] sm:$0xff]
    %v4914 = vld [vmem:[#allocation2 + $0xa8] sm:$0xff]
    %v4915 = vld [vmem:[#allocation2 + $0xb0] sm:$0xff]
    %v4916 = vld [vmem:[#allocation2 + $0xb8] sm:$0xff]
    %v4917 = vld [vmem:[#allocation2 + $0xc0] sm:$0xff]
    %v4918 = vld [vmem:[#allocation2 + $0xc8] sm:$0xff]
    %v4919 = vld [vmem:[#allocation2 + $0xd0] sm:$0xff]
    %v4920 = vld [vmem:[#allocation2 + $0xd8] sm:$0xff]
    %v4921 = vld [vmem:[#allocation2 + $0xe0] sm:$0xff]
    %v4922 = vld [vmem:[#allocation2 + $0xe8] sm:$0xff]
    %v4923 = vld [vmem:[#allocation2 + $0xf0] sm:$0xff]
    %v4924 = vld [vmem:[#allocation2 + $0xf8] sm:$0xff]
    %4925 = vmatprep.subr.mxu0 0.0
    %4926 = vmatpush1.msra.mxu0 %v4893
    %4927 = vmatprep.subr.mxu0 0.0
    %4928 = vmatpush1.msra.mxu0 %v4894
    %4929 = vmatprep.subr.mxu0 0.0
    %4930 = vmatpush1.msra.mxu0 %v4895
    %4931 = vmatprep.subr.mxu0 0.0
    %4932 = vmatpush1.msra.mxu0 %v4896
    %4933 = vmatprep.subr.mxu0 0.0
    %4934 = vmatpush1.msra.mxu0 %v4897
    %4935 = vmatprep.subr.mxu0 0.0
    %4936 = vmatpush1.msra.mxu0 %v4898
    %4937 = vmatprep.subr.mxu0 0.0
    %4938 = vmatpush1.msra.mxu0 %v4899
    %4939 = vmatprep.subr.mxu0 0.0
    %4940 = vmatpush1.msra.mxu0 %v4900
    %4941 = vmatprep.subr.mxu0 0.0
    %4942 = vmatpush1.msra.mxu0 %v4901
    %4943 = vmatprep.subr.mxu0 0.0
    %4944 = vmatpush1.msra.mxu0 %v4902
    %4945 = vmatprep.subr.mxu0 0.0
    %4946 = vmatpush1.msra.mxu0 %v4903
    %4947 = vmatprep.subr.mxu0 0.0
    %4948 = vmatpush1.msra.mxu0 %v4904
    %4949 = vmatprep.subr.mxu0 0.0
    %4950 = vmatpush1.msra.mxu0 %v4905
    %4951 = vmatprep.subr.mxu0 0.0
    %4952 = vmatpush1.msra.mxu0 %v4906
    %4953 = vmatprep.subr.mxu0 0.0
    %4954 = vmatpush1.msra.mxu0 %v4907
    %4955 = vmatprep.subr.mxu0 0.0
    %4956 = vmatpush1.msra.mxu0 %v4908
    %4957 = vmatprep.subr.mxu0 0.0
    %4958 = vmatpush1.msra.mxu0 %v4909
    %4959 = vmatprep.subr.mxu0 0.0
    %4960 = vmatpush1.msra.mxu0 %v4910
    %4961 = vmatprep.subr.mxu0 0.0
    %4962 = vmatpush1.msra.mxu0 %v4911
    %4963 = vmatprep.subr.mxu0 0.0
    %4964 = vmatpush1.msra.mxu0 %v4912
    %4965 = vmatprep.subr.mxu0 0.0
    %4966 = vmatpush1.msra.mxu0 %v4913
    %4967 = vmatprep.subr.mxu0 0.0
    %4968 = vmatpush1.msra.mxu0 %v4914
    %4969 = vmatprep.subr.mxu0 0.0
    %4970 = vmatpush1.msra.mxu0 %v4915
    %4971 = vmatprep.subr.mxu0 0.0
    %4972 = vmatpush1.msra.mxu0 %v4916
    %4973 = vmatprep.subr.mxu0 0.0
    %4974 = vmatpush1.msra.mxu0 %v4917
    %4975 = vmatprep.subr.mxu0 0.0
    %4976 = vmatpush1.msra.mxu0 %v4918
    %4977 = vmatprep.subr.mxu0 0.0
    %4978 = vmatpush1.msra.mxu0 %v4919
    %4979 = vmatprep.subr.mxu0 0.0
    %4980 = vmatpush1.msra.mxu0 %v4920
    %4981 = vmatprep.subr.mxu0 0.0
    %4982 = vmatpush1.msra.mxu0 %v4921
    %4983 = vmatprep.subr.mxu0 0.0
    %4984 = vmatpush1.msra.mxu0 %v4922
    %4985 = vmatprep.subr.mxu0 0.0
    %4986 = vmatpush1.msra.mxu0 %v4923
    %4987 = vmatprep.subr.mxu0 0.0
    %4988 = vmatpush1.msra.mxu0 %v4924
    %4989 = vmatprep.mubr.f32.mxu0 %v51
    %4990 = vmatmul.mubr.f32.gmra.mrb[0].mxu0 %v50
    %v4991 = vpop.f32.mrb[0].mxu0
    %v4992 = vadd.f32 0.0, %v4991
    %v4993 = vpop.f32.mrb[0].mxu0
    %4994 = vdwg.mxu0
    %v4995 = vmul.f32 %v4893, %v4893
    %v4996 = vmul.f32 %v4894, %v4894
    %v4997 = vmul.f32 %v4895, %v4895
    %v4998 = vmul.f32 %v4896, %v4896
    %v4999 = vmul.f32 %v4897, %v4897
    %v5000 = vmul.f32 %v4898, %v4898
    %v5001 = vmul.f32 %v4899, %v4899
    %v5002 = vmul.f32 %v4900, %v4900
    %v5003 = vmul.f32 %v4901, %v4901
    %v5004 = vmul.f32 %v4902, %v4902
    %v5005 = vmul.f32 %v4903, %v4903
    %v5006 = vmul.f32 %v4904, %v4904
    %v5007 = vmul.f32 %v4905, %v4905
    %v5008 = vmul.f32 %v4906, %v4906
    %v5009 = vmul.f32 %v4907, %v4907
    %v5010 = vmul.f32 %v4908, %v4908
    %v5011 = vmul.f32 %v4909, %v4909
    %v5012 = vmul.f32 %v4910, %v4910
    %v5013 = vmul.f32 %v4911, %v4911
    %v5014 = vmul.f32 %v4912, %v4912
    %v5015 = vmul.f32 %v4913, %v4913
    %v5016 = vmul.f32 %v4914, %v4914
    %v5017 = vmul.f32 %v4915, %v4915
    %v5018 = vmul.f32 %v4916, %v4916
    %v5019 = vmul.f32 %v4917, %v4917
    %v5020 = vmul.f32 %v4918, %v4918
    %v5021 = vmul.f32 %v4919, %v4919
    %v5022 = vmul.f32 %v4920, %v4920
    %v5023 = vmul.f32 %v4921, %v4921
    %v5024 = vmul.f32 %v4922, %v4922
    %v5025 = vmul.f32 %v4923, %v4923
    %v5026 = vmul.f32 %v4924, %v4924
    %5027 = vmatprep.subr.mxu0 0.0
    %5028 = vmatpush1.msra.mxu0 %v4995
    %5029 = vmatprep.subr.mxu0 0.0
    %5030 = vmatpush1.msra.mxu0 %v4996
    %5031 = vmatprep.subr.mxu0 0.0
    %5032 = vmatpush1.msra.mxu0 %v4997
    %5033 = vmatprep.subr.mxu0 0.0
    %5034 = vmatpush1.msra.mxu0 %v4998
    %5035 = vmatprep.subr.mxu0 0.0
    %5036 = vmatpush1.msra.mxu0 %v4999
    %5037 = vmatprep.subr.mxu0 0.0
    %5038 = vmatpush1.msra.mxu0 %v5000
    %5039 = vmatprep.subr.mxu0 0.0
    %5040 = vmatpush1.msra.mxu0 %v5001
    %5041 = vmatprep.subr.mxu0 0.0
    %5042 = vmatpush1.msra.mxu0 %v5002
    %5043 = vmatprep.subr.mxu0 0.0
    %5044 = vmatpush1.msra.mxu0 %v5003
    %5045 = vmatprep.subr.mxu0 0.0
    %5046 = vmatpush1.msra.mxu0 %v5004
    %5047 = vmatprep.subr.mxu0 0.0
    %5048 = vmatpush1.msra.mxu0 %v5005
    %5049 = vmatprep.subr.mxu0 0.0
    %5050 = vmatpush1.msra.mxu0 %v5006
    %5051 = vmatprep.subr.mxu0 0.0
    %5052 = vmatpush1.msra.mxu0 %v5007
    %5053 = vmatprep.subr.mxu0 0.0
    %5054 = vmatpush1.msra.mxu0 %v5008
    %5055 = vmatprep.subr.mxu0 0.0
    %5056 = vmatpush1.msra.mxu0 %v5009
    %5057 = vmatprep.subr.mxu0 0.0
    %5058 = vmatpush1.msra.mxu0 %v5010
    %5059 = vmatprep.subr.mxu0 0.0
    %5060 = vmatpush1.msra.mxu0 %v5011
    %5061 = vmatprep.subr.mxu0 0.0
    %5062 = vmatpush1.msra.mxu0 %v5012
    %5063 = vmatprep.subr.mxu0 0.0
    %5064 = vmatpush1.msra.mxu0 %v5013
    %5065 = vmatprep.subr.mxu0 0.0
    %5066 = vmatpush1.msra.mxu0 %v5014
    %5067 = vmatprep.subr.mxu0 0.0
    %5068 = vmatpush1.msra.mxu0 %v5015
    %5069 = vmatprep.subr.mxu0 0.0
    %5070 = vmatpush1.msra.mxu0 %v5016
    %5071 = vmatprep.subr.mxu0 0.0
    %5072 = vmatpush1.msra.mxu0 %v5017
    %5073 = vmatprep.subr.mxu0 0.0
    %5074 = vmatpush1.msra.mxu0 %v5018
    %5075 = vmatprep.subr.mxu0 0.0
    %5076 = vmatpush1.msra.mxu0 %v5019
    %5077 = vmatprep.subr.mxu0 0.0
    %5078 = vmatpush1.msra.mxu0 %v5020
    %5079 = vmatprep.subr.mxu0 0.0
    %5080 = vmatpush1.msra.mxu0 %v5021
    %5081 = vmatprep.subr.mxu0 0.0
    %5082 = vmatpush1.msra.mxu0 %v5022
    %5083 = vmatprep.subr.mxu0 0.0
    %5084 = vmatpush1.msra.mxu0 %v5023
    %5085 = vmatprep.subr.mxu0 0.0
    %5086 = vmatpush1.msra.mxu0 %v5024
    %5087 = vmatprep.subr.mxu0 0.0
    %5088 = vmatpush1.msra.mxu0 %v5025
    %5089 = vmatprep.subr.mxu0 0.0
    %5090 = vmatpush1.msra.mxu0 %v5026
    %5091 = vmatprep.mubr.f32.mxu0 %v51
    %5092 = vmatmul.mubr.f32.gmra.mrb[0].mxu0 %v50
    %v5093 = vpop.f32.mrb[0].mxu0
    %v5094 = vadd.f32 0.0, %v5093
    %v5095 = vpop.f32.mrb[0].mxu0
    %5096 = vdwg.mxu0
    %v5097 = vmul.f32 %v4992, %v4992
    %v5098 = vsub.f32 %v5094, %v5097
    %v5099 = vadd.f32 %v5098, 0.001
    %v5100 = vrsqrt.pop %v5099
    %v5102 = vrot.slane %v4891, 4
    %v5104 = vmul.f32 %v5100, %v5102
    %v5105 = vmul.f32 %v4992, %v5104
    %v5107 = vrot.slane %v5105, 4
    %v5109 = vsub.f32 %v4892, %v5107
    %v5110 = vlaneseq
    %v5111 = vshrl.u32 %v5110, 7
    %v5112 = vsub.s32 4, %v5111
    %v5113 = vrot.slane %v5104, %v5112
    %v5114 = vmul.f32 %v4893, %v5113
    %v5115 = vmul.f32 %v4894, %v5113
    %v5116 = vmul.f32 %v4895, %v5113
    %v5117 = vmul.f32 %v4896, %v5113
    %v5118 = vmul.f32 %v4897, %v5113
    %v5119 = vmul.f32 %v4898, %v5113
    %v5120 = vmul.f32 %v4899, %v5113
    %v5121 = vmul.f32 %v4900, %v5113
    %v5122 = vmul.f32 %v4901, %v5113
    %v5123 = vmul.f32 %v4902, %v5113
    %v5124 = vmul.f32 %v4903, %v5113
    %v5125 = vmul.f32 %v4904, %v5113
    %v5126 = vmul.f32 %v4905, %v5113
    %v5127 = vmul.f32 %v4906, %v5113
    %v5128 = vmul.f32 %v4907, %v5113
    %v5129 = vmul.f32 %v4908, %v5113
    %v5130 = vmul.f32 %v4909, %v5113
    %v5131 = vmul.f32 %v4910, %v5113
    %v5132 = vmul.f32 %v4911, %v5113
    %v5133 = vmul.f32 %v4912, %v5113
    %v5134 = vmul.f32 %v4913, %v5113
    %v5135 = vmul.f32 %v4914, %v5113
    %v5136 = vmul.f32 %v4915, %v5113
    %v5137 = vmul.f32 %v4916, %v5113
    %v5138 = vmul.f32 %v4917, %v5113
    %v5139 = vmul.f32 %v4918, %v5113
    %v5140 = vmul.f32 %v4919, %v5113
    %v5141 = vmul.f32 %v4920, %v5113
    %v5142 = vmul.f32 %v4921, %v5113
    %v5143 = vmul.f32 %v4922, %v5113
    %v5144 = vmul.f32 %v4923, %v5113
    %v5145 = vmul.f32 %v4924, %v5113
    %v5146 = vlaneseq
    %v5147 = vshrl.u32 %v5146, 7
    %v5148 = vsub.s32 0, %v5147
    %v5149 = vrot.slane %v5109, %v5148
    %v5150 = vadd.f32 %v5114, %v5149
    %v5151 = vadd.f32 %v5115, %v5149
    %v5152 = vadd.f32 %v5116, %v5149
    %v5153 = vadd.f32 %v5117, %v5149
    %v5154 = vadd.f32 %v5118, %v5149
    %v5155 = vadd.f32 %v5119, %v5149
    %v5156 = vadd.f32 %v5120, %v5149
    %v5157 = vadd.f32 %v5121, %v5149
    %v5158 = vadd.f32 %v5122, %v5149
    %v5159 = vadd.f32 %v5123, %v5149
    %v5160 = vadd.f32 %v5124, %v5149
    %v5161 = vadd.f32 %v5125, %v5149
    %v5162 = vadd.f32 %v5126, %v5149
    %v5163 = vadd.f32 %v5127, %v5149
    %v5164 = vadd.f32 %v5128, %v5149
    %v5165 = vadd.f32 %v5129, %v5149
    %v5166 = vadd.f32 %v5130, %v5149
    %v5167 = vadd.f32 %v5131, %v5149
    %v5168 = vadd.f32 %v5132, %v5149
    %v5169 = vadd.f32 %v5133, %v5149
    %v5170 = vadd.f32 %v5134, %v5149
    %v5171 = vadd.f32 %v5135, %v5149
    %v5172 = vadd.f32 %v5136, %v5149
    %v5173 = vadd.f32 %v5137, %v5149
    %v5174 = vadd.f32 %v5138, %v5149
    %v5175 = vadd.f32 %v5139, %v5149
    %v5176 = vadd.f32 %v5140, %v5149
    %v5177 = vadd.f32 %v5141, %v5149
    %v5178 = vadd.f32 %v5142, %v5149
    %v5179 = vadd.f32 %v5143, %v5149
    %v5180 = vadd.f32 %v5144, %v5149
    %v5181 = vadd.f32 %v5145, %v5149
    %v5182 = vmax.f32 %v5150, 0.0
    %v5183 = vmax.f32 %v5151, 0.0
    %v5184 = vmax.f32 %v5152, 0.0
    %v5185 = vmax.f32 %v5153, 0.0
    %v5186 = vmax.f32 %v5154, 0.0
    %v5187 = vmax.f32 %v5155, 0.0
    %v5188 = vmax.f32 %v5156, 0.0
    %v5189 = vmax.f32 %v5157, 0.0
    %v5190 = vmax.f32 %v5158, 0.0
    %v5191 = vmax.f32 %v5159, 0.0
    %v5192 = vmax.f32 %v5160, 0.0
    %v5193 = vmax.f32 %v5161, 0.0
    %v5194 = vmax.f32 %v5162, 0.0
    %v5195 = vmax.f32 %v5163, 0.0
    %v5196 = vmax.f32 %v5164, 0.0
    %v5197 = vmax.f32 %v5165, 0.0
    %v5198 = vmax.f32 %v5166, 0.0
    %v5199 = vmax.f32 %v5167, 0.0
    %v5200 = vmax.f32 %v5168, 0.0
    %v5201 = vmax.f32 %v5169, 0.0
    %v5202 = vmax.f32 %v5170, 0.0
    %v5203 = vmax.f32 %v5171, 0.0
    %v5204 = vmax.f32 %v5172, 0.0
    %v5205 = vmax.f32 %v5173, 0.0
    %v5206 = vmax.f32 %v5174, 0.0
    %v5207 = vmax.f32 %v5175, 0.0
    %v5208 = vmax.f32 %v5176, 0.0
    %v5209 = vmax.f32 %v5177, 0.0
    %v5210 = vmax.f32 %v5178, 0.0
    %v5211 = vmax.f32 %v5179, 0.0
    %v5212 = vmax.f32 %v5180, 0.0
    %v5213 = vmax.f32 %v5181, 0.0
    %v5214 = vmul.f32 %v5182, %v1164
    %v5215 = vmul.f32 %v5183, %v1168
    %v5216 = vmul.f32 %v5184, %v1172
    %v5217 = vmul.f32 %v5185, %v1176
    %v5218 = vmul.f32 %v5186, %v1180
    %v5219 = vmul.f32 %v5187, %v1184
    %v5220 = vmul.f32 %v5188, %v1188
    %v5221 = vmul.f32 %v5189, %v1192
    %v5222 = vmul.f32 %v5190, %v1196
    %v5223 = vmul.f32 %v5191, %v1200
    %v5224 = vmul.f32 %v5192, %v1204
    %v5225 = vmul.f32 %v5193, %v1208
    %v5226 = vmul.f32 %v5194, %v1212
    %v5227 = vmul.f32 %v5195, %v1216
    %v5228 = vmul.f32 %v5196, %v1220
    %v5229 = vmul.f32 %v5197, %v1224
    %v5230 = vmul.f32 %v5198, %v1228
    %v5231 = vmul.f32 %v5199, %v1232
    %v5232 = vmul.f32 %v5200, %v1236
    %v5233 = vmul.f32 %v5201, %v1240
    %v5234 = vmul.f32 %v5202, %v1244
    %v5235 = vmul.f32 %v5203, %v1248
    %v5236 = vmul.f32 %v5204, %v1252
    %v5237 = vmul.f32 %v5205, %v1256
    %v5238 = vmul.f32 %v5206, %v1260
    %v5239 = vmul.f32 %v5207, %v1264
    %v5240 = vmul.f32 %v5208, %v1268
    %v5241 = vmul.f32 %v5209, %v1272
    %v5242 = vmul.f32 %v5210, %v1276
    %v5243 = vmul.f32 %v5211, %v1280
    %v5244 = vmul.f32 %v5212, %v1284
    %v5245 = vmul.f32 %v5213, %v1288
    %v5246 = vld [vmem:[%s2 + $0x110] sm:$0xff]
    %v5247 = vld [vmem:[%s2 + $0x118] sm:$0xff]
    %v5248 = vld [vmem:[%s2 + $0x120] sm:$0xff]
    %v5249 = vld [vmem:[%s2 + $0x128] sm:$0xff]
    %v5250 = vld [vmem:[%s2 + $0x130] sm:$0xff]
    %v5251 = vld [vmem:[%s2 + $0x138] sm:$0xff]
    %v5252 = vld [vmem:[%s2 + $0x140] sm:$0xff]
    %v5253 = vld [vmem:[%s2 + $0x148] sm:$0xff]
    %v5255 = vsel %vm806, %v5214, 0
    %v5258 = vsel %vm806, %v5215, 0
    %v5261 = vsel %vm806, %v5216, 0
    %v5264 = vsel %vm806, %v5217, 0
    %v5267 = vsel %vm806, %v5218, 0
    %v5270 = vsel %vm806, %v5219, 0
    %v5273 = vsel %vm806, %v5220, 0
    %v5276 = vsel %vm806, %v5221, 0
    %v5279 = vsel %vm806, %v5222, 0
    %v5282 = vsel %vm806, %v5223, 0
    %v5285 = vsel %vm806, %v5224, 0
    %v5288 = vsel %vm806, %v5225, 0
    %v5291 = vsel %vm806, %v5226, 0
    %v5294 = vsel %vm806, %v5227, 0
    %v5297 = vsel %vm806, %v5228, 0
    %v5300 = vsel %vm806, %v5229, 0
    %v5303 = vsel %vm806, %v5230, 0
    %v5306 = vsel %vm806, %v5231, 0
    %v5309 = vsel %vm806, %v5232, 0
    %v5312 = vsel %vm806, %v5233, 0
    %v5315 = vsel %vm806, %v5234, 0
    %v5318 = vsel %vm806, %v5235, 0
    %v5321 = vsel %vm806, %v5236, 0
    %v5324 = vsel %vm806, %v5237, 0
    %v5327 = vsel %vm806, %v5238, 0
    %v5330 = vsel %vm806, %v5239, 0
    %v5333 = vsel %vm806, %v5240, 0
    %v5336 = vsel %vm806, %v5241, 0
    %v5339 = vsel %vm806, %v5242, 0
    %v5342 = vsel %vm806, %v5243, 0
    %v5345 = vsel %vm806, %v5244, 0
    %v5348 = vsel %vm806, %v5245, 0
    %5350 = vmatprep.subr.mxu0 0.0
    %5351 = vmatpush1.msra.mxu0 %v5246
    %5352 = vmatprep.subr.mxu0 0.0
    %5353 = vmatpush1.msra.mxu0 %v5247
    %5354 = vmatprep.subr.mxu0 0.0
    %5355 = vmatpush1.msra.mxu0 %v5248
    %5356 = vmatprep.subr.mxu0 0.0
    %5357 = vmatpush1.msra.mxu0 %v5249
    %5358 = vmatprep.subr.mxu0 0.0
    %5359 = vmatpush1.msra.mxu0 %v5250
    %5360 = vmatprep.subr.mxu0 0.0
    %5361 = vmatpush1.msra.mxu0 %v5251
    %5362 = vmatprep.subr.mxu0 0.0
    %5363 = vmatpush1.msra.mxu0 %v5252
    %5364 = vmatprep.subr.mxu0 0.0
    %5365 = vmatpush1.msra.mxu0 %v5253
    %5366 = vmatprep.subr.mxu0 0.0
    %5367 = vmatpush1.msra.mxu0 0.0
    %5368 = vmatprep.subr.mxu0 0.0
    %5369 = vmatpush1.msra.mxu0 0.0
    %5370 = vmatprep.subr.mxu0 0.0
    %5371 = vmatpush1.msra.mxu0 0.0
    %5372 = vmatprep.subr.mxu0 0.0
    %5373 = vmatpush1.msra.mxu0 0.0
    %5374 = vmatprep.subr.mxu0 0.0
    %5375 = vmatpush1.msra.mxu0 0.0
    %5376 = vmatprep.subr.mxu0 0.0
    %5377 = vmatpush1.msra.mxu0 0.0
    %5378 = vmatprep.subr.mxu0 0.0
    %5379 = vmatpush1.msra.mxu0 0.0
    %5380 = vmatprep.subr.mxu0 0.0
    %5381 = vmatpush1.msra.mxu0 0.0
    %5382 = vmatprep.subr.mxu0 0.0
    %5383 = vmatpush1.msra.mxu0 0.0
    %5384 = vmatprep.subr.mxu0 0.0
    %5385 = vmatpush1.msra.mxu0 0.0
    %5386 = vmatprep.subr.mxu0 0.0
    %5387 = vmatpush1.msra.mxu0 0.0
    %5388 = vmatprep.subr.mxu0 0.0
    %5389 = vmatpush1.msra.mxu0 0.0
    %5390 = vmatprep.subr.mxu0 0.0
    %5391 = vmatpush1.msra.mxu0 0.0
    %5392 = vmatprep.subr.mxu0 0.0
    %5393 = vmatpush1.msra.mxu0 0.0
    %5394 = vmatprep.subr.mxu0 0.0
    %5395 = vmatpush1.msra.mxu0 0.0
    %5396 = vmatprep.subr.mxu0 0.0
    %5397 = vmatpush1.msra.mxu0 0.0
    %5398 = vmatprep.subr.mxu0 0.0
    %5399 = vmatpush1.msra.mxu0 0.0
    %5400 = vmatprep.subr.mxu0 0.0
    %5401 = vmatpush1.msra.mxu0 0.0
    %5402 = vmatprep.subr.mxu0 0.0
    %5403 = vmatpush1.msra.mxu0 0.0
    %5404 = vmatprep.subr.mxu0 0.0
    %5405 = vmatpush1.msra.mxu0 0.0
    %5406 = vmatprep.subr.mxu0 0.0
    %5407 = vmatpush1.msra.mxu0 0.0
    %5408 = vmatprep.subr.mxu0 0.0
    %5409 = vmatpush1.msra.mxu0 0.0
    %5410 = vmatprep.subr.mxu0 0.0
    %5411 = vmatpush1.msra.mxu0 0.0
    %5412 = vmatprep.subr.mxu0 0.0
    %5413 = vmatpush1.msra.mxu0 0.0
    %5414 = vmatprep.mubr.f32.mxu0 0.0
    %5415 = vmatmul.mubr.f32.gmra.mrb[0].mxu0 %v5255
    %v5416 = vpop.f32.mrb[0].mxu0
    %v5417 = vadd.f32 0.0, %v5416
    %v5418 = vpop.f32.mrb[0].mxu0
    %5419 = vmatprep.mubr.f32.mxu0 0.0
    %5420 = vmatmul.mubr.f32.gmra.mrb[0].mxu0 %v5258
    %v5421 = vpop.f32.mrb[0].mxu0
    %v5422 = vadd.f32 0.0, %v5421
    %v5423 = vpop.f32.mrb[0].mxu0
    %5424 = vmatprep.mubr.f32.mxu0 0.0
    %5425 = vmatmul.mubr.f32.gmra.mrb[0].mxu0 %v5261
    %v5426 = vpop.f32.mrb[0].mxu0
    %v5427 = vadd.f32 0.0, %v5426
    %v5428 = vpop.f32.mrb[0].mxu0
    %5429 = vmatprep.mubr.f32.mxu0 0.0
    %5430 = vmatmul.mubr.f32.gmra.mrb[0].mxu0 %v5264
    %v5431 = vpop.f32.mrb[0].mxu0
    %v5432 = vadd.f32 0.0, %v5431
    %v5433 = vpop.f32.mrb[0].mxu0
    %5434 = vmatprep.mubr.f32.mxu0 0.0
    %5435 = vmatmul.mubr.f32.gmra.mrb[0].mxu0 %v5267
    %v5436 = vpop.f32.mrb[0].mxu0
    %v5437 = vadd.f32 0.0, %v5436
    %v5438 = vpop.f32.mrb[0].mxu0
    %5439 = vmatprep.mubr.f32.mxu0 0.0
    %5440 = vmatmul.mubr.f32.gmra.mrb[0].mxu0 %v5270
    %v5441 = vpop.f32.mrb[0].mxu0
    %v5442 = vadd.f32 0.0, %v5441
    %v5443 = vpop.f32.mrb[0].mxu0
    %5444 = vmatprep.mubr.f32.mxu0 0.0
    %5445 = vmatmul.mubr.f32.gmra.mrb[0].mxu0 %v5273
    %v5446 = vpop.f32.mrb[0].mxu0
    %v5447 = vadd.f32 0.0, %v5446
    %v5448 = vpop.f32.mrb[0].mxu0
    %5449 = vmatprep.mubr.f32.mxu0 0.0
    %5450 = vmatmul.mubr.f32.gmra.mrb[0].mxu0 %v5276
    %v5451 = vpop.f32.mrb[0].mxu0
    %v5452 = vadd.f32 0.0, %v5451
    %v5453 = vpop.f32.mrb[0].mxu0
    %5454 = vmatprep.mubr.f32.mxu0 0.0
    %5455 = vmatmul.mubr.f32.gmra.mrb[0].mxu0 %v5279
    %v5456 = vpop.f32.mrb[0].mxu0
    %v5457 = vadd.f32 0.0, %v5456
    %v5458 = vpop.f32.mrb[0].mxu0
    %5459 = vmatprep.mubr.f32.mxu0 0.0
    %5460 = vmatmul.mubr.f32.gmra.mrb[0].mxu0 %v5282
    %v5461 = vpop.f32.mrb[0].mxu0
    %v5462 = vadd.f32 0.0, %v5461
    %v5463 = vpop.f32.mrb[0].mxu0
    %5464 = vmatprep.mubr.f32.mxu0 0.0
    %5465 = vmatmul.mubr.f32.gmra.mrb[0].mxu0 %v5285
    %v5466 = vpop.f32.mrb[0].mxu0
    %v5467 = vadd.f32 0.0, %v5466
    %v5468 = vpop.f32.mrb[0].mxu0
    %5469 = vmatprep.mubr.f32.mxu0 0.0
    %5470 = vmatmul.mubr.f32.gmra.mrb[0].mxu0 %v5288
    %v5471 = vpop.f32.mrb[0].mxu0
    %v5472 = vadd.f32 0.0, %v5471
    %v5473 = vpop.f32.mrb[0].mxu0
    %5474 = vmatprep.mubr.f32.mxu0 0.0
    %5475 = vmatmul.mubr.f32.gmra.mrb[0].mxu0 %v5291
    %v5476 = vpop.f32.mrb[0].mxu0
    %v5477 = vadd.f32 0.0, %v5476
    %v5478 = vpop.f32.mrb[0].mxu0
    %5479 = vmatprep.mubr.f32.mxu0 0.0
    %5480 = vmatmul.mubr.f32.gmra.mrb[0].mxu0 %v5294
    %v5481 = vpop.f32.mrb[0].mxu0
    %v5482 = vadd.f32 0.0, %v5481
    %v5483 = vpop.f32.mrb[0].mxu0
    %5484 = vmatprep.mubr.f32.mxu0 0.0
    %5485 = vmatmul.mubr.f32.gmra.mrb[0].mxu0 %v5297
    %v5486 = vpop.f32.mrb[0].mxu0
    %v5487 = vadd.f32 0.0, %v5486
    %v5488 = vpop.f32.mrb[0].mxu0
    %5489 = vmatprep.mubr.f32.mxu0 0.0
    %5490 = vmatmul.mubr.f32.gmra.mrb[0].mxu0 %v5300
    %v5491 = vpop.f32.mrb[0].mxu0
    %v5492 = vadd.f32 0.0, %v5491
    %v5493 = vpop.f32.mrb[0].mxu0
    %5494 = vmatprep.mubr.f32.mxu0 0.0
    %5495 = vmatmul.mubr.f32.gmra.mrb[0].mxu0 %v5303
    %v5496 = vpop.f32.mrb[0].mxu0
    %v5497 = vadd.f32 0.0, %v5496
    %v5498 = vpop.f32.mrb[0].mxu0
    %5499 = vmatprep.mubr.f32.mxu0 0.0
    %5500 = vmatmul.mubr.f32.gmra.mrb[0].mxu0 %v5306
    %v5501 = vpop.f32.mrb[0].mxu0
    %v5502 = vadd.f32 0.0, %v5501
    %v5503 = vpop.f32.mrb[0].mxu0
    %5504 = vmatprep.mubr.f32.mxu0 0.0
    %5505 = vmatmul.mubr.f32.gmra.mrb[0].mxu0 %v5309
    %v5506 = vpop.f32.mrb[0].mxu0
    %v5507 = vadd.f32 0.0, %v5506
    %v5508 = vpop.f32.mrb[0].mxu0
    %5509 = vmatprep.mubr.f32.mxu0 0.0
    %5510 = vmatmul.mubr.f32.gmra.mrb[0].mxu0 %v5312
    %v5511 = vpop.f32.mrb[0].mxu0
    %v5512 = vadd.f32 0.0, %v5511
    %v5513 = vpop.f32.mrb[0].mxu0
    %5514 = vmatprep.mubr.f32.mxu0 0.0
    %5515 = vmatmul.mubr.f32.gmra.mrb[0].mxu0 %v5315
    %v5516 = vpop.f32.mrb[0].mxu0
    %v5517 = vadd.f32 0.0, %v5516
    %v5518 = vpop.f32.mrb[0].mxu0
    %5519 = vmatprep.mubr.f32.mxu0 0.0
    %5520 = vmatmul.mubr.f32.gmra.mrb[0].mxu0 %v5318
    %v5521 = vpop.f32.mrb[0].mxu0
    %v5522 = vadd.f32 0.0, %v5521
    %v5523 = vpop.f32.mrb[0].mxu0
    %5524 = vmatprep.mubr.f32.mxu0 0.0
    %5525 = vmatmul.mubr.f32.gmra.mrb[0].mxu0 %v5321
    %v5526 = vpop.f32.mrb[0].mxu0
    %v5527 = vadd.f32 0.0, %v5526
    %v5528 = vpop.f32.mrb[0].mxu0
    %5529 = vmatprep.mubr.f32.mxu0 0.0
    %5530 = vmatmul.mubr.f32.gmra.mrb[0].mxu0 %v5324
    %v5531 = vpop.f32.mrb[0].mxu0
    %v5532 = vadd.f32 0.0, %v5531
    %v5533 = vpop.f32.mrb[0].mxu0
    %5534 = vmatprep.mubr.f32.mxu0 0.0
    %5535 = vmatmul.mubr.f32.gmra.mrb[0].mxu0 %v5327
    %v5536 = vpop.f32.mrb[0].mxu0
    %v5537 = vadd.f32 0.0, %v5536
    %v5538 = vpop.f32.mrb[0].mxu0
    %5539 = vmatprep.mubr.f32.mxu0 0.0
    %5540 = vmatmul.mubr.f32.gmra.mrb[0].mxu0 %v5330
    %v5541 = vpop.f32.mrb[0].mxu0
    %v5542 = vadd.f32 0.0, %v5541
    %v5543 = vpop.f32.mrb[0].mxu0
    %5544 = vmatprep.mubr.f32.mxu0 0.0
    %5545 = vmatmul.mubr.f32.gmra.mrb[0].mxu0 %v5333
    %v5546 = vpop.f32.mrb[0].mxu0
    %v5547 = vadd.f32 0.0, %v5546
    %v5548 = vpop.f32.mrb[0].mxu0
    %5549 = vmatprep.mubr.f32.mxu0 0.0
    %5550 = vmatmul.mubr.f32.gmra.mrb[0].mxu0 %v5336
    %v5551 = vpop.f32.mrb[0].mxu0
    %v5552 = vadd.f32 0.0, %v5551
    %v5553 = vpop.f32.mrb[0].mxu0
    %5554 = vmatprep.mubr.f32.mxu0 0.0
    %5555 = vmatmul.mubr.f32.gmra.mrb[0].mxu0 %v5339
    %v5556 = vpop.f32.mrb[0].mxu0
    %v5557 = vadd.f32 0.0, %v5556
    %v5558 = vpop.f32.mrb[0].mxu0
    %5559 = vmatprep.mubr.f32.mxu0 0.0
    %5560 = vmatmul.mubr.f32.gmra.mrb[0].mxu0 %v5342
    %v5561 = vpop.f32.mrb[0].mxu0
    %v5562 = vadd.f32 0.0, %v5561
    %v5563 = vpop.f32.mrb[0].mxu0
    %5564 = vmatprep.mubr.f32.mxu0 0.0
    %5565 = vmatmul.mubr.f32.gmra.mrb[0].mxu0 %v5345
    %v5566 = vpop.f32.mrb[0].mxu0
    %v5567 = vadd.f32 0.0, %v5566
    %v5568 = vpop.f32.mrb[0].mxu0
    %5569 = vmatprep.mubr.f32.mxu0 0.0
    %5570 = vmatmul.mubr.f32.gmra.mrb[0].mxu0 %v5348
    %v5571 = vpop.f32.mrb[0].mxu0
    %v5572 = vadd.f32 0.0, %v5571
    %v5573 = vpop.f32.mrb[0].mxu0
    %5574 = vdwg.mxu0
    %5575 = vst [vmem:[#allocation3] sm:$0xff] %v5417
    %5576 = vst [vmem:[#allocation3 + $0x8] sm:$0xff] %v5422
    %5577 = vst [vmem:[#allocation3 + $0x10] sm:$0xff] %v5427
    %5578 = vst [vmem:[#allocation3 + $0x18] sm:$0xff] %v5432
    %5579 = vst [vmem:[#allocation3 + $0x20] sm:$0xff] %v5437
    %5580 = vst [vmem:[#allocation3 + $0x28] sm:$0xff] %v5442
    %5581 = vst [vmem:[#allocation3 + $0x30] sm:$0xff] %v5447
    %5582 = vst [vmem:[#allocation3 + $0x38] sm:$0xff] %v5452
    %5583 = vst [vmem:[#allocation3 + $0x40] sm:$0xff] %v5457
    %5584 = vst [vmem:[#allocation3 + $0x48] sm:$0xff] %v5462
    %5585 = vst [vmem:[#allocation3 + $0x50] sm:$0xff] %v5467
    %5586 = vst [vmem:[#allocation3 + $0x58] sm:$0xff] %v5472
    %5587 = vst [vmem:[#allocation3 + $0x60] sm:$0xff] %v5477
    %5588 = vst [vmem:[#allocation3 + $0x68] sm:$0xff] %v5482
    %5589 = vst [vmem:[#allocation3 + $0x70] sm:$0xff] %v5487
    %5590 = vst [vmem:[#allocation3 + $0x78] sm:$0xff] %v5492
    %5591 = vst [vmem:[#allocation3 + $0x80] sm:$0xff] %v5497
    %5592 = vst [vmem:[#allocation3 + $0x88] sm:$0xff] %v5502
    %5593 = vst [vmem:[#allocation3 + $0x90] sm:$0xff] %v5507
    %5594 = vst [vmem:[#allocation3 + $0x98] sm:$0xff] %v5512
    %5595 = vst [vmem:[#allocation3 + $0xa0] sm:$0xff] %v5517
    %5596 = vst [vmem:[#allocation3 + $0xa8] sm:$0xff] %v5522
    %5597 = vst [vmem:[#allocation3 + $0xb0] sm:$0xff] %v5527
    %5598 = vst [vmem:[#allocation3 + $0xb8] sm:$0xff] %v5532
    %5599 = vst [vmem:[#allocation3 + $0xc0] sm:$0xff] %v5537
    %5600 = vst [vmem:[#allocation3 + $0xc8] sm:$0xff] %v5542
    %5601 = vst [vmem:[#allocation3 + $0xd0] sm:$0xff] %v5547
    %5602 = vst [vmem:[#allocation3 + $0xd8] sm:$0xff] %v5552
    %5603 = vst [vmem:[#allocation3 + $0xe0] sm:$0xff] %v5557
    %5604 = vst [vmem:[#allocation3 + $0xe8] sm:$0xff] %v5562
    %5605 = vst [vmem:[#allocation3 + $0xf0] sm:$0xff] %v5567
    %5606 = vst [vmem:[#allocation3 + $0xf8] sm:$0xff] %v5572
    %v5607 = vld [vmem:[#allocation3 + $0x4] sm:$0xff]
    %v5608 = vld [vmem:[#allocation3 + $0xc] sm:$0xff]
    %v5609 = vld [vmem:[#allocation3 + $0x14] sm:$0xff]
    %v5610 = vld [vmem:[#allocation3 + $0x1c] sm:$0xff]
    %v5611 = vld [vmem:[#allocation3 + $0x24] sm:$0xff]
    %v5612 = vld [vmem:[#allocation3 + $0x2c] sm:$0xff]
    %v5613 = vld [vmem:[#allocation3 + $0x34] sm:$0xff]
    %v5614 = vld [vmem:[#allocation3 + $0x3c] sm:$0xff]
    %v5615 = vld [vmem:[#allocation3 + $0x44] sm:$0xff]
    %v5616 = vld [vmem:[#allocation3 + $0x4c] sm:$0xff]
    %v5617 = vld [vmem:[#allocation3 + $0x54] sm:$0xff]
    %v5618 = vld [vmem:[#allocation3 + $0x5c] sm:$0xff]
    %v5619 = vld [vmem:[#allocation3 + $0x64] sm:$0xff]
    %v5620 = vld [vmem:[#allocation3 + $0x6c] sm:$0xff]
    %v5621 = vld [vmem:[#allocation3 + $0x74] sm:$0xff]
    %v5622 = vld [vmem:[#allocation3 + $0x7c] sm:$0xff]
    %v5623 = vld [vmem:[#allocation3 + $0x84] sm:$0xff]
    %v5624 = vld [vmem:[#allocation3 + $0x8c] sm:$0xff]
    %v5625 = vld [vmem:[#allocation3 + $0x94] sm:$0xff]
    %v5626 = vld [vmem:[#allocation3 + $0x9c] sm:$0xff]
    %v5627 = vld [vmem:[#allocation3 + $0xa4] sm:$0xff]
    %v5628 = vld [vmem:[#allocation3 + $0xac] sm:$0xff]
    %v5629 = vld [vmem:[#allocation3 + $0xb4] sm:$0xff]
    %v5630 = vld [vmem:[#allocation3 + $0xbc] sm:$0xff]
    %v5631 = vld [vmem:[#allocation3 + $0xc4] sm:$0xff]
    %v5632 = vld [vmem:[#allocation3 + $0xcc] sm:$0xff]
    %v5633 = vld [vmem:[#allocation3 + $0xd4] sm:$0xff]
    %v5634 = vld [vmem:[#allocation3 + $0xdc] sm:$0xff]
    %v5635 = vld [vmem:[%s3 + $0x10] sm:$0x1]
    %v5636 = vlaneseq
    %v5637 = vshrl.u32 %v5636, 7
    %v5638 = vsub.s32 0, %v5637
    %v5639 = vrot.slane %v5635, %v5638
    %v5640 = vmul.f32 %v5607, %v5639
    %v5641 = vmul.f32 %v5608, %v5639
    %v5642 = vmul.f32 %v5609, %v5639
    %v5643 = vmul.f32 %v5610, %v5639
    %v5644 = vmul.f32 %v5611, %v5639
    %v5645 = vmul.f32 %v5612, %v5639
    %v5646 = vmul.f32 %v5613, %v5639
    %v5647 = vmul.f32 %v5614, %v5639
    %v5648 = vmul.f32 %v5615, %v5639
    %v5649 = vmul.f32 %v5616, %v5639
    %v5650 = vmul.f32 %v5617, %v5639
    %v5651 = vmul.f32 %v5618, %v5639
    %v5652 = vmul.f32 %v5619, %v5639
    %v5653 = vmul.f32 %v5620, %v5639
    %v5654 = vmul.f32 %v5621, %v5639
    %v5655 = vmul.f32 %v5622, %v5639
    %v5656 = vmul.f32 %v5623, %v5639
    %v5657 = vmul.f32 %v5624, %v5639
    %v5658 = vmul.f32 %v5625, %v5639
    %v5659 = vmul.f32 %v5626, %v5639
    %v5660 = vmul.f32 %v5627, %v5639
    %v5661 = vmul.f32 %v5628, %v5639
    %v5662 = vmul.f32 %v5629, %v5639
    %v5663 = vmul.f32 %v5630, %v5639
    %v5664 = vmul.f32 %v5631, %v5639
    %v5665 = vmul.f32 %v5632, %v5639
    %v5666 = vmul.f32 %v5633, %v5639
    %v5667 = vmul.f32 %v5634, %v5639
    %v5668 = vld [vmem:[#allocation3 + $0x5] sm:$0xff]
    %v5669 = vld [vmem:[#allocation3 + $0xd] sm:$0xff]
    %v5670 = vld [vmem:[#allocation3 + $0x15] sm:$0xff]
    %v5671 = vld [vmem:[#allocation3 + $0x1d] sm:$0xff]
    %v5672 = vld [vmem:[#allocation3 + $0x25] sm:$0xff]
    %v5673 = vld [vmem:[#allocation3 + $0x2d] sm:$0xff]
    %v5674 = vld [vmem:[#allocation3 + $0x35] sm:$0xff]
    %v5675 = vld [vmem:[#allocation3 + $0x3d] sm:$0xff]
    %v5676 = vld [vmem:[#allocation3 + $0x45] sm:$0xff]
    %v5677 = vld [vmem:[#allocation3 + $0x4d] sm:$0xff]
    %v5678 = vld [vmem:[#allocation3 + $0x55] sm:$0xff]
    %v5679 = vld [vmem:[#allocation3 + $0x5d] sm:$0xff]
    %v5680 = vld [vmem:[#allocation3 + $0x65] sm:$0xff]
    %v5681 = vld [vmem:[#allocation3 + $0x6d] sm:$0xff]
    %v5682 = vld [vmem:[#allocation3 + $0x75] sm:$0xff]
    %v5683 = vld [vmem:[#allocation3 + $0x7d] sm:$0xff]
    %v5684 = vld [vmem:[#allocation3 + $0x85] sm:$0xff]
    %v5685 = vld [vmem:[#allocation3 + $0x8d] sm:$0xff]
    %v5686 = vld [vmem:[#allocation3 + $0x95] sm:$0xff]
    %v5687 = vld [vmem:[#allocation3 + $0x9d] sm:$0xff]
    %v5688 = vld [vmem:[#allocation3 + $0xa5] sm:$0xff]
    %v5689 = vld [vmem:[#allocation3 + $0xad] sm:$0xff]
    %v5690 = vld [vmem:[#allocation3 + $0xb5] sm:$0xff]
    %v5691 = vld [vmem:[#allocation3 + $0xbd] sm:$0xff]
    %v5692 = vld [vmem:[#allocation3 + $0xc5] sm:$0xff]
    %v5693 = vld [vmem:[#allocation3 + $0xcd] sm:$0xff]
    %v5694 = vld [vmem:[#allocation3 + $0xd5] sm:$0xff]
    %v5695 = vld [vmem:[#allocation3 + $0xdd] sm:$0xff]
    %v5696 = vld [vmem:[%s3 + $0x11] sm:$0x1]
    %v5697 = vlaneseq
    %v5698 = vshrl.u32 %v5697, 7
    %v5699 = vsub.s32 0, %v5698
    %v5700 = vrot.slane %v5696, %v5699
    %v5701 = vmul.f32 %v5668, %v5700
    %v5702 = vmul.f32 %v5669, %v5700
    %v5703 = vmul.f32 %v5670, %v5700
    %v5704 = vmul.f32 %v5671, %v5700
    %v5705 = vmul.f32 %v5672, %v5700
    %v5706 = vmul.f32 %v5673, %v5700
    %v5707 = vmul.f32 %v5674, %v5700
    %v5708 = vmul.f32 %v5675, %v5700
    %v5709 = vmul.f32 %v5676, %v5700
    %v5710 = vmul.f32 %v5677, %v5700
    %v5711 = vmul.f32 %v5678, %v5700
    %v5712 = vmul.f32 %v5679, %v5700
    %v5713 = vmul.f32 %v5680, %v5700
    %v5714 = vmul.f32 %v5681, %v5700
    %v5715 = vmul.f32 %v5682, %v5700
    %v5716 = vmul.f32 %v5683, %v5700
    %v5717 = vmul.f32 %v5684, %v5700
    %v5718 = vmul.f32 %v5685, %v5700
    %v5719 = vmul.f32 %v5686, %v5700
    %v5720 = vmul.f32 %v5687, %v5700
    %v5721 = vmul.f32 %v5688, %v5700
    %v5722 = vmul.f32 %v5689, %v5700
    %v5723 = vmul.f32 %v5690, %v5700
    %v5724 = vmul.f32 %v5691, %v5700
    %v5725 = vmul.f32 %v5692, %v5700
    %v5726 = vmul.f32 %v5693, %v5700
    %v5727 = vmul.f32 %v5694, %v5700
    %v5728 = vmul.f32 %v5695, %v5700
    %v5729 = vadd.f32 %v5640, %v5701
    %v5730 = vadd.f32 %v5641, %v5702
    %v5731 = vadd.f32 %v5642, %v5703
    %v5732 = vadd.f32 %v5643, %v5704
    %v5733 = vadd.f32 %v5644, %v5705
    %v5734 = vadd.f32 %v5645, %v5706
    %v5735 = vadd.f32 %v5646, %v5707
    %v5736 = vadd.f32 %v5647, %v5708
    %v5737 = vadd.f32 %v5648, %v5709
    %v5738 = vadd.f32 %v5649, %v5710
    %v5739 = vadd.f32 %v5650, %v5711
    %v5740 = vadd.f32 %v5651, %v5712
    %v5741 = vadd.f32 %v5652, %v5713
    %v5742 = vadd.f32 %v5653, %v5714
    %v5743 = vadd.f32 %v5654, %v5715
    %v5744 = vadd.f32 %v5655, %v5716
    %v5745 = vadd.f32 %v5656, %v5717
    %v5746 = vadd.f32 %v5657, %v5718
    %v5747 = vadd.f32 %v5658, %v5719
    %v5748 = vadd.f32 %v5659, %v5720
    %v5749 = vadd.f32 %v5660, %v5721
    %v5750 = vadd.f32 %v5661, %v5722
    %v5751 = vadd.f32 %v5662, %v5723
    %v5752 = vadd.f32 %v5663, %v5724
    %v5753 = vadd.f32 %v5664, %v5725
    %v5754 = vadd.f32 %v5665, %v5726
    %v5755 = vadd.f32 %v5666, %v5727
    %v5756 = vadd.f32 %v5667, %v5728
    %v5757 = vld [vmem:[#allocation3 + $0x6] sm:$0xff]
    %v5758 = vld [vmem:[#allocation3 + $0xe] sm:$0xff]
    %v5759 = vld [vmem:[#allocation3 + $0x16] sm:$0xff]
    %v5760 = vld [vmem:[#allocation3 + $0x1e] sm:$0xff]
    %v5761 = vld [vmem:[#allocation3 + $0x26] sm:$0xff]
    %v5762 = vld [vmem:[#allocation3 + $0x2e] sm:$0xff]
    %v5763 = vld [vmem:[#allocation3 + $0x36] sm:$0xff]
    %v5764 = vld [vmem:[#allocation3 + $0x3e] sm:$0xff]
    %v5765 = vld [vmem:[#allocation3 + $0x46] sm:$0xff]
    %v5766 = vld [vmem:[#allocation3 + $0x4e] sm:$0xff]
    %v5767 = vld [vmem:[#allocation3 + $0x56] sm:$0xff]
    %v5768 = vld [vmem:[#allocation3 + $0x5e] sm:$0xff]
    %v5769 = vld [vmem:[#allocation3 + $0x66] sm:$0xff]
    %v5770 = vld [vmem:[#allocation3 + $0x6e] sm:$0xff]
    %v5771 = vld [vmem:[#allocation3 + $0x76] sm:$0xff]
    %v5772 = vld [vmem:[#allocation3 + $0x7e] sm:$0xff]
    %v5773 = vld [vmem:[#allocation3 + $0x86] sm:$0xff]
    %v5774 = vld [vmem:[#allocation3 + $0x8e] sm:$0xff]
    %v5775 = vld [vmem:[#allocation3 + $0x96] sm:$0xff]
    %v5776 = vld [vmem:[#allocation3 + $0x9e] sm:$0xff]
    %v5777 = vld [vmem:[#allocation3 + $0xa6] sm:$0xff]
    %v5778 = vld [vmem:[#allocation3 + $0xae] sm:$0xff]
    %v5779 = vld [vmem:[#allocation3 + $0xb6] sm:$0xff]
    %v5780 = vld [vmem:[#allocation3 + $0xbe] sm:$0xff]
    %v5781 = vld [vmem:[#allocation3 + $0xc6] sm:$0xff]
    %v5782 = vld [vmem:[#allocation3 + $0xce] sm:$0xff]
    %v5783 = vld [vmem:[#allocation3 + $0xd6] sm:$0xff]
    %v5784 = vld [vmem:[#allocation3 + $0xde] sm:$0xff]
    %v5785 = vld [vmem:[%s3 + $0x12] sm:$0x1]
    %v5786 = vlaneseq
    %v5787 = vshrl.u32 %v5786, 7
    %v5788 = vsub.s32 0, %v5787
    %v5789 = vrot.slane %v5785, %v5788
    %v5790 = vmul.f32 %v5757, %v5789
    %v5791 = vmul.f32 %v5758, %v5789
    %v5792 = vmul.f32 %v5759, %v5789
    %v5793 = vmul.f32 %v5760, %v5789
    %v5794 = vmul.f32 %v5761, %v5789
    %v5795 = vmul.f32 %v5762, %v5789
    %v5796 = vmul.f32 %v5763, %v5789
    %v5797 = vmul.f32 %v5764, %v5789
    %v5798 = vmul.f32 %v5765, %v5789
    %v5799 = vmul.f32 %v5766, %v5789
    %v5800 = vmul.f32 %v5767, %v5789
    %v5801 = vmul.f32 %v5768, %v5789
    %v5802 = vmul.f32 %v5769, %v5789
    %v5803 = vmul.f32 %v5770, %v5789
    %v5804 = vmul.f32 %v5771, %v5789
    %v5805 = vmul.f32 %v5772, %v5789
    %v5806 = vmul.f32 %v5773, %v5789
    %v5807 = vmul.f32 %v5774, %v5789
    %v5808 = vmul.f32 %v5775, %v5789
    %v5809 = vmul.f32 %v5776, %v5789
    %v5810 = vmul.f32 %v5777, %v5789
    %v5811 = vmul.f32 %v5778, %v5789
    %v5812 = vmul.f32 %v5779, %v5789
    %v5813 = vmul.f32 %v5780, %v5789
    %v5814 = vmul.f32 %v5781, %v5789
    %v5815 = vmul.f32 %v5782, %v5789
    %v5816 = vmul.f32 %v5783, %v5789
    %v5817 = vmul.f32 %v5784, %v5789
    %v5818 = vadd.f32 %v5729, %v5790
    %v5819 = vadd.f32 %v5730, %v5791
    %v5820 = vadd.f32 %v5731, %v5792
    %v5821 = vadd.f32 %v5732, %v5793
    %v5822 = vadd.f32 %v5733, %v5794
    %v5823 = vadd.f32 %v5734, %v5795
    %v5824 = vadd.f32 %v5735, %v5796
    %v5825 = vadd.f32 %v5736, %v5797
    %v5826 = vadd.f32 %v5737, %v5798
    %v5827 = vadd.f32 %v5738, %v5799
    %v5828 = vadd.f32 %v5739, %v5800
    %v5829 = vadd.f32 %v5740, %v5801
    %v5830 = vadd.f32 %v5741, %v5802
    %v5831 = vadd.f32 %v5742, %v5803
    %v5832 = vadd.f32 %v5743, %v5804
    %v5833 = vadd.f32 %v5744, %v5805
    %v5834 = vadd.f32 %v5745, %v5806
    %v5835 = vadd.f32 %v5746, %v5807
    %v5836 = vadd.f32 %v5747, %v5808
    %v5837 = vadd.f32 %v5748, %v5809
    %v5838 = vadd.f32 %v5749, %v5810
    %v5839 = vadd.f32 %v5750, %v5811
    %v5840 = vadd.f32 %v5751, %v5812
    %v5841 = vadd.f32 %v5752, %v5813
    %v5842 = vadd.f32 %v5753, %v5814
    %v5843 = vadd.f32 %v5754, %v5815
    %v5844 = vadd.f32 %v5755, %v5816
    %v5845 = vadd.f32 %v5756, %v5817
    %5846 = vst [vmem:[#allocation4] sm:$0xff] %v5818
    %5847 = vst [vmem:[#allocation4 + $0x8] sm:$0xff] %v5819
    %5848 = vst [vmem:[#allocation4 + $0x10] sm:$0xff] %v5820
    %5849 = vst [vmem:[#allocation4 + $0x18] sm:$0xff] %v5821
    %5850 = vst [vmem:[#allocation4 + $0x20] sm:$0xff] %v5822
    %5851 = vst [vmem:[#allocation4 + $0x28] sm:$0xff] %v5823
    %5852 = vst [vmem:[#allocation4 + $0x30] sm:$0xff] %v5824
    %5853 = vst [vmem:[#allocation4 + $0x38] sm:$0xff] %v5825
    %5854 = vst [vmem:[#allocation4 + $0x40] sm:$0xff] %v5826
    %5855 = vst [vmem:[#allocation4 + $0x48] sm:$0xff] %v5827
    %5856 = vst [vmem:[#allocation4 + $0x50] sm:$0xff] %v5828
    %5857 = vst [vmem:[#allocation4 + $0x58] sm:$0xff] %v5829
    %5858 = vst [vmem:[#allocation4 + $0x60] sm:$0xff] %v5830
    %5859 = vst [vmem:[#allocation4 + $0x68] sm:$0xff] %v5831
    %5860 = vst [vmem:[#allocation4 + $0x70] sm:$0xff] %v5832
    %5861 = vst [vmem:[#allocation4 + $0x78] sm:$0xff] %v5833
    %5862 = vst [vmem:[#allocation4 + $0x80] sm:$0xff] %v5834
    %5863 = vst [vmem:[#allocation4 + $0x88] sm:$0xff] %v5835
    %5864 = vst [vmem:[#allocation4 + $0x90] sm:$0xff] %v5836
    %5865 = vst [vmem:[#allocation4 + $0x98] sm:$0xff] %v5837
    %5866 = vst [vmem:[#allocation4 + $0xa0] sm:$0xff] %v5838
    %5867 = vst [vmem:[#allocation4 + $0xa8] sm:$0xff] %v5839
    %5868 = vst [vmem:[#allocation4 + $0xb0] sm:$0xff] %v5840
    %5869 = vst [vmem:[#allocation4 + $0xb8] sm:$0xff] %v5841
    %5870 = vst [vmem:[#allocation4 + $0xc0] sm:$0xff] %v5842
    %5871 = vst [vmem:[#allocation4 + $0xc8] sm:$0xff] %v5843
    %5872 = vst [vmem:[#allocation4 + $0xd0] sm:$0xff] %v5844
    %5873 = vst [vmem:[#allocation4 + $0xd8] sm:$0xff] %v5845
    %v5874 = vld [vmem:[#allocation3 + $0xf] sm:$0xff]
    %v5875 = vld [vmem:[#allocation3 + $0x17] sm:$0xff]
    %v5876 = vld [vmem:[#allocation3 + $0x1f] sm:$0xff]
    %v5877 = vld [vmem:[#allocation3 + $0x27] sm:$0xff]
    %v5878 = vld [vmem:[#allocation3 + $0x2f] sm:$0xff]
    %v5879 = vld [vmem:[#allocation3 + $0x37] sm:$0xff]
    %v5880 = vld [vmem:[#allocation3 + $0x3f] sm:$0xff]
    %v5881 = vld [vmem:[#allocation3 + $0x47] sm:$0xff]
    %v5882 = vld [vmem:[#allocation3 + $0x4f] sm:$0xff]
    %v5883 = vld [vmem:[#allocation3 + $0x57] sm:$0xff]
    %v5884 = vld [vmem:[#allocation3 + $0x5f] sm:$0xff]
    %v5885 = vld [vmem:[#allocation3 + $0x67] sm:$0xff]
    %v5886 = vld [vmem:[#allocation3 + $0x6f] sm:$0xff]
    %v5887 = vld [vmem:[#allocation3 + $0x77] sm:$0xff]
    %v5888 = vld [vmem:[#allocation3 + $0x7f] sm:$0xff]
    %v5889 = vld [vmem:[#allocation3 + $0x87] sm:$0xff]
    %v5890 = vld [vmem:[#allocation3 + $0x8f] sm:$0xff]
    %v5891 = vld [vmem:[#allocation3 + $0x97] sm:$0xff]
    %v5892 = vld [vmem:[#allocation3 + $0x9f] sm:$0xff]
    %v5893 = vld [vmem:[#allocation3 + $0xa7] sm:$0xff]
    %v5894 = vld [vmem:[#allocation3 + $0xaf] sm:$0xff]
    %v5895 = vld [vmem:[#allocation3 + $0xb7] sm:$0xff]
    %v5896 = vld [vmem:[#allocation3 + $0xbf] sm:$0xff]
    %v5897 = vld [vmem:[#allocation3 + $0xc7] sm:$0xff]
    %v5898 = vld [vmem:[#allocation3 + $0xcf] sm:$0xff]
    %v5899 = vld [vmem:[#allocation3 + $0xd7] sm:$0xff]
    %v5900 = vld [vmem:[#allocation3 + $0xdf] sm:$0xff]
    %v5901 = vld [vmem:[#allocation3 + $0xe7] sm:$0xff]
    %v5902 = vld [vmem:[%s3 + $0x13] sm:$0x1]
    %v5903 = vlaneseq
    %v5904 = vshrl.u32 %v5903, 7
    %v5905 = vsub.s32 0, %v5904
    %v5906 = vrot.slane %v5902, %v5905
    %v5907 = vmul.f32 %v5874, %v5906
    %v5908 = vmul.f32 %v5875, %v5906
    %v5909 = vmul.f32 %v5876, %v5906
    %v5910 = vmul.f32 %v5877, %v5906
    %v5911 = vmul.f32 %v5878, %v5906
    %v5912 = vmul.f32 %v5879, %v5906
    %v5913 = vmul.f32 %v5880, %v5906
    %v5914 = vmul.f32 %v5881, %v5906
    %v5915 = vmul.f32 %v5882, %v5906
    %v5916 = vmul.f32 %v5883, %v5906
    %v5917 = vmul.f32 %v5884, %v5906
    %v5918 = vmul.f32 %v5885, %v5906
    %v5919 = vmul.f32 %v5886, %v5906
    %v5920 = vmul.f32 %v5887, %v5906
    %v5921 = vmul.f32 %v5888, %v5906
    %v5922 = vmul.f32 %v5889, %v5906
    %v5923 = vmul.f32 %v5890, %v5906
    %v5924 = vmul.f32 %v5891, %v5906
    %v5925 = vmul.f32 %v5892, %v5906
    %v5926 = vmul.f32 %v5893, %v5906
    %v5927 = vmul.f32 %v5894, %v5906
    %v5928 = vmul.f32 %v5895, %v5906
    %v5929 = vmul.f32 %v5896, %v5906
    %v5930 = vmul.f32 %v5897, %v5906
    %v5931 = vmul.f32 %v5898, %v5906
    %v5932 = vmul.f32 %v5899, %v5906
    %v5933 = vmul.f32 %v5900, %v5906
    %v5934 = vmul.f32 %v5901, %v5906
    %v5935 = vld [vmem:[#allocation3 + $0x10] sm:$0xff]
    %v5936 = vld [vmem:[#allocation3 + $0x18] sm:$0xff]
    %v5937 = vld [vmem:[#allocation3 + $0x20] sm:$0xff]
    %v5938 = vld [vmem:[#allocation3 + $0x28] sm:$0xff]
    %v5939 = vld [vmem:[#allocation3 + $0x30] sm:$0xff]
    %v5940 = vld [vmem:[#allocation3 + $0x38] sm:$0xff]
    %v5941 = vld [vmem:[#allocation3 + $0x40] sm:$0xff]
    %v5942 = vld [vmem:[#allocation3 + $0x48] sm:$0xff]
    %v5943 = vld [vmem:[#allocation3 + $0x50] sm:$0xff]
    %v5944 = vld [vmem:[#allocation3 + $0x58] sm:$0xff]
    %v5945 = vld [vmem:[#allocation3 + $0x60] sm:$0xff]
    %v5946 = vld [vmem:[#allocation3 + $0x68] sm:$0xff]
    %v5947 = vld [vmem:[#allocation3 + $0x70] sm:$0xff]
    %v5948 = vld [vmem:[#allocation3 + $0x78] sm:$0xff]
    %v5949 = vld [vmem:[#allocation3 + $0x80] sm:$0xff]
    %v5950 = vld [vmem:[#allocation3 + $0x88] sm:$0xff]
    %v5951 = vld [vmem:[#allocation3 + $0x90] sm:$0xff]
    %v5952 = vld [vmem:[#allocation3 + $0x98] sm:$0xff]
    %v5953 = vld [vmem:[#allocation3 + $0xa0] sm:$0xff]
    %v5954 = vld [vmem:[#allocation3 + $0xa8] sm:$0xff]
    %v5955 = vld [vmem:[#allocation3 + $0xb0] sm:$0xff]
    %v5956 = vld [vmem:[#allocation3 + $0xb8] sm:$0xff]
    %v5957 = vld [vmem:[#allocation3 + $0xc0] sm:$0xff]
    %v5958 = vld [vmem:[#allocation3 + $0xc8] sm:$0xff]
    %v5959 = vld [vmem:[#allocation3 + $0xd0] sm:$0xff]
    %v5960 = vld [vmem:[#allocation3 + $0xd8] sm:$0xff]
    %v5961 = vld [vmem:[#allocation3 + $0xe0] sm:$0xff]
    %v5962 = vld [vmem:[#allocation3 + $0xe8] sm:$0xff]
    %v5963 = vld [vmem:[%s3 + $0x14] sm:$0x1]
    %v5964 = vlaneseq
    %v5965 = vshrl.u32 %v5964, 7
    %v5966 = vsub.s32 0, %v5965
    %v5967 = vrot.slane %v5963, %v5966
    %v5968 = vmul.f32 %v5935, %v5967
    %v5969 = vmul.f32 %v5936, %v5967
    %v5970 = vmul.f32 %v5937, %v5967
    %v5971 = vmul.f32 %v5938, %v5967
    %v5972 = vmul.f32 %v5939, %v5967
    %v5973 = vmul.f32 %v5940, %v5967
    %v5974 = vmul.f32 %v5941, %v5967
    %v5975 = vmul.f32 %v5942, %v5967
    %v5976 = vmul.f32 %v5943, %v5967
    %v5977 = vmul.f32 %v5944, %v5967
    %v5978 = vmul.f32 %v5945, %v5967
    %v5979 = vmul.f32 %v5946, %v5967
    %v5980 = vmul.f32 %v5947, %v5967
    %v5981 = vmul.f32 %v5948, %v5967
    %v5982 = vmul.f32 %v5949, %v5967
    %v5983 = vmul.f32 %v5950, %v5967
    %v5984 = vmul.f32 %v5951, %v5967
    %v5985 = vmul.f32 %v5952, %v5967
    %v5986 = vmul.f32 %v5953, %v5967
    %v5987 = vmul.f32 %v5954, %v5967
    %v5988 = vmul.f32 %v5955, %v5967
    %v5989 = vmul.f32 %v5956, %v5967
    %v5990 = vmul.f32 %v5957, %v5967
    %v5991 = vmul.f32 %v5958, %v5967
    %v5992 = vmul.f32 %v5959, %v5967
    %v5993 = vmul.f32 %v5960, %v5967
    %v5994 = vmul.f32 %v5961, %v5967
    %v5995 = vmul.f32 %v5962, %v5967
    %v5996 = vadd.f32 %v5907, %v5968
    %v5997 = vadd.f32 %v5908, %v5969
    %v5998 = vadd.f32 %v5909, %v5970
    %v5999 = vadd.f32 %v5910, %v5971
    %v6000 = vadd.f32 %v5911, %v5972
    %v6001 = vadd.f32 %v5912, %v5973
    %v6002 = vadd.f32 %v5913, %v5974
    %v6003 = vadd.f32 %v5914, %v5975
    %v6004 = vadd.f32 %v5915, %v5976
    %v6005 = vadd.f32 %v5916, %v5977
    %v6006 = vadd.f32 %v5917, %v5978
    %v6007 = vadd.f32 %v5918, %v5979
    %v6008 = vadd.f32 %v5919, %v5980
    %v6009 = vadd.f32 %v5920, %v5981
    %v6010 = vadd.f32 %v5921, %v5982
    %v6011 = vadd.f32 %v5922, %v5983
    %v6012 = vadd.f32 %v5923, %v5984
    %v6013 = vadd.f32 %v5924, %v5985
    %v6014 = vadd.f32 %v5925, %v5986
    %v6015 = vadd.f32 %v5926, %v5987
    %v6016 = vadd.f32 %v5927, %v5988
    %v6017 = vadd.f32 %v5928, %v5989
    %v6018 = vadd.f32 %v5929, %v5990
    %v6019 = vadd.f32 %v5930, %v5991
    %v6020 = vadd.f32 %v5931, %v5992
    %v6021 = vadd.f32 %v5932, %v5993
    %v6022 = vadd.f32 %v5933, %v5994
    %v6023 = vadd.f32 %v5934, %v5995
    %v6024 = vld [vmem:[#allocation3 + $0x11] sm:$0xff]
    %v6025 = vld [vmem:[#allocation3 + $0x19] sm:$0xff]
    %v6026 = vld [vmem:[#allocation3 + $0x21] sm:$0xff]
    %v6027 = vld [vmem:[#allocation3 + $0x29] sm:$0xff]
    %v6028 = vld [vmem:[#allocation3 + $0x31] sm:$0xff]
    %v6029 = vld [vmem:[#allocation3 + $0x39] sm:$0xff]
    %v6030 = vld [vmem:[#allocation3 + $0x41] sm:$0xff]
    %v6031 = vld [vmem:[#allocation3 + $0x49] sm:$0xff]
    %v6032 = vld [vmem:[#allocation3 + $0x51] sm:$0xff]
    %v6033 = vld [vmem:[#allocation3 + $0x59] sm:$0xff]
    %v6034 = vld [vmem:[#allocation3 + $0x61] sm:$0xff]
    %v6035 = vld [vmem:[#allocation3 + $0x69] sm:$0xff]
    %v6036 = vld [vmem:[#allocation3 + $0x71] sm:$0xff]
    %v6037 = vld [vmem:[#allocation3 + $0x79] sm:$0xff]
    %v6038 = vld [vmem:[#allocation3 + $0x81] sm:$0xff]
    %v6039 = vld [vmem:[#allocation3 + $0x89] sm:$0xff]
    %v6040 = vld [vmem:[#allocation3 + $0x91] sm:$0xff]
    %v6041 = vld [vmem:[#allocation3 + $0x99] sm:$0xff]
    %v6042 = vld [vmem:[#allocation3 + $0xa1] sm:$0xff]
    %v6043 = vld [vmem:[#allocation3 + $0xa9] sm:$0xff]
    %v6044 = vld [vmem:[#allocation3 + $0xb1] sm:$0xff]
    %v6045 = vld [vmem:[#allocation3 + $0xb9] sm:$0xff]
    %v6046 = vld [vmem:[#allocation3 + $0xc1] sm:$0xff]
    %v6047 = vld [vmem:[#allocation3 + $0xc9] sm:$0xff]
    %v6048 = vld [vmem:[#allocation3 + $0xd1] sm:$0xff]
    %v6049 = vld [vmem:[#allocation3 + $0xd9] sm:$0xff]
    %v6050 = vld [vmem:[#allocation3 + $0xe1] sm:$0xff]
    %v6051 = vld [vmem:[#allocation3 + $0xe9] sm:$0xff]
    %v6052 = vld [vmem:[%s3 + $0x15] sm:$0x1]
    %v6053 = vlaneseq
    %v6054 = vshrl.u32 %v6053, 7
    %v6055 = vsub.s32 0, %v6054
    %v6056 = vrot.slane %v6052, %v6055
    %v6057 = vmul.f32 %v6024, %v6056
    %v6058 = vmul.f32 %v6025, %v6056
    %v6059 = vmul.f32 %v6026, %v6056
    %v6060 = vmul.f32 %v6027, %v6056
    %v6061 = vmul.f32 %v6028, %v6056
    %v6062 = vmul.f32 %v6029, %v6056
    %v6063 = vmul.f32 %v6030, %v6056
    %v6064 = vmul.f32 %v6031, %v6056
    %v6065 = vmul.f32 %v6032, %v6056
    %v6066 = vmul.f32 %v6033, %v6056
    %v6067 = vmul.f32 %v6034, %v6056
    %v6068 = vmul.f32 %v6035, %v6056
    %v6069 = vmul.f32 %v6036, %v6056
    %v6070 = vmul.f32 %v6037, %v6056
    %v6071 = vmul.f32 %v6038, %v6056
    %v6072 = vmul.f32 %v6039, %v6056
    %v6073 = vmul.f32 %v6040, %v6056
    %v6074 = vmul.f32 %v6041, %v6056
    %v6075 = vmul.f32 %v6042, %v6056
    %v6076 = vmul.f32 %v6043, %v6056
    %v6077 = vmul.f32 %v6044, %v6056
    %v6078 = vmul.f32 %v6045, %v6056
    %v6079 = vmul.f32 %v6046, %v6056
    %v6080 = vmul.f32 %v6047, %v6056
    %v6081 = vmul.f32 %v6048, %v6056
    %v6082 = vmul.f32 %v6049, %v6056
    %v6083 = vmul.f32 %v6050, %v6056
    %v6084 = vmul.f32 %v6051, %v6056
    %v6085 = vadd.f32 %v5996, %v6057
    %v6086 = vadd.f32 %v5997, %v6058
    %v6087 = vadd.f32 %v5998, %v6059
    %v6088 = vadd.f32 %v5999, %v6060
    %v6089 = vadd.f32 %v6000, %v6061
    %v6090 = vadd.f32 %v6001, %v6062
    %v6091 = vadd.f32 %v6002, %v6063
    %v6092 = vadd.f32 %v6003, %v6064
    %v6093 = vadd.f32 %v6004, %v6065
    %v6094 = vadd.f32 %v6005, %v6066
    %v6095 = vadd.f32 %v6006, %v6067
    %v6096 = vadd.f32 %v6007, %v6068
    %v6097 = vadd.f32 %v6008, %v6069
    %v6098 = vadd.f32 %v6009, %v6070
    %v6099 = vadd.f32 %v6010, %v6071
    %v6100 = vadd.f32 %v6011, %v6072
    %v6101 = vadd.f32 %v6012, %v6073
    %v6102 = vadd.f32 %v6013, %v6074
    %v6103 = vadd.f32 %v6014, %v6075
    %v6104 = vadd.f32 %v6015, %v6076
    %v6105 = vadd.f32 %v6016, %v6077
    %v6106 = vadd.f32 %v6017, %v6078
    %v6107 = vadd.f32 %v6018, %v6079
    %v6108 = vadd.f32 %v6019, %v6080
    %v6109 = vadd.f32 %v6020, %v6081
    %v6110 = vadd.f32 %v6021, %v6082
    %v6111 = vadd.f32 %v6022, %v6083
    %v6112 = vadd.f32 %v6023, %v6084
    %v6113 = vld [vmem:[#allocation4] sm:$0xff]
    %v6114 = vld [vmem:[#allocation4 + $0x8] sm:$0xff]
    %v6115 = vld [vmem:[#allocation4 + $0x10] sm:$0xff]
    %v6116 = vld [vmem:[#allocation4 + $0x18] sm:$0xff]
    %v6117 = vld [vmem:[#allocation4 + $0x20] sm:$0xff]
    %v6118 = vld [vmem:[#allocation4 + $0x28] sm:$0xff]
    %v6119 = vld [vmem:[#allocation4 + $0x30] sm:$0xff]
    %v6120 = vld [vmem:[#allocation4 + $0x38] sm:$0xff]
    %v6121 = vld [vmem:[#allocation4 + $0x40] sm:$0xff]
    %v6122 = vld [vmem:[#allocation4 + $0x48] sm:$0xff]
    %v6123 = vld [vmem:[#allocation4 + $0x50] sm:$0xff]
    %v6124 = vld [vmem:[#allocation4 + $0x58] sm:$0xff]
    %v6125 = vld [vmem:[#allocation4 + $0x60] sm:$0xff]
    %v6126 = vld [vmem:[#allocation4 + $0x68] sm:$0xff]
    %v6127 = vld [vmem:[#allocation4 + $0x70] sm:$0xff]
    %v6128 = vld [vmem:[#allocation4 + $0x78] sm:$0xff]
    %v6129 = vld [vmem:[#allocation4 + $0x80] sm:$0xff]
    %v6130 = vld [vmem:[#allocation4 + $0x88] sm:$0xff]
    %v6131 = vld [vmem:[#allocation4 + $0x90] sm:$0xff]
    %v6132 = vld [vmem:[#allocation4 + $0x98] sm:$0xff]
    %v6133 = vld [vmem:[#allocation4 + $0xa0] sm:$0xff]
    %v6134 = vld [vmem:[#allocation4 + $0xa8] sm:$0xff]
    %v6135 = vld [vmem:[#allocation4 + $0xb0] sm:$0xff]
    %v6136 = vld [vmem:[#allocation4 + $0xb8] sm:$0xff]
    %v6137 = vld [vmem:[#allocation4 + $0xc0] sm:$0xff]
    %v6138 = vld [vmem:[#allocation4 + $0xc8] sm:$0xff]
    %v6139 = vld [vmem:[#allocation4 + $0xd0] sm:$0xff]
    %v6140 = vld [vmem:[#allocation4 + $0xd8] sm:$0xff]
    %v6141 = vadd.f32 %v6113, %v6085
    %v6142 = vadd.f32 %v6114, %v6086
    %v6143 = vadd.f32 %v6115, %v6087
    %v6144 = vadd.f32 %v6116, %v6088
    %v6145 = vadd.f32 %v6117, %v6089
    %v6146 = vadd.f32 %v6118, %v6090
    %v6147 = vadd.f32 %v6119, %v6091
    %v6148 = vadd.f32 %v6120, %v6092
    %v6149 = vadd.f32 %v6121, %v6093
    %v6150 = vadd.f32 %v6122, %v6094
    %v6151 = vadd.f32 %v6123, %v6095
    %v6152 = vadd.f32 %v6124, %v6096
    %v6153 = vadd.f32 %v6125, %v6097
    %v6154 = vadd.f32 %v6126, %v6098
    %v6155 = vadd.f32 %v6127, %v6099
    %v6156 = vadd.f32 %v6128, %v6100
    %v6157 = vadd.f32 %v6129, %v6101
    %v6158 = vadd.f32 %v6130, %v6102
    %v6159 = vadd.f32 %v6131, %v6103
    %v6160 = vadd.f32 %v6132, %v6104
    %v6161 = vadd.f32 %v6133, %v6105
    %v6162 = vadd.f32 %v6134, %v6106
    %v6163 = vadd.f32 %v6135, %v6107
    %v6164 = vadd.f32 %v6136, %v6108
    %v6165 = vadd.f32 %v6137, %v6109
    %v6166 = vadd.f32 %v6138, %v6110
    %v6167 = vadd.f32 %v6139, %v6111
    %v6168 = vadd.f32 %v6140, %v6112
    %6169 = vst [vmem:[#allocation4] sm:$0xff] %v6141
    %6170 = vst [vmem:[#allocation4 + $0x8] sm:$0xff] %v6142
    %6171 = vst [vmem:[#allocation4 + $0x10] sm:$0xff] %v6143
    %6172 = vst [vmem:[#allocation4 + $0x18] sm:$0xff] %v6144
    %6173 = vst [vmem:[#allocation4 + $0x20] sm:$0xff] %v6145
    %6174 = vst [vmem:[#allocation4 + $0x28] sm:$0xff] %v6146
    %6175 = vst [vmem:[#allocation4 + $0x30] sm:$0xff] %v6147
    %6176 = vst [vmem:[#allocation4 + $0x38] sm:$0xff] %v6148
    %6177 = vst [vmem:[#allocation4 + $0x40] sm:$0xff] %v6149
    %6178 = vst [vmem:[#allocation4 + $0x48] sm:$0xff] %v6150
    %6179 = vst [vmem:[#allocation4 + $0x50] sm:$0xff] %v6151
    %6180 = vst [vmem:[#allocation4 + $0x58] sm:$0xff] %v6152
    %6181 = vst [vmem:[#allocation4 + $0x60] sm:$0xff] %v6153
    %6182 = vst [vmem:[#allocation4 + $0x68] sm:$0xff] %v6154
    %6183 = vst [vmem:[#allocation4 + $0x70] sm:$0xff] %v6155
    %6184 = vst [vmem:[#allocation4 + $0x78] sm:$0xff] %v6156
    %6185 = vst [vmem:[#allocation4 + $0x80] sm:$0xff] %v6157
    %6186 = vst [vmem:[#allocation4 + $0x88] sm:$0xff] %v6158
    %6187 = vst [vmem:[#allocation4 + $0x90] sm:$0xff] %v6159
    %6188 = vst [vmem:[#allocation4 + $0x98] sm:$0xff] %v6160
    %6189 = vst [vmem:[#allocation4 + $0xa0] sm:$0xff] %v6161
    %6190 = vst [vmem:[#allocation4 + $0xa8] sm:$0xff] %v6162
    %6191 = vst [vmem:[#allocation4 + $0xb0] sm:$0xff] %v6163
    %6192 = vst [vmem:[#allocation4 + $0xb8] sm:$0xff] %v6164
    %6193 = vst [vmem:[#allocation4 + $0xc0] sm:$0xff] %v6165
    %6194 = vst [vmem:[#allocation4 + $0xc8] sm:$0xff] %v6166
    %6195 = vst [vmem:[#allocation4 + $0xd0] sm:$0xff] %v6167
    %6196 = vst [vmem:[#allocation4 + $0xd8] sm:$0xff] %v6168
    %v6197 = vld [vmem:[#allocation3 + $0x1a] sm:$0xff]
    %v6198 = vld [vmem:[#allocation3 + $0x22] sm:$0xff]
    %v6199 = vld [vmem:[#allocation3 + $0x2a] sm:$0xff]
    %v6200 = vld [vmem:[#allocation3 + $0x32] sm:$0xff]
    %v6201 = vld [vmem:[#allocation3 + $0x3a] sm:$0xff]
    %v6202 = vld [vmem:[#allocation3 + $0x42] sm:$0xff]
    %v6203 = vld [vmem:[#allocation3 + $0x4a] sm:$0xff]
    %v6204 = vld [vmem:[#allocation3 + $0x52] sm:$0xff]
    %v6205 = vld [vmem:[#allocation3 + $0x5a] sm:$0xff]
    %v6206 = vld [vmem:[#allocation3 + $0x62] sm:$0xff]
    %v6207 = vld [vmem:[#allocation3 + $0x6a] sm:$0xff]
    %v6208 = vld [vmem:[#allocation3 + $0x72] sm:$0xff]
    %v6209 = vld [vmem:[#allocation3 + $0x7a] sm:$0xff]
    %v6210 = vld [vmem:[#allocation3 + $0x82] sm:$0xff]
    %v6211 = vld [vmem:[#allocation3 + $0x8a] sm:$0xff]
    %v6212 = vld [vmem:[#allocation3 + $0x92] sm:$0xff]
    %v6213 = vld [vmem:[#allocation3 + $0x9a] sm:$0xff]
    %v6214 = vld [vmem:[#allocation3 + $0xa2] sm:$0xff]
    %v6215 = vld [vmem:[#allocation3 + $0xaa] sm:$0xff]
    %v6216 = vld [vmem:[#allocation3 + $0xb2] sm:$0xff]
    %v6217 = vld [vmem:[#allocation3 + $0xba] sm:$0xff]
    %v6218 = vld [vmem:[#allocation3 + $0xc2] sm:$0xff]
    %v6219 = vld [vmem:[#allocation3 + $0xca] sm:$0xff]
    %v6220 = vld [vmem:[#allocation3 + $0xd2] sm:$0xff]
    %v6221 = vld [vmem:[#allocation3 + $0xda] sm:$0xff]
    %v6222 = vld [vmem:[#allocation3 + $0xe2] sm:$0xff]
    %v6223 = vld [vmem:[#allocation3 + $0xea] sm:$0xff]
    %v6224 = vld [vmem:[#allocation3 + $0xf2] sm:$0xff]
    %v6225 = vld [vmem:[%s3 + $0x16] sm:$0x1]
    %v6226 = vlaneseq
    %v6227 = vshrl.u32 %v6226, 7
    %v6228 = vsub.s32 0, %v6227
    %v6229 = vrot.slane %v6225, %v6228
    %v6230 = vmul.f32 %v6197, %v6229
    %v6231 = vmul.f32 %v6198, %v6229
    %v6232 = vmul.f32 %v6199, %v6229
    %v6233 = vmul.f32 %v6200, %v6229
    %v6234 = vmul.f32 %v6201, %v6229
    %v6235 = vmul.f32 %v6202, %v6229
    %v6236 = vmul.f32 %v6203, %v6229
    %v6237 = vmul.f32 %v6204, %v6229
    %v6238 = vmul.f32 %v6205, %v6229
    %v6239 = vmul.f32 %v6206, %v6229
    %v6240 = vmul.f32 %v6207, %v6229
    %v6241 = vmul.f32 %v6208, %v6229
    %v6242 = vmul.f32 %v6209, %v6229
    %v6243 = vmul.f32 %v6210, %v6229
    %v6244 = vmul.f32 %v6211, %v6229
    %v6245 = vmul.f32 %v6212, %v6229
    %v6246 = vmul.f32 %v6213, %v6229
    %v6247 = vmul.f32 %v6214, %v6229
    %v6248 = vmul.f32 %v6215, %v6229
    %v6249 = vmul.f32 %v6216, %v6229
    %v6250 = vmul.f32 %v6217, %v6229
    %v6251 = vmul.f32 %v6218, %v6229
    %v6252 = vmul.f32 %v6219, %v6229
    %v6253 = vmul.f32 %v6220, %v6229
    %v6254 = vmul.f32 %v6221, %v6229
    %v6255 = vmul.f32 %v6222, %v6229
    %v6256 = vmul.f32 %v6223, %v6229
    %v6257 = vmul.f32 %v6224, %v6229
    %v6258 = vld [vmem:[#allocation3 + $0x1b] sm:$0xff]
    %v6259 = vld [vmem:[#allocation3 + $0x23] sm:$0xff]
    %v6260 = vld [vmem:[#allocation3 + $0x2b] sm:$0xff]
    %v6261 = vld [vmem:[#allocation3 + $0x33] sm:$0xff]
    %v6262 = vld [vmem:[#allocation3 + $0x3b] sm:$0xff]
    %v6263 = vld [vmem:[#allocation3 + $0x43] sm:$0xff]
    %v6264 = vld [vmem:[#allocation3 + $0x4b] sm:$0xff]
    %v6265 = vld [vmem:[#allocation3 + $0x53] sm:$0xff]
    %v6266 = vld [vmem:[#allocation3 + $0x5b] sm:$0xff]
    %v6267 = vld [vmem:[#allocation3 + $0x63] sm:$0xff]
    %v6268 = vld [vmem:[#allocation3 + $0x6b] sm:$0xff]
    %v6269 = vld [vmem:[#allocation3 + $0x73] sm:$0xff]
    %v6270 = vld [vmem:[#allocation3 + $0x7b] sm:$0xff]
    %v6271 = vld [vmem:[#allocation3 + $0x83] sm:$0xff]
    %v6272 = vld [vmem:[#allocation3 + $0x8b] sm:$0xff]
    %v6273 = vld [vmem:[#allocation3 + $0x93] sm:$0xff]
    %v6274 = vld [vmem:[#allocation3 + $0x9b] sm:$0xff]
    %v6275 = vld [vmem:[#allocation3 + $0xa3] sm:$0xff]
    %v6276 = vld [vmem:[#allocation3 + $0xab] sm:$0xff]
    %v6277 = vld [vmem:[#allocation3 + $0xb3] sm:$0xff]
    %v6278 = vld [vmem:[#allocation3 + $0xbb] sm:$0xff]
    %v6279 = vld [vmem:[#allocation3 + $0xc3] sm:$0xff]
    %v6280 = vld [vmem:[#allocation3 + $0xcb] sm:$0xff]
    %v6281 = vld [vmem:[#allocation3 + $0xd3] sm:$0xff]
    %v6282 = vld [vmem:[#allocation3 + $0xdb] sm:$0xff]
    %v6283 = vld [vmem:[#allocation3 + $0xe3] sm:$0xff]
    %v6284 = vld [vmem:[#allocation3 + $0xeb] sm:$0xff]
    %v6285 = vld [vmem:[#allocation3 + $0xf3] sm:$0xff]
    %v6286 = vld [vmem:[%s3 + $0x17] sm:$0x1]
    %v6287 = vlaneseq
    %v6288 = vshrl.u32 %v6287, 7
    %v6289 = vsub.s32 0, %v6288
    %v6290 = vrot.slane %v6286, %v6289
    %v6291 = vmul.f32 %v6258, %v6290
    %v6292 = vmul.f32 %v6259, %v6290
    %v6293 = vmul.f32 %v6260, %v6290
    %v6294 = vmul.f32 %v6261, %v6290
    %v6295 = vmul.f32 %v6262, %v6290
    %v6296 = vmul.f32 %v6263, %v6290
    %v6297 = vmul.f32 %v6264, %v6290
    %v6298 = vmul.f32 %v6265, %v6290
    %v6299 = vmul.f32 %v6266, %v6290
    %v6300 = vmul.f32 %v6267, %v6290
    %v6301 = vmul.f32 %v6268, %v6290
    %v6302 = vmul.f32 %v6269, %v6290
    %v6303 = vmul.f32 %v6270, %v6290
    %v6304 = vmul.f32 %v6271, %v6290
    %v6305 = vmul.f32 %v6272, %v6290
    %v6306 = vmul.f32 %v6273, %v6290
    %v6307 = vmul.f32 %v6274, %v6290
    %v6308 = vmul.f32 %v6275, %v6290
    %v6309 = vmul.f32 %v6276, %v6290
    %v6310 = vmul.f32 %v6277, %v6290
    %v6311 = vmul.f32 %v6278, %v6290
    %v6312 = vmul.f32 %v6279, %v6290
    %v6313 = vmul.f32 %v6280, %v6290
    %v6314 = vmul.f32 %v6281, %v6290
    %v6315 = vmul.f32 %v6282, %v6290
    %v6316 = vmul.f32 %v6283, %v6290
    %v6317 = vmul.f32 %v6284, %v6290
    %v6318 = vmul.f32 %v6285, %v6290
    %v6319 = vadd.f32 %v6230, %v6291
    %v6320 = vadd.f32 %v6231, %v6292
    %v6321 = vadd.f32 %v6232, %v6293
    %v6322 = vadd.f32 %v6233, %v6294
    %v6323 = vadd.f32 %v6234, %v6295
    %v6324 = vadd.f32 %v6235, %v6296
    %v6325 = vadd.f32 %v6236, %v6297
    %v6326 = vadd.f32 %v6237, %v6298
    %v6327 = vadd.f32 %v6238, %v6299
    %v6328 = vadd.f32 %v6239, %v6300
    %v6329 = vadd.f32 %v6240, %v6301
    %v6330 = vadd.f32 %v6241, %v6302
    %v6331 = vadd.f32 %v6242, %v6303
    %v6332 = vadd.f32 %v6243, %v6304
    %v6333 = vadd.f32 %v6244, %v6305
    %v6334 = vadd.f32 %v6245, %v6306
    %v6335 = vadd.f32 %v6246, %v6307
    %v6336 = vadd.f32 %v6247, %v6308
    %v6337 = vadd.f32 %v6248, %v6309
    %v6338 = vadd.f32 %v6249, %v6310
    %v6339 = vadd.f32 %v6250, %v6311
    %v6340 = vadd.f32 %v6251, %v6312
    %v6341 = vadd.f32 %v6252, %v6313
    %v6342 = vadd.f32 %v6253, %v6314
    %v6343 = vadd.f32 %v6254, %v6315
    %v6344 = vadd.f32 %v6255, %v6316
    %v6345 = vadd.f32 %v6256, %v6317
    %v6346 = vadd.f32 %v6257, %v6318
    %v6347 = vld [vmem:[#allocation3 + $0x1c] sm:$0xff]
    %v6348 = vld [vmem:[#allocation3 + $0x24] sm:$0xff]
    %v6349 = vld [vmem:[#allocation3 + $0x2c] sm:$0xff]
    %v6350 = vld [vmem:[#allocation3 + $0x34] sm:$0xff]
    %v6351 = vld [vmem:[#allocation3 + $0x3c] sm:$0xff]
    %v6352 = vld [vmem:[#allocation3 + $0x44] sm:$0xff]
    %v6353 = vld [vmem:[#allocation3 + $0x4c] sm:$0xff]
    %v6354 = vld [vmem:[#allocation3 + $0x54] sm:$0xff]
    %v6355 = vld [vmem:[#allocation3 + $0x5c] sm:$0xff]
    %v6356 = vld [vmem:[#allocation3 + $0x64] sm:$0xff]
    %v6357 = vld [vmem:[#allocation3 + $0x6c] sm:$0xff]
    %v6358 = vld [vmem:[#allocation3 + $0x74] sm:$0xff]
    %v6359 = vld [vmem:[#allocation3 + $0x7c] sm:$0xff]
    %v6360 = vld [vmem:[#allocation3 + $0x84] sm:$0xff]
    %v6361 = vld [vmem:[#allocation3 + $0x8c] sm:$0xff]
    %v6362 = vld [vmem:[#allocation3 + $0x94] sm:$0xff]
    %v6363 = vld [vmem:[#allocation3 + $0x9c] sm:$0xff]
    %v6364 = vld [vmem:[#allocation3 + $0xa4] sm:$0xff]
    %v6365 = vld [vmem:[#allocation3 + $0xac] sm:$0xff]
    %v6366 = vld [vmem:[#allocation3 + $0xb4] sm:$0xff]
    %v6367 = vld [vmem:[#allocation3 + $0xbc] sm:$0xff]
    %v6368 = vld [vmem:[#allocation3 + $0xc4] sm:$0xff]
    %v6369 = vld [vmem:[#allocation3 + $0xcc] sm:$0xff]
    %v6370 = vld [vmem:[#allocation3 + $0xd4] sm:$0xff]
    %v6371 = vld [vmem:[#allocation3 + $0xdc] sm:$0xff]
    %v6372 = vld [vmem:[#allocation3 + $0xe4] sm:$0xff]
    %v6373 = vld [vmem:[#allocation3 + $0xec] sm:$0xff]
    %v6374 = vld [vmem:[#allocation3 + $0xf4] sm:$0xff]
    %v6375 = vld [vmem:[%s3 + $0x18] sm:$0x1]
    %v6376 = vlaneseq
    %v6377 = vshrl.u32 %v6376, 7
    %v6378 = vsub.s32 0, %v6377
    %v6379 = vrot.slane %v6375, %v6378
    %v6380 = vmul.f32 %v6347, %v6379
    %v6381 = vmul.f32 %v6348, %v6379
    %v6382 = vmul.f32 %v6349, %v6379
    %v6383 = vmul.f32 %v6350, %v6379
    %v6384 = vmul.f32 %v6351, %v6379
    %v6385 = vmul.f32 %v6352, %v6379
    %v6386 = vmul.f32 %v6353, %v6379
    %v6387 = vmul.f32 %v6354, %v6379
    %v6388 = vmul.f32 %v6355, %v6379
    %v6389 = vmul.f32 %v6356, %v6379
    %v6390 = vmul.f32 %v6357, %v6379
    %v6391 = vmul.f32 %v6358, %v6379
    %v6392 = vmul.f32 %v6359, %v6379
    %v6393 = vmul.f32 %v6360, %v6379
    %v6394 = vmul.f32 %v6361, %v6379
    %v6395 = vmul.f32 %v6362, %v6379
    %v6396 = vmul.f32 %v6363, %v6379
    %v6397 = vmul.f32 %v6364, %v6379
    %v6398 = vmul.f32 %v6365, %v6379
    %v6399 = vmul.f32 %v6366, %v6379
    %v6400 = vmul.f32 %v6367, %v6379
    %v6401 = vmul.f32 %v6368, %v6379
    %v6402 = vmul.f32 %v6369, %v6379
    %v6403 = vmul.f32 %v6370, %v6379
    %v6404 = vmul.f32 %v6371, %v6379
    %v6405 = vmul.f32 %v6372, %v6379
    %v6406 = vmul.f32 %v6373, %v6379
    %v6407 = vmul.f32 %v6374, %v6379
    %v6408 = vadd.f32 %v6319, %v6380
    %v6409 = vadd.f32 %v6320, %v6381
    %v6410 = vadd.f32 %v6321, %v6382
    %v6411 = vadd.f32 %v6322, %v6383
    %v6412 = vadd.f32 %v6323, %v6384
    %v6413 = vadd.f32 %v6324, %v6385
    %v6414 = vadd.f32 %v6325, %v6386
    %v6415 = vadd.f32 %v6326, %v6387
    %v6416 = vadd.f32 %v6327, %v6388
    %v6417 = vadd.f32 %v6328, %v6389
    %v6418 = vadd.f32 %v6329, %v6390
    %v6419 = vadd.f32 %v6330, %v6391
    %v6420 = vadd.f32 %v6331, %v6392
    %v6421 = vadd.f32 %v6332, %v6393
    %v6422 = vadd.f32 %v6333, %v6394
    %v6423 = vadd.f32 %v6334, %v6395
    %v6424 = vadd.f32 %v6335, %v6396
    %v6425 = vadd.f32 %v6336, %v6397
    %v6426 = vadd.f32 %v6337, %v6398
    %v6427 = vadd.f32 %v6338, %v6399
    %v6428 = vadd.f32 %v6339, %v6400
    %v6429 = vadd.f32 %v6340, %v6401
    %v6430 = vadd.f32 %v6341, %v6402
    %v6431 = vadd.f32 %v6342, %v6403
    %v6432 = vadd.f32 %v6343, %v6404
    %v6433 = vadd.f32 %v6344, %v6405
    %v6434 = vadd.f32 %v6345, %v6406
    %v6435 = vadd.f32 %v6346, %v6407
    %v6436 = vld [vmem:[#allocation4] sm:$0xff]
    %v6437 = vld [vmem:[#allocation4 + $0x8] sm:$0xff]
    %v6438 = vld [vmem:[#allocation4 + $0x10] sm:$0xff]
    %v6439 = vld [vmem:[#allocation4 + $0x18] sm:$0xff]
    %v6440 = vld [vmem:[#allocation4 + $0x20] sm:$0xff]
    %v6441 = vld [vmem:[#allocation4 + $0x28] sm:$0xff]
    %v6442 = vld [vmem:[#allocation4 + $0x30] sm:$0xff]
    %v6443 = vld [vmem:[#allocation4 + $0x38] sm:$0xff]
    %v6444 = vld [vmem:[#allocation4 + $0x40] sm:$0xff]
    %v6445 = vld [vmem:[#allocation4 + $0x48] sm:$0xff]
    %v6446 = vld [vmem:[#allocation4 + $0x50] sm:$0xff]
    %v6447 = vld [vmem:[#allocation4 + $0x58] sm:$0xff]
    %v6448 = vld [vmem:[#allocation4 + $0x60] sm:$0xff]
    %v6449 = vld [vmem:[#allocation4 + $0x68] sm:$0xff]
    %v6450 = vld [vmem:[#allocation4 + $0x70] sm:$0xff]
    %v6451 = vld [vmem:[#allocation4 + $0x78] sm:$0xff]
    %v6452 = vld [vmem:[#allocation4 + $0x80] sm:$0xff]
    %v6453 = vld [vmem:[#allocation4 + $0x88] sm:$0xff]
    %v6454 = vld [vmem:[#allocation4 + $0x90] sm:$0xff]
    %v6455 = vld [vmem:[#allocation4 + $0x98] sm:$0xff]
    %v6456 = vld [vmem:[#allocation4 + $0xa0] sm:$0xff]
    %v6457 = vld [vmem:[#allocation4 + $0xa8] sm:$0xff]
    %v6458 = vld [vmem:[#allocation4 + $0xb0] sm:$0xff]
    %v6459 = vld [vmem:[#allocation4 + $0xb8] sm:$0xff]
    %v6460 = vld [vmem:[#allocation4 + $0xc0] sm:$0xff]
    %v6461 = vld [vmem:[#allocation4 + $0xc8] sm:$0xff]
    %v6462 = vld [vmem:[#allocation4 + $0xd0] sm:$0xff]
    %v6463 = vld [vmem:[#allocation4 + $0xd8] sm:$0xff]
    %v6464 = vadd.f32 %v6436, %v6408
    %v6465 = vadd.f32 %v6437, %v6409
    %v6466 = vadd.f32 %v6438, %v6410
    %v6467 = vadd.f32 %v6439, %v6411
    %v6468 = vadd.f32 %v6440, %v6412
    %v6469 = vadd.f32 %v6441, %v6413
    %v6470 = vadd.f32 %v6442, %v6414
    %v6471 = vadd.f32 %v6443, %v6415
    %v6472 = vadd.f32 %v6444, %v6416
    %v6473 = vadd.f32 %v6445, %v6417
    %v6474 = vadd.f32 %v6446, %v6418
    %v6475 = vadd.f32 %v6447, %v6419
    %v6476 = vadd.f32 %v6448, %v6420
    %v6477 = vadd.f32 %v6449, %v6421
    %v6478 = vadd.f32 %v6450, %v6422
    %v6479 = vadd.f32 %v6451, %v6423
    %v6480 = vadd.f32 %v6452, %v6424
    %v6481 = vadd.f32 %v6453, %v6425
    %v6482 = vadd.f32 %v6454, %v6426
    %v6483 = vadd.f32 %v6455, %v6427
    %v6484 = vadd.f32 %v6456, %v6428
    %v6485 = vadd.f32 %v6457, %v6429
    %v6486 = vadd.f32 %v6458, %v6430
    %v6487 = vadd.f32 %v6459, %v6431
    %v6488 = vadd.f32 %v6460, %v6432
    %v6489 = vadd.f32 %v6461, %v6433
    %v6490 = vadd.f32 %v6462, %v6434
    %v6491 = vadd.f32 %v6463, %v6435
    %6492 = vst [vmem:[#allocation4] sm:$0xff] %v6464
    %6493 = vst [vmem:[#allocation4 + $0x8] sm:$0xff] %v6465
    %6494 = vst [vmem:[#allocation4 + $0x10] sm:$0xff] %v6466
    %6495 = vst [vmem:[#allocation4 + $0x18] sm:$0xff] %v6467
    %6496 = vst [vmem:[#allocation4 + $0x20] sm:$0xff] %v6468
    %6497 = vst [vmem:[#allocation4 + $0x28] sm:$0xff] %v6469
    %6498 = vst [vmem:[#allocation4 + $0x30] sm:$0xff] %v6470
    %6499 = vst [vmem:[#allocation4 + $0x38] sm:$0xff] %v6471
    %6500 = vst [vmem:[#allocation4 + $0x40] sm:$0xff] %v6472
    %6501 = vst [vmem:[#allocation4 + $0x48] sm:$0xff] %v6473
    %6502 = vst [vmem:[#allocation4 + $0x50] sm:$0xff] %v6474
    %6503 = vst [vmem:[#allocation4 + $0x58] sm:$0xff] %v6475
    %6504 = vst [vmem:[#allocation4 + $0x60] sm:$0xff] %v6476
    %6505 = vst [vmem:[#allocation4 + $0x68] sm:$0xff] %v6477
    %6506 = vst [vmem:[#allocation4 + $0x70] sm:$0xff] %v6478
    %6507 = vst [vmem:[#allocation4 + $0x78] sm:$0xff] %v6479
    %6508 = vst [vmem:[#allocation4 + $0x80] sm:$0xff] %v6480
    %6509 = vst [vmem:[#allocation4 + $0x88] sm:$0xff] %v6481
    %6510 = vst [vmem:[#allocation4 + $0x90] sm:$0xff] %v6482
    %6511 = vst [vmem:[#allocation4 + $0x98] sm:$0xff] %v6483
    %6512 = vst [vmem:[#allocation4 + $0xa0] sm:$0xff] %v6484
    %6513 = vst [vmem:[#allocation4 + $0xa8] sm:$0xff] %v6485
    %6514 = vst [vmem:[#allocation4 + $0xb0] sm:$0xff] %v6486
    %6515 = vst [vmem:[#allocation4 + $0xb8] sm:$0xff] %v6487
    %6516 = vst [vmem:[#allocation4 + $0xc0] sm:$0xff] %v6488
    %6517 = vst [vmem:[#allocation4 + $0xc8] sm:$0xff] %v6489
    %6518 = vst [vmem:[#allocation4 + $0xd0] sm:$0xff] %v6490
    %6519 = vst [vmem:[#allocation4 + $0xd8] sm:$0xff] %v6491
    %v6520 = vld [vmem:[#allocation4] sm:$0xff]
    %v6521 = vld [vmem:[#allocation4 + $0x8] sm:$0xff]
    %v6522 = vld [vmem:[#allocation4 + $0x10] sm:$0xff]
    %v6523 = vld [vmem:[#allocation4 + $0x18] sm:$0xff]
    %v6524 = vld [vmem:[#allocation4 + $0x20] sm:$0xff]
    %v6525 = vld [vmem:[#allocation4 + $0x28] sm:$0xff]
    %v6526 = vld [vmem:[#allocation4 + $0x30] sm:$0xff]
    %v6527 = vld [vmem:[#allocation4 + $0x38] sm:$0xff]
    %v6528 = vld [vmem:[#allocation4 + $0x40] sm:$0xff]
    %v6529 = vld [vmem:[#allocation4 + $0x48] sm:$0xff]
    %v6530 = vld [vmem:[#allocation4 + $0x50] sm:$0xff]
    %v6531 = vld [vmem:[#allocation4 + $0x58] sm:$0xff]
    %v6532 = vld [vmem:[#allocation4 + $0x60] sm:$0xff]
    %v6533 = vld [vmem:[#allocation4 + $0x68] sm:$0xff]
    %v6534 = vld [vmem:[#allocation4 + $0x70] sm:$0xff]
    %v6535 = vld [vmem:[#allocation4 + $0x78] sm:$0xff]
    %v6536 = vld [vmem:[#allocation4 + $0x80] sm:$0xff]
    %v6537 = vld [vmem:[#allocation4 + $0x88] sm:$0xff]
    %v6538 = vld [vmem:[#allocation4 + $0x90] sm:$0xff]
    %v6539 = vld [vmem:[#allocation4 + $0x98] sm:$0xff]
    %v6540 = vld [vmem:[#allocation4 + $0xa0] sm:$0xff]
    %v6541 = vld [vmem:[#allocation4 + $0xa8] sm:$0xff]
    %v6542 = vld [vmem:[#allocation4 + $0xb0] sm:$0xff]
    %v6543 = vld [vmem:[#allocation4 + $0xb8] sm:$0xff]
    %v6544 = vld [vmem:[#allocation4 + $0xc0] sm:$0xff]
    %v6545 = vld [vmem:[#allocation4 + $0xc8] sm:$0xff]
    %v6546 = vld [vmem:[#allocation4 + $0xd0] sm:$0xff]
    %v6547 = vld [vmem:[#allocation4 + $0xd8] sm:$0xff]
    %v6548 = vld [vmem:[%s2 + $0x2d0] sm:$0xff]
    %v6549 = vld [vmem:[%s2 + $0x2d8] sm:$0xff]
    %v6550 = vld [vmem:[%s2 + $0x2e0] sm:$0xff]
    %v6551 = vld [vmem:[%s2 + $0x2e8] sm:$0xff]
    %v6552 = vld [vmem:[%s2 + $0x2f0] sm:$0xff]
    %v6553 = vld [vmem:[%s2 + $0x2f8] sm:$0xff]
    %v6554 = vld [vmem:[%s2 + $0x300] sm:$0xff]
    %v6555 = vld [vmem:[%s2 + $0x308] sm:$0xff]
    %v6556 = vld [vmem:[%s2 + $0x310] sm:$0xff]
    %v6557 = vld [vmem:[%s2 + $0x318] sm:$0xff]
    %v6558 = vld [vmem:[%s2 + $0x320] sm:$0xff]
    %v6559 = vld [vmem:[%s2 + $0x328] sm:$0xff]
    %v6560 = vld [vmem:[%s2 + $0x330] sm:$0xff]
    %v6561 = vld [vmem:[%s2 + $0x338] sm:$0xff]
    %v6562 = vld [vmem:[%s2 + $0x340] sm:$0xff]
    %v6563 = vld [vmem:[%s2 + $0x348] sm:$0xff]
    %6564 = vmatprep.subr.mxu0 0.0
    %6565 = vmatpush1.msra.mxu0 %v6548
    %6566 = vmatprep.subr.mxu0 0.0
    %6567 = vmatpush1.msra.mxu0 %v6549
    %6568 = vmatprep.subr.mxu0 0.0
    %6569 = vmatpush1.msra.mxu0 %v6550
    %6570 = vmatprep.subr.mxu0 0.0
    %6571 = vmatpush1.msra.mxu0 %v6551
    %6572 = vmatprep.subr.mxu0 0.0
    %6573 = vmatpush1.msra.mxu0 %v6552
    %6574 = vmatprep.subr.mxu0 0.0
    %6575 = vmatpush1.msra.mxu0 %v6553
    %6576 = vmatprep.subr.mxu0 0.0
    %6577 = vmatpush1.msra.mxu0 %v6554
    %6578 = vmatprep.subr.mxu0 0.0
    %6579 = vmatpush1.msra.mxu0 %v6555
    %6580 = vmatprep.subr.mxu0 0.0
    %6581 = vmatpush1.msra.mxu0 %v6556
    %6582 = vmatprep.subr.mxu0 0.0
    %6583 = vmatpush1.msra.mxu0 %v6557
    %6584 = vmatprep.subr.mxu0 0.0
    %6585 = vmatpush1.msra.mxu0 %v6558
    %6586 = vmatprep.subr.mxu0 0.0
    %6587 = vmatpush1.msra.mxu0 %v6559
    %6588 = vmatprep.subr.mxu0 0.0
    %6589 = vmatpush1.msra.mxu0 %v6560
    %6590 = vmatprep.subr.mxu0 0.0
    %6591 = vmatpush1.msra.mxu0 %v6561
    %6592 = vmatprep.subr.mxu0 0.0
    %6593 = vmatpush1.msra.mxu0 %v6562
    %6594 = vmatprep.subr.mxu0 0.0
    %6595 = vmatpush1.msra.mxu0 %v6563
    %6596 = vmatprep.subr.mxu0 0.0
    %6597 = vmatpush1.msra.mxu0 0.0
    %6598 = vmatprep.subr.mxu0 0.0
    %6599 = vmatpush1.msra.mxu0 0.0
    %6600 = vmatprep.subr.mxu0 0.0
    %6601 = vmatpush1.msra.mxu0 0.0
    %6602 = vmatprep.subr.mxu0 0.0
    %6603 = vmatpush1.msra.mxu0 0.0
    %6604 = vmatprep.subr.mxu0 0.0
    %6605 = vmatpush1.msra.mxu0 0.0
    %6606 = vmatprep.subr.mxu0 0.0
    %6607 = vmatpush1.msra.mxu0 0.0
    %6608 = vmatprep.subr.mxu0 0.0
    %6609 = vmatpush1.msra.mxu0 0.0
    %6610 = vmatprep.subr.mxu0 0.0
    %6611 = vmatpush1.msra.mxu0 0.0
    %6612 = vmatprep.subr.mxu0 0.0
    %6613 = vmatpush1.msra.mxu0 0.0
    %6614 = vmatprep.subr.mxu0 0.0
    %6615 = vmatpush1.msra.mxu0 0.0
    %6616 = vmatprep.subr.mxu0 0.0
    %6617 = vmatpush1.msra.mxu0 0.0
    %6618 = vmatprep.subr.mxu0 0.0
    %6619 = vmatpush1.msra.mxu0 0.0
    %6620 = vmatprep.subr.mxu0 0.0
    %6621 = vmatpush1.msra.mxu0 0.0
    %6622 = vmatprep.subr.mxu0 0.0
    %6623 = vmatpush1.msra.mxu0 0.0
    %6624 = vmatprep.subr.mxu0 0.0
    %6625 = vmatpush1.msra.mxu0 0.0
    %6626 = vmatprep.subr.mxu0 0.0
    %6627 = vmatpush1.msra.mxu0 0.0
    %6628 = vmatprep.mubr.f32.mxu0 0.0
    %6629 = vmatmul.mubr.f32.gmra.mrb[0].mxu0 %v6520
    %v6630 = vpop.f32.mrb[0].mxu0
    %v6631 = vadd.f32 0.0, %v6630
    %v6632 = vpop.f32.mrb[0].mxu0
    %6633 = vmatprep.mubr.f32.mxu0 0.0
    %6634 = vmatmul.mubr.f32.gmra.mrb[0].mxu0 %v6521
    %v6635 = vpop.f32.mrb[0].mxu0
    %v6636 = vadd.f32 0.0, %v6635
    %v6637 = vpop.f32.mrb[0].mxu0
    %6638 = vmatprep.mubr.f32.mxu0 0.0
    %6639 = vmatmul.mubr.f32.gmra.mrb[0].mxu0 %v6522
    %v6640 = vpop.f32.mrb[0].mxu0
    %v6641 = vadd.f32 0.0, %v6640
    %v6642 = vpop.f32.mrb[0].mxu0
    %6643 = vmatprep.mubr.f32.mxu0 0.0
    %6644 = vmatmul.mubr.f32.gmra.mrb[0].mxu0 %v6523
    %v6645 = vpop.f32.mrb[0].mxu0
    %v6646 = vadd.f32 0.0, %v6645
    %v6647 = vpop.f32.mrb[0].mxu0
    %6648 = vmatprep.mubr.f32.mxu0 0.0
    %6649 = vmatmul.mubr.f32.gmra.mrb[0].mxu0 %v6524
    %v6650 = vpop.f32.mrb[0].mxu0
    %v6651 = vadd.f32 0.0, %v6650
    %v6652 = vpop.f32.mrb[0].mxu0
    %6653 = vmatprep.mubr.f32.mxu0 0.0
    %6654 = vmatmul.mubr.f32.gmra.mrb[0].mxu0 %v6525
    %v6655 = vpop.f32.mrb[0].mxu0
    %v6656 = vadd.f32 0.0, %v6655
    %v6657 = vpop.f32.mrb[0].mxu0
    %6658 = vmatprep.mubr.f32.mxu0 0.0
    %6659 = vmatmul.mubr.f32.gmra.mrb[0].mxu0 %v6526
    %v6660 = vpop.f32.mrb[0].mxu0
    %v6661 = vadd.f32 0.0, %v6660
    %v6662 = vpop.f32.mrb[0].mxu0
    %6663 = vmatprep.mubr.f32.mxu0 0.0
    %6664 = vmatmul.mubr.f32.gmra.mrb[0].mxu0 %v6527
    %v6665 = vpop.f32.mrb[0].mxu0
    %v6666 = vadd.f32 0.0, %v6665
    %v6667 = vpop.f32.mrb[0].mxu0
    %6668 = vmatprep.mubr.f32.mxu0 0.0
    %6669 = vmatmul.mubr.f32.gmra.mrb[0].mxu0 %v6528
    %v6670 = vpop.f32.mrb[0].mxu0
    %v6671 = vadd.f32 0.0, %v6670
    %v6672 = vpop.f32.mrb[0].mxu0
    %6673 = vmatprep.mubr.f32.mxu0 0.0
    %6674 = vmatmul.mubr.f32.gmra.mrb[0].mxu0 %v6529
    %v6675 = vpop.f32.mrb[0].mxu0
    %v6676 = vadd.f32 0.0, %v6675
    %v6677 = vpop.f32.mrb[0].mxu0
    %6678 = vmatprep.mubr.f32.mxu0 0.0
    %6679 = vmatmul.mubr.f32.gmra.mrb[0].mxu0 %v6530
    %v6680 = vpop.f32.mrb[0].mxu0
    %v6681 = vadd.f32 0.0, %v6680
    %v6682 = vpop.f32.mrb[0].mxu0
    %6683 = vmatprep.mubr.f32.mxu0 0.0
    %6684 = vmatmul.mubr.f32.gmra.mrb[0].mxu0 %v6531
    %v6685 = vpop.f32.mrb[0].mxu0
    %v6686 = vadd.f32 0.0, %v6685
    %v6687 = vpop.f32.mrb[0].mxu0
    %6688 = vmatprep.mubr.f32.mxu0 0.0
    %6689 = vmatmul.mubr.f32.gmra.mrb[0].mxu0 %v6532
    %v6690 = vpop.f32.mrb[0].mxu0
    %v6691 = vadd.f32 0.0, %v6690
    %v6692 = vpop.f32.mrb[0].mxu0
    %6693 = vmatprep.mubr.f32.mxu0 0.0
    %6694 = vmatmul.mubr.f32.gmra.mrb[0].mxu0 %v6533
    %v6695 = vpop.f32.mrb[0].mxu0
    %v6696 = vadd.f32 0.0, %v6695
    %v6697 = vpop.f32.mrb[0].mxu0
    %6698 = vmatprep.mubr.f32.mxu0 0.0
    %6699 = vmatmul.mubr.f32.gmra.mrb[0].mxu0 %v6534
    %v6700 = vpop.f32.mrb[0].mxu0
    %v6701 = vadd.f32 0.0, %v6700
    %v6702 = vpop.f32.mrb[0].mxu0
    %6703 = vmatprep.mubr.f32.mxu0 0.0
    %6704 = vmatmul.mubr.f32.gmra.mrb[0].mxu0 %v6535
    %v6705 = vpop.f32.mrb[0].mxu0
    %v6706 = vadd.f32 0.0, %v6705
    %v6707 = vpop.f32.mrb[0].mxu0
    %6708 = vmatprep.mubr.f32.mxu0 0.0
    %6709 = vmatmul.mubr.f32.gmra.mrb[0].mxu0 %v6536
    %v6710 = vpop.f32.mrb[0].mxu0
    %v6711 = vadd.f32 0.0, %v6710
    %v6712 = vpop.f32.mrb[0].mxu0
    %6713 = vmatprep.mubr.f32.mxu0 0.0
    %6714 = vmatmul.mubr.f32.gmra.mrb[0].mxu0 %v6537
    %v6715 = vpop.f32.mrb[0].mxu0
    %v6716 = vadd.f32 0.0, %v6715
    %v6717 = vpop.f32.mrb[0].mxu0
    %6718 = vmatprep.mubr.f32.mxu0 0.0
    %6719 = vmatmul.mubr.f32.gmra.mrb[0].mxu0 %v6538
    %v6720 = vpop.f32.mrb[0].mxu0
    %v6721 = vadd.f32 0.0, %v6720
    %v6722 = vpop.f32.mrb[0].mxu0
    %6723 = vmatprep.mubr.f32.mxu0 0.0
    %6724 = vmatmul.mubr.f32.gmra.mrb[0].mxu0 %v6539
    %v6725 = vpop.f32.mrb[0].mxu0
    %v6726 = vadd.f32 0.0, %v6725
    %v6727 = vpop.f32.mrb[0].mxu0
    %6728 = vmatprep.mubr.f32.mxu0 0.0
    %6729 = vmatmul.mubr.f32.gmra.mrb[0].mxu0 %v6540
    %v6730 = vpop.f32.mrb[0].mxu0
    %v6731 = vadd.f32 0.0, %v6730
    %v6732 = vpop.f32.mrb[0].mxu0
    %6733 = vmatprep.mubr.f32.mxu0 0.0
    %6734 = vmatmul.mubr.f32.gmra.mrb[0].mxu0 %v6541
    %v6735 = vpop.f32.mrb[0].mxu0
    %v6736 = vadd.f32 0.0, %v6735
    %v6737 = vpop.f32.mrb[0].mxu0
    %6738 = vmatprep.mubr.f32.mxu0 0.0
    %6739 = vmatmul.mubr.f32.gmra.mrb[0].mxu0 %v6542
    %v6740 = vpop.f32.mrb[0].mxu0
    %v6741 = vadd.f32 0.0, %v6740
    %v6742 = vpop.f32.mrb[0].mxu0
    %6743 = vmatprep.mubr.f32.mxu0 0.0
    %6744 = vmatmul.mubr.f32.gmra.mrb[0].mxu0 %v6543
    %v6745 = vpop.f32.mrb[0].mxu0
    %v6746 = vadd.f32 0.0, %v6745
    %v6747 = vpop.f32.mrb[0].mxu0
    %6748 = vmatprep.mubr.f32.mxu0 0.0
    %6749 = vmatmul.mubr.f32.gmra.mrb[0].mxu0 %v6544
    %v6750 = vpop.f32.mrb[0].mxu0
    %v6751 = vadd.f32 0.0, %v6750
    %v6752 = vpop.f32.mrb[0].mxu0
    %6753 = vmatprep.mubr.f32.mxu0 0.0
    %6754 = vmatmul.mubr.f32.gmra.mrb[0].mxu0 %v6545
    %v6755 = vpop.f32.mrb[0].mxu0
    %v6756 = vadd.f32 0.0, %v6755
    %v6757 = vpop.f32.mrb[0].mxu0
    %6758 = vmatprep.mubr.f32.mxu0 0.0
    %6759 = vmatmul.mubr.f32.gmra.mrb[0].mxu0 %v6546
    %v6760 = vpop.f32.mrb[0].mxu0
    %v6761 = vadd.f32 0.0, %v6760
    %v6762 = vpop.f32.mrb[0].mxu0
    %6763 = vmatprep.mubr.f32.mxu0 0.0
    %6764 = vmatmul.mubr.f32.gmra.mrb[0].mxu0 %v6547
    %v6765 = vpop.f32.mrb[0].mxu0
    %v6766 = vadd.f32 0.0, %v6765
    %v6767 = vpop.f32.mrb[0].mxu0
    %6768 = vdwg.mxu0
    %v6769 = vld [vmem:[#allocation2 + $0x10] sm:$0xff]
    %v6770 = vld [vmem:[#allocation2 + $0x18] sm:$0xff]
    %v6771 = vld [vmem:[#allocation2 + $0x20] sm:$0xff]
    %v6772 = vld [vmem:[#allocation2 + $0x28] sm:$0xff]
    %v6773 = vld [vmem:[#allocation2 + $0x30] sm:$0xff]
    %v6774 = vld [vmem:[#allocation2 + $0x38] sm:$0xff]
    %v6775 = vld [vmem:[#allocation2 + $0x40] sm:$0xff]
    %v6776 = vld [vmem:[#allocation2 + $0x48] sm:$0xff]
    %v6777 = vld [vmem:[#allocation2 + $0x50] sm:$0xff]
    %v6778 = vld [vmem:[#allocation2 + $0x58] sm:$0xff]
    %v6779 = vld [vmem:[#allocation2 + $0x60] sm:$0xff]
    %v6780 = vld [vmem:[#allocation2 + $0x68] sm:$0xff]
    %v6781 = vld [vmem:[#allocation2 + $0x70] sm:$0xff]
    %v6782 = vld [vmem:[#allocation2 + $0x78] sm:$0xff]
    %v6783 = vld [vmem:[#allocation2 + $0x80] sm:$0xff]
    %v6784 = vld [vmem:[#allocation2 + $0x88] sm:$0xff]
    %v6785 = vld [vmem:[#allocation2 + $0x90] sm:$0xff]
    %v6786 = vld [vmem:[#allocation2 + $0x98] sm:$0xff]
    %v6787 = vld [vmem:[#allocation2 + $0xa0] sm:$0xff]
    %v6788 = vld [vmem:[#allocation2 + $0xa8] sm:$0xff]
    %v6789 = vld [vmem:[#allocation2 + $0xb0] sm:$0xff]
    %v6790 = vld [vmem:[#allocation2 + $0xb8] sm:$0xff]
    %v6791 = vld [vmem:[#allocation2 + $0xc0] sm:$0xff]
    %v6792 = vld [vmem:[#allocation2 + $0xc8] sm:$0xff]
    %v6793 = vld [vmem:[#allocation2 + $0xd0] sm:$0xff]
    %v6794 = vld [vmem:[#allocation2 + $0xd8] sm:$0xff]
    %v6795 = vld [vmem:[#allocation2 + $0xe0] sm:$0xff]
    %v6796 = vld [vmem:[#allocation2 + $0xe8] sm:$0xff]
    %v6797 = vadd.f32 %v6769, %v6631
    %v6798 = vadd.f32 %v6770, %v6636
    %v6799 = vadd.f32 %v6771, %v6641
    %v6800 = vadd.f32 %v6772, %v6646
    %v6801 = vadd.f32 %v6773, %v6651
    %v6802 = vadd.f32 %v6774, %v6656
    %v6803 = vadd.f32 %v6775, %v6661
    %v6804 = vadd.f32 %v6776, %v6666
    %v6805 = vadd.f32 %v6777, %v6671
    %v6806 = vadd.f32 %v6778, %v6676
    %v6807 = vadd.f32 %v6779, %v6681
    %v6808 = vadd.f32 %v6780, %v6686
    %v6809 = vadd.f32 %v6781, %v6691
    %v6810 = vadd.f32 %v6782, %v6696
    %v6811 = vadd.f32 %v6783, %v6701
    %v6812 = vadd.f32 %v6784, %v6706
    %v6813 = vadd.f32 %v6785, %v6711
    %v6814 = vadd.f32 %v6786, %v6716
    %v6815 = vadd.f32 %v6787, %v6721
    %v6816 = vadd.f32 %v6788, %v6726
    %v6817 = vadd.f32 %v6789, %v6731
    %v6818 = vadd.f32 %v6790, %v6736
    %v6819 = vadd.f32 %v6791, %v6741
    %v6820 = vadd.f32 %v6792, %v6746
    %v6821 = vadd.f32 %v6793, %v6751
    %v6822 = vadd.f32 %v6794, %v6756
    %v6823 = vadd.f32 %v6795, %v6761
    %v6824 = vadd.f32 %v6796, %v6766
    %6825 = vst.msk [vmem:[#allocation2 + $0x10] sm:$0xff] %vm806, %v6797
    %6826 = vst.msk [vmem:[#allocation2 + $0x18] sm:$0xff] %vm806, %v6798
    %6827 = vst.msk [vmem:[#allocation2 + $0x20] sm:$0xff] %vm806, %v6799
    %6828 = vst.msk [vmem:[#allocation2 + $0x28] sm:$0xff] %vm806, %v6800
    %6829 = vst.msk [vmem:[#allocation2 + $0x30] sm:$0xff] %vm806, %v6801
    %6830 = vst.msk [vmem:[#allocation2 + $0x38] sm:$0xff] %vm806, %v6802
    %6831 = vst.msk [vmem:[#allocation2 + $0x40] sm:$0xff] %vm806, %v6803
    %6832 = vst.msk [vmem:[#allocation2 + $0x48] sm:$0xff] %vm806, %v6804
    %6833 = vst.msk [vmem:[#allocation2 + $0x50] sm:$0xff] %vm806, %v6805
    %6834 = vst.msk [vmem:[#allocation2 + $0x58] sm:$0xff] %vm806, %v6806
    %6835 = vst.msk [vmem:[#allocation2 + $0x60] sm:$0xff] %vm806, %v6807
    %6836 = vst.msk [vmem:[#allocation2 + $0x68] sm:$0xff] %vm806, %v6808
    %6837 = vst.msk [vmem:[#allocation2 + $0x70] sm:$0xff] %vm806, %v6809
    %6838 = vst.msk [vmem:[#allocation2 + $0x78] sm:$0xff] %vm806, %v6810
    %6839 = vst.msk [vmem:[#allocation2 + $0x80] sm:$0xff] %vm806, %v6811
    %6840 = vst.msk [vmem:[#allocation2 + $0x88] sm:$0xff] %vm806, %v6812
    %6841 = vst.msk [vmem:[#allocation2 + $0x90] sm:$0xff] %vm806, %v6813
    %6842 = vst.msk [vmem:[#allocation2 + $0x98] sm:$0xff] %vm806, %v6814
    %6843 = vst.msk [vmem:[#allocation2 + $0xa0] sm:$0xff] %vm806, %v6815
    %6844 = vst.msk [vmem:[#allocation2 + $0xa8] sm:$0xff] %vm806, %v6816
    %6845 = vst.msk [vmem:[#allocation2 + $0xb0] sm:$0xff] %vm806, %v6817
    %6846 = vst.msk [vmem:[#allocation2 + $0xb8] sm:$0xff] %vm806, %v6818
    %6847 = vst.msk [vmem:[#allocation2 + $0xc0] sm:$0xff] %vm806, %v6819
    %6848 = vst.msk [vmem:[#allocation2 + $0xc8] sm:$0xff] %vm806, %v6820
    %6849 = vst.msk [vmem:[#allocation2 + $0xd0] sm:$0xff] %vm806, %v6821
    %6850 = vst.msk [vmem:[#allocation2 + $0xd8] sm:$0xff] %vm806, %v6822
    %6851 = vst.msk [vmem:[#allocation2 + $0xe0] sm:$0xff] %vm806, %v6823
    %6852 = vst.msk [vmem:[#allocation2 + $0xe8] sm:$0xff] %vm806, %v6824
    %v6853 = vld [vmem:[#allocation2] sm:$0xff]
    %v6854 = vld [vmem:[#allocation2 + $0x8] sm:$0xff]
    %v6855 = vld [vmem:[#allocation2 + $0x10] sm:$0xff]
    %v6856 = vld [vmem:[#allocation2 + $0x18] sm:$0xff]
    %v6857 = vld [vmem:[#allocation2 + $0x20] sm:$0xff]
    %v6858 = vld [vmem:[#allocation2 + $0x28] sm:$0xff]
    %v6859 = vld [vmem:[#allocation2 + $0x30] sm:$0xff]
    %v6860 = vld [vmem:[#allocation2 + $0x38] sm:$0xff]
    %v6861 = vld [vmem:[#allocation2 + $0x40] sm:$0xff]
    %v6862 = vld [vmem:[#allocation2 + $0x48] sm:$0xff]
    %v6863 = vld [vmem:[#allocation2 + $0x50] sm:$0xff]
    %v6864 = vld [vmem:[#allocation2 + $0x58] sm:$0xff]
    %v6865 = vld [vmem:[#allocation2 + $0x60] sm:$0xff]
    %v6866 = vld [vmem:[#allocation2 + $0x68] sm:$0xff]
    %v6867 = vld [vmem:[#allocation2 + $0x70] sm:$0xff]
    %v6868 = vld [vmem:[#allocation2 + $0x78] sm:$0xff]
    %v6869 = vld [vmem:[#allocation2 + $0x80] sm:$0xff]
    %v6870 = vld [vmem:[#allocation2 + $0x88] sm:$0xff]
    %v6871 = vld [vmem:[#allocation2 + $0x90] sm:$0xff]
    %v6872 = vld [vmem:[#allocation2 + $0x98] sm:$0xff]
    %v6873 = vld [vmem:[#allocation2 + $0xa0] sm:$0xff]
    %v6874 = vld [vmem:[#allocation2 + $0xa8] sm:$0xff]
    %v6875 = vld [vmem:[#allocation2 + $0xb0] sm:$0xff]
    %v6876 = vld [vmem:[#allocation2 + $0xb8] sm:$0xff]
    %v6877 = vld [vmem:[#allocation2 + $0xc0] sm:$0xff]
    %v6878 = vld [vmem:[#allocation2 + $0xc8] sm:$0xff]
    %v6879 = vld [vmem:[#allocation2 + $0xd0] sm:$0xff]
    %v6880 = vld [vmem:[#allocation2 + $0xd8] sm:$0xff]
    %v6881 = vld [vmem:[#allocation2 + $0xe0] sm:$0xff]
    %v6882 = vld [vmem:[#allocation2 + $0xe8] sm:$0xff]
    %v6883 = vld [vmem:[#allocation2 + $0xf0] sm:$0xff]
    %v6884 = vld [vmem:[#allocation2 + $0xf8] sm:$0xff]
    %6885 = vmatprep.subr.mxu0 0.0
    %6886 = vmatpush1.msra.mxu0 %v6853
    %6887 = vmatprep.subr.mxu0 0.0
    %6888 = vmatpush1.msra.mxu0 %v6854
    %6889 = vmatprep.subr.mxu0 0.0
    %6890 = vmatpush1.msra.mxu0 %v6855
    %6891 = vmatprep.subr.mxu0 0.0
    %6892 = vmatpush1.msra.mxu0 %v6856
    %6893 = vmatprep.subr.mxu0 0.0
    %6894 = vmatpush1.msra.mxu0 %v6857
    %6895 = vmatprep.subr.mxu0 0.0
    %6896 = vmatpush1.msra.mxu0 %v6858
    %6897 = vmatprep.subr.mxu0 0.0
    %6898 = vmatpush1.msra.mxu0 %v6859
    %6899 = vmatprep.subr.mxu0 0.0
    %6900 = vmatpush1.msra.mxu0 %v6860
    %6901 = vmatprep.subr.mxu0 0.0
    %6902 = vmatpush1.msra.mxu0 %v6861
    %6903 = vmatprep.subr.mxu0 0.0
    %6904 = vmatpush1.msra.mxu0 %v6862
    %6905 = vmatprep.subr.mxu0 0.0
    %6906 = vmatpush1.msra.mxu0 %v6863
    %6907 = vmatprep.subr.mxu0 0.0
    %6908 = vmatpush1.msra.mxu0 %v6864
    %6909 = vmatprep.subr.mxu0 0.0
    %6910 = vmatpush1.msra.mxu0 %v6865
    %6911 = vmatprep.subr.mxu0 0.0
    %6912 = vmatpush1.msra.mxu0 %v6866
    %6913 = vmatprep.subr.mxu0 0.0
    %6914 = vmatpush1.msra.mxu0 %v6867
    %6915 = vmatprep.subr.mxu0 0.0
    %6916 = vmatpush1.msra.mxu0 %v6868
    %6917 = vmatprep.subr.mxu0 0.0
    %6918 = vmatpush1.msra.mxu0 %v6869
    %6919 = vmatprep.subr.mxu0 0.0
    %6920 = vmatpush1.msra.mxu0 %v6870
    %6921 = vmatprep.subr.mxu0 0.0
    %6922 = vmatpush1.msra.mxu0 %v6871
    %6923 = vmatprep.subr.mxu0 0.0
    %6924 = vmatpush1.msra.mxu0 %v6872
    %6925 = vmatprep.subr.mxu0 0.0
    %6926 = vmatpush1.msra.mxu0 %v6873
    %6927 = vmatprep.subr.mxu0 0.0
    %6928 = vmatpush1.msra.mxu0 %v6874
    %6929 = vmatprep.subr.mxu0 0.0
    %6930 = vmatpush1.msra.mxu0 %v6875
    %6931 = vmatprep.subr.mxu0 0.0
    %6932 = vmatpush1.msra.mxu0 %v6876
    %6933 = vmatprep.subr.mxu0 0.0
    %6934 = vmatpush1.msra.mxu0 %v6877
    %6935 = vmatprep.subr.mxu0 0.0
    %6936 = vmatpush1.msra.mxu0 %v6878
    %6937 = vmatprep.subr.mxu0 0.0
    %6938 = vmatpush1.msra.mxu0 %v6879
    %6939 = vmatprep.subr.mxu0 0.0
    %6940 = vmatpush1.msra.mxu0 %v6880
    %6941 = vmatprep.subr.mxu0 0.0
    %6942 = vmatpush1.msra.mxu0 %v6881
    %6943 = vmatprep.subr.mxu0 0.0
    %6944 = vmatpush1.msra.mxu0 %v6882
    %6945 = vmatprep.subr.mxu0 0.0
    %6946 = vmatpush1.msra.mxu0 %v6883
    %6947 = vmatprep.subr.mxu0 0.0
    %6948 = vmatpush1.msra.mxu0 %v6884
    %6949 = vmatprep.mubr.f32.mxu0 %v51
    %6950 = vmatmul.mubr.f32.gmra.mrb[0].mxu0 %v50
    %v6951 = vpop.f32.mrb[0].mxu0
    %v6952 = vadd.f32 0.0, %v6951
    %v6953 = vpop.f32.mrb[0].mxu0
    %6954 = vdwg.mxu0
    %v6955 = vld [vmem:[%s3 + $0xa] sm:$0x1]
    %v6956 = vlaneseq
    %v6957 = vshrl.u32 %v6956, 7
    %v6958 = vsub.s32 0, %v6957
    %v6959 = vrot.slane %v6955, %v6958
    %v6960 = vadd.f32 %v6952, %v6959
    %v6961 = vld [vmem:[%s2 + $0x150] sm:$0xff]
    %v6962 = vld [vmem:[%s2 + $0x158] sm:$0xff]
    %v6963 = vld [vmem:[%s2 + $0x160] sm:$0xff]
    %v6964 = vld [vmem:[%s2 + $0x168] sm:$0xff]
    %v6965 = vld [vmem:[%s2 + $0x170] sm:$0xff]
    %v6966 = vld [vmem:[%s2 + $0x178] sm:$0xff]
    %v6967 = vld [vmem:[%s2 + $0x180] sm:$0xff]
    %v6968 = vld [vmem:[%s2 + $0x188] sm:$0xff]
    %v6969 = vld [vmem:[%s2 + $0x190] sm:$0xff]
    %v6970 = vld [vmem:[%s2 + $0x198] sm:$0xff]
    %v6971 = vld [vmem:[%s2 + $0x1a0] sm:$0xff]
    %v6972 = vld [vmem:[%s2 + $0x1a8] sm:$0xff]
    %v6973 = vld [vmem:[%s2 + $0x1b0] sm:$0xff]
    %v6974 = vld [vmem:[%s2 + $0x1b8] sm:$0xff]
    %v6975 = vld [vmem:[%s2 + $0x1c0] sm:$0xff]
    %v6976 = vld [vmem:[%s2 + $0x1c8] sm:$0xff]
    %v6978 = vsel %vm806, %v6960, 0
    %6980 = vmatprep.subr.mxu0 0.0
    %6981 = vmatpush1.msra.mxu0 %v6969
    %6982 = vmatprep.subr.mxu0 0.0
    %6983 = vmatpush1.msra.mxu0 %v6970
    %6984 = vmatprep.subr.mxu0 0.0
    %6985 = vmatpush1.msra.mxu0 %v6971
    %6986 = vmatprep.subr.mxu0 0.0
    %6987 = vmatpush1.msra.mxu0 %v6972
    %6988 = vmatprep.subr.mxu0 0.0
    %6989 = vmatpush1.msra.mxu0 %v6973
    %6990 = vmatprep.subr.mxu0 0.0
    %6991 = vmatpush1.msra.mxu0 %v6974
    %6992 = vmatprep.subr.mxu0 0.0
    %6993 = vmatpush1.msra.mxu0 %v6975
    %6994 = vmatprep.subr.mxu0 0.0
    %6995 = vmatpush1.msra.mxu0 %v6976
    %6996 = vmatprep.subr.mxu0 0.0
    %6997 = vmatpush1.msra.mxu0 0.0
    %6998 = vmatprep.subr.mxu0 0.0
    %6999 = vmatpush1.msra.mxu0 0.0
    %7000 = vmatprep.subr.mxu0 0.0
    %7001 = vmatpush1.msra.mxu0 0.0
    %7002 = vmatprep.subr.mxu0 0.0
    %7003 = vmatpush1.msra.mxu0 0.0
    %7004 = vmatprep.subr.mxu0 0.0
    %7005 = vmatpush1.msra.mxu0 0.0
    %7006 = vmatprep.subr.mxu0 0.0
    %7007 = vmatpush1.msra.mxu0 0.0
    %7008 = vmatprep.subr.mxu0 0.0
    %7009 = vmatpush1.msra.mxu0 0.0
    %7010 = vmatprep.subr.mxu0 0.0
    %7011 = vmatpush1.msra.mxu0 0.0
    %7012 = vmatprep.subr.mxu0 0.0
    %7013 = vmatpush1.msra.mxu0 0.0
    %7014 = vmatprep.subr.mxu0 0.0
    %7015 = vmatpush1.msra.mxu0 0.0
    %7016 = vmatprep.subr.mxu0 0.0
    %7017 = vmatpush1.msra.mxu0 0.0
    %7018 = vmatprep.subr.mxu0 0.0
    %7019 = vmatpush1.msra.mxu0 0.0
    %7020 = vmatprep.subr.mxu0 0.0
    %7021 = vmatpush1.msra.mxu0 0.0
    %7022 = vmatprep.subr.mxu0 0.0
    %7023 = vmatpush1.msra.mxu0 0.0
    %7024 = vmatprep.subr.mxu0 0.0
    %7025 = vmatpush1.msra.mxu0 0.0
    %7026 = vmatprep.subr.mxu0 0.0
    %7027 = vmatpush1.msra.mxu0 0.0
    %7028 = vmatprep.subr.mxu0 0.0
    %7029 = vmatpush1.msra.mxu0 0.0
    %7030 = vmatprep.subr.mxu0 0.0
    %7031 = vmatpush1.msra.mxu0 0.0
    %7032 = vmatprep.subr.mxu0 0.0
    %7033 = vmatpush1.msra.mxu0 0.0
    %7034 = vmatprep.subr.mxu0 0.0
    %7035 = vmatpush1.msra.mxu0 0.0
    %7036 = vmatprep.subr.mxu0 0.0
    %7037 = vmatpush1.msra.mxu0 0.0
    %7038 = vmatprep.subr.mxu0 0.0
    %7039 = vmatpush1.msra.mxu0 0.0
    %7040 = vmatprep.subr.mxu0 0.0
    %7041 = vmatpush1.msra.mxu0 0.0
    %7042 = vmatprep.subr.mxu0 0.0
    %7043 = vmatpush1.msra.mxu0 0.0
    %7044 = vmatprep.mubr.f32.mxu0 0.0
    %7045 = vmatmul.mubr.f32.gmra.mrb[0].mxu0 %v6978
    %v7046 = vpop.f32.mrb[0].mxu0
    %v7047 = vadd.f32 0.0, %v7046
    %v7048 = vpop.f32.mrb[0].mxu0
    %7049 = vdwg.mxu0
    %v7051 = vsel %vm806, %v477, 0
    %7053 = vmatprep.subr.mxu0 0.0
    %7054 = vmatpush1.msra.mxu0 %v6961
    %7055 = vmatprep.subr.mxu0 0.0
    %7056 = vmatpush1.msra.mxu0 %v6962
    %7057 = vmatprep.subr.mxu0 0.0
    %7058 = vmatpush1.msra.mxu0 %v6963
    %7059 = vmatprep.subr.mxu0 0.0
    %7060 = vmatpush1.msra.mxu0 %v6964
    %7061 = vmatprep.subr.mxu0 0.0
    %7062 = vmatpush1.msra.mxu0 %v6965
    %7063 = vmatprep.subr.mxu0 0.0
    %7064 = vmatpush1.msra.mxu0 %v6966
    %7065 = vmatprep.subr.mxu0 0.0
    %7066 = vmatpush1.msra.mxu0 %v6967
    %7067 = vmatprep.subr.mxu0 0.0
    %7068 = vmatpush1.msra.mxu0 %v6968
    %7069 = vmatprep.subr.mxu0 0.0
    %7070 = vmatpush1.msra.mxu0 0.0
    %7071 = vmatprep.subr.mxu0 0.0
    %7072 = vmatpush1.msra.mxu0 0.0
    %7073 = vmatprep.subr.mxu0 0.0
    %7074 = vmatpush1.msra.mxu0 0.0
    %7075 = vmatprep.subr.mxu0 0.0
    %7076 = vmatpush1.msra.mxu0 0.0
    %7077 = vmatprep.subr.mxu0 0.0
    %7078 = vmatpush1.msra.mxu0 0.0
    %7079 = vmatprep.subr.mxu0 0.0
    %7080 = vmatpush1.msra.mxu0 0.0
    %7081 = vmatprep.subr.mxu0 0.0
    %7082 = vmatpush1.msra.mxu0 0.0
    %7083 = vmatprep.subr.mxu0 0.0
    %7084 = vmatpush1.msra.mxu0 0.0
    %7085 = vmatprep.subr.mxu0 0.0
    %7086 = vmatpush1.msra.mxu0 0.0
    %7087 = vmatprep.subr.mxu0 0.0
    %7088 = vmatpush1.msra.mxu0 0.0
    %7089 = vmatprep.subr.mxu0 0.0
    %7090 = vmatpush1.msra.mxu0 0.0
    %7091 = vmatprep.subr.mxu0 0.0
    %7092 = vmatpush1.msra.mxu0 0.0
    %7093 = vmatprep.subr.mxu0 0.0
    %7094 = vmatpush1.msra.mxu0 0.0
    %7095 = vmatprep.subr.mxu0 0.0
    %7096 = vmatpush1.msra.mxu0 0.0
    %7097 = vmatprep.subr.mxu0 0.0
    %7098 = vmatpush1.msra.mxu0 0.0
    %7099 = vmatprep.subr.mxu0 0.0
    %7100 = vmatpush1.msra.mxu0 0.0
    %7101 = vmatprep.subr.mxu0 0.0
    %7102 = vmatpush1.msra.mxu0 0.0
    %7103 = vmatprep.subr.mxu0 0.0
    %7104 = vmatpush1.msra.mxu0 0.0
    %7105 = vmatprep.subr.mxu0 0.0
    %7106 = vmatpush1.msra.mxu0 0.0
    %7107 = vmatprep.subr.mxu0 0.0
    %7108 = vmatpush1.msra.mxu0 0.0
    %7109 = vmatprep.subr.mxu0 0.0
    %7110 = vmatpush1.msra.mxu0 0.0
    %7111 = vmatprep.subr.mxu0 0.0
    %7112 = vmatpush1.msra.mxu0 0.0
    %7113 = vmatprep.subr.mxu0 0.0
    %7114 = vmatpush1.msra.mxu0 0.0
    %7115 = vmatprep.subr.mxu0 0.0
    %7116 = vmatpush1.msra.mxu0 0.0
    %7117 = vmatprep.mubr.f32.mxu0 0.0
    %7118 = vmatmul.mubr.f32.gmra.mrb[0].mxu0 %v7051
    %v7119 = vpop.f32.mrb[0].mxu0
    %v7120 = vadd.f32 %v7047, %v7119
    %v7121 = vpop.f32.mrb[0].mxu0
    %7122 = vdwg.mxu0
    %v7123 = vld [vmem:[%s3 + $0xb] sm:$0x1]
    %v7124 = vlaneseq
    %v7125 = vshrl.u32 %v7124, 7
    %v7126 = vsub.s32 0, %v7125
    %v7127 = vrot.slane %v7123, %v7126
    %v7128 = vadd.f32 %v7120, %v7127
    %vm7129 = vcmask 17408
    %7130 = vst.msk [vmem:[#allocation5] sm:$0x3] %vm7129, %v7128
    // Predicated region
    $region18: #{sae_3dcnn_forward.1} parent=1 // pred_check
      _
    $region19: #{sae_3dcnn_forward.1} parent=1 // pred_check_branch
      %7132 = sbr.rel (0) target = $region21
    $region20: #{sae_3dcnn_forward.1} parent=1 // pred_region
      %s7134 = ssub.s32 32, 32
      %7135 = vsyncadd [#allocation6], %s7134
      %s7137 = sshll.u32 [#allocation5], 4
      %s7138 = int_to_ptr.vmem [resolvable:$true] %s7137
      %7140 = dma.vmem_to_hbm [thread:$0]  %s7138, 32, %s4, [#allocation6]
    $region21: #{sae_3dcnn_forward.1} parent=1 // pred_fallthru
      _
    // Predicated region
    $region22: #{sae_3dcnn_forward.1} parent=1 // pred_check
      _
    $region23: #{sae_3dcnn_forward.1} parent=1 // pred_check_branch
      %7142 = sbr.rel (0) target = $region25
    $region24: #{sae_3dcnn_forward.1} parent=1 // pred_region
      %7143 = dma.done [#allocation6], 32
    $region25: #{sae_3dcnn_forward.1} parent=1 // pred_fallthru
      _
    %7144 = vsyncpa [#allocation6], 1

</llo_original>
